<compile_context>
chip_gen: v7x
topology: tpu7x:2x2x1
jax: 0.10.0
libtpu: 0.0.40
codegen_flags: <defaults>
</compile_context>

<pallas_src>
import jax
import jax.numpy as jnp
from jax import lax
from jax.experimental import pallas as pl
from jax.experimental.pallas import tpu as pltpu


# --------------------------------------------------------------------------
# Fused kernel: asyConv branch (p2) + atrous branch (p3) + conv2d/BN/ReLU
# --------------------------------------------------------------------------
def rfb_fused_kernel(xpad_ref, wasy_ref, watr_ref, w2_ref, aux_ref,
                     out_ref, p_scr):
    # xpad_ref: (1, H+6, W+6, Cin)    bf16  input, spatially padded by 3 (NHWC)
    # wasy_ref: (3, 3, Cin, Cout)     bf16  BN-folded, merged asyConv weight
    # watr_ref: (3, 3, Cin, Cout)     bf16  BN-folded atrous (dil=3) weight
    # w2_ref:   (3, 3, 2*Cout, Cout)  bf16  BN-folded stage-2 weight over [p2|p3]
    # aux_ref:  (4, Cout)             f32   rows = [t_asy, t_atr, t_2, prelu_a]
    # out_ref:  (1, H, W, Cout)       f32
    # p_scr:    (H+2, W+2, 2*Cout)    bf16  [p2|p3] with a zero 1-pixel halo
    Hq, Wq, C2 = p_scr.shape
    H, W = Hq - 2, Wq - 2
    Cout = C2 // 2
    Cin = xpad_ref.shape[-1]

    x = xpad_ref[0]                                     # (H+6, W+6, Cin)

    def conv_acc(w_ref, taps):
        acc = jnp.zeros((H * W, Cout), jnp.float32)
        for kh, kw, r0, c0 in taps:
            win = x[r0:r0 + H, c0:c0 + W, :].reshape(H * W, Cin)
            acc = acc + jnp.dot(win, w_ref[kh, kw],
                                preferred_element_type=jnp.float32)
        return acc

    # Offsets into the pad-3 buffer: offset = (3 - pad) + k * dilation.
    asy_taps = [(kh, kw, 2 + kh, 2 + kw) for kh in range(3) for kw in range(3)]
    atr_taps = [(kh, kw, 3 * kh, 3 * kw) for kh in range(3) for kw in range(3)]

    # p2: merged (square + vertical + horizontal) asyConv, BN pre-folded.
    p2 = conv_acc(wasy_ref, asy_taps) + aux_ref[0:1, :]
    # p3: atrous conv (+ folded bias/BN) followed by PReLU.
    z = conv_acc(watr_ref, atr_taps) + aux_ref[1:2, :]
    p3 = jnp.where(z > 0, z, aux_ref[3:4, :] * z)

    # Stage the channel-concatenated [p2 | p3] in a VMEM scratch with a zero
    # halo; this replaces the HBM round-trip + jnp.pad between two pallas_calls.
    p_scr[...] = jnp.zeros_like(p_scr)
    p_scr[1:1 + H, 1:1 + W, 0:Cout] = p2.reshape(H, W, Cout).astype(jnp.bfloat16)
    p_scr[1:1 + H, 1:1 + W, Cout:C2] = p3.reshape(H, W, Cout).astype(jnp.bfloat16)
    p = p_scr[...]                                      # (H+2, W+2, 2*Cout)

    # Stage 2: 3x3 conv over the concatenated tensor, one dot per tap.
    acc = jnp.zeros((H * W, Cout), jnp.float32)
    for kh in range(3):
        for kw in range(3):
            win = p[kh:kh + H, kw:kw + W, :].reshape(H * W, C2)
            acc = acc + jnp.dot(win, w2_ref[kh, kw],
                                preferred_element_type=jnp.float32)
    out = jnp.maximum(acc + aux_ref[2:3, :], 0.0)
    out_ref[0] = out.reshape(H, W, Cout)


# --------------------------------------------------------------------------
# Wrapper
# --------------------------------------------------------------------------
def rfb_pallas(f_nchw, fp):
    """f_nchw: (B, Cin, H, W) float32 (PyTorch layout). fp: folded params."""
    Cout = fp["aux"].shape[1]
    x = jnp.transpose(f_nchw, (0, 2, 3, 1)).astype(jnp.bfloat16)      # NHWC bf16
    B, H, W, Cin = x.shape
    xpad = jnp.pad(x, ((0, 0), (3, 3), (3, 3), (0, 0)))               # pad-3 halo

    def whole(a):
        return pl.BlockSpec(a.shape, lambda b, n=a.ndim: (0,) * n)

    out = pl.pallas_call(
        rfb_fused_kernel,
        grid=(B,),
        in_specs=[pl.BlockSpec((1, H + 6, W + 6, Cin), lambda b: (b, 0, 0, 0)),
                  whole(fp["w_asy"]), whole(fp["w_atr"]),
                  whole(fp["w2"]), whole(fp["aux"])],
        out_specs=pl.BlockSpec((1, H, W, Cout), lambda b: (b, 0, 0, 0)),
        out_shape=jax.ShapeDtypeStruct((B, H, W, Cout), jnp.float32),
        scratch_shapes=[pltpu.VMEM((H + 2, W + 2, 2 * Cout), jnp.bfloat16)],
        compiler_params=pltpu.CompilerParams(dimension_semantics=("parallel",)),
    )(xpad, fp["w_asy"], fp["w_atr"], fp["w2"], fp["aux"])

    return jnp.transpose(out, (0, 3, 1, 2))                           # back to NCHW


# --------------------------------------------------------------------------
# Deterministic synthetic parameters (raw, mirroring the PyTorch module)
# --------------------------------------------------------------------------
def make_raw_params(key, Cin, Cout):
    ks = iter(jax.random.split(key, 32))

    def w(shape, scale):
        return scale * jax.random.normal(next(ks), shape, jnp.float32)

    def bn():
        gamma = 1.0 + 0.2 * jax.random.normal(next(ks), (Cout,), jnp.float32)
        beta = 0.1 * jax.random.normal(next(ks), (Cout,), jnp.float32)
        mean = 0.1 * jax.random.normal(next(ks), (Cout,), jnp.float32)
        var = 0.5 + jax.random.uniform(next(ks), (Cout,), jnp.float32)
        return (gamma, beta, mean, var)

    return {
        "w_sq": w((3, 3, Cin, Cout), 0.3), "bn_sq": bn(),
        "w_ver": w((3, 1, Cin, Cout), 0.3), "bn_ver": bn(),
        "w_hor": w((1, 3, Cin, Cout), 0.3), "bn_hor": bn(),
        "w_atr": w((3, 3, Cin, Cout), 0.3), "b_atr": w((Cout,), 0.1),
        "bn_atr": bn(),
        "prelu_a": jnp.float32(0.25),                       # nn.PReLU() default
        "w2": w((3, 3, 2 * Cout, Cout), 0.2), "b2": w((Cout,), 0.1),
        "bn2": bn(),
    }


def fold_params(raw, eps=1e-5):
    """Fold eval-mode BN into the weights and merge the asyConv branches."""
    def scale_shift(bn):
        gamma, beta, mean, var = bn
        s = gamma / jnp.sqrt(var + eps)
        return s, beta - mean * s

    s_sq, t_sq = scale_shift(raw["bn_sq"])
    s_ver, t_ver = scale_shift(raw["bn_ver"])
    s_hor, t_hor = scale_shift(raw["bn_hor"])
    s_atr, t_atr = scale_shift(raw["bn_atr"])
    s2, t2 = scale_shift(raw["bn2"])

    # Merge the three asyConv branches: the (3,1) pad-(1,0) kernel embeds in
    # the centre column, the (1,3) pad-(0,1) kernel in the centre row.
    w_asy = s_sq * raw["w_sq"]                                   # (3,3,Cin,Cout)
    w_asy = w_asy.at[:, 1, :, :].add(s_ver * raw["w_ver"][:, 0])
    w_asy = w_asy.at[1, :, :, :].add(s_hor * raw["w_hor"][0])
    t_asy = t_sq + t_ver + t_hor

    w_atr = s_atr * raw["w_atr"]
    t_atrf = s_atr * raw["b_atr"] + t_atr

    w2 = s2 * raw["w2"]
    t2f = s2 * raw["b2"] + t2

    Cout = w2.shape[-1]
    aux = jnp.stack(
        [t_asy, t_atrf, t2f, jnp.full((Cout,), raw["prelu_a"], jnp.float32)],
        axis=0).astype(jnp.float32)                              # (4, Cout)
    return {"w_asy": w_asy.astype(jnp.bfloat16),
            "w_atr": w_atr.astype(jnp.bfloat16),
            "w2": w2.astype(jnp.bfloat16),
            "aux": aux}


# --------------------------------------------------------------------------
# Pure-JAX references (for correctness checks)
# --------------------------------------------------------------------------
def _conv(x, w_hwio, pad, dil=1):
    return lax.conv_general_dilated(
        x, w_hwio, window_strides=(1, 1), padding=pad,
        rhs_dilation=(dil, dil),
        dimension_numbers=("NCHW", "HWIO", "NCHW"))


def rfb_reference(f_nchw, raw, eps=1e-5):
    """f32 reference of the original module semantics (eval-mode BN)."""
    x = f_nchw.astype(jnp.float32)

    def bn(y, p):
        gamma, beta, mean, var = (v.reshape(1, -1, 1, 1) for v in p)
        return (y - mean) / jnp.sqrt(var + eps) * gamma + beta

    sq = bn(_conv(x, raw["w_sq"], [(1, 1), (1, 1)]), raw["bn_sq"])
    ver = bn(_conv(x, raw["w_ver"], [(1, 1), (0, 0)]), raw["bn_ver"])
    hor = bn(_conv(x, raw["w_hor"], [(0, 0), (1, 1)]), raw["bn_hor"])
    p2 = sq + ver + hor

    atr = _conv(x, raw["w_atr"], [(3, 3), (3, 3)], dil=3) \
        + raw["b_atr"].reshape(1, -1, 1, 1)
    z = bn(atr, raw["bn_atr"])
    p3 = jnp.where(z > 0, z, raw["prelu_a"] * z)

    p = jnp.concatenate([p2, p3], axis=1)
    q = _conv(p, raw["w2"], [(1, 1), (1, 1)]) + raw["b2"].reshape(1, -1, 1, 1)
    return jnp.maximum(bn(q, raw["bn2"]), 0.0)


def rfb_reference_folded(f_nchw, fp):
    """Reference with the same bf16 quantization points as the kernel
    (checks the Pallas implementation itself to tight tolerance)."""
    Cout = fp["aux"].shape[1]
    x = f_nchw.astype(jnp.bfloat16).astype(jnp.float32)
    shift = lambda r: fp["aux"][r].reshape(1, Cout, 1, 1)

    p2 = _conv(x, fp["w_asy"].astype(jnp.float32), [(1, 1), (1, 1)]) + shift(0)
    z = _conv(x, fp["w_atr"].astype(jnp.float32), [(3, 3), (3, 3)], dil=3) \
        + shift(1)
    p3 = jnp.where(z > 0, z, shift(3) * z)
    p = jnp.concatenate([p2, p3], axis=1).astype(jnp.bfloat16).astype(jnp.float32)
    q = _conv(p, fp["w2"].astype(jnp.float32), [(1, 1), (1, 1)]) + shift(2)
    return jnp.maximum(q, 0.0)


if __name__ == "__main__":
    B, Cin, Cout, H, W = 2, 4, 8, 16, 16
    key = jax.random.PRNGKey(0)
    kf, kp = jax.random.split(key)
    f = jax.random.normal(kf, (B, Cin, H, W), jnp.float32)   # NCHW like PyTorch

    raw = make_raw_params(kp, Cin, Cout)
    fp = fold_params(raw)

    out = jax.block_until_ready(jax.jit(rfb_pallas)(f, fp))
    assert out.shape == (B, Cout, H, W), out.shape

    # Tight check: same numerics (bf16 operands, f32 accumulation) as the kernel.
    ref_impl = jax.block_until_ready(rfb_reference_folded(f, fp))
    err_impl = float(jnp.max(jnp.abs(out - ref_impl)))
    if err_impl > 3e-3:
        raise AssertionError(f"kernel vs folded reference: max abs err {err_impl}")

    # Loose end-to-end check vs the full-precision module semantics (the bf16
    # cast of activations/weights is the only approximation).
    ref_f32 = jax.block_until_ready(rfb_reference(f, raw))
    scale = float(jnp.max(jnp.abs(ref_f32))) + 1e-6
    rel = float(jnp.max(jnp.abs(out - ref_f32))) / scale
    if rel > 5e-2:
        raise AssertionError(f"kernel vs f32 module reference: rel err {rel}")

    print("KERNEL_OK")
</pallas_src>

<mosaic_0001>
module attributes {stable_mosaic.version = 11 : i64} {
  func.func @rfb_fused_kernel(%arg0: i32, %arg1: memref<1x22x22x4xbf16, #tpu.memory_space<vmem>>, %arg2: memref<3x3x4x8xbf16, #tpu.memory_space<vmem>>, %arg3: memref<3x3x4x8xbf16, #tpu.memory_space<vmem>>, %arg4: memref<3x3x16x8xbf16, #tpu.memory_space<vmem>>, %arg5: memref<4x8xf32, #tpu.memory_space<vmem>>, %arg6: memref<1x16x16x8xf32, #tpu.memory_space<vmem>>, %arg7: memref<18x18x16xbf16, #tpu.memory_space<vmem>>) attributes {dimension_semantics = [#tpu.dimension_semantics<parallel>], iteration_bounds = array<i64: 2>, scalar_prefetch = 0 : i64, scratch_operands = 1 : i64, tpu.core_type = #tpu.core_type<tc>, window_params = [{transform_indices = @transform_0, window_bounds = array<i64: 1, 22, 22, 4>}, {pipeline_mode = #tpu.pipeline_mode<synchronous>, transform_indices = @transform_1, window_bounds = array<i64: 3, 3, 4, 8>}, {pipeline_mode = #tpu.pipeline_mode<synchronous>, transform_indices = @transform_2, window_bounds = array<i64: 3, 3, 4, 8>}, {pipeline_mode = #tpu.pipeline_mode<synchronous>, transform_indices = @transform_3, window_bounds = array<i64: 3, 3, 16, 8>}, {pipeline_mode = #tpu.pipeline_mode<synchronous>, transform_indices = @transform_4, window_bounds = array<i64: 4, 8>}, {transform_indices = @transform_5, window_bounds = array<i64: 1, 16, 16, 8>}]} {
    %c0 = arith.constant 0 : index
    %c0_0 = arith.constant 0 : index
    %c0_1 = arith.constant 0 : index
    %c0_2 = arith.constant 0 : index
    %0 = vector.load %arg1[%c0, %c0_0, %c0_1, %c0_2] : memref<1x22x22x4xbf16, #tpu.memory_space<vmem>>, vector<1x22x22x4xbf16>
    %1 = vector.shape_cast %0 : vector<1x22x22x4xbf16> to vector<22x22x4xbf16>
    %cst = arith.constant 0.000000e+00 : f32
    %2 = vector.broadcast %cst : f32 to vector<256x8xf32>
    %3 = vector.extract_strided_slice %1 {offsets = [2, 2, 0], sizes = [16, 16, 4], strides = [1, 1, 1]} : vector<22x22x4xbf16> to vector<16x16x4xbf16>
    %4 = vector.shape_cast %3 : vector<16x16x4xbf16> to vector<256x4xbf16>
    %c0_3 = arith.constant 0 : index
    %c0_4 = arith.constant 0 : index
    %c0_5 = arith.constant 0 : index
    %c0_6 = arith.constant 0 : index
    %5 = vector.load %arg2[%c0_3, %c0_4, %c0_5, %c0_6] : memref<3x3x4x8xbf16, #tpu.memory_space<vmem>>, vector<1x1x4x8xbf16>
    %6 = vector.shape_cast %5 : vector<1x1x4x8xbf16> to vector<4x8xbf16>
    %cst_7 = arith.constant dense<0.000000e+00> : vector<256x8xf32>
    %7 = tpu.matmul %4, %6, %cst_7 {dimension_numbers = #tpu.dot_dimension_numbers<[1], [0], [0], [1], [0, 0, 1, 1], [], []>} : vector<256x4xbf16>, vector<4x8xbf16>, vector<256x8xf32> -> vector<256x8xf32>
    %8 = arith.addf %2, %7 : vector<256x8xf32>
    %9 = vector.extract_strided_slice %1 {offsets = [2, 3, 0], sizes = [16, 16, 4], strides = [1, 1, 1]} : vector<22x22x4xbf16> to vector<16x16x4xbf16>
    %10 = vector.shape_cast %9 : vector<16x16x4xbf16> to vector<256x4xbf16>
    %c0_8 = arith.constant 0 : index
    %c1 = arith.constant 1 : index
    %c0_9 = arith.constant 0 : index
    %c0_10 = arith.constant 0 : index
    %11 = vector.load %arg2[%c0_8, %c1, %c0_9, %c0_10] : memref<3x3x4x8xbf16, #tpu.memory_space<vmem>>, vector<1x1x4x8xbf16>
    %12 = vector.shape_cast %11 : vector<1x1x4x8xbf16> to vector<4x8xbf16>
    %cst_11 = arith.constant dense<0.000000e+00> : vector<256x8xf32>
    %13 = tpu.matmul %10, %12, %cst_11 {dimension_numbers = #tpu.dot_dimension_numbers<[1], [0], [0], [1], [0, 0, 1, 1], [], []>} : vector<256x4xbf16>, vector<4x8xbf16>, vector<256x8xf32> -> vector<256x8xf32>
    %14 = arith.addf %8, %13 : vector<256x8xf32>
    %15 = vector.extract_strided_slice %1 {offsets = [2, 4, 0], sizes = [16, 16, 4], strides = [1, 1, 1]} : vector<22x22x4xbf16> to vector<16x16x4xbf16>
    %16 = vector.shape_cast %15 : vector<16x16x4xbf16> to vector<256x4xbf16>
    %c0_12 = arith.constant 0 : index
    %c2 = arith.constant 2 : index
    %c0_13 = arith.constant 0 : index
    %c0_14 = arith.constant 0 : index
    %17 = vector.load %arg2[%c0_12, %c2, %c0_13, %c0_14] : memref<3x3x4x8xbf16, #tpu.memory_space<vmem>>, vector<1x1x4x8xbf16>
    %18 = vector.shape_cast %17 : vector<1x1x4x8xbf16> to vector<4x8xbf16>
    %cst_15 = arith.constant dense<0.000000e+00> : vector<256x8xf32>
    %19 = tpu.matmul %16, %18, %cst_15 {dimension_numbers = #tpu.dot_dimension_numbers<[1], [0], [0], [1], [0, 0, 1, 1], [], []>} : vector<256x4xbf16>, vector<4x8xbf16>, vector<256x8xf32> -> vector<256x8xf32>
    %20 = arith.addf %14, %19 : vector<256x8xf32>
    %21 = vector.extract_strided_slice %1 {offsets = [3, 2, 0], sizes = [16, 16, 4], strides = [1, 1, 1]} : vector<22x22x4xbf16> to vector<16x16x4xbf16>
    %22 = vector.shape_cast %21 : vector<16x16x4xbf16> to vector<256x4xbf16>
    %c1_16 = arith.constant 1 : index
    %c0_17 = arith.constant 0 : index
    %c0_18 = arith.constant 0 : index
    %c0_19 = arith.constant 0 : index
    %23 = vector.load %arg2[%c1_16, %c0_17, %c0_18, %c0_19] : memref<3x3x4x8xbf16, #tpu.memory_space<vmem>>, vector<1x1x4x8xbf16>
    %24 = vector.shape_cast %23 : vector<1x1x4x8xbf16> to vector<4x8xbf16>
    %cst_20 = arith.constant dense<0.000000e+00> : vector<256x8xf32>
    %25 = tpu.matmul %22, %24, %cst_20 {dimension_numbers = #tpu.dot_dimension_numbers<[1], [0], [0], [1], [0, 0, 1, 1], [], []>} : vector<256x4xbf16>, vector<4x8xbf16>, vector<256x8xf32> -> vector<256x8xf32>
    %26 = arith.addf %20, %25 : vector<256x8xf32>
    %27 = vector.extract_strided_slice %1 {offsets = [3, 3, 0], sizes = [16, 16, 4], strides = [1, 1, 1]} : vector<22x22x4xbf16> to vector<16x16x4xbf16>
    %28 = vector.shape_cast %27 : vector<16x16x4xbf16> to vector<256x4xbf16>
    %c1_21 = arith.constant 1 : index
    %c1_22 = arith.constant 1 : index
    %c0_23 = arith.constant 0 : index
    %c0_24 = arith.constant 0 : index
    %29 = vector.load %arg2[%c1_21, %c1_22, %c0_23, %c0_24] : memref<3x3x4x8xbf16, #tpu.memory_space<vmem>>, vector<1x1x4x8xbf16>
    %30 = vector.shape_cast %29 : vector<1x1x4x8xbf16> to vector<4x8xbf16>
    %cst_25 = arith.constant dense<0.000000e+00> : vector<256x8xf32>
    %31 = tpu.matmul %28, %30, %cst_25 {dimension_numbers = #tpu.dot_dimension_numbers<[1], [0], [0], [1], [0, 0, 1, 1], [], []>} : vector<256x4xbf16>, vector<4x8xbf16>, vector<256x8xf32> -> vector<256x8xf32>
    %32 = arith.addf %26, %31 : vector<256x8xf32>
    %33 = vector.extract_strided_slice %1 {offsets = [3, 4, 0], sizes = [16, 16, 4], strides = [1, 1, 1]} : vector<22x22x4xbf16> to vector<16x16x4xbf16>
    %34 = vector.shape_cast %33 : vector<16x16x4xbf16> to vector<256x4xbf16>
    %c1_26 = arith.constant 1 : index
    %c2_27 = arith.constant 2 : index
    %c0_28 = arith.constant 0 : index
    %c0_29 = arith.constant 0 : index
    %35 = vector.load %arg2[%c1_26, %c2_27, %c0_28, %c0_29] : memref<3x3x4x8xbf16, #tpu.memory_space<vmem>>, vector<1x1x4x8xbf16>
    %36 = vector.shape_cast %35 : vector<1x1x4x8xbf16> to vector<4x8xbf16>
    %cst_30 = arith.constant dense<0.000000e+00> : vector<256x8xf32>
    %37 = tpu.matmul %34, %36, %cst_30 {dimension_numbers = #tpu.dot_dimension_numbers<[1], [0], [0], [1], [0, 0, 1, 1], [], []>} : vector<256x4xbf16>, vector<4x8xbf16>, vector<256x8xf32> -> vector<256x8xf32>
    %38 = arith.addf %32, %37 : vector<256x8xf32>
    %39 = vector.extract_strided_slice %1 {offsets = [4, 2, 0], sizes = [16, 16, 4], strides = [1, 1, 1]} : vector<22x22x4xbf16> to vector<16x16x4xbf16>
    %40 = vector.shape_cast %39 : vector<16x16x4xbf16> to vector<256x4xbf16>
    %c2_31 = arith.constant 2 : index
    %c0_32 = arith.constant 0 : index
    %c0_33 = arith.constant 0 : index
    %c0_34 = arith.constant 0 : index
    %41 = vector.load %arg2[%c2_31, %c0_32, %c0_33, %c0_34] : memref<3x3x4x8xbf16, #tpu.memory_space<vmem>>, vector<1x1x4x8xbf16>
    %42 = vector.shape_cast %41 : vector<1x1x4x8xbf16> to vector<4x8xbf16>
    %cst_35 = arith.constant dense<0.000000e+00> : vector<256x8xf32>
    %43 = tpu.matmul %40, %42, %cst_35 {dimension_numbers = #tpu.dot_dimension_numbers<[1], [0], [0], [1], [0, 0, 1, 1], [], []>} : vector<256x4xbf16>, vector<4x8xbf16>, vector<256x8xf32> -> vector<256x8xf32>
    %44 = arith.addf %38, %43 : vector<256x8xf32>
    %45 = vector.extract_strided_slice %1 {offsets = [4, 3, 0], sizes = [16, 16, 4], strides = [1, 1, 1]} : vector<22x22x4xbf16> to vector<16x16x4xbf16>
    %46 = vector.shape_cast %45 : vector<16x16x4xbf16> to vector<256x4xbf16>
    %c2_36 = arith.constant 2 : index
    %c1_37 = arith.constant 1 : index
    %c0_38 = arith.constant 0 : index
    %c0_39 = arith.constant 0 : index
    %47 = vector.load %arg2[%c2_36, %c1_37, %c0_38, %c0_39] : memref<3x3x4x8xbf16, #tpu.memory_space<vmem>>, vector<1x1x4x8xbf16>
    %48 = vector.shape_cast %47 : vector<1x1x4x8xbf16> to vector<4x8xbf16>
    %cst_40 = arith.constant dense<0.000000e+00> : vector<256x8xf32>
    %49 = tpu.matmul %46, %48, %cst_40 {dimension_numbers = #tpu.dot_dimension_numbers<[1], [0], [0], [1], [0, 0, 1, 1], [], []>} : vector<256x4xbf16>, vector<4x8xbf16>, vector<256x8xf32> -> vector<256x8xf32>
    %50 = arith.addf %44, %49 : vector<256x8xf32>
    %51 = vector.extract_strided_slice %1 {offsets = [4, 4, 0], sizes = [16, 16, 4], strides = [1, 1, 1]} : vector<22x22x4xbf16> to vector<16x16x4xbf16>
    %52 = vector.shape_cast %51 : vector<16x16x4xbf16> to vector<256x4xbf16>
    %c2_41 = arith.constant 2 : index
    %c2_42 = arith.constant 2 : index
    %c0_43 = arith.constant 0 : index
    %c0_44 = arith.constant 0 : index
    %53 = vector.load %arg2[%c2_41, %c2_42, %c0_43, %c0_44] : memref<3x3x4x8xbf16, #tpu.memory_space<vmem>>, vector<1x1x4x8xbf16>
    %54 = vector.shape_cast %53 : vector<1x1x4x8xbf16> to vector<4x8xbf16>
    %cst_45 = arith.constant dense<0.000000e+00> : vector<256x8xf32>
    %55 = tpu.matmul %52, %54, %cst_45 {dimension_numbers = #tpu.dot_dimension_numbers<[1], [0], [0], [1], [0, 0, 1, 1], [], []>} : vector<256x4xbf16>, vector<4x8xbf16>, vector<256x8xf32> -> vector<256x8xf32>
    %56 = arith.addf %50, %55 : vector<256x8xf32>
    %c0_46 = arith.constant 0 : index
    %c0_47 = arith.constant 0 : index
    %57 = vector.load %arg5[%c0_46, %c0_47] : memref<4x8xf32, #tpu.memory_space<vmem>>, vector<1x8xf32>
    %58 = vector.broadcast %57 : vector<1x8xf32> to vector<256x8xf32>
    %59 = arith.addf %56, %58 : vector<256x8xf32>
    %cst_48 = arith.constant 0.000000e+00 : f32
    %60 = vector.broadcast %cst_48 : f32 to vector<256x8xf32>
    %61 = vector.extract_strided_slice %1 {offsets = [0, 0, 0], sizes = [16, 16, 4], strides = [1, 1, 1]} : vector<22x22x4xbf16> to vector<16x16x4xbf16>
    %62 = vector.shape_cast %61 : vector<16x16x4xbf16> to vector<256x4xbf16>
    %c0_49 = arith.constant 0 : index
    %c0_50 = arith.constant 0 : index
    %c0_51 = arith.constant 0 : index
    %c0_52 = arith.constant 0 : index
    %63 = vector.load %arg3[%c0_49, %c0_50, %c0_51, %c0_52] : memref<3x3x4x8xbf16, #tpu.memory_space<vmem>>, vector<1x1x4x8xbf16>
    %64 = vector.shape_cast %63 : vector<1x1x4x8xbf16> to vector<4x8xbf16>
    %cst_53 = arith.constant dense<0.000000e+00> : vector<256x8xf32>
    %65 = tpu.matmul %62, %64, %cst_53 {dimension_numbers = #tpu.dot_dimension_numbers<[1], [0], [0], [1], [0, 0, 1, 1], [], []>} : vector<256x4xbf16>, vector<4x8xbf16>, vector<256x8xf32> -> vector<256x8xf32>
    %66 = arith.addf %60, %65 : vector<256x8xf32>
    %67 = vector.extract_strided_slice %1 {offsets = [0, 3, 0], sizes = [16, 16, 4], strides = [1, 1, 1]} : vector<22x22x4xbf16> to vector<16x16x4xbf16>
    %68 = vector.shape_cast %67 : vector<16x16x4xbf16> to vector<256x4xbf16>
    %c0_54 = arith.constant 0 : index
    %c1_55 = arith.constant 1 : index
    %c0_56 = arith.constant 0 : index
    %c0_57 = arith.constant 0 : index
    %69 = vector.load %arg3[%c0_54, %c1_55, %c0_56, %c0_57] : memref<3x3x4x8xbf16, #tpu.memory_space<vmem>>, vector<1x1x4x8xbf16>
    %70 = vector.shape_cast %69 : vector<1x1x4x8xbf16> to vector<4x8xbf16>
    %cst_58 = arith.constant dense<0.000000e+00> : vector<256x8xf32>
    %71 = tpu.matmul %68, %70, %cst_58 {dimension_numbers = #tpu.dot_dimension_numbers<[1], [0], [0], [1], [0, 0, 1, 1], [], []>} : vector<256x4xbf16>, vector<4x8xbf16>, vector<256x8xf32> -> vector<256x8xf32>
    %72 = arith.addf %66, %71 : vector<256x8xf32>
    %73 = vector.extract_strided_slice %1 {offsets = [0, 6, 0], sizes = [16, 16, 4], strides = [1, 1, 1]} : vector<22x22x4xbf16> to vector<16x16x4xbf16>
    %74 = vector.shape_cast %73 : vector<16x16x4xbf16> to vector<256x4xbf16>
    %c0_59 = arith.constant 0 : index
    %c2_60 = arith.constant 2 : index
    %c0_61 = arith.constant 0 : index
    %c0_62 = arith.constant 0 : index
    %75 = vector.load %arg3[%c0_59, %c2_60, %c0_61, %c0_62] : memref<3x3x4x8xbf16, #tpu.memory_space<vmem>>, vector<1x1x4x8xbf16>
    %76 = vector.shape_cast %75 : vector<1x1x4x8xbf16> to vector<4x8xbf16>
    %cst_63 = arith.constant dense<0.000000e+00> : vector<256x8xf32>
    %77 = tpu.matmul %74, %76, %cst_63 {dimension_numbers = #tpu.dot_dimension_numbers<[1], [0], [0], [1], [0, 0, 1, 1], [], []>} : vector<256x4xbf16>, vector<4x8xbf16>, vector<256x8xf32> -> vector<256x8xf32>
    %78 = arith.addf %72, %77 : vector<256x8xf32>
    %79 = vector.extract_strided_slice %1 {offsets = [3, 0, 0], sizes = [16, 16, 4], strides = [1, 1, 1]} : vector<22x22x4xbf16> to vector<16x16x4xbf16>
    %80 = vector.shape_cast %79 : vector<16x16x4xbf16> to vector<256x4xbf16>
    %c1_64 = arith.constant 1 : index
    %c0_65 = arith.constant 0 : index
    %c0_66 = arith.constant 0 : index
    %c0_67 = arith.constant 0 : index
    %81 = vector.load %arg3[%c1_64, %c0_65, %c0_66, %c0_67] : memref<3x3x4x8xbf16, #tpu.memory_space<vmem>>, vector<1x1x4x8xbf16>
    %82 = vector.shape_cast %81 : vector<1x1x4x8xbf16> to vector<4x8xbf16>
    %cst_68 = arith.constant dense<0.000000e+00> : vector<256x8xf32>
    %83 = tpu.matmul %80, %82, %cst_68 {dimension_numbers = #tpu.dot_dimension_numbers<[1], [0], [0], [1], [0, 0, 1, 1], [], []>} : vector<256x4xbf16>, vector<4x8xbf16>, vector<256x8xf32> -> vector<256x8xf32>
    %84 = arith.addf %78, %83 : vector<256x8xf32>
    %85 = vector.extract_strided_slice %1 {offsets = [3, 3, 0], sizes = [16, 16, 4], strides = [1, 1, 1]} : vector<22x22x4xbf16> to vector<16x16x4xbf16>
    %86 = vector.shape_cast %85 : vector<16x16x4xbf16> to vector<256x4xbf16>
    %c1_69 = arith.constant 1 : index
    %c1_70 = arith.constant 1 : index
    %c0_71 = arith.constant 0 : index
    %c0_72 = arith.constant 0 : index
    %87 = vector.load %arg3[%c1_69, %c1_70, %c0_71, %c0_72] : memref<3x3x4x8xbf16, #tpu.memory_space<vmem>>, vector<1x1x4x8xbf16>
    %88 = vector.shape_cast %87 : vector<1x1x4x8xbf16> to vector<4x8xbf16>
    %cst_73 = arith.constant dense<0.000000e+00> : vector<256x8xf32>
    %89 = tpu.matmul %86, %88, %cst_73 {dimension_numbers = #tpu.dot_dimension_numbers<[1], [0], [0], [1], [0, 0, 1, 1], [], []>} : vector<256x4xbf16>, vector<4x8xbf16>, vector<256x8xf32> -> vector<256x8xf32>
    %90 = arith.addf %84, %89 : vector<256x8xf32>
    %91 = vector.extract_strided_slice %1 {offsets = [3, 6, 0], sizes = [16, 16, 4], strides = [1, 1, 1]} : vector<22x22x4xbf16> to vector<16x16x4xbf16>
    %92 = vector.shape_cast %91 : vector<16x16x4xbf16> to vector<256x4xbf16>
    %c1_74 = arith.constant 1 : index
    %c2_75 = arith.constant 2 : index
    %c0_76 = arith.constant 0 : index
    %c0_77 = arith.constant 0 : index
    %93 = vector.load %arg3[%c1_74, %c2_75, %c0_76, %c0_77] : memref<3x3x4x8xbf16, #tpu.memory_space<vmem>>, vector<1x1x4x8xbf16>
    %94 = vector.shape_cast %93 : vector<1x1x4x8xbf16> to vector<4x8xbf16>
    %cst_78 = arith.constant dense<0.000000e+00> : vector<256x8xf32>
    %95 = tpu.matmul %92, %94, %cst_78 {dimension_numbers = #tpu.dot_dimension_numbers<[1], [0], [0], [1], [0, 0, 1, 1], [], []>} : vector<256x4xbf16>, vector<4x8xbf16>, vector<256x8xf32> -> vector<256x8xf32>
    %96 = arith.addf %90, %95 : vector<256x8xf32>
    %97 = vector.extract_strided_slice %1 {offsets = [6, 0, 0], sizes = [16, 16, 4], strides = [1, 1, 1]} : vector<22x22x4xbf16> to vector<16x16x4xbf16>
    %98 = vector.shape_cast %97 : vector<16x16x4xbf16> to vector<256x4xbf16>
    %c2_79 = arith.constant 2 : index
    %c0_80 = arith.constant 0 : index
    %c0_81 = arith.constant 0 : index
    %c0_82 = arith.constant 0 : index
    %99 = vector.load %arg3[%c2_79, %c0_80, %c0_81, %c0_82] : memref<3x3x4x8xbf16, #tpu.memory_space<vmem>>, vector<1x1x4x8xbf16>
    %100 = vector.shape_cast %99 : vector<1x1x4x8xbf16> to vector<4x8xbf16>
    %cst_83 = arith.constant dense<0.000000e+00> : vector<256x8xf32>
    %101 = tpu.matmul %98, %100, %cst_83 {dimension_numbers = #tpu.dot_dimension_numbers<[1], [0], [0], [1], [0, 0, 1, 1], [], []>} : vector<256x4xbf16>, vector<4x8xbf16>, vector<256x8xf32> -> vector<256x8xf32>
    %102 = arith.addf %96, %101 : vector<256x8xf32>
    %103 = vector.extract_strided_slice %1 {offsets = [6, 3, 0], sizes = [16, 16, 4], strides = [1, 1, 1]} : vector<22x22x4xbf16> to vector<16x16x4xbf16>
    %104 = vector.shape_cast %103 : vector<16x16x4xbf16> to vector<256x4xbf16>
    %c2_84 = arith.constant 2 : index
    %c1_85 = arith.constant 1 : index
    %c0_86 = arith.constant 0 : index
    %c0_87 = arith.constant 0 : index
    %105 = vector.load %arg3[%c2_84, %c1_85, %c0_86, %c0_87] : memref<3x3x4x8xbf16, #tpu.memory_space<vmem>>, vector<1x1x4x8xbf16>
    %106 = vector.shape_cast %105 : vector<1x1x4x8xbf16> to vector<4x8xbf16>
    %cst_88 = arith.constant dense<0.000000e+00> : vector<256x8xf32>
    %107 = tpu.matmul %104, %106, %cst_88 {dimension_numbers = #tpu.dot_dimension_numbers<[1], [0], [0], [1], [0, 0, 1, 1], [], []>} : vector<256x4xbf16>, vector<4x8xbf16>, vector<256x8xf32> -> vector<256x8xf32>
    %108 = arith.addf %102, %107 : vector<256x8xf32>
    %109 = vector.extract_strided_slice %1 {offsets = [6, 6, 0], sizes = [16, 16, 4], strides = [1, 1, 1]} : vector<22x22x4xbf16> to vector<16x16x4xbf16>
    %110 = vector.shape_cast %109 : vector<16x16x4xbf16> to vector<256x4xbf16>
    %c2_89 = arith.constant 2 : index
    %c2_90 = arith.constant 2 : index
    %c0_91 = arith.constant 0 : index
    %c0_92 = arith.constant 0 : index
    %111 = vector.load %arg3[%c2_89, %c2_90, %c0_91, %c0_92] : memref<3x3x4x8xbf16, #tpu.memory_space<vmem>>, vector<1x1x4x8xbf16>
    %112 = vector.shape_cast %111 : vector<1x1x4x8xbf16> to vector<4x8xbf16>
    %cst_93 = arith.constant dense<0.000000e+00> : vector<256x8xf32>
    %113 = tpu.matmul %110, %112, %cst_93 {dimension_numbers = #tpu.dot_dimension_numbers<[1], [0], [0], [1], [0, 0, 1, 1], [], []>} : vector<256x4xbf16>, vector<4x8xbf16>, vector<256x8xf32> -> vector<256x8xf32>
    %114 = arith.addf %108, %113 : vector<256x8xf32>
    %c1_94 = arith.constant 1 : index
    %c0_95 = arith.constant 0 : index
    %115 = vector.load %arg5[%c1_94, %c0_95] : memref<4x8xf32, #tpu.memory_space<vmem>>, vector<1x8xf32>
    %116 = vector.broadcast %115 : vector<1x8xf32> to vector<256x8xf32>
    %117 = arith.addf %114, %116 : vector<256x8xf32>
    %cst_96 = arith.constant 0.000000e+00 : f32
    %118 = vector.broadcast %cst_96 : f32 to vector<256x8xf32>
    %119 = arith.cmpf ogt, %117, %118 : vector<256x8xf32>
    %c3 = arith.constant 3 : index
    %c0_97 = arith.constant 0 : index
    %120 = vector.load %arg5[%c3, %c0_97] : memref<4x8xf32, #tpu.memory_space<vmem>>, vector<1x8xf32>
    %121 = vector.broadcast %120 : vector<1x8xf32> to vector<256x8xf32>
    %122 = arith.mulf %121, %117 : vector<256x8xf32>
    %123 = arith.select %119, %117, %122 : vector<256x8xi1>, vector<256x8xf32>
    %cst_98 = arith.constant 0.000000e+00 : bf16
    %124 = vector.broadcast %cst_98 : bf16 to vector<18x18x16xbf16>
    %c0_99 = arith.constant 0 : index
    %c0_100 = arith.constant 0 : index
    %c0_101 = arith.constant 0 : index
    %125 = vector.load %arg7[%c0_99, %c0_100, %c0_101] : memref<18x18x16xbf16, #tpu.memory_space<vmem>>, vector<18x18x16xbf16>
    tpu.vector_store %arg7[%c0_99, %c0_100, %c0_101], %124 {strides = array<i32>} : memref<18x18x16xbf16, #tpu.memory_space<vmem>>, vector<18x18x16xbf16>,
    %126 = vector.shape_cast %59 : vector<256x8xf32> to vector<16x16x8xf32>
    %127 = arith.truncf %126 : vector<16x16x8xf32> to vector<16x16x8xbf16>
    %c1_102 = arith.constant 1 : index
    %c1_103 = arith.constant 1 : index
    %c0_104 = arith.constant 0 : index
    %128 = vector.load %arg7[%c1_102, %c1_103, %c0_104] : memref<18x18x16xbf16, #tpu.memory_space<vmem>>, vector<16x16x8xbf16>
    tpu.vector_store %arg7[%c1_102, %c1_103, %c0_104], %127 {strides = array<i32>} : memref<18x18x16xbf16, #tpu.memory_space<vmem>>, vector<16x16x8xbf16>,
    %129 = vector.shape_cast %123 : vector<256x8xf32> to vector<16x16x8xf32>
    %130 = arith.truncf %129 : vector<16x16x8xf32> to vector<16x16x8xbf16>
    %c1_105 = arith.constant 1 : index
    %c1_106 = arith.constant 1 : index
    %c8 = arith.constant 8 : index
    %131 = vector.load %arg7[%c1_105, %c1_106, %c8] : memref<18x18x16xbf16, #tpu.memory_space<vmem>>, vector<16x16x8xbf16>
    tpu.vector_store %arg7[%c1_105, %c1_106, %c8], %130 {strides = array<i32>} : memref<18x18x16xbf16, #tpu.memory_space<vmem>>, vector<16x16x8xbf16>,
    %c0_107 = arith.constant 0 : index
    %c0_108 = arith.constant 0 : index
    %c0_109 = arith.constant 0 : index
    %132 = vector.load %arg7[%c0_107, %c0_108, %c0_109] : memref<18x18x16xbf16, #tpu.memory_space<vmem>>, vector<18x18x16xbf16>
    %cst_110 = arith.constant 0.000000e+00 : f32
    %133 = vector.broadcast %cst_110 : f32 to vector<256x8xf32>
    %134 = vector.extract_strided_slice %132 {offsets = [0, 0, 0], sizes = [16, 16, 16], strides = [1, 1, 1]} : vector<18x18x16xbf16> to vector<16x16x16xbf16>
    %135 = vector.shape_cast %134 : vector<16x16x16xbf16> to vector<256x16xbf16>
    %c0_111 = arith.constant 0 : index
    %c0_112 = arith.constant 0 : index
    %c0_113 = arith.constant 0 : index
    %c0_114 = arith.constant 0 : index
    %136 = vector.load %arg4[%c0_111, %c0_112, %c0_113, %c0_114] : memref<3x3x16x8xbf16, #tpu.memory_space<vmem>>, vector<1x1x16x8xbf16>
    %137 = vector.shape_cast %136 : vector<1x1x16x8xbf16> to vector<16x8xbf16>
    %cst_115 = arith.constant dense<0.000000e+00> : vector<256x8xf32>
    %138 = tpu.matmul %135, %137, %cst_115 {dimension_numbers = #tpu.dot_dimension_numbers<[1], [0], [0], [1], [0, 0, 1, 1], [], []>} : vector<256x16xbf16>, vector<16x8xbf16>, vector<256x8xf32> -> vector<256x8xf32>
    %139 = arith.addf %133, %138 : vector<256x8xf32>
    %140 = vector.extract_strided_slice %132 {offsets = [0, 1, 0], sizes = [16, 16, 16], strides = [1, 1, 1]} : vector<18x18x16xbf16> to vector<16x16x16xbf16>
    %141 = vector.shape_cast %140 : vector<16x16x16xbf16> to vector<256x16xbf16>
    %c0_116 = arith.constant 0 : index
    %c1_117 = arith.constant 1 : index
    %c0_118 = arith.constant 0 : index
    %c0_119 = arith.constant 0 : index
    %142 = vector.load %arg4[%c0_116, %c1_117, %c0_118, %c0_119] : memref<3x3x16x8xbf16, #tpu.memory_space<vmem>>, vector<1x1x16x8xbf16>
    %143 = vector.shape_cast %142 : vector<1x1x16x8xbf16> to vector<16x8xbf16>
    %cst_120 = arith.constant dense<0.000000e+00> : vector<256x8xf32>
    %144 = tpu.matmul %141, %143, %cst_120 {dimension_numbers = #tpu.dot_dimension_numbers<[1], [0], [0], [1], [0, 0, 1, 1], [], []>} : vector<256x16xbf16>, vector<16x8xbf16>, vector<256x8xf32> -> vector<256x8xf32>
    %145 = arith.addf %139, %144 : vector<256x8xf32>
    %146 = vector.extract_strided_slice %132 {offsets = [0, 2, 0], sizes = [16, 16, 16], strides = [1, 1, 1]} : vector<18x18x16xbf16> to vector<16x16x16xbf16>
    %147 = vector.shape_cast %146 : vector<16x16x16xbf16> to vector<256x16xbf16>
    %c0_121 = arith.constant 0 : index
    %c2_122 = arith.constant 2 : index
    %c0_123 = arith.constant 0 : index
    %c0_124 = arith.constant 0 : index
    %148 = vector.load %arg4[%c0_121, %c2_122, %c0_123, %c0_124] : memref<3x3x16x8xbf16, #tpu.memory_space<vmem>>, vector<1x1x16x8xbf16>
    %149 = vector.shape_cast %148 : vector<1x1x16x8xbf16> to vector<16x8xbf16>
    %cst_125 = arith.constant dense<0.000000e+00> : vector<256x8xf32>
    %150 = tpu.matmul %147, %149, %cst_125 {dimension_numbers = #tpu.dot_dimension_numbers<[1], [0], [0], [1], [0, 0, 1, 1], [], []>} : vector<256x16xbf16>, vector<16x8xbf16>, vector<256x8xf32> -> vector<256x8xf32>
    %151 = arith.addf %145, %150 : vector<256x8xf32>
    %152 = vector.extract_strided_slice %132 {offsets = [1, 0, 0], sizes = [16, 16, 16], strides = [1, 1, 1]} : vector<18x18x16xbf16> to vector<16x16x16xbf16>
    %153 = vector.shape_cast %152 : vector<16x16x16xbf16> to vector<256x16xbf16>
    %c1_126 = arith.constant 1 : index
    %c0_127 = arith.constant 0 : index
    %c0_128 = arith.constant 0 : index
    %c0_129 = arith.constant 0 : index
    %154 = vector.load %arg4[%c1_126, %c0_127, %c0_128, %c0_129] : memref<3x3x16x8xbf16, #tpu.memory_space<vmem>>, vector<1x1x16x8xbf16>
    %155 = vector.shape_cast %154 : vector<1x1x16x8xbf16> to vector<16x8xbf16>
    %cst_130 = arith.constant dense<0.000000e+00> : vector<256x8xf32>
    %156 = tpu.matmul %153, %155, %cst_130 {dimension_numbers = #tpu.dot_dimension_numbers<[1], [0], [0], [1], [0, 0, 1, 1], [], []>} : vector<256x16xbf16>, vector<16x8xbf16>, vector<256x8xf32> -> vector<256x8xf32>
    %157 = arith.addf %151, %156 : vector<256x8xf32>
    %158 = vector.extract_strided_slice %132 {offsets = [1, 1, 0], sizes = [16, 16, 16], strides = [1, 1, 1]} : vector<18x18x16xbf16> to vector<16x16x16xbf16>
    %159 = vector.shape_cast %158 : vector<16x16x16xbf16> to vector<256x16xbf16>
    %c1_131 = arith.constant 1 : index
    %c1_132 = arith.constant 1 : index
    %c0_133 = arith.constant 0 : index
    %c0_134 = arith.constant 0 : index
    %160 = vector.load %arg4[%c1_131, %c1_132, %c0_133, %c0_134] : memref<3x3x16x8xbf16, #tpu.memory_space<vmem>>, vector<1x1x16x8xbf16>
    %161 = vector.shape_cast %160 : vector<1x1x16x8xbf16> to vector<16x8xbf16>
    %cst_135 = arith.constant dense<0.000000e+00> : vector<256x8xf32>
    %162 = tpu.matmul %159, %161, %cst_135 {dimension_numbers = #tpu.dot_dimension_numbers<[1], [0], [0], [1], [0, 0, 1, 1], [], []>} : vector<256x16xbf16>, vector<16x8xbf16>, vector<256x8xf32> -> vector<256x8xf32>
    %163 = arith.addf %157, %162 : vector<256x8xf32>
    %164 = vector.extract_strided_slice %132 {offsets = [1, 2, 0], sizes = [16, 16, 16], strides = [1, 1, 1]} : vector<18x18x16xbf16> to vector<16x16x16xbf16>
    %165 = vector.shape_cast %164 : vector<16x16x16xbf16> to vector<256x16xbf16>
    %c1_136 = arith.constant 1 : index
    %c2_137 = arith.constant 2 : index
    %c0_138 = arith.constant 0 : index
    %c0_139 = arith.constant 0 : index
    %166 = vector.load %arg4[%c1_136, %c2_137, %c0_138, %c0_139] : memref<3x3x16x8xbf16, #tpu.memory_space<vmem>>, vector<1x1x16x8xbf16>
    %167 = vector.shape_cast %166 : vector<1x1x16x8xbf16> to vector<16x8xbf16>
    %cst_140 = arith.constant dense<0.000000e+00> : vector<256x8xf32>
    %168 = tpu.matmul %165, %167, %cst_140 {dimension_numbers = #tpu.dot_dimension_numbers<[1], [0], [0], [1], [0, 0, 1, 1], [], []>} : vector<256x16xbf16>, vector<16x8xbf16>, vector<256x8xf32> -> vector<256x8xf32>
    %169 = arith.addf %163, %168 : vector<256x8xf32>
    %170 = vector.extract_strided_slice %132 {offsets = [2, 0, 0], sizes = [16, 16, 16], strides = [1, 1, 1]} : vector<18x18x16xbf16> to vector<16x16x16xbf16>
    %171 = vector.shape_cast %170 : vector<16x16x16xbf16> to vector<256x16xbf16>
    %c2_141 = arith.constant 2 : index
    %c0_142 = arith.constant 0 : index
    %c0_143 = arith.constant 0 : index
    %c0_144 = arith.constant 0 : index
    %172 = vector.load %arg4[%c2_141, %c0_142, %c0_143, %c0_144] : memref<3x3x16x8xbf16, #tpu.memory_space<vmem>>, vector<1x1x16x8xbf16>
    %173 = vector.shape_cast %172 : vector<1x1x16x8xbf16> to vector<16x8xbf16>
    %cst_145 = arith.constant dense<0.000000e+00> : vector<256x8xf32>
    %174 = tpu.matmul %171, %173, %cst_145 {dimension_numbers = #tpu.dot_dimension_numbers<[1], [0], [0], [1], [0, 0, 1, 1], [], []>} : vector<256x16xbf16>, vector<16x8xbf16>, vector<256x8xf32> -> vector<256x8xf32>
    %175 = arith.addf %169, %174 : vector<256x8xf32>
    %176 = vector.extract_strided_slice %132 {offsets = [2, 1, 0], sizes = [16, 16, 16], strides = [1, 1, 1]} : vector<18x18x16xbf16> to vector<16x16x16xbf16>
    %177 = vector.shape_cast %176 : vector<16x16x16xbf16> to vector<256x16xbf16>
    %c2_146 = arith.constant 2 : index
    %c1_147 = arith.constant 1 : index
    %c0_148 = arith.constant 0 : index
    %c0_149 = arith.constant 0 : index
    %178 = vector.load %arg4[%c2_146, %c1_147, %c0_148, %c0_149] : memref<3x3x16x8xbf16, #tpu.memory_space<vmem>>, vector<1x1x16x8xbf16>
    %179 = vector.shape_cast %178 : vector<1x1x16x8xbf16> to vector<16x8xbf16>
    %cst_150 = arith.constant dense<0.000000e+00> : vector<256x8xf32>
    %180 = tpu.matmul %177, %179, %cst_150 {dimension_numbers = #tpu.dot_dimension_numbers<[1], [0], [0], [1], [0, 0, 1, 1], [], []>} : vector<256x16xbf16>, vector<16x8xbf16>, vector<256x8xf32> -> vector<256x8xf32>
    %181 = arith.addf %175, %180 : vector<256x8xf32>
    %182 = vector.extract_strided_slice %132 {offsets = [2, 2, 0], sizes = [16, 16, 16], strides = [1, 1, 1]} : vector<18x18x16xbf16> to vector<16x16x16xbf16>
    %183 = vector.shape_cast %182 : vector<16x16x16xbf16> to vector<256x16xbf16>
    %c2_151 = arith.constant 2 : index
    %c2_152 = arith.constant 2 : index
    %c0_153 = arith.constant 0 : index
    %c0_154 = arith.constant 0 : index
    %184 = vector.load %arg4[%c2_151, %c2_152, %c0_153, %c0_154] : memref<3x3x16x8xbf16, #tpu.memory_space<vmem>>, vector<1x1x16x8xbf16>
    %185 = vector.shape_cast %184 : vector<1x1x16x8xbf16> to vector<16x8xbf16>
    %cst_155 = arith.constant dense<0.000000e+00> : vector<256x8xf32>
    %186 = tpu.matmul %183, %185, %cst_155 {dimension_numbers = #tpu.dot_dimension_numbers<[1], [0], [0], [1], [0, 0, 1, 1], [], []>} : vector<256x16xbf16>, vector<16x8xbf16>, vector<256x8xf32> -> vector<256x8xf32>
    %187 = arith.addf %181, %186 : vector<256x8xf32>
    %c2_156 = arith.constant 2 : index
    %c0_157 = arith.constant 0 : index
    %188 = vector.load %arg5[%c2_156, %c0_157] : memref<4x8xf32, #tpu.memory_space<vmem>>, vector<1x8xf32>
    %189 = vector.broadcast %188 : vector<1x8xf32> to vector<256x8xf32>
    %190 = arith.addf %187, %189 : vector<256x8xf32>
    %cst_158 = arith.constant 0.000000e+00 : f32
    %191 = vector.broadcast %cst_158 : f32 to vector<256x8xf32>
    %192 = arith.maximumf %190, %191 : vector<256x8xf32>
    %193 = vector.shape_cast %192 : vector<256x8xf32> to vector<16x16x8xf32>
    %c0_159 = arith.constant 0 : index
    %c0_160 = arith.constant 0 : index
    %c0_161 = arith.constant 0 : index
    %c0_162 = arith.constant 0 : index
    %194 = vector.load %arg6[%c0_159, %c0_160, %c0_161, %c0_162] : memref<1x16x16x8xf32, #tpu.memory_space<vmem>>, vector<1x16x16x8xf32>
    %195 = vector.shape_cast %194 : vector<1x16x16x8xf32> to vector<16x16x8xf32>
    %196 = vector.shape_cast %193 : vector<16x16x8xf32> to vector<1x16x16x8xf32>
    tpu.vector_store %arg6[%c0_159, %c0_160, %c0_161, %c0_162], %196 {strides = array<i32>} : memref<1x16x16x8xf32, #tpu.memory_space<vmem>>, vector<1x16x16x8xf32>,
    return
  }
  func.func @transform_0(%arg0: i32) -> (i32, i32, i32, i32) {
    %c0_i32 = arith.constant 0 : i32
    %c0_i32_0 = arith.constant 0 : i32
    %c0_i32_1 = arith.constant 0 : i32
    %c0_i32_2 = arith.constant 0 : i32
    return %arg0, %c0_i32, %c0_i32_0, %c0_i32_1 : i32, i32, i32, i32
  }
  func.func @transform_1(%arg0: i32) -> (i32, i32, i32, i32) {
    %c0_i32 = arith.constant 0 : i32
    %c0_i32_0 = arith.constant 0 : i32
    %c0_i32_1 = arith.constant 0 : i32
    %c0_i32_2 = arith.constant 0 : i32
    %c0_i32_3 = arith.constant 0 : i32
    return %c0_i32, %c0_i32_0, %c0_i32_1, %c0_i32_2 : i32, i32, i32, i32
  }
  func.func @transform_2(%arg0: i32) -> (i32, i32, i32, i32) {
    %c0_i32 = arith.constant 0 : i32
    %c0_i32_0 = arith.constant 0 : i32
    %c0_i32_1 = arith.constant 0 : i32
    %c0_i32_2 = arith.constant 0 : i32
    %c0_i32_3 = arith.constant 0 : i32
    return %c0_i32, %c0_i32_0, %c0_i32_1, %c0_i32_2 : i32, i32, i32, i32
  }
  func.func @transform_3(%arg0: i32) -> (i32, i32, i32, i32) {
    %c0_i32 = arith.constant 0 : i32
    %c0_i32_0 = arith.constant 0 : i32
    %c0_i32_1 = arith.constant 0 : i32
    %c0_i32_2 = arith.constant 0 : i32
    %c0_i32_3 = arith.constant 0 : i32
    return %c0_i32, %c0_i32_0, %c0_i32_1, %c0_i32_2 : i32, i32, i32, i32
  }
  func.func @transform_4(%arg0: i32) -> (i32, i32) {
    %c0_i32 = arith.constant 0 : i32
    %c0_i32_0 = arith.constant 0 : i32
    %c0_i32_1 = arith.constant 0 : i32
    return %c0_i32, %c0_i32_0 : i32, i32
  }
  func.func @transform_5(%arg0: i32) -> (i32, i32, i32, i32) {
    %c0_i32 = arith.constant 0 : i32
    %c0_i32_0 = arith.constant 0 : i32
    %c0_i32_1 = arith.constant 0 : i32
    %c0_i32_2 = arith.constant 0 : i32
    return %arg0, %c0_i32, %c0_i32_0, %c0_i32_1 : i32, i32, i32, i32
  }
}

</mosaic_0001>

<llo_original>
// kernel: rfb_pallas.1
$region0: #{rfb_pallas.1}
  #allocation0 [shape = 'u32[]', space=smem, size = 0x4, offset = 0x4, fixed_abs, tag = 'smem constant byte address 0x4 - core index']
  #allocation1 [shape = 'u32[144,128]{1,0:T(1,128)}', space=vmem, size = 0x12000, scoped, tag = 'internal scratch']
  #allocation2 [shape = 'bf16[18,18,16]{2,1,0:T(8,128)(2,1)}', space=vmem, size = 0x1b000, scoped, tag = 'scratch operand']
  %s0 = inlined_call_operand.vmem [shape: bf16[2,22,22,4], index: 0, kind: input, shape index: {}]
  %s1 = inlined_call_operand.vmem [shape: bf16[3,3,4,8], index: 1, kind: input, shape index: {}]
  %s2 = inlined_call_operand.vmem [shape: bf16[3,3,4,8], index: 2, kind: input, shape index: {}]
  %s3 = inlined_call_operand.vmem [shape: bf16[3,3,16,8], index: 3, kind: input, shape index: {}]
  %s4 = inlined_call_operand.vmem [shape: f32[4,8], index: 4, kind: input, shape index: {}]
  %s5 = inlined_call_operand.vmem [shape: f32[2,16,16,8], index: 5, kind: output, shape index: {}]
  %s6 = sld [smem:[#allocation0]]
  $region53: #{rfb_pallas.1} parent=0
    _
  %s8 = ssub.s32 1, %s6
  %s9 = scalar_select 0, %s8, %s6
  loop: start=0, step=1, limit=4
  $region2: #{rfb_pallas.1} parent=0 // loop_pre_header
    _
  $region3: #{rfb_pallas.1} parent=0 // loop_header
    %s11 = sphi 0, %s15
    %p12 = scmp.ge.s32.totalorder %s11, 4
    %s21 = sphi 0, %s23
    %s24 = sphi 0, %s21
    %s25 = sphi 0, %s24
    %s41 = sphi 0, %s25
    %s45 = sphi 0, %s45
    %s47 = sphi 0, %s45
    %s48 = sphi 0, %s47
    %s62 = sphi 0, %s48
    %s66 = sphi 0, %s66
    %s68 = sphi 0, %s66
    %s69 = sphi 0, %s68
    %s83 = sphi 0, %s69
    %s87 = sphi 0, %s87
    %s89 = sphi 0, %s87
    %s90 = sphi 0, %s89
    %s104 = sphi 0, %s90
    %s108 = sphi 0, %s108
    %s110 = sphi 0, %s108
    %s111 = sphi 0, %s110
    %s125 = sphi 0, %s111
    %s131 = sphi 0, %s133
    %s134 = sphi 0, %s131
    %s135 = sphi 0, %s134
    %s151 = sphi 0, %s135
  $region4: #{rfb_pallas.1} parent=0 // loop_header_branch
    %14 = sbr.rel (%p12) target = $region8
  $region5: #{rfb_pallas.1} parent=0 // loop_body
    %s16 = ssub.s32 %s11, 1
    %s17 = ssub.s32 %s11, 2
    %s18 = sadd.s32 %s11, 1
    %s19 = ssub.s32 %s11, %s18
    %p20 = scmp.eq.s32.totalorder %s19, 0
    %s22 = sadd.s32 %s21, 1
    %s23 = scalar_select %p20, %s21, %s22
    %p26 = pneg %p20
    %p27 = scmp.eq.s32.totalorder %s11, 1
    %p28 = por %p26, %p27
    %p29 = scmp.ne.s32.totalorder %s21, %s24
    %p30 = scmp.eq.s32.totalorder %s11, 0
    %p31 = por %p29, %p30
    %p32 = scmp.ne.s32.totalorder %s21, %s24
    %p33 = scmp.eq.s32.totalorder %s16, 1
    %p34 = por %p32, %p33
    %p35 = scmp.ne.s32.totalorder %s24, %s25
    %p36 = scmp.eq.s32.totalorder %s16, 0
    %p37 = por %p35, %p36
    %p38 = scmp.ne.s32.totalorder %s24, %s25
    %p39 = scmp.eq.s32.totalorder %s17, 1
    %p40 = por %p38, %p39
    %p42 = scmp.ne.s32.totalorder %s25, %s41
    %p43 = scmp.eq.s32.totalorder %s17, 0
    %p44 = por %p42, %p43
    %s46 = sadd.s32 %s45, 1
    %p49 = scmp.eq.s32.totalorder %s11, 1
    %p50 = scmp.ne.s32.totalorder %s45, %s47
    %p51 = scmp.eq.s32.totalorder %s11, 0
    %p52 = por %p50, %p51
    %p53 = scmp.ne.s32.totalorder %s45, %s47
    %p54 = scmp.eq.s32.totalorder %s16, 1
    %p55 = por %p53, %p54
    %p56 = scmp.ne.s32.totalorder %s47, %s48
    %p57 = scmp.eq.s32.totalorder %s16, 0
    %p58 = por %p56, %p57
    %p59 = scmp.ne.s32.totalorder %s47, %s48
    %p60 = scmp.eq.s32.totalorder %s17, 1
    %p61 = por %p59, %p60
    %p63 = scmp.ne.s32.totalorder %s48, %s62
    %p64 = scmp.eq.s32.totalorder %s17, 0
    %p65 = por %p63, %p64
    %s67 = sadd.s32 %s66, 1
    %p70 = scmp.eq.s32.totalorder %s11, 1
    %p71 = scmp.ne.s32.totalorder %s66, %s68
    %p72 = scmp.eq.s32.totalorder %s11, 0
    %p73 = por %p71, %p72
    %p74 = scmp.ne.s32.totalorder %s66, %s68
    %p75 = scmp.eq.s32.totalorder %s16, 1
    %p76 = por %p74, %p75
    %p77 = scmp.ne.s32.totalorder %s68, %s69
    %p78 = scmp.eq.s32.totalorder %s16, 0
    %p79 = por %p77, %p78
    %p80 = scmp.ne.s32.totalorder %s68, %s69
    %p81 = scmp.eq.s32.totalorder %s17, 1
    %p82 = por %p80, %p81
    %p84 = scmp.ne.s32.totalorder %s69, %s83
    %p85 = scmp.eq.s32.totalorder %s17, 0
    %p86 = por %p84, %p85
    %s88 = sadd.s32 %s87, 1
    %p91 = scmp.eq.s32.totalorder %s11, 1
    %p92 = scmp.ne.s32.totalorder %s87, %s89
    %p93 = scmp.eq.s32.totalorder %s11, 0
    %p94 = por %p92, %p93
    %p95 = scmp.ne.s32.totalorder %s87, %s89
    %p96 = scmp.eq.s32.totalorder %s16, 1
    %p97 = por %p95, %p96
    %p98 = scmp.ne.s32.totalorder %s89, %s90
    %p99 = scmp.eq.s32.totalorder %s16, 0
    %p100 = por %p98, %p99
    %p101 = scmp.ne.s32.totalorder %s89, %s90
    %p102 = scmp.eq.s32.totalorder %s17, 1
    %p103 = por %p101, %p102
    %p105 = scmp.ne.s32.totalorder %s90, %s104
    %p106 = scmp.eq.s32.totalorder %s17, 0
    %p107 = por %p105, %p106
    %s109 = sadd.s32 %s108, 1
    %p112 = scmp.eq.s32.totalorder %s11, 1
    %p113 = scmp.ne.s32.totalorder %s108, %s110
    %p114 = scmp.eq.s32.totalorder %s11, 0
    %p115 = por %p113, %p114
    %p116 = scmp.ne.s32.totalorder %s108, %s110
    %p117 = scmp.eq.s32.totalorder %s16, 1
    %p118 = por %p116, %p117
    %p119 = scmp.ne.s32.totalorder %s110, %s111
    %p120 = scmp.eq.s32.totalorder %s16, 0
    %p121 = por %p119, %p120
    %p122 = scmp.ne.s32.totalorder %s110, %s111
    %p123 = scmp.eq.s32.totalorder %s17, 1
    %p124 = por %p122, %p123
    %p126 = scmp.ne.s32.totalorder %s111, %s125
    %p127 = scmp.eq.s32.totalorder %s17, 0
    %p128 = por %p126, %p127
    %s129 = ssub.s32 %s11, %s18
    %p130 = scmp.eq.s32.totalorder %s129, 0
    %s132 = sadd.s32 %s131, 1
    %s133 = scalar_select %p130, %s131, %s132
    %p136 = pneg %p130
    %p137 = scmp.eq.s32.totalorder %s11, 1
    %p138 = por %p136, %p137
    %p139 = scmp.ne.s32.totalorder %s131, %s134
    %p140 = scmp.eq.s32.totalorder %s11, 0
    %p141 = por %p139, %p140
    %p142 = scmp.ne.s32.totalorder %s131, %s134
    %p143 = scmp.eq.s32.totalorder %s16, 1
    %p144 = por %p142, %p143
    %p145 = scmp.ne.s32.totalorder %s134, %s135
    %p146 = scmp.eq.s32.totalorder %s16, 0
    %p147 = por %p145, %p146
    %p148 = scmp.ne.s32.totalorder %s134, %s135
    %p149 = scmp.eq.s32.totalorder %s17, 1
    %p150 = por %p148, %p149
    %p152 = scmp.ne.s32.totalorder %s135, %s151
    %p153 = scmp.eq.s32.totalorder %s17, 0
    %p154 = por %p152, %p153
    %p155 = scmp.le.s32.totalorder 1, %s11
    %p156 = scmp.lt.s32.totalorder %s11, 3
    %p157 = pnand %p155, %p156
    %p158 = pneg %p157
    // Predicated region
    $region9: #{rfb_pallas.1} parent=5 // pred_check
      _
    $region10: #{rfb_pallas.1} parent=5 // pred_check_branch
      %160 = sbr.rel (%p157) target = $region12
    $region11: #{rfb_pallas.1} parent=5 // pred_region
      %s161 = ssub.s32 %s11, 1
      // Predicated region
      $region13: #{rfb_pallas.1} parent=11 // pred_check
        %p162 = pneg %p58
      $region14: #{rfb_pallas.1} parent=11 // pred_check_branch
        %164 = sbr.rel (%p162) target = $region16
      $region15: #{rfb_pallas.1} parent=11 // pred_region
        _
      $region16: #{rfb_pallas.1} parent=11 // pred_fallthru
        _
      // Predicated region
      $region17: #{rfb_pallas.1} parent=11 // pred_check
        %p165 = pneg %p79
      $region18: #{rfb_pallas.1} parent=11 // pred_check_branch
        %167 = sbr.rel (%p165) target = $region20
      $region19: #{rfb_pallas.1} parent=11 // pred_region
        _
      $region20: #{rfb_pallas.1} parent=11 // pred_fallthru
        _
      // Predicated region
      $region21: #{rfb_pallas.1} parent=11 // pred_check
        %p168 = pneg %p100
      $region22: #{rfb_pallas.1} parent=11 // pred_check_branch
        %170 = sbr.rel (%p168) target = $region24
      $region23: #{rfb_pallas.1} parent=11 // pred_region
        _
      $region24: #{rfb_pallas.1} parent=11 // pred_fallthru
        _
      // Predicated region
      $region25: #{rfb_pallas.1} parent=11 // pred_check
        %p171 = pneg %p121
      $region26: #{rfb_pallas.1} parent=11 // pred_check_branch
        %173 = sbr.rel (%p171) target = $region28
      $region27: #{rfb_pallas.1} parent=11 // pred_region
        _
      $region28: #{rfb_pallas.1} parent=11 // pred_fallthru
        _
    $region12: #{rfb_pallas.1} parent=5 // pred_fallthru
      _
    %p174 = scmp.lt.s32.totalorder %s11, 2
    // Predicated region
    $region29: #{rfb_pallas.1} parent=5 // pred_check
      %p175 = pneg %p174
    $region30: #{rfb_pallas.1} parent=5 // pred_check_branch
      %177 = sbr.rel (%p175) target = $region32
    $region31: #{rfb_pallas.1} parent=5 // pred_region
      // Predicated region
      $region33: #{rfb_pallas.1} parent=31 // pred_check
        %p178 = pneg %p31
      $region34: #{rfb_pallas.1} parent=31 // pred_check_branch
        %180 = sbr.rel (%p178) target = $region36
      $region35: #{rfb_pallas.1} parent=31 // pred_region
        %p181 = scmp.lt.s32.totalorder %s11, 1
        %s182 = scalar_select %p181, %s11, 1
        %s183 = smul.addr %s182, 66
        %s184 = smul.addr %s183, 4
        %s185 = scalar_lea.vmem %s0, %s184
      $region36: #{rfb_pallas.1} parent=31 // pred_fallthru
        _
    $region32: #{rfb_pallas.1} parent=5 // pred_fallthru
      _
    %p186 = scmp.le.s32.totalorder 1, %s11
    %p187 = scmp.lt.s32.totalorder %s11, 3
    %p188 = pnand %p186, %p187
    %p189 = pneg %p188
    // Predicated region
    $region37: #{rfb_pallas.1} parent=5 // pred_check
      _
    $region38: #{rfb_pallas.1} parent=5 // pred_check_branch
      %191 = sbr.rel (%p188) target = $region40
    $region39: #{rfb_pallas.1} parent=5 // pred_region
      %s192 = ssub.s32 %s11, 1
      %p193 = scmp.lt.s32.totalorder %s16, 1
      %s194 = scalar_select %p193, %s16, 1
      %s195 = smul.addr %s194, 66
      %s196 = smul.addr %s195, 4
      %s197 = scalar_lea.vmem %s0, %s196
      %p198 = pneg %p37
      %p199 = pneg %p34
      %p200 = pneg %p58
      %p201 = pneg %p55
      %p202 = pneg %p79
      %p203 = pneg %p76
      %p204 = pneg %p100
      %p205 = pneg %p97
      %p206 = pneg %p121
      %p207 = pneg %p118
      %p208 = pneg %p147
      %p209 = pneg %p144
      %p210 = scmp.lt.s32.totalorder %s16, 1
      %s211 = scalar_select %p210, %s16, 1
      %s212 = smul.addr %s211, 32
      %s213 = smul.addr %s212, 8
      %s214 = scalar_lea.vmem %s5, %s213
      %p215 = scmp.lt.s32.totalorder %s16, 1
      %s216 = scalar_select %p215, %s16, 1
      %s217 = smul.addr %s216, 66
      %s218 = smul.addr %s217, 4
      %s219 = scalar_lea.vmem %s0, %s218
      %p220 = scmp.lt.s32.totalorder %s16, 1
      %s221 = scalar_select %p220, %s16, 1
      %s222 = smul.addr %s221, 32
      %s223 = smul.addr %s222, 8
      %s224 = scalar_lea.vmem %s5, %s223
      %v226 = vld [vmem:[%s219] sm:$0xf]
      %v227 = vld [vmem:[%s219 + $0x4] sm:$0xf]
      %v228 = vld [vmem:[%s219 + $0x8] sm:$0x7]
      %v229 = vld [vmem:[%s219 + $0xc] sm:$0xf]
      %v230 = vld [vmem:[%s219 + $0x10] sm:$0xf]
      %v231 = vld [vmem:[%s219 + $0x14] sm:$0x7]
      %v232 = vld [vmem:[%s219 + $0x18] sm:$0xf]
      %v233 = vld [vmem:[%s219 + $0x1c] sm:$0xf]
      %v234 = vld [vmem:[%s219 + $0x20] sm:$0x7]
      %v235 = vld [vmem:[%s219 + $0x24] sm:$0xf]
      %v236 = vld [vmem:[%s219 + $0x28] sm:$0xf]
      %v237 = vld [vmem:[%s219 + $0x2c] sm:$0x7]
      %v238 = vld [vmem:[%s219 + $0x30] sm:$0xf]
      %v239 = vld [vmem:[%s219 + $0x34] sm:$0xf]
      %v240 = vld [vmem:[%s219 + $0x38] sm:$0x7]
      %v241 = vld [vmem:[%s219 + $0x3c] sm:$0xf]
      %v242 = vld [vmem:[%s219 + $0x40] sm:$0xf]
      %v243 = vld [vmem:[%s219 + $0x44] sm:$0x7]
      %v244 = vld [vmem:[%s219 + $0x48] sm:$0xf]
      %v245 = vld [vmem:[%s219 + $0x4c] sm:$0xf]
      %v246 = vld [vmem:[%s219 + $0x50] sm:$0x7]
      %v247 = vld [vmem:[%s219 + $0x54] sm:$0xf]
      %v248 = vld [vmem:[%s219 + $0x58] sm:$0xf]
      %v249 = vld [vmem:[%s219 + $0x5c] sm:$0x7]
      %v250 = vld [vmem:[%s219 + $0x60] sm:$0xf]
      %v251 = vld [vmem:[%s219 + $0x64] sm:$0xf]
      %v252 = vld [vmem:[%s219 + $0x68] sm:$0x7]
      %v253 = vld [vmem:[%s219 + $0x6c] sm:$0xf]
      %v254 = vld [vmem:[%s219 + $0x70] sm:$0xf]
      %v255 = vld [vmem:[%s219 + $0x74] sm:$0x7]
      %v256 = vld [vmem:[%s219 + $0x78] sm:$0xf]
      %v257 = vld [vmem:[%s219 + $0x7c] sm:$0xf]
      %v258 = vld [vmem:[%s219 + $0x80] sm:$0x7]
      %v259 = vld [vmem:[%s219 + $0x84] sm:$0xf]
      %v260 = vld [vmem:[%s219 + $0x88] sm:$0xf]
      %v261 = vld [vmem:[%s219 + $0x8c] sm:$0x7]
      %v262 = vld [vmem:[%s219 + $0x90] sm:$0xf]
      %v263 = vld [vmem:[%s219 + $0x94] sm:$0xf]
      %v264 = vld [vmem:[%s219 + $0x98] sm:$0x7]
      %v265 = vld [vmem:[%s219 + $0x9c] sm:$0xf]
      %v266 = vld [vmem:[%s219 + $0xa0] sm:$0xf]
      %v267 = vld [vmem:[%s219 + $0xa4] sm:$0x7]
      %v268 = vld [vmem:[%s219 + $0xa8] sm:$0xf]
      %v269 = vld [vmem:[%s219 + $0xac] sm:$0xf]
      %v270 = vld [vmem:[%s219 + $0xb0] sm:$0x7]
      %v271 = vld [vmem:[%s219 + $0xb4] sm:$0xf]
      %v272 = vld [vmem:[%s219 + $0xb8] sm:$0xf]
      %v273 = vld [vmem:[%s219 + $0xbc] sm:$0x7]
      %v274 = vld [vmem:[%s219 + $0xc0] sm:$0xf]
      %v275 = vld [vmem:[%s219 + $0xc4] sm:$0xf]
      %v276 = vld [vmem:[%s219 + $0xc8] sm:$0x7]
      %v277 = vld [vmem:[%s219 + $0xcc] sm:$0xf]
      %v278 = vld [vmem:[%s219 + $0xd0] sm:$0xf]
      %v279 = vld [vmem:[%s219 + $0xd4] sm:$0x7]
      %v280 = vld [vmem:[%s219 + $0xd8] sm:$0xf]
      %v281 = vld [vmem:[%s219 + $0xdc] sm:$0xf]
      %v282 = vld [vmem:[%s219 + $0xe0] sm:$0x7]
      %v283 = vld [vmem:[%s219 + $0xe4] sm:$0xf]
      %v284 = vld [vmem:[%s219 + $0xe8] sm:$0xf]
      %v285 = vld [vmem:[%s219 + $0xec] sm:$0x7]
      %v286 = vld [vmem:[%s219 + $0xf0] sm:$0xf]
      %v287 = vld [vmem:[%s219 + $0xf4] sm:$0xf]
      %v288 = vld [vmem:[%s219 + $0xf8] sm:$0x7]
      %v289 = vld [vmem:[%s219 + $0xfc] sm:$0xf]
      %v290 = vld [vmem:[%s219 + $0x100] sm:$0xf]
      %v291 = vld [vmem:[%s219 + $0x104] sm:$0x7]
      %vm340 = vcmask 1042432
      %vm341 = vcmask 1046532
      %vm342 = vmor %vm340, %vm341
      %v343 = vrot.slane %v232, 5
      %v344 = vrot.slane %v343, 4
      %v345 = vrot.slane %v233, 5
      %v346 = vsel %vm342, %v344, %v345
      %v347 = vrot.slane %v345, 4
      %v348 = vrot.slane %v234, 5
      %v349 = vsel %vm342, %v347, %v348
      %v350 = vrot.slane %v235, 5
      %v351 = vrot.slane %v350, 4
      %v352 = vrot.slane %v236, 5
      %v353 = vsel %vm342, %v351, %v352
      %v354 = vrot.slane %v352, 4
      %v355 = vrot.slane %v237, 5
      %v356 = vsel %vm342, %v354, %v355
      %v357 = vrot.slane %v238, 5
      %v358 = vrot.slane %v357, 4
      %v359 = vrot.slane %v239, 5
      %v360 = vsel %vm342, %v358, %v359
      %v361 = vrot.slane %v359, 4
      %v362 = vrot.slane %v240, 5
      %v363 = vsel %vm342, %v361, %v362
      %v364 = vrot.slane %v241, 5
      %v365 = vrot.slane %v364, 4
      %v366 = vrot.slane %v242, 5
      %v367 = vsel %vm342, %v365, %v366
      %v368 = vrot.slane %v366, 4
      %v369 = vrot.slane %v243, 5
      %v370 = vsel %vm342, %v368, %v369
      %v371 = vrot.slane %v244, 5
      %v372 = vrot.slane %v371, 4
      %v373 = vrot.slane %v245, 5
      %v374 = vsel %vm342, %v372, %v373
      %v375 = vrot.slane %v373, 4
      %v376 = vrot.slane %v246, 5
      %v377 = vsel %vm342, %v375, %v376
      %v378 = vrot.slane %v247, 5
      %v379 = vrot.slane %v378, 4
      %v380 = vrot.slane %v248, 5
      %v381 = vsel %vm342, %v379, %v380
      %v382 = vrot.slane %v380, 4
      %v383 = vrot.slane %v249, 5
      %v384 = vsel %vm342, %v382, %v383
      %v385 = vrot.slane %v250, 5
      %v386 = vrot.slane %v385, 4
      %v387 = vrot.slane %v251, 5
      %v388 = vsel %vm342, %v386, %v387
      %v389 = vrot.slane %v387, 4
      %v390 = vrot.slane %v252, 5
      %v391 = vsel %vm342, %v389, %v390
      %v392 = vrot.slane %v253, 5
      %v393 = vrot.slane %v392, 4
      %v394 = vrot.slane %v254, 5
      %v395 = vsel %vm342, %v393, %v394
      %v396 = vrot.slane %v394, 4
      %v397 = vrot.slane %v255, 5
      %v398 = vsel %vm342, %v396, %v397
      %v399 = vrot.slane %v256, 5
      %v400 = vrot.slane %v399, 4
      %v401 = vrot.slane %v257, 5
      %v402 = vsel %vm342, %v400, %v401
      %v403 = vrot.slane %v401, 4
      %v404 = vrot.slane %v258, 5
      %v405 = vsel %vm342, %v403, %v404
      %v406 = vrot.slane %v259, 5
      %v407 = vrot.slane %v406, 4
      %v408 = vrot.slane %v260, 5
      %v409 = vsel %vm342, %v407, %v408
      %v410 = vrot.slane %v408, 4
      %v411 = vrot.slane %v261, 5
      %v412 = vsel %vm342, %v410, %v411
      %v413 = vrot.slane %v262, 5
      %v414 = vrot.slane %v413, 4
      %v415 = vrot.slane %v263, 5
      %v416 = vsel %vm342, %v414, %v415
      %v417 = vrot.slane %v415, 4
      %v418 = vrot.slane %v264, 5
      %v419 = vsel %vm342, %v417, %v418
      %v420 = vrot.slane %v265, 5
      %v421 = vrot.slane %v420, 4
      %v422 = vrot.slane %v266, 5
      %v423 = vsel %vm342, %v421, %v422
      %v424 = vrot.slane %v422, 4
      %v425 = vrot.slane %v267, 5
      %v426 = vsel %vm342, %v424, %v425
      %v427 = vrot.slane %v268, 5
      %v428 = vrot.slane %v427, 4
      %v429 = vrot.slane %v269, 5
      %v430 = vsel %vm342, %v428, %v429
      %v431 = vrot.slane %v429, 4
      %v432 = vrot.slane %v270, 5
      %v433 = vsel %vm342, %v431, %v432
      %v434 = vrot.slane %v271, 5
      %v435 = vrot.slane %v434, 4
      %v436 = vrot.slane %v272, 5
      %v437 = vsel %vm342, %v435, %v436
      %v438 = vrot.slane %v436, 4
      %v439 = vrot.slane %v273, 5
      %v440 = vsel %vm342, %v438, %v439
      %v441 = vrot.slane %v274, 5
      %v442 = vrot.slane %v441, 4
      %v443 = vrot.slane %v275, 5
      %v444 = vsel %vm342, %v442, %v443
      %v445 = vrot.slane %v443, 4
      %v446 = vrot.slane %v276, 5
      %v447 = vsel %vm342, %v445, %v446
      %v448 = vrot.slane %v277, 5
      %v449 = vrot.slane %v448, 4
      %v450 = vrot.slane %v278, 5
      %v451 = vsel %vm342, %v449, %v450
      %v452 = vrot.slane %v450, 4
      %v453 = vrot.slane %v279, 5
      %v454 = vsel %vm342, %v452, %v453
      %v455 = vld [vmem:[%s1] sm:$0x3]
      %vm456 = vsmask.f32 2304
      %vm457 = vsmask.f32 6416
      %vm458 = vmor %vm456, %vm457
      %v460 = vshrl.u32 %v232, 16
      %v462 = vrot.slane %v460, 5
      %v463 = vshll.u32 %v232, 16
      %v465 = vrot.slane %v463, 6
      %v466 = vor.u32 %v462, %v465
      %v467 = vrot.slane %v466, 4
      %v469 = vshrl.u32 %v233, 16
      %v471 = vrot.slane %v469, 5
      %v472 = vshll.u32 %v233, 16
      %v474 = vrot.slane %v472, 6
      %v475 = vor.u32 %v471, %v474
      %v476 = vsel %vm458, %v467, %v475
      %v477 = vrot.slane %v475, 4
      %v479 = vshrl.u32 %v234, 16
      %v481 = vrot.slane %v479, 5
      %v482 = vshll.u32 %v234, 16
      %v484 = vrot.slane %v482, 6
      %v485 = vor.u32 %v481, %v484
      %v486 = vsel %vm458, %v477, %v485
      %v488 = vshrl.u32 %v235, 16
      %v490 = vrot.slane %v488, 5
      %v491 = vshll.u32 %v235, 16
      %v493 = vrot.slane %v491, 6
      %v494 = vor.u32 %v490, %v493
      %v495 = vrot.slane %v494, 4
      %v497 = vshrl.u32 %v236, 16
      %v499 = vrot.slane %v497, 5
      %v500 = vshll.u32 %v236, 16
      %v502 = vrot.slane %v500, 6
      %v503 = vor.u32 %v499, %v502
      %v504 = vsel %vm458, %v495, %v503
      %v505 = vrot.slane %v503, 4
      %v507 = vshrl.u32 %v237, 16
      %v509 = vrot.slane %v507, 5
      %v510 = vshll.u32 %v237, 16
      %v512 = vrot.slane %v510, 6
      %v513 = vor.u32 %v509, %v512
      %v514 = vsel %vm458, %v505, %v513
      %v516 = vshrl.u32 %v238, 16
      %v518 = vrot.slane %v516, 5
      %v519 = vshll.u32 %v238, 16
      %v521 = vrot.slane %v519, 6
      %v522 = vor.u32 %v518, %v521
      %v523 = vrot.slane %v522, 4
      %v525 = vshrl.u32 %v239, 16
      %v527 = vrot.slane %v525, 5
      %v528 = vshll.u32 %v239, 16
      %v530 = vrot.slane %v528, 6
      %v531 = vor.u32 %v527, %v530
      %v532 = vsel %vm458, %v523, %v531
      %v533 = vrot.slane %v531, 4
      %v535 = vshrl.u32 %v240, 16
      %v537 = vrot.slane %v535, 5
      %v538 = vshll.u32 %v240, 16
      %v540 = vrot.slane %v538, 6
      %v541 = vor.u32 %v537, %v540
      %v542 = vsel %vm458, %v533, %v541
      %v544 = vshrl.u32 %v241, 16
      %v546 = vrot.slane %v544, 5
      %v547 = vshll.u32 %v241, 16
      %v549 = vrot.slane %v547, 6
      %v550 = vor.u32 %v546, %v549
      %v551 = vrot.slane %v550, 4
      %v553 = vshrl.u32 %v242, 16
      %v555 = vrot.slane %v553, 5
      %v556 = vshll.u32 %v242, 16
      %v558 = vrot.slane %v556, 6
      %v559 = vor.u32 %v555, %v558
      %v560 = vsel %vm458, %v551, %v559
      %v561 = vrot.slane %v559, 4
      %v563 = vshrl.u32 %v243, 16
      %v565 = vrot.slane %v563, 5
      %v566 = vshll.u32 %v243, 16
      %v568 = vrot.slane %v566, 6
      %v569 = vor.u32 %v565, %v568
      %v570 = vsel %vm458, %v561, %v569
      %v572 = vshrl.u32 %v244, 16
      %v574 = vrot.slane %v572, 5
      %v575 = vshll.u32 %v244, 16
      %v577 = vrot.slane %v575, 6
      %v578 = vor.u32 %v574, %v577
      %v579 = vrot.slane %v578, 4
      %v581 = vshrl.u32 %v245, 16
      %v583 = vrot.slane %v581, 5
      %v584 = vshll.u32 %v245, 16
      %v586 = vrot.slane %v584, 6
      %v587 = vor.u32 %v583, %v586
      %v588 = vsel %vm458, %v579, %v587
      %v589 = vrot.slane %v587, 4
      %v591 = vshrl.u32 %v246, 16
      %v593 = vrot.slane %v591, 5
      %v594 = vshll.u32 %v246, 16
      %v596 = vrot.slane %v594, 6
      %v597 = vor.u32 %v593, %v596
      %v598 = vsel %vm458, %v589, %v597
      %v600 = vshrl.u32 %v247, 16
      %v602 = vrot.slane %v600, 5
      %v603 = vshll.u32 %v247, 16
      %v605 = vrot.slane %v603, 6
      %v606 = vor.u32 %v602, %v605
      %v607 = vrot.slane %v606, 4
      %v609 = vshrl.u32 %v248, 16
      %v611 = vrot.slane %v609, 5
      %v612 = vshll.u32 %v248, 16
      %v614 = vrot.slane %v612, 6
      %v615 = vor.u32 %v611, %v614
      %v616 = vsel %vm458, %v607, %v615
      %v617 = vrot.slane %v615, 4
      %v619 = vshrl.u32 %v249, 16
      %v621 = vrot.slane %v619, 5
      %v622 = vshll.u32 %v249, 16
      %v624 = vrot.slane %v622, 6
      %v625 = vor.u32 %v621, %v624
      %v626 = vsel %vm458, %v617, %v625
      %v628 = vshrl.u32 %v250, 16
      %v630 = vrot.slane %v628, 5
      %v631 = vshll.u32 %v250, 16
      %v633 = vrot.slane %v631, 6
      %v634 = vor.u32 %v630, %v633
      %v635 = vrot.slane %v634, 4
      %v637 = vshrl.u32 %v251, 16
      %v639 = vrot.slane %v637, 5
      %v640 = vshll.u32 %v251, 16
      %v642 = vrot.slane %v640, 6
      %v643 = vor.u32 %v639, %v642
      %v644 = vsel %vm458, %v635, %v643
      %v645 = vrot.slane %v643, 4
      %v647 = vshrl.u32 %v252, 16
      %v649 = vrot.slane %v647, 5
      %v650 = vshll.u32 %v252, 16
      %v652 = vrot.slane %v650, 6
      %v653 = vor.u32 %v649, %v652
      %v654 = vsel %vm458, %v645, %v653
      %v656 = vshrl.u32 %v253, 16
      %v658 = vrot.slane %v656, 5
      %v659 = vshll.u32 %v253, 16
      %v661 = vrot.slane %v659, 6
      %v662 = vor.u32 %v658, %v661
      %v663 = vrot.slane %v662, 4
      %v665 = vshrl.u32 %v254, 16
      %v667 = vrot.slane %v665, 5
      %v668 = vshll.u32 %v254, 16
      %v670 = vrot.slane %v668, 6
      %v671 = vor.u32 %v667, %v670
      %v672 = vsel %vm458, %v663, %v671
      %v673 = vrot.slane %v671, 4
      %v675 = vshrl.u32 %v255, 16
      %v677 = vrot.slane %v675, 5
      %v678 = vshll.u32 %v255, 16
      %v680 = vrot.slane %v678, 6
      %v681 = vor.u32 %v677, %v680
      %v682 = vsel %vm458, %v673, %v681
      %v684 = vshrl.u32 %v256, 16
      %v686 = vrot.slane %v684, 5
      %v687 = vshll.u32 %v256, 16
      %v689 = vrot.slane %v687, 6
      %v690 = vor.u32 %v686, %v689
      %v691 = vrot.slane %v690, 4
      %v693 = vshrl.u32 %v257, 16
      %v695 = vrot.slane %v693, 5
      %v696 = vshll.u32 %v257, 16
      %v698 = vrot.slane %v696, 6
      %v699 = vor.u32 %v695, %v698
      %v700 = vsel %vm458, %v691, %v699
      %v701 = vrot.slane %v699, 4
      %v703 = vshrl.u32 %v258, 16
      %v705 = vrot.slane %v703, 5
      %v706 = vshll.u32 %v258, 16
      %v708 = vrot.slane %v706, 6
      %v709 = vor.u32 %v705, %v708
      %v710 = vsel %vm458, %v701, %v709
      %v712 = vshrl.u32 %v259, 16
      %v714 = vrot.slane %v712, 5
      %v715 = vshll.u32 %v259, 16
      %v717 = vrot.slane %v715, 6
      %v718 = vor.u32 %v714, %v717
      %v719 = vrot.slane %v718, 4
      %v721 = vshrl.u32 %v260, 16
      %v723 = vrot.slane %v721, 5
      %v724 = vshll.u32 %v260, 16
      %v726 = vrot.slane %v724, 6
      %v727 = vor.u32 %v723, %v726
      %v728 = vsel %vm458, %v719, %v727
      %v729 = vrot.slane %v727, 4
      %v731 = vshrl.u32 %v261, 16
      %v733 = vrot.slane %v731, 5
      %v734 = vshll.u32 %v261, 16
      %v736 = vrot.slane %v734, 6
      %v737 = vor.u32 %v733, %v736
      %v738 = vsel %vm458, %v729, %v737
      %v740 = vshrl.u32 %v262, 16
      %v742 = vrot.slane %v740, 5
      %v743 = vshll.u32 %v262, 16
      %v745 = vrot.slane %v743, 6
      %v746 = vor.u32 %v742, %v745
      %v747 = vrot.slane %v746, 4
      %v749 = vshrl.u32 %v263, 16
      %v751 = vrot.slane %v749, 5
      %v752 = vshll.u32 %v263, 16
      %v754 = vrot.slane %v752, 6
      %v755 = vor.u32 %v751, %v754
      %v756 = vsel %vm458, %v747, %v755
      %v757 = vrot.slane %v755, 4
      %v759 = vshrl.u32 %v264, 16
      %v761 = vrot.slane %v759, 5
      %v762 = vshll.u32 %v264, 16
      %v764 = vrot.slane %v762, 6
      %v765 = vor.u32 %v761, %v764
      %v766 = vsel %vm458, %v757, %v765
      %v768 = vshrl.u32 %v265, 16
      %v770 = vrot.slane %v768, 5
      %v771 = vshll.u32 %v265, 16
      %v773 = vrot.slane %v771, 6
      %v774 = vor.u32 %v770, %v773
      %v775 = vrot.slane %v774, 4
      %v777 = vshrl.u32 %v266, 16
      %v779 = vrot.slane %v777, 5
      %v780 = vshll.u32 %v266, 16
      %v782 = vrot.slane %v780, 6
      %v783 = vor.u32 %v779, %v782
      %v784 = vsel %vm458, %v775, %v783
      %v785 = vrot.slane %v783, 4
      %v787 = vshrl.u32 %v267, 16
      %v789 = vrot.slane %v787, 5
      %v790 = vshll.u32 %v267, 16
      %v792 = vrot.slane %v790, 6
      %v793 = vor.u32 %v789, %v792
      %v794 = vsel %vm458, %v785, %v793
      %v796 = vshrl.u32 %v268, 16
      %v798 = vrot.slane %v796, 5
      %v799 = vshll.u32 %v268, 16
      %v801 = vrot.slane %v799, 6
      %v802 = vor.u32 %v798, %v801
      %v803 = vrot.slane %v802, 4
      %v805 = vshrl.u32 %v269, 16
      %v807 = vrot.slane %v805, 5
      %v808 = vshll.u32 %v269, 16
      %v810 = vrot.slane %v808, 6
      %v811 = vor.u32 %v807, %v810
      %v812 = vsel %vm458, %v803, %v811
      %v813 = vrot.slane %v811, 4
      %v815 = vshrl.u32 %v270, 16
      %v817 = vrot.slane %v815, 5
      %v818 = vshll.u32 %v270, 16
      %v820 = vrot.slane %v818, 6
      %v821 = vor.u32 %v817, %v820
      %v822 = vsel %vm458, %v813, %v821
      %v824 = vshrl.u32 %v271, 16
      %v826 = vrot.slane %v824, 5
      %v827 = vshll.u32 %v271, 16
      %v829 = vrot.slane %v827, 6
      %v830 = vor.u32 %v826, %v829
      %v831 = vrot.slane %v830, 4
      %v833 = vshrl.u32 %v272, 16
      %v835 = vrot.slane %v833, 5
      %v836 = vshll.u32 %v272, 16
      %v838 = vrot.slane %v836, 6
      %v839 = vor.u32 %v835, %v838
      %v840 = vsel %vm458, %v831, %v839
      %v841 = vrot.slane %v839, 4
      %v843 = vshrl.u32 %v273, 16
      %v845 = vrot.slane %v843, 5
      %v846 = vshll.u32 %v273, 16
      %v848 = vrot.slane %v846, 6
      %v849 = vor.u32 %v845, %v848
      %v850 = vsel %vm458, %v841, %v849
      %v852 = vshrl.u32 %v274, 16
      %v854 = vrot.slane %v852, 5
      %v855 = vshll.u32 %v274, 16
      %v857 = vrot.slane %v855, 6
      %v858 = vor.u32 %v854, %v857
      %v859 = vrot.slane %v858, 4
      %v861 = vshrl.u32 %v275, 16
      %v863 = vrot.slane %v861, 5
      %v864 = vshll.u32 %v275, 16
      %v866 = vrot.slane %v864, 6
      %v867 = vor.u32 %v863, %v866
      %v868 = vsel %vm458, %v859, %v867
      %v869 = vrot.slane %v867, 4
      %v871 = vshrl.u32 %v276, 16
      %v873 = vrot.slane %v871, 5
      %v874 = vshll.u32 %v276, 16
      %v876 = vrot.slane %v874, 6
      %v877 = vor.u32 %v873, %v876
      %v878 = vsel %vm458, %v869, %v877
      %v880 = vshrl.u32 %v277, 16
      %v882 = vrot.slane %v880, 5
      %v883 = vshll.u32 %v277, 16
      %v885 = vrot.slane %v883, 6
      %v886 = vor.u32 %v882, %v885
      %v887 = vrot.slane %v886, 4
      %v889 = vshrl.u32 %v278, 16
      %v891 = vrot.slane %v889, 5
      %v892 = vshll.u32 %v278, 16
      %v894 = vrot.slane %v892, 6
      %v895 = vor.u32 %v891, %v894
      %v896 = vsel %vm458, %v887, %v895
      %v897 = vrot.slane %v895, 4
      %v899 = vshrl.u32 %v279, 16
      %v901 = vrot.slane %v899, 5
      %v902 = vshll.u32 %v279, 16
      %v904 = vrot.slane %v902, 6
      %v905 = vor.u32 %v901, %v904
      %v906 = vsel %vm458, %v897, %v905
      %s907 = scalar_lea.vmem %s1, 2
      %v908 = vld [vmem:[%s907] sm:$0x3]
      %v909 = vunpack.c.l.b16 %v476
      %v910 = vunpack.c.l.b16 %v486
      %v911 = vunpack.c.l.b16 %v504
      %v912 = vunpack.c.l.b16 %v514
      %v913 = vunpack.c.l.b16 %v532
      %v914 = vunpack.c.l.b16 %v542
      %v915 = vunpack.c.l.b16 %v560
      %v916 = vunpack.c.l.b16 %v570
      %v917 = vunpack.c.l.b16 %v588
      %v918 = vunpack.c.l.b16 %v598
      %v919 = vunpack.c.l.b16 %v616
      %v920 = vunpack.c.l.b16 %v626
      %v921 = vunpack.c.l.b16 %v644
      %v922 = vunpack.c.l.b16 %v654
      %v923 = vunpack.c.l.b16 %v672
      %v924 = vunpack.c.l.b16 %v682
      %v925 = vunpack.c.l.b16 %v700
      %v926 = vunpack.c.l.b16 %v710
      %v927 = vunpack.c.l.b16 %v728
      %v928 = vunpack.c.l.b16 %v738
      %v929 = vunpack.c.l.b16 %v756
      %v930 = vunpack.c.l.b16 %v766
      %v931 = vunpack.c.l.b16 %v784
      %v932 = vunpack.c.l.b16 %v794
      %v933 = vunpack.c.l.b16 %v812
      %v934 = vunpack.c.l.b16 %v822
      %v935 = vunpack.c.l.b16 %v840
      %v936 = vunpack.c.l.b16 %v850
      %v937 = vunpack.c.l.b16 %v868
      %v938 = vunpack.c.l.b16 %v878
      %v939 = vunpack.c.l.b16 %v896
      %v940 = vunpack.c.l.b16 %v906
      %v941 = vpack.c.b16 %v910, %v909
      %v942 = vpack.c.b16 %v912, %v911
      %v943 = vpack.c.b16 %v914, %v913
      %v944 = vpack.c.b16 %v916, %v915
      %v945 = vpack.c.b16 %v918, %v917
      %v946 = vpack.c.b16 %v920, %v919
      %v947 = vpack.c.b16 %v922, %v921
      %v948 = vpack.c.b16 %v924, %v923
      %v949 = vpack.c.b16 %v926, %v925
      %v950 = vpack.c.b16 %v928, %v927
      %v951 = vpack.c.b16 %v930, %v929
      %v952 = vpack.c.b16 %v932, %v931
      %v953 = vpack.c.b16 %v934, %v933
      %v954 = vpack.c.b16 %v936, %v935
      %v955 = vpack.c.b16 %v938, %v937
      %v956 = vpack.c.b16 %v940, %v939
      %vm957 = vcmask 31744
      %v959 = vsel %vm957, %v941, 0
      %v962 = vsel %vm957, %v942, 0
      %v965 = vsel %vm957, %v943, 0
      %v968 = vsel %vm957, %v944, 0
      %v971 = vsel %vm957, %v945, 0
      %v974 = vsel %vm957, %v946, 0
      %v977 = vsel %vm957, %v947, 0
      %v980 = vsel %vm957, %v948, 0
      %v983 = vsel %vm957, %v949, 0
      %v986 = vsel %vm957, %v950, 0
      %v989 = vsel %vm957, %v951, 0
      %v992 = vsel %vm957, %v952, 0
      %v995 = vsel %vm957, %v953, 0
      %v998 = vsel %vm957, %v954, 0
      %v1001 = vsel %vm957, %v955, 0
      %v1004 = vsel %vm957, %v956, 0
      %vm1006 = vcmask 1041408
      %v1008 = vsel %vm1006, %v908, 0
      %1010 = vmatprep.subr.bf16.mxu0 0
      %1011 = vmatpush1.bf16.msra.mxu0 %v1008
      %1012 = vmatprep.subr.bf16.mxu0 0
      %1013 = vmatpush1.bf16.msra.mxu0 0
      %1014 = vmatprep.subr.bf16.mxu0 0
      %1015 = vmatpush1.bf16.msra.mxu0 0
      %1016 = vmatprep.subr.bf16.mxu0 0
      %1017 = vmatpush1.bf16.msra.mxu0 0
      %1018 = vmatprep.subr.bf16.mxu0 0
      %1019 = vmatpush1.bf16.msra.mxu0 0
      %1020 = vmatprep.subr.bf16.mxu0 0
      %1021 = vmatpush1.bf16.msra.mxu0 0
      %1022 = vmatprep.subr.bf16.mxu0 0
      %1023 = vmatpush1.bf16.msra.mxu0 0
      %1024 = vmatprep.subr.bf16.mxu0 0
      %1025 = vmatpush1.bf16.msra.mxu0 0
      %1026 = vmatprep.subr.bf16.mxu0 0
      %1027 = vmatpush1.bf16.msra.mxu0 0
      %1028 = vmatprep.subr.bf16.mxu0 0
      %1029 = vmatpush1.bf16.msra.mxu0 0
      %1030 = vmatprep.subr.bf16.mxu0 0
      %1031 = vmatpush1.bf16.msra.mxu0 0
      %1032 = vmatprep.subr.bf16.mxu0 0
      %1033 = vmatpush1.bf16.msra.mxu0 0
      %1034 = vmatprep.subr.bf16.mxu0 0
      %1035 = vmatpush1.bf16.msra.mxu0 0
      %1036 = vmatprep.subr.bf16.mxu0 0
      %1037 = vmatpush1.bf16.msra.mxu0 0
      %1038 = vmatprep.subr.bf16.mxu0 0
      %1039 = vmatpush1.bf16.msra.mxu0 0
      %1040 = vmatprep.subr.bf16.mxu0 0
      %1041 = vmatpush1.bf16.msra.mxu0 0
      %1042 = vmatprep.mubr.bf16.mxu0 0
      %1043 = vmatmul.mubr.bf16.gmra.mrb[0].mxu0 %v959
      %v1044 = vpop.f32.mrb[0].mxu0
      %v1045 = vadd.f32 0.0, %v1044
      %v1046 = vpop.f32.mrb[0].mxu0
      %v1047 = vpop.f32.mrb[0].mxu0
      %v1048 = vadd.f32 0.0, %v1047
      %v1049 = vpop.f32.mrb[0].mxu0
      %1050 = vmatprep.mubr.bf16.mxu0 0
      %1051 = vmatmul.mubr.bf16.gmra.mrb[0].mxu0 %v962
      %v1052 = vpop.f32.mrb[0].mxu0
      %v1053 = vadd.f32 0.0, %v1052
      %v1054 = vpop.f32.mrb[0].mxu0
      %v1055 = vpop.f32.mrb[0].mxu0
      %v1056 = vadd.f32 0.0, %v1055
      %v1057 = vpop.f32.mrb[0].mxu0
      %1058 = vmatprep.mubr.bf16.mxu0 0
      %1059 = vmatmul.mubr.bf16.gmra.mrb[0].mxu0 %v965
      %v1060 = vpop.f32.mrb[0].mxu0
      %v1061 = vadd.f32 0.0, %v1060
      %v1062 = vpop.f32.mrb[0].mxu0
      %v1063 = vpop.f32.mrb[0].mxu0
      %v1064 = vadd.f32 0.0, %v1063
      %v1065 = vpop.f32.mrb[0].mxu0
      %1066 = vmatprep.mubr.bf16.mxu0 0
      %1067 = vmatmul.mubr.bf16.gmra.mrb[0].mxu0 %v968
      %v1068 = vpop.f32.mrb[0].mxu0
      %v1069 = vadd.f32 0.0, %v1068
      %v1070 = vpop.f32.mrb[0].mxu0
      %v1071 = vpop.f32.mrb[0].mxu0
      %v1072 = vadd.f32 0.0, %v1071
      %v1073 = vpop.f32.mrb[0].mxu0
      %1074 = vmatprep.mubr.bf16.mxu0 0
      %1075 = vmatmul.mubr.bf16.gmra.mrb[0].mxu0 %v971
      %v1076 = vpop.f32.mrb[0].mxu0
      %v1077 = vadd.f32 0.0, %v1076
      %v1078 = vpop.f32.mrb[0].mxu0
      %v1079 = vpop.f32.mrb[0].mxu0
      %v1080 = vadd.f32 0.0, %v1079
      %v1081 = vpop.f32.mrb[0].mxu0
      %1082 = vmatprep.mubr.bf16.mxu0 0
      %1083 = vmatmul.mubr.bf16.gmra.mrb[0].mxu0 %v974
      %v1084 = vpop.f32.mrb[0].mxu0
      %v1085 = vadd.f32 0.0, %v1084
      %v1086 = vpop.f32.mrb[0].mxu0
      %v1087 = vpop.f32.mrb[0].mxu0
      %v1088 = vadd.f32 0.0, %v1087
      %v1089 = vpop.f32.mrb[0].mxu0
      %1090 = vmatprep.mubr.bf16.mxu0 0
      %1091 = vmatmul.mubr.bf16.gmra.mrb[0].mxu0 %v977
      %v1092 = vpop.f32.mrb[0].mxu0
      %v1093 = vadd.f32 0.0, %v1092
      %v1094 = vpop.f32.mrb[0].mxu0
      %v1095 = vpop.f32.mrb[0].mxu0
      %v1096 = vadd.f32 0.0, %v1095
      %v1097 = vpop.f32.mrb[0].mxu0
      %1098 = vmatprep.mubr.bf16.mxu0 0
      %1099 = vmatmul.mubr.bf16.gmra.mrb[0].mxu0 %v980
      %v1100 = vpop.f32.mrb[0].mxu0
      %v1101 = vadd.f32 0.0, %v1100
      %v1102 = vpop.f32.mrb[0].mxu0
      %v1103 = vpop.f32.mrb[0].mxu0
      %v1104 = vadd.f32 0.0, %v1103
      %v1105 = vpop.f32.mrb[0].mxu0
      %1106 = vmatprep.mubr.bf16.mxu0 0
      %1107 = vmatmul.mubr.bf16.gmra.mrb[0].mxu0 %v983
      %v1108 = vpop.f32.mrb[0].mxu0
      %v1109 = vadd.f32 0.0, %v1108
      %v1110 = vpop.f32.mrb[0].mxu0
      %v1111 = vpop.f32.mrb[0].mxu0
      %v1112 = vadd.f32 0.0, %v1111
      %v1113 = vpop.f32.mrb[0].mxu0
      %1114 = vmatprep.mubr.bf16.mxu0 0
      %1115 = vmatmul.mubr.bf16.gmra.mrb[0].mxu0 %v986
      %v1116 = vpop.f32.mrb[0].mxu0
      %v1117 = vadd.f32 0.0, %v1116
      %v1118 = vpop.f32.mrb[0].mxu0
      %v1119 = vpop.f32.mrb[0].mxu0
      %v1120 = vadd.f32 0.0, %v1119
      %v1121 = vpop.f32.mrb[0].mxu0
      %1122 = vmatprep.mubr.bf16.mxu0 0
      %1123 = vmatmul.mubr.bf16.gmra.mrb[0].mxu0 %v989
      %v1124 = vpop.f32.mrb[0].mxu0
      %v1125 = vadd.f32 0.0, %v1124
      %v1126 = vpop.f32.mrb[0].mxu0
      %v1127 = vpop.f32.mrb[0].mxu0
      %v1128 = vadd.f32 0.0, %v1127
      %v1129 = vpop.f32.mrb[0].mxu0
      %1130 = vmatprep.mubr.bf16.mxu0 0
      %1131 = vmatmul.mubr.bf16.gmra.mrb[0].mxu0 %v992
      %v1132 = vpop.f32.mrb[0].mxu0
      %v1133 = vadd.f32 0.0, %v1132
      %v1134 = vpop.f32.mrb[0].mxu0
      %v1135 = vpop.f32.mrb[0].mxu0
      %v1136 = vadd.f32 0.0, %v1135
      %v1137 = vpop.f32.mrb[0].mxu0
      %1138 = vmatprep.mubr.bf16.mxu0 0
      %1139 = vmatmul.mubr.bf16.gmra.mrb[0].mxu0 %v995
      %v1140 = vpop.f32.mrb[0].mxu0
      %v1141 = vadd.f32 0.0, %v1140
      %v1142 = vpop.f32.mrb[0].mxu0
      %v1143 = vpop.f32.mrb[0].mxu0
      %v1144 = vadd.f32 0.0, %v1143
      %v1145 = vpop.f32.mrb[0].mxu0
      %1146 = vmatprep.mubr.bf16.mxu0 0
      %1147 = vmatmul.mubr.bf16.gmra.mrb[0].mxu0 %v998
      %v1148 = vpop.f32.mrb[0].mxu0
      %v1149 = vadd.f32 0.0, %v1148
      %v1150 = vpop.f32.mrb[0].mxu0
      %v1151 = vpop.f32.mrb[0].mxu0
      %v1152 = vadd.f32 0.0, %v1151
      %v1153 = vpop.f32.mrb[0].mxu0
      %1154 = vmatprep.mubr.bf16.mxu0 0
      %1155 = vmatmul.mubr.bf16.gmra.mrb[0].mxu0 %v1001
      %v1156 = vpop.f32.mrb[0].mxu0
      %v1157 = vadd.f32 0.0, %v1156
      %v1158 = vpop.f32.mrb[0].mxu0
      %v1159 = vpop.f32.mrb[0].mxu0
      %v1160 = vadd.f32 0.0, %v1159
      %v1161 = vpop.f32.mrb[0].mxu0
      %1162 = vmatprep.mubr.bf16.mxu0 0
      %1163 = vmatmul.mubr.bf16.gmra.mrb[0].mxu0 %v1004
      %v1164 = vpop.f32.mrb[0].mxu0
      %v1165 = vadd.f32 0.0, %v1164
      %v1166 = vpop.f32.mrb[0].mxu0
      %v1167 = vpop.f32.mrb[0].mxu0
      %v1168 = vadd.f32 0.0, %v1167
      %v1169 = vpop.f32.mrb[0].mxu0
      %1170 = vdwg.mxu0
      %v1171 = vunpack.c.l.b16 %v346
      %v1172 = vunpack.c.l.b16 %v349
      %v1173 = vunpack.c.l.b16 %v353
      %v1174 = vunpack.c.l.b16 %v356
      %v1175 = vunpack.c.l.b16 %v360
      %v1176 = vunpack.c.l.b16 %v363
      %v1177 = vunpack.c.l.b16 %v367
      %v1178 = vunpack.c.l.b16 %v370
      %v1179 = vunpack.c.l.b16 %v374
      %v1180 = vunpack.c.l.b16 %v377
      %v1181 = vunpack.c.l.b16 %v381
      %v1182 = vunpack.c.l.b16 %v384
      %v1183 = vunpack.c.l.b16 %v388
      %v1184 = vunpack.c.l.b16 %v391
      %v1185 = vunpack.c.l.b16 %v395
      %v1186 = vunpack.c.l.b16 %v398
      %v1187 = vunpack.c.l.b16 %v402
      %v1188 = vunpack.c.l.b16 %v405
      %v1189 = vunpack.c.l.b16 %v409
      %v1190 = vunpack.c.l.b16 %v412
      %v1191 = vunpack.c.l.b16 %v416
      %v1192 = vunpack.c.l.b16 %v419
      %v1193 = vunpack.c.l.b16 %v423
      %v1194 = vunpack.c.l.b16 %v426
      %v1195 = vunpack.c.l.b16 %v430
      %v1196 = vunpack.c.l.b16 %v433
      %v1197 = vunpack.c.l.b16 %v437
      %v1198 = vunpack.c.l.b16 %v440
      %v1199 = vunpack.c.l.b16 %v444
      %v1200 = vunpack.c.l.b16 %v447
      %v1201 = vunpack.c.l.b16 %v451
      %v1202 = vunpack.c.l.b16 %v454
      %v1203 = vpack.c.b16 %v1172, %v1171
      %v1204 = vpack.c.b16 %v1174, %v1173
      %v1205 = vpack.c.b16 %v1176, %v1175
      %v1206 = vpack.c.b16 %v1178, %v1177
      %v1207 = vpack.c.b16 %v1180, %v1179
      %v1208 = vpack.c.b16 %v1182, %v1181
      %v1209 = vpack.c.b16 %v1184, %v1183
      %v1210 = vpack.c.b16 %v1186, %v1185
      %v1211 = vpack.c.b16 %v1188, %v1187
      %v1212 = vpack.c.b16 %v1190, %v1189
      %v1213 = vpack.c.b16 %v1192, %v1191
      %v1214 = vpack.c.b16 %v1194, %v1193
      %v1215 = vpack.c.b16 %v1196, %v1195
      %v1216 = vpack.c.b16 %v1198, %v1197
      %v1217 = vpack.c.b16 %v1200, %v1199
      %v1218 = vpack.c.b16 %v1202, %v1201
      %v1220 = vsel %vm957, %v1203, 0
      %v1223 = vsel %vm957, %v1204, 0
      %v1226 = vsel %vm957, %v1205, 0
      %v1229 = vsel %vm957, %v1206, 0
      %v1232 = vsel %vm957, %v1207, 0
      %v1235 = vsel %vm957, %v1208, 0
      %v1238 = vsel %vm957, %v1209, 0
      %v1241 = vsel %vm957, %v1210, 0
      %v1244 = vsel %vm957, %v1211, 0
      %v1247 = vsel %vm957, %v1212, 0
      %v1250 = vsel %vm957, %v1213, 0
      %v1253 = vsel %vm957, %v1214, 0
      %v1256 = vsel %vm957, %v1215, 0
      %v1259 = vsel %vm957, %v1216, 0
      %v1262 = vsel %vm957, %v1217, 0
      %v1265 = vsel %vm957, %v1218, 0
      %v1268 = vsel %vm1006, %v455, 0
      %1270 = vmatprep.subr.bf16.mxu0 0
      %1271 = vmatpush1.bf16.msra.mxu0 %v1268
      %1272 = vmatprep.subr.bf16.mxu0 0
      %1273 = vmatpush1.bf16.msra.mxu0 0
      %1274 = vmatprep.subr.bf16.mxu0 0
      %1275 = vmatpush1.bf16.msra.mxu0 0
      %1276 = vmatprep.subr.bf16.mxu0 0
      %1277 = vmatpush1.bf16.msra.mxu0 0
      %1278 = vmatprep.subr.bf16.mxu0 0
      %1279 = vmatpush1.bf16.msra.mxu0 0
      %1280 = vmatprep.subr.bf16.mxu0 0
      %1281 = vmatpush1.bf16.msra.mxu0 0
      %1282 = vmatprep.subr.bf16.mxu0 0
      %1283 = vmatpush1.bf16.msra.mxu0 0
      %1284 = vmatprep.subr.bf16.mxu0 0
      %1285 = vmatpush1.bf16.msra.mxu0 0
      %1286 = vmatprep.subr.bf16.mxu0 0
      %1287 = vmatpush1.bf16.msra.mxu0 0
      %1288 = vmatprep.subr.bf16.mxu0 0
      %1289 = vmatpush1.bf16.msra.mxu0 0
      %1290 = vmatprep.subr.bf16.mxu0 0
      %1291 = vmatpush1.bf16.msra.mxu0 0
      %1292 = vmatprep.subr.bf16.mxu0 0
      %1293 = vmatpush1.bf16.msra.mxu0 0
      %1294 = vmatprep.subr.bf16.mxu0 0
      %1295 = vmatpush1.bf16.msra.mxu0 0
      %1296 = vmatprep.subr.bf16.mxu0 0
      %1297 = vmatpush1.bf16.msra.mxu0 0
      %1298 = vmatprep.subr.bf16.mxu0 0
      %1299 = vmatpush1.bf16.msra.mxu0 0
      %1300 = vmatprep.subr.bf16.mxu0 0
      %1301 = vmatpush1.bf16.msra.mxu0 0
      %1302 = vmatprep.mubr.bf16.mxu0 0
      %1303 = vmatmul.mubr.bf16.gmra.mrb[0].mxu0 %v1220
      %v1304 = vpop.f32.mrb[0].mxu0
      %v1305 = vadd.f32 %v1045, %v1304
      %v1306 = vpop.f32.mrb[0].mxu0
      %v1307 = vpop.f32.mrb[0].mxu0
      %v1308 = vadd.f32 %v1048, %v1307
      %v1309 = vpop.f32.mrb[0].mxu0
      %1310 = vmatprep.mubr.bf16.mxu0 0
      %1311 = vmatmul.mubr.bf16.gmra.mrb[0].mxu0 %v1223
      %v1312 = vpop.f32.mrb[0].mxu0
      %v1313 = vadd.f32 %v1053, %v1312
      %v1314 = vpop.f32.mrb[0].mxu0
      %v1315 = vpop.f32.mrb[0].mxu0
      %v1316 = vadd.f32 %v1056, %v1315
      %v1317 = vpop.f32.mrb[0].mxu0
      %1318 = vmatprep.mubr.bf16.mxu0 0
      %1319 = vmatmul.mubr.bf16.gmra.mrb[0].mxu0 %v1226
      %v1320 = vpop.f32.mrb[0].mxu0
      %v1321 = vadd.f32 %v1061, %v1320
      %v1322 = vpop.f32.mrb[0].mxu0
      %v1323 = vpop.f32.mrb[0].mxu0
      %v1324 = vadd.f32 %v1064, %v1323
      %v1325 = vpop.f32.mrb[0].mxu0
      %1326 = vmatprep.mubr.bf16.mxu0 0
      %1327 = vmatmul.mubr.bf16.gmra.mrb[0].mxu0 %v1229
      %v1328 = vpop.f32.mrb[0].mxu0
      %v1329 = vadd.f32 %v1069, %v1328
      %v1330 = vpop.f32.mrb[0].mxu0
      %v1331 = vpop.f32.mrb[0].mxu0
      %v1332 = vadd.f32 %v1072, %v1331
      %v1333 = vpop.f32.mrb[0].mxu0
      %1334 = vmatprep.mubr.bf16.mxu0 0
      %1335 = vmatmul.mubr.bf16.gmra.mrb[0].mxu0 %v1232
      %v1336 = vpop.f32.mrb[0].mxu0
      %v1337 = vadd.f32 %v1077, %v1336
      %v1338 = vpop.f32.mrb[0].mxu0
      %v1339 = vpop.f32.mrb[0].mxu0
      %v1340 = vadd.f32 %v1080, %v1339
      %v1341 = vpop.f32.mrb[0].mxu0
      %1342 = vmatprep.mubr.bf16.mxu0 0
      %1343 = vmatmul.mubr.bf16.gmra.mrb[0].mxu0 %v1235
      %v1344 = vpop.f32.mrb[0].mxu0
      %v1345 = vadd.f32 %v1085, %v1344
      %v1346 = vpop.f32.mrb[0].mxu0
      %v1347 = vpop.f32.mrb[0].mxu0
      %v1348 = vadd.f32 %v1088, %v1347
      %v1349 = vpop.f32.mrb[0].mxu0
      %1350 = vmatprep.mubr.bf16.mxu0 0
      %1351 = vmatmul.mubr.bf16.gmra.mrb[0].mxu0 %v1238
      %v1352 = vpop.f32.mrb[0].mxu0
      %v1353 = vadd.f32 %v1093, %v1352
      %v1354 = vpop.f32.mrb[0].mxu0
      %v1355 = vpop.f32.mrb[0].mxu0
      %v1356 = vadd.f32 %v1096, %v1355
      %v1357 = vpop.f32.mrb[0].mxu0
      %1358 = vmatprep.mubr.bf16.mxu0 0
      %1359 = vmatmul.mubr.bf16.gmra.mrb[0].mxu0 %v1241
      %v1360 = vpop.f32.mrb[0].mxu0
      %v1361 = vadd.f32 %v1101, %v1360
      %v1362 = vpop.f32.mrb[0].mxu0
      %v1363 = vpop.f32.mrb[0].mxu0
      %v1364 = vadd.f32 %v1104, %v1363
      %v1365 = vpop.f32.mrb[0].mxu0
      %1366 = vmatprep.mubr.bf16.mxu0 0
      %1367 = vmatmul.mubr.bf16.gmra.mrb[0].mxu0 %v1244
      %v1368 = vpop.f32.mrb[0].mxu0
      %v1369 = vadd.f32 %v1109, %v1368
      %v1370 = vpop.f32.mrb[0].mxu0
      %v1371 = vpop.f32.mrb[0].mxu0
      %v1372 = vadd.f32 %v1112, %v1371
      %v1373 = vpop.f32.mrb[0].mxu0
      %1374 = vmatprep.mubr.bf16.mxu0 0
      %1375 = vmatmul.mubr.bf16.gmra.mrb[0].mxu0 %v1247
      %v1376 = vpop.f32.mrb[0].mxu0
      %v1377 = vadd.f32 %v1117, %v1376
      %v1378 = vpop.f32.mrb[0].mxu0
      %v1379 = vpop.f32.mrb[0].mxu0
      %v1380 = vadd.f32 %v1120, %v1379
      %v1381 = vpop.f32.mrb[0].mxu0
      %1382 = vmatprep.mubr.bf16.mxu0 0
      %1383 = vmatmul.mubr.bf16.gmra.mrb[0].mxu0 %v1250
      %v1384 = vpop.f32.mrb[0].mxu0
      %v1385 = vadd.f32 %v1125, %v1384
      %v1386 = vpop.f32.mrb[0].mxu0
      %v1387 = vpop.f32.mrb[0].mxu0
      %v1388 = vadd.f32 %v1128, %v1387
      %v1389 = vpop.f32.mrb[0].mxu0
      %1390 = vmatprep.mubr.bf16.mxu0 0
      %1391 = vmatmul.mubr.bf16.gmra.mrb[0].mxu0 %v1253
      %v1392 = vpop.f32.mrb[0].mxu0
      %v1393 = vadd.f32 %v1133, %v1392
      %v1394 = vpop.f32.mrb[0].mxu0
      %v1395 = vpop.f32.mrb[0].mxu0
      %v1396 = vadd.f32 %v1136, %v1395
      %v1397 = vpop.f32.mrb[0].mxu0
      %1398 = vmatprep.mubr.bf16.mxu0 0
      %1399 = vmatmul.mubr.bf16.gmra.mrb[0].mxu0 %v1256
      %v1400 = vpop.f32.mrb[0].mxu0
      %v1401 = vadd.f32 %v1141, %v1400
      %v1402 = vpop.f32.mrb[0].mxu0
      %v1403 = vpop.f32.mrb[0].mxu0
      %v1404 = vadd.f32 %v1144, %v1403
      %v1405 = vpop.f32.mrb[0].mxu0
      %1406 = vmatprep.mubr.bf16.mxu0 0
      %1407 = vmatmul.mubr.bf16.gmra.mrb[0].mxu0 %v1259
      %v1408 = vpop.f32.mrb[0].mxu0
      %v1409 = vadd.f32 %v1149, %v1408
      %v1410 = vpop.f32.mrb[0].mxu0
      %v1411 = vpop.f32.mrb[0].mxu0
      %v1412 = vadd.f32 %v1152, %v1411
      %v1413 = vpop.f32.mrb[0].mxu0
      %1414 = vmatprep.mubr.bf16.mxu0 0
      %1415 = vmatmul.mubr.bf16.gmra.mrb[0].mxu0 %v1262
      %v1416 = vpop.f32.mrb[0].mxu0
      %v1417 = vadd.f32 %v1157, %v1416
      %v1418 = vpop.f32.mrb[0].mxu0
      %v1419 = vpop.f32.mrb[0].mxu0
      %v1420 = vadd.f32 %v1160, %v1419
      %v1421 = vpop.f32.mrb[0].mxu0
      %1422 = vmatprep.mubr.bf16.mxu0 0
      %1423 = vmatmul.mubr.bf16.gmra.mrb[0].mxu0 %v1265
      %v1424 = vpop.f32.mrb[0].mxu0
      %v1425 = vadd.f32 %v1165, %v1424
      %v1426 = vpop.f32.mrb[0].mxu0
      %v1427 = vpop.f32.mrb[0].mxu0
      %v1428 = vadd.f32 %v1168, %v1427
      %v1429 = vpop.f32.mrb[0].mxu0
      %1430 = vdwg.mxu0
      %vm1431 = vcmask 1041408
      %vm1432 = vcmask 1045508
      %vm1433 = vmor %vm1431, %vm1432
      %v1434 = vrot.slane %v232, 6
      %v1435 = vrot.slane %v1434, 4
      %v1436 = vrot.slane %v233, 6
      %v1437 = vsel %vm1433, %v1435, %v1436
      %v1438 = vrot.slane %v1436, 4
      %v1439 = vrot.slane %v234, 6
      %v1440 = vsel %vm1433, %v1438, %v1439
      %v1441 = vrot.slane %v235, 6
      %v1442 = vrot.slane %v1441, 4
      %v1443 = vrot.slane %v236, 6
      %v1444 = vsel %vm1433, %v1442, %v1443
      %v1445 = vrot.slane %v1443, 4
      %v1446 = vrot.slane %v237, 6
      %v1447 = vsel %vm1433, %v1445, %v1446
      %v1448 = vrot.slane %v238, 6
      %v1449 = vrot.slane %v1448, 4
      %v1450 = vrot.slane %v239, 6
      %v1451 = vsel %vm1433, %v1449, %v1450
      %v1452 = vrot.slane %v1450, 4
      %v1453 = vrot.slane %v240, 6
      %v1454 = vsel %vm1433, %v1452, %v1453
      %v1455 = vrot.slane %v241, 6
      %v1456 = vrot.slane %v1455, 4
      %v1457 = vrot.slane %v242, 6
      %v1458 = vsel %vm1433, %v1456, %v1457
      %v1459 = vrot.slane %v1457, 4
      %v1460 = vrot.slane %v243, 6
      %v1461 = vsel %vm1433, %v1459, %v1460
      %v1462 = vrot.slane %v244, 6
      %v1463 = vrot.slane %v1462, 4
      %v1464 = vrot.slane %v245, 6
      %v1465 = vsel %vm1433, %v1463, %v1464
      %v1466 = vrot.slane %v1464, 4
      %v1467 = vrot.slane %v246, 6
      %v1468 = vsel %vm1433, %v1466, %v1467
      %v1469 = vrot.slane %v247, 6
      %v1470 = vrot.slane %v1469, 4
      %v1471 = vrot.slane %v248, 6
      %v1472 = vsel %vm1433, %v1470, %v1471
      %v1473 = vrot.slane %v1471, 4
      %v1474 = vrot.slane %v249, 6
      %v1475 = vsel %vm1433, %v1473, %v1474
      %v1476 = vrot.slane %v250, 6
      %v1477 = vrot.slane %v1476, 4
      %v1478 = vrot.slane %v251, 6
      %v1479 = vsel %vm1433, %v1477, %v1478
      %v1480 = vrot.slane %v1478, 4
      %v1481 = vrot.slane %v252, 6
      %v1482 = vsel %vm1433, %v1480, %v1481
      %v1483 = vrot.slane %v253, 6
      %v1484 = vrot.slane %v1483, 4
      %v1485 = vrot.slane %v254, 6
      %v1486 = vsel %vm1433, %v1484, %v1485
      %v1487 = vrot.slane %v1485, 4
      %v1488 = vrot.slane %v255, 6
      %v1489 = vsel %vm1433, %v1487, %v1488
      %v1490 = vrot.slane %v256, 6
      %v1491 = vrot.slane %v1490, 4
      %v1492 = vrot.slane %v257, 6
      %v1493 = vsel %vm1433, %v1491, %v1492
      %v1494 = vrot.slane %v1492, 4
      %v1495 = vrot.slane %v258, 6
      %v1496 = vsel %vm1433, %v1494, %v1495
      %v1497 = vrot.slane %v259, 6
      %v1498 = vrot.slane %v1497, 4
      %v1499 = vrot.slane %v260, 6
      %v1500 = vsel %vm1433, %v1498, %v1499
      %v1501 = vrot.slane %v1499, 4
      %v1502 = vrot.slane %v261, 6
      %v1503 = vsel %vm1433, %v1501, %v1502
      %v1504 = vrot.slane %v262, 6
      %v1505 = vrot.slane %v1504, 4
      %v1506 = vrot.slane %v263, 6
      %v1507 = vsel %vm1433, %v1505, %v1506
      %v1508 = vrot.slane %v1506, 4
      %v1509 = vrot.slane %v264, 6
      %v1510 = vsel %vm1433, %v1508, %v1509
      %v1511 = vrot.slane %v265, 6
      %v1512 = vrot.slane %v1511, 4
      %v1513 = vrot.slane %v266, 6
      %v1514 = vsel %vm1433, %v1512, %v1513
      %v1515 = vrot.slane %v1513, 4
      %v1516 = vrot.slane %v267, 6
      %v1517 = vsel %vm1433, %v1515, %v1516
      %v1518 = vrot.slane %v268, 6
      %v1519 = vrot.slane %v1518, 4
      %v1520 = vrot.slane %v269, 6
      %v1521 = vsel %vm1433, %v1519, %v1520
      %v1522 = vrot.slane %v1520, 4
      %v1523 = vrot.slane %v270, 6
      %v1524 = vsel %vm1433, %v1522, %v1523
      %v1525 = vrot.slane %v271, 6
      %v1526 = vrot.slane %v1525, 4
      %v1527 = vrot.slane %v272, 6
      %v1528 = vsel %vm1433, %v1526, %v1527
      %v1529 = vrot.slane %v1527, 4
      %v1530 = vrot.slane %v273, 6
      %v1531 = vsel %vm1433, %v1529, %v1530
      %v1532 = vrot.slane %v274, 6
      %v1533 = vrot.slane %v1532, 4
      %v1534 = vrot.slane %v275, 6
      %v1535 = vsel %vm1433, %v1533, %v1534
      %v1536 = vrot.slane %v1534, 4
      %v1537 = vrot.slane %v276, 6
      %v1538 = vsel %vm1433, %v1536, %v1537
      %v1539 = vrot.slane %v277, 6
      %v1540 = vrot.slane %v1539, 4
      %v1541 = vrot.slane %v278, 6
      %v1542 = vsel %vm1433, %v1540, %v1541
      %v1543 = vrot.slane %v1541, 4
      %v1544 = vrot.slane %v279, 6
      %v1545 = vsel %vm1433, %v1543, %v1544
      %s1546 = scalar_lea.vmem %s1, 4
      %v1547 = vld [vmem:[%s1546] sm:$0x3]
      %v1548 = vunpack.c.l.b16 %v1437
      %v1549 = vunpack.c.l.b16 %v1440
      %v1550 = vunpack.c.l.b16 %v1444
      %v1551 = vunpack.c.l.b16 %v1447
      %v1552 = vunpack.c.l.b16 %v1451
      %v1553 = vunpack.c.l.b16 %v1454
      %v1554 = vunpack.c.l.b16 %v1458
      %v1555 = vunpack.c.l.b16 %v1461
      %v1556 = vunpack.c.l.b16 %v1465
      %v1557 = vunpack.c.l.b16 %v1468
      %v1558 = vunpack.c.l.b16 %v1472
      %v1559 = vunpack.c.l.b16 %v1475
      %v1560 = vunpack.c.l.b16 %v1479
      %v1561 = vunpack.c.l.b16 %v1482
      %v1562 = vunpack.c.l.b16 %v1486
      %v1563 = vunpack.c.l.b16 %v1489
      %v1564 = vunpack.c.l.b16 %v1493
      %v1565 = vunpack.c.l.b16 %v1496
      %v1566 = vunpack.c.l.b16 %v1500
      %v1567 = vunpack.c.l.b16 %v1503
      %v1568 = vunpack.c.l.b16 %v1507
      %v1569 = vunpack.c.l.b16 %v1510
      %v1570 = vunpack.c.l.b16 %v1514
      %v1571 = vunpack.c.l.b16 %v1517
      %v1572 = vunpack.c.l.b16 %v1521
      %v1573 = vunpack.c.l.b16 %v1524
      %v1574 = vunpack.c.l.b16 %v1528
      %v1575 = vunpack.c.l.b16 %v1531
      %v1576 = vunpack.c.l.b16 %v1535
      %v1577 = vunpack.c.l.b16 %v1538
      %v1578 = vunpack.c.l.b16 %v1542
      %v1579 = vunpack.c.l.b16 %v1545
      %v1580 = vpack.c.b16 %v1549, %v1548
      %v1581 = vpack.c.b16 %v1551, %v1550
      %v1582 = vpack.c.b16 %v1553, %v1552
      %v1583 = vpack.c.b16 %v1555, %v1554
      %v1584 = vpack.c.b16 %v1557, %v1556
      %v1585 = vpack.c.b16 %v1559, %v1558
      %v1586 = vpack.c.b16 %v1561, %v1560
      %v1587 = vpack.c.b16 %v1563, %v1562
      %v1588 = vpack.c.b16 %v1565, %v1564
      %v1589 = vpack.c.b16 %v1567, %v1566
      %v1590 = vpack.c.b16 %v1569, %v1568
      %v1591 = vpack.c.b16 %v1571, %v1570
      %v1592 = vpack.c.b16 %v1573, %v1572
      %v1593 = vpack.c.b16 %v1575, %v1574
      %v1594 = vpack.c.b16 %v1577, %v1576
      %v1595 = vpack.c.b16 %v1579, %v1578
      %v1597 = vsel %vm957, %v1580, 0
      %v1600 = vsel %vm957, %v1581, 0
      %v1603 = vsel %vm957, %v1582, 0
      %v1606 = vsel %vm957, %v1583, 0
      %v1609 = vsel %vm957, %v1584, 0
      %v1612 = vsel %vm957, %v1585, 0
      %v1615 = vsel %vm957, %v1586, 0
      %v1618 = vsel %vm957, %v1587, 0
      %v1621 = vsel %vm957, %v1588, 0
      %v1624 = vsel %vm957, %v1589, 0
      %v1627 = vsel %vm957, %v1590, 0
      %v1630 = vsel %vm957, %v1591, 0
      %v1633 = vsel %vm957, %v1592, 0
      %v1636 = vsel %vm957, %v1593, 0
      %v1639 = vsel %vm957, %v1594, 0
      %v1642 = vsel %vm957, %v1595, 0
      %v1645 = vsel %vm1006, %v1547, 0
      %1647 = vmatprep.subr.bf16.mxu0 0
      %1648 = vmatpush1.bf16.msra.mxu0 %v1645
      %1649 = vmatprep.subr.bf16.mxu0 0
      %1650 = vmatpush1.bf16.msra.mxu0 0
      %1651 = vmatprep.subr.bf16.mxu0 0
      %1652 = vmatpush1.bf16.msra.mxu0 0
      %1653 = vmatprep.subr.bf16.mxu0 0
      %1654 = vmatpush1.bf16.msra.mxu0 0
      %1655 = vmatprep.subr.bf16.mxu0 0
      %1656 = vmatpush1.bf16.msra.mxu0 0
      %1657 = vmatprep.subr.bf16.mxu0 0
      %1658 = vmatpush1.bf16.msra.mxu0 0
      %1659 = vmatprep.subr.bf16.mxu0 0
      %1660 = vmatpush1.bf16.msra.mxu0 0
      %1661 = vmatprep.subr.bf16.mxu0 0
      %1662 = vmatpush1.bf16.msra.mxu0 0
      %1663 = vmatprep.subr.bf16.mxu0 0
      %1664 = vmatpush1.bf16.msra.mxu0 0
      %1665 = vmatprep.subr.bf16.mxu0 0
      %1666 = vmatpush1.bf16.msra.mxu0 0
      %1667 = vmatprep.subr.bf16.mxu0 0
      %1668 = vmatpush1.bf16.msra.mxu0 0
      %1669 = vmatprep.subr.bf16.mxu0 0
      %1670 = vmatpush1.bf16.msra.mxu0 0
      %1671 = vmatprep.subr.bf16.mxu0 0
      %1672 = vmatpush1.bf16.msra.mxu0 0
      %1673 = vmatprep.subr.bf16.mxu0 0
      %1674 = vmatpush1.bf16.msra.mxu0 0
      %1675 = vmatprep.subr.bf16.mxu0 0
      %1676 = vmatpush1.bf16.msra.mxu0 0
      %1677 = vmatprep.subr.bf16.mxu0 0
      %1678 = vmatpush1.bf16.msra.mxu0 0
      %1679 = vmatprep.mubr.bf16.mxu0 0
      %1680 = vmatmul.mubr.bf16.gmra.mrb[0].mxu0 %v1597
      %v1681 = vpop.f32.mrb[0].mxu0
      %v1682 = vadd.f32 0.0, %v1681
      %v1683 = vpop.f32.mrb[0].mxu0
      %v1684 = vpop.f32.mrb[0].mxu0
      %v1685 = vadd.f32 0.0, %v1684
      %v1686 = vpop.f32.mrb[0].mxu0
      %1687 = vmatprep.mubr.bf16.mxu0 0
      %1688 = vmatmul.mubr.bf16.gmra.mrb[0].mxu0 %v1600
      %v1689 = vpop.f32.mrb[0].mxu0
      %v1690 = vadd.f32 0.0, %v1689
      %v1691 = vpop.f32.mrb[0].mxu0
      %v1692 = vpop.f32.mrb[0].mxu0
      %v1693 = vadd.f32 0.0, %v1692
      %v1694 = vpop.f32.mrb[0].mxu0
      %1695 = vmatprep.mubr.bf16.mxu0 0
      %1696 = vmatmul.mubr.bf16.gmra.mrb[0].mxu0 %v1603
      %v1697 = vpop.f32.mrb[0].mxu0
      %v1698 = vadd.f32 0.0, %v1697
      %v1699 = vpop.f32.mrb[0].mxu0
      %v1700 = vpop.f32.mrb[0].mxu0
      %v1701 = vadd.f32 0.0, %v1700
      %v1702 = vpop.f32.mrb[0].mxu0
      %1703 = vmatprep.mubr.bf16.mxu0 0
      %1704 = vmatmul.mubr.bf16.gmra.mrb[0].mxu0 %v1606
      %v1705 = vpop.f32.mrb[0].mxu0
      %v1706 = vadd.f32 0.0, %v1705
      %v1707 = vpop.f32.mrb[0].mxu0
      %v1708 = vpop.f32.mrb[0].mxu0
      %v1709 = vadd.f32 0.0, %v1708
      %v1710 = vpop.f32.mrb[0].mxu0
      %1711 = vmatprep.mubr.bf16.mxu0 0
      %1712 = vmatmul.mubr.bf16.gmra.mrb[0].mxu0 %v1609
      %v1713 = vpop.f32.mrb[0].mxu0
      %v1714 = vadd.f32 0.0, %v1713
      %v1715 = vpop.f32.mrb[0].mxu0
      %v1716 = vpop.f32.mrb[0].mxu0
      %v1717 = vadd.f32 0.0, %v1716
      %v1718 = vpop.f32.mrb[0].mxu0
      %1719 = vmatprep.mubr.bf16.mxu0 0
      %1720 = vmatmul.mubr.bf16.gmra.mrb[0].mxu0 %v1612
      %v1721 = vpop.f32.mrb[0].mxu0
      %v1722 = vadd.f32 0.0, %v1721
      %v1723 = vpop.f32.mrb[0].mxu0
      %v1724 = vpop.f32.mrb[0].mxu0
      %v1725 = vadd.f32 0.0, %v1724
      %v1726 = vpop.f32.mrb[0].mxu0
      %1727 = vmatprep.mubr.bf16.mxu0 0
      %1728 = vmatmul.mubr.bf16.gmra.mrb[0].mxu0 %v1615
      %v1729 = vpop.f32.mrb[0].mxu0
      %v1730 = vadd.f32 0.0, %v1729
      %v1731 = vpop.f32.mrb[0].mxu0
      %v1732 = vpop.f32.mrb[0].mxu0
      %v1733 = vadd.f32 0.0, %v1732
      %v1734 = vpop.f32.mrb[0].mxu0
      %1735 = vmatprep.mubr.bf16.mxu0 0
      %1736 = vmatmul.mubr.bf16.gmra.mrb[0].mxu0 %v1618
      %v1737 = vpop.f32.mrb[0].mxu0
      %v1738 = vadd.f32 0.0, %v1737
      %v1739 = vpop.f32.mrb[0].mxu0
      %v1740 = vpop.f32.mrb[0].mxu0
      %v1741 = vadd.f32 0.0, %v1740
      %v1742 = vpop.f32.mrb[0].mxu0
      %1743 = vmatprep.mubr.bf16.mxu0 0
      %1744 = vmatmul.mubr.bf16.gmra.mrb[0].mxu0 %v1621
      %v1745 = vpop.f32.mrb[0].mxu0
      %v1746 = vadd.f32 0.0, %v1745
      %v1747 = vpop.f32.mrb[0].mxu0
      %v1748 = vpop.f32.mrb[0].mxu0
      %v1749 = vadd.f32 0.0, %v1748
      %v1750 = vpop.f32.mrb[0].mxu0
      %1751 = vmatprep.mubr.bf16.mxu0 0
      %1752 = vmatmul.mubr.bf16.gmra.mrb[0].mxu0 %v1624
      %v1753 = vpop.f32.mrb[0].mxu0
      %v1754 = vadd.f32 0.0, %v1753
      %v1755 = vpop.f32.mrb[0].mxu0
      %v1756 = vpop.f32.mrb[0].mxu0
      %v1757 = vadd.f32 0.0, %v1756
      %v1758 = vpop.f32.mrb[0].mxu0
      %1759 = vmatprep.mubr.bf16.mxu0 0
      %1760 = vmatmul.mubr.bf16.gmra.mrb[0].mxu0 %v1627
      %v1761 = vpop.f32.mrb[0].mxu0
      %v1762 = vadd.f32 0.0, %v1761
      %v1763 = vpop.f32.mrb[0].mxu0
      %v1764 = vpop.f32.mrb[0].mxu0
      %v1765 = vadd.f32 0.0, %v1764
      %v1766 = vpop.f32.mrb[0].mxu0
      %1767 = vmatprep.mubr.bf16.mxu0 0
      %1768 = vmatmul.mubr.bf16.gmra.mrb[0].mxu0 %v1630
      %v1769 = vpop.f32.mrb[0].mxu0
      %v1770 = vadd.f32 0.0, %v1769
      %v1771 = vpop.f32.mrb[0].mxu0
      %v1772 = vpop.f32.mrb[0].mxu0
      %v1773 = vadd.f32 0.0, %v1772
      %v1774 = vpop.f32.mrb[0].mxu0
      %1775 = vmatprep.mubr.bf16.mxu0 0
      %1776 = vmatmul.mubr.bf16.gmra.mrb[0].mxu0 %v1633
      %v1777 = vpop.f32.mrb[0].mxu0
      %v1778 = vadd.f32 0.0, %v1777
      %v1779 = vpop.f32.mrb[0].mxu0
      %v1780 = vpop.f32.mrb[0].mxu0
      %v1781 = vadd.f32 0.0, %v1780
      %v1782 = vpop.f32.mrb[0].mxu0
      %1783 = vmatprep.mubr.bf16.mxu0 0
      %1784 = vmatmul.mubr.bf16.gmra.mrb[0].mxu0 %v1636
      %v1785 = vpop.f32.mrb[0].mxu0
      %v1786 = vadd.f32 0.0, %v1785
      %v1787 = vpop.f32.mrb[0].mxu0
      %v1788 = vpop.f32.mrb[0].mxu0
      %v1789 = vadd.f32 0.0, %v1788
      %v1790 = vpop.f32.mrb[0].mxu0
      %1791 = vmatprep.mubr.bf16.mxu0 0
      %1792 = vmatmul.mubr.bf16.gmra.mrb[0].mxu0 %v1639
      %v1793 = vpop.f32.mrb[0].mxu0
      %v1794 = vadd.f32 0.0, %v1793
      %v1795 = vpop.f32.mrb[0].mxu0
      %v1796 = vpop.f32.mrb[0].mxu0
      %v1797 = vadd.f32 0.0, %v1796
      %v1798 = vpop.f32.mrb[0].mxu0
      %1799 = vmatprep.mubr.bf16.mxu0 0
      %1800 = vmatmul.mubr.bf16.gmra.mrb[0].mxu0 %v1642
      %v1801 = vpop.f32.mrb[0].mxu0
      %v1802 = vadd.f32 0.0, %v1801
      %v1803 = vpop.f32.mrb[0].mxu0
      %v1804 = vpop.f32.mrb[0].mxu0
      %v1805 = vadd.f32 0.0, %v1804
      %v1806 = vpop.f32.mrb[0].mxu0
      %1807 = vdwg.mxu0
      %v1808 = vadd.f32 %v1305, %v1682
      %v1809 = vadd.f32 %v1308, %v1685
      %v1810 = vadd.f32 %v1313, %v1690
      %v1811 = vadd.f32 %v1316, %v1693
      %v1812 = vadd.f32 %v1321, %v1698
      %v1813 = vadd.f32 %v1324, %v1701
      %v1814 = vadd.f32 %v1329, %v1706
      %v1815 = vadd.f32 %v1332, %v1709
      %v1816 = vadd.f32 %v1337, %v1714
      %v1817 = vadd.f32 %v1340, %v1717
      %v1818 = vadd.f32 %v1345, %v1722
      %v1819 = vadd.f32 %v1348, %v1725
      %v1820 = vadd.f32 %v1353, %v1730
      %v1821 = vadd.f32 %v1356, %v1733
      %v1822 = vadd.f32 %v1361, %v1738
      %v1823 = vadd.f32 %v1364, %v1741
      %v1824 = vadd.f32 %v1369, %v1746
      %v1825 = vadd.f32 %v1372, %v1749
      %v1826 = vadd.f32 %v1377, %v1754
      %v1827 = vadd.f32 %v1380, %v1757
      %v1828 = vadd.f32 %v1385, %v1762
      %v1829 = vadd.f32 %v1388, %v1765
      %v1830 = vadd.f32 %v1393, %v1770
      %v1831 = vadd.f32 %v1396, %v1773
      %v1832 = vadd.f32 %v1401, %v1778
      %v1833 = vadd.f32 %v1404, %v1781
      %v1834 = vadd.f32 %v1409, %v1786
      %v1835 = vadd.f32 %v1412, %v1789
      %v1836 = vadd.f32 %v1417, %v1794
      %v1837 = vadd.f32 %v1420, %v1797
      %v1838 = vadd.f32 %v1425, %v1802
      %v1839 = vadd.f32 %v1428, %v1805
      %v1843 = vrot.slane %v280, 5
      %v1844 = vrot.slane %v1843, 4
      %v1845 = vrot.slane %v281, 5
      %v1846 = vsel %vm342, %v1844, %v1845
      %v1847 = vrot.slane %v1845, 4
      %v1848 = vrot.slane %v282, 5
      %v1849 = vsel %vm342, %v1847, %v1848
      %s1850 = scalar_lea.vmem %s1, 6
      %v1851 = vld [vmem:[%s1850] sm:$0x3]
      %v1852 = vunpack.c.l.b16 %v1846
      %v1853 = vunpack.c.l.b16 %v1849
      %v1854 = vpack.c.b16 %v1853, %v1852
      %v1856 = vsel %vm957, %v1854, 0
      %v1859 = vsel %vm1006, %v1851, 0
      %1861 = vmatprep.subr.bf16.mxu0 0
      %1862 = vmatpush1.bf16.msra.mxu0 %v1859
      %1863 = vmatprep.subr.bf16.mxu0 0
      %1864 = vmatpush1.bf16.msra.mxu0 0
      %1865 = vmatprep.subr.bf16.mxu0 0
      %1866 = vmatpush1.bf16.msra.mxu0 0
      %1867 = vmatprep.subr.bf16.mxu0 0
      %1868 = vmatpush1.bf16.msra.mxu0 0
      %1869 = vmatprep.subr.bf16.mxu0 0
      %1870 = vmatpush1.bf16.msra.mxu0 0
      %1871 = vmatprep.subr.bf16.mxu0 0
      %1872 = vmatpush1.bf16.msra.mxu0 0
      %1873 = vmatprep.subr.bf16.mxu0 0
      %1874 = vmatpush1.bf16.msra.mxu0 0
      %1875 = vmatprep.subr.bf16.mxu0 0
      %1876 = vmatpush1.bf16.msra.mxu0 0
      %1877 = vmatprep.subr.bf16.mxu0 0
      %1878 = vmatpush1.bf16.msra.mxu0 0
      %1879 = vmatprep.subr.bf16.mxu0 0
      %1880 = vmatpush1.bf16.msra.mxu0 0
      %1881 = vmatprep.subr.bf16.mxu0 0
      %1882 = vmatpush1.bf16.msra.mxu0 0
      %1883 = vmatprep.subr.bf16.mxu0 0
      %1884 = vmatpush1.bf16.msra.mxu0 0
      %1885 = vmatprep.subr.bf16.mxu0 0
      %1886 = vmatpush1.bf16.msra.mxu0 0
      %1887 = vmatprep.subr.bf16.mxu0 0
      %1888 = vmatpush1.bf16.msra.mxu0 0
      %1889 = vmatprep.subr.bf16.mxu0 0
      %1890 = vmatpush1.bf16.msra.mxu0 0
      %1891 = vmatprep.subr.bf16.mxu0 0
      %1892 = vmatpush1.bf16.msra.mxu0 0
      %1893 = vmatprep.mubr.bf16.mxu0 0
      %1894 = vmatmul.mubr.bf16.gmra.mrb[0].mxu0 %v1223
      %v1895 = vpop.f32.mrb[0].mxu0
      %v1896 = vadd.f32 0.0, %v1895
      %v1897 = vpop.f32.mrb[0].mxu0
      %v1898 = vpop.f32.mrb[0].mxu0
      %v1899 = vadd.f32 0.0, %v1898
      %v1900 = vpop.f32.mrb[0].mxu0
      %1901 = vmatprep.mubr.bf16.mxu0 0
      %1902 = vmatmul.mubr.bf16.gmra.mrb[0].mxu0 %v1226
      %v1903 = vpop.f32.mrb[0].mxu0
      %v1904 = vadd.f32 0.0, %v1903
      %v1905 = vpop.f32.mrb[0].mxu0
      %v1906 = vpop.f32.mrb[0].mxu0
      %v1907 = vadd.f32 0.0, %v1906
      %v1908 = vpop.f32.mrb[0].mxu0
      %1909 = vmatprep.mubr.bf16.mxu0 0
      %1910 = vmatmul.mubr.bf16.gmra.mrb[0].mxu0 %v1229
      %v1911 = vpop.f32.mrb[0].mxu0
      %v1912 = vadd.f32 0.0, %v1911
      %v1913 = vpop.f32.mrb[0].mxu0
      %v1914 = vpop.f32.mrb[0].mxu0
      %v1915 = vadd.f32 0.0, %v1914
      %v1916 = vpop.f32.mrb[0].mxu0
      %1917 = vmatprep.mubr.bf16.mxu0 0
      %1918 = vmatmul.mubr.bf16.gmra.mrb[0].mxu0 %v1232
      %v1919 = vpop.f32.mrb[0].mxu0
      %v1920 = vadd.f32 0.0, %v1919
      %v1921 = vpop.f32.mrb[0].mxu0
      %v1922 = vpop.f32.mrb[0].mxu0
      %v1923 = vadd.f32 0.0, %v1922
      %v1924 = vpop.f32.mrb[0].mxu0
      %1925 = vmatprep.mubr.bf16.mxu0 0
      %1926 = vmatmul.mubr.bf16.gmra.mrb[0].mxu0 %v1235
      %v1927 = vpop.f32.mrb[0].mxu0
      %v1928 = vadd.f32 0.0, %v1927
      %v1929 = vpop.f32.mrb[0].mxu0
      %v1930 = vpop.f32.mrb[0].mxu0
      %v1931 = vadd.f32 0.0, %v1930
      %v1932 = vpop.f32.mrb[0].mxu0
      %1933 = vmatprep.mubr.bf16.mxu0 0
      %1934 = vmatmul.mubr.bf16.gmra.mrb[0].mxu0 %v1238
      %v1935 = vpop.f32.mrb[0].mxu0
      %v1936 = vadd.f32 0.0, %v1935
      %v1937 = vpop.f32.mrb[0].mxu0
      %v1938 = vpop.f32.mrb[0].mxu0
      %v1939 = vadd.f32 0.0, %v1938
      %v1940 = vpop.f32.mrb[0].mxu0
      %1941 = vmatprep.mubr.bf16.mxu0 0
      %1942 = vmatmul.mubr.bf16.gmra.mrb[0].mxu0 %v1241
      %v1943 = vpop.f32.mrb[0].mxu0
      %v1944 = vadd.f32 0.0, %v1943
      %v1945 = vpop.f32.mrb[0].mxu0
      %v1946 = vpop.f32.mrb[0].mxu0
      %v1947 = vadd.f32 0.0, %v1946
      %v1948 = vpop.f32.mrb[0].mxu0
      %1949 = vmatprep.mubr.bf16.mxu0 0
      %1950 = vmatmul.mubr.bf16.gmra.mrb[0].mxu0 %v1244
      %v1951 = vpop.f32.mrb[0].mxu0
      %v1952 = vadd.f32 0.0, %v1951
      %v1953 = vpop.f32.mrb[0].mxu0
      %v1954 = vpop.f32.mrb[0].mxu0
      %v1955 = vadd.f32 0.0, %v1954
      %v1956 = vpop.f32.mrb[0].mxu0
      %1957 = vmatprep.mubr.bf16.mxu0 0
      %1958 = vmatmul.mubr.bf16.gmra.mrb[0].mxu0 %v1247
      %v1959 = vpop.f32.mrb[0].mxu0
      %v1960 = vadd.f32 0.0, %v1959
      %v1961 = vpop.f32.mrb[0].mxu0
      %v1962 = vpop.f32.mrb[0].mxu0
      %v1963 = vadd.f32 0.0, %v1962
      %v1964 = vpop.f32.mrb[0].mxu0
      %1965 = vmatprep.mubr.bf16.mxu0 0
      %1966 = vmatmul.mubr.bf16.gmra.mrb[0].mxu0 %v1250
      %v1967 = vpop.f32.mrb[0].mxu0
      %v1968 = vadd.f32 0.0, %v1967
      %v1969 = vpop.f32.mrb[0].mxu0
      %v1970 = vpop.f32.mrb[0].mxu0
      %v1971 = vadd.f32 0.0, %v1970
      %v1972 = vpop.f32.mrb[0].mxu0
      %1973 = vmatprep.mubr.bf16.mxu0 0
      %1974 = vmatmul.mubr.bf16.gmra.mrb[0].mxu0 %v1253
      %v1975 = vpop.f32.mrb[0].mxu0
      %v1976 = vadd.f32 0.0, %v1975
      %v1977 = vpop.f32.mrb[0].mxu0
      %v1978 = vpop.f32.mrb[0].mxu0
      %v1979 = vadd.f32 0.0, %v1978
      %v1980 = vpop.f32.mrb[0].mxu0
      %1981 = vmatprep.mubr.bf16.mxu0 0
      %1982 = vmatmul.mubr.bf16.gmra.mrb[0].mxu0 %v1256
      %v1983 = vpop.f32.mrb[0].mxu0
      %v1984 = vadd.f32 0.0, %v1983
      %v1985 = vpop.f32.mrb[0].mxu0
      %v1986 = vpop.f32.mrb[0].mxu0
      %v1987 = vadd.f32 0.0, %v1986
      %v1988 = vpop.f32.mrb[0].mxu0
      %1989 = vmatprep.mubr.bf16.mxu0 0
      %1990 = vmatmul.mubr.bf16.gmra.mrb[0].mxu0 %v1259
      %v1991 = vpop.f32.mrb[0].mxu0
      %v1992 = vadd.f32 0.0, %v1991
      %v1993 = vpop.f32.mrb[0].mxu0
      %v1994 = vpop.f32.mrb[0].mxu0
      %v1995 = vadd.f32 0.0, %v1994
      %v1996 = vpop.f32.mrb[0].mxu0
      %1997 = vmatprep.mubr.bf16.mxu0 0
      %1998 = vmatmul.mubr.bf16.gmra.mrb[0].mxu0 %v1262
      %v1999 = vpop.f32.mrb[0].mxu0
      %v2000 = vadd.f32 0.0, %v1999
      %v2001 = vpop.f32.mrb[0].mxu0
      %v2002 = vpop.f32.mrb[0].mxu0
      %v2003 = vadd.f32 0.0, %v2002
      %v2004 = vpop.f32.mrb[0].mxu0
      %2005 = vmatprep.mubr.bf16.mxu0 0
      %2006 = vmatmul.mubr.bf16.gmra.mrb[0].mxu0 %v1265
      %v2007 = vpop.f32.mrb[0].mxu0
      %v2008 = vadd.f32 0.0, %v2007
      %v2009 = vpop.f32.mrb[0].mxu0
      %v2010 = vpop.f32.mrb[0].mxu0
      %v2011 = vadd.f32 0.0, %v2010
      %v2012 = vpop.f32.mrb[0].mxu0
      %2013 = vmatprep.mubr.bf16.mxu0 0
      %2014 = vmatmul.mubr.bf16.gmra.mrb[0].mxu0 %v1856
      %v2015 = vpop.f32.mrb[0].mxu0
      %v2016 = vadd.f32 0.0, %v2015
      %v2017 = vpop.f32.mrb[0].mxu0
      %v2018 = vpop.f32.mrb[0].mxu0
      %v2019 = vadd.f32 0.0, %v2018
      %v2020 = vpop.f32.mrb[0].mxu0
      %2021 = vdwg.mxu0
      %v2022 = vadd.f32 %v1808, %v1896
      %v2023 = vadd.f32 %v1809, %v1899
      %v2024 = vadd.f32 %v1810, %v1904
      %v2025 = vadd.f32 %v1811, %v1907
      %v2026 = vadd.f32 %v1812, %v1912
      %v2027 = vadd.f32 %v1813, %v1915
      %v2028 = vadd.f32 %v1814, %v1920
      %v2029 = vadd.f32 %v1815, %v1923
      %v2030 = vadd.f32 %v1816, %v1928
      %v2031 = vadd.f32 %v1817, %v1931
      %v2032 = vadd.f32 %v1818, %v1936
      %v2033 = vadd.f32 %v1819, %v1939
      %v2034 = vadd.f32 %v1820, %v1944
      %v2035 = vadd.f32 %v1821, %v1947
      %v2036 = vadd.f32 %v1822, %v1952
      %v2037 = vadd.f32 %v1823, %v1955
      %v2038 = vadd.f32 %v1824, %v1960
      %v2039 = vadd.f32 %v1825, %v1963
      %v2040 = vadd.f32 %v1826, %v1968
      %v2041 = vadd.f32 %v1827, %v1971
      %v2042 = vadd.f32 %v1828, %v1976
      %v2043 = vadd.f32 %v1829, %v1979
      %v2044 = vadd.f32 %v1830, %v1984
      %v2045 = vadd.f32 %v1831, %v1987
      %v2046 = vadd.f32 %v1832, %v1992
      %v2047 = vadd.f32 %v1833, %v1995
      %v2048 = vadd.f32 %v1834, %v2000
      %v2049 = vadd.f32 %v1835, %v2003
      %v2050 = vadd.f32 %v1836, %v2008
      %v2051 = vadd.f32 %v1837, %v2011
      %v2052 = vadd.f32 %v1838, %v2016
      %v2053 = vadd.f32 %v1839, %v2019
      %v2055 = vshrl.u32 %v280, 16
      %v2057 = vrot.slane %v2055, 5
      %v2058 = vshll.u32 %v280, 16
      %v2060 = vrot.slane %v2058, 6
      %v2061 = vor.u32 %v2057, %v2060
      %v2062 = vrot.slane %v2061, 4
      %v2064 = vshrl.u32 %v281, 16
      %v2066 = vrot.slane %v2064, 5
      %v2067 = vshll.u32 %v281, 16
      %v2069 = vrot.slane %v2067, 6
      %v2070 = vor.u32 %v2066, %v2069
      %v2071 = vsel %vm458, %v2062, %v2070
      %v2072 = vrot.slane %v2070, 4
      %v2074 = vshrl.u32 %v282, 16
      %v2076 = vrot.slane %v2074, 5
      %v2077 = vshll.u32 %v282, 16
      %v2079 = vrot.slane %v2077, 6
      %v2080 = vor.u32 %v2076, %v2079
      %v2081 = vsel %vm458, %v2072, %v2080
      %s2082 = scalar_lea.vmem %s1, 8
      %v2083 = vld [vmem:[%s2082] sm:$0x3]
      %v2084 = vunpack.c.l.b16 %v2071
      %v2085 = vunpack.c.l.b16 %v2081
      %v2086 = vpack.c.b16 %v2085, %v2084
      %v2088 = vsel %vm957, %v2086, 0
      %v2091 = vsel %vm1006, %v2083, 0
      %2093 = vmatprep.subr.bf16.mxu0 0
      %2094 = vmatpush1.bf16.msra.mxu0 %v2091
      %2095 = vmatprep.subr.bf16.mxu0 0
      %2096 = vmatpush1.bf16.msra.mxu0 0
      %2097 = vmatprep.subr.bf16.mxu0 0
      %2098 = vmatpush1.bf16.msra.mxu0 0
      %2099 = vmatprep.subr.bf16.mxu0 0
      %2100 = vmatpush1.bf16.msra.mxu0 0
      %2101 = vmatprep.subr.bf16.mxu0 0
      %2102 = vmatpush1.bf16.msra.mxu0 0
      %2103 = vmatprep.subr.bf16.mxu0 0
      %2104 = vmatpush1.bf16.msra.mxu0 0
      %2105 = vmatprep.subr.bf16.mxu0 0
      %2106 = vmatpush1.bf16.msra.mxu0 0
      %2107 = vmatprep.subr.bf16.mxu0 0
      %2108 = vmatpush1.bf16.msra.mxu0 0
      %2109 = vmatprep.subr.bf16.mxu0 0
      %2110 = vmatpush1.bf16.msra.mxu0 0
      %2111 = vmatprep.subr.bf16.mxu0 0
      %2112 = vmatpush1.bf16.msra.mxu0 0
      %2113 = vmatprep.subr.bf16.mxu0 0
      %2114 = vmatpush1.bf16.msra.mxu0 0
      %2115 = vmatprep.subr.bf16.mxu0 0
      %2116 = vmatpush1.bf16.msra.mxu0 0
      %2117 = vmatprep.subr.bf16.mxu0 0
      %2118 = vmatpush1.bf16.msra.mxu0 0
      %2119 = vmatprep.subr.bf16.mxu0 0
      %2120 = vmatpush1.bf16.msra.mxu0 0
      %2121 = vmatprep.subr.bf16.mxu0 0
      %2122 = vmatpush1.bf16.msra.mxu0 0
      %2123 = vmatprep.subr.bf16.mxu0 0
      %2124 = vmatpush1.bf16.msra.mxu0 0
      %2125 = vmatprep.mubr.bf16.mxu0 0
      %2126 = vmatmul.mubr.bf16.gmra.mrb[0].mxu0 %v962
      %v2127 = vpop.f32.mrb[0].mxu0
      %v2128 = vadd.f32 0.0, %v2127
      %v2129 = vpop.f32.mrb[0].mxu0
      %v2130 = vpop.f32.mrb[0].mxu0
      %v2131 = vadd.f32 0.0, %v2130
      %v2132 = vpop.f32.mrb[0].mxu0
      %2133 = vmatprep.mubr.bf16.mxu0 0
      %2134 = vmatmul.mubr.bf16.gmra.mrb[0].mxu0 %v965
      %v2135 = vpop.f32.mrb[0].mxu0
      %v2136 = vadd.f32 0.0, %v2135
      %v2137 = vpop.f32.mrb[0].mxu0
      %v2138 = vpop.f32.mrb[0].mxu0
      %v2139 = vadd.f32 0.0, %v2138
      %v2140 = vpop.f32.mrb[0].mxu0
      %2141 = vmatprep.mubr.bf16.mxu0 0
      %2142 = vmatmul.mubr.bf16.gmra.mrb[0].mxu0 %v968
      %v2143 = vpop.f32.mrb[0].mxu0
      %v2144 = vadd.f32 0.0, %v2143
      %v2145 = vpop.f32.mrb[0].mxu0
      %v2146 = vpop.f32.mrb[0].mxu0
      %v2147 = vadd.f32 0.0, %v2146
      %v2148 = vpop.f32.mrb[0].mxu0
      %2149 = vmatprep.mubr.bf16.mxu0 0
      %2150 = vmatmul.mubr.bf16.gmra.mrb[0].mxu0 %v971
      %v2151 = vpop.f32.mrb[0].mxu0
      %v2152 = vadd.f32 0.0, %v2151
      %v2153 = vpop.f32.mrb[0].mxu0
      %v2154 = vpop.f32.mrb[0].mxu0
      %v2155 = vadd.f32 0.0, %v2154
      %v2156 = vpop.f32.mrb[0].mxu0
      %2157 = vmatprep.mubr.bf16.mxu0 0
      %2158 = vmatmul.mubr.bf16.gmra.mrb[0].mxu0 %v974
      %v2159 = vpop.f32.mrb[0].mxu0
      %v2160 = vadd.f32 0.0, %v2159
      %v2161 = vpop.f32.mrb[0].mxu0
      %v2162 = vpop.f32.mrb[0].mxu0
      %v2163 = vadd.f32 0.0, %v2162
      %v2164 = vpop.f32.mrb[0].mxu0
      %2165 = vmatprep.mubr.bf16.mxu0 0
      %2166 = vmatmul.mubr.bf16.gmra.mrb[0].mxu0 %v977
      %v2167 = vpop.f32.mrb[0].mxu0
      %v2168 = vadd.f32 0.0, %v2167
      %v2169 = vpop.f32.mrb[0].mxu0
      %v2170 = vpop.f32.mrb[0].mxu0
      %v2171 = vadd.f32 0.0, %v2170
      %v2172 = vpop.f32.mrb[0].mxu0
      %2173 = vmatprep.mubr.bf16.mxu0 0
      %2174 = vmatmul.mubr.bf16.gmra.mrb[0].mxu0 %v980
      %v2175 = vpop.f32.mrb[0].mxu0
      %v2176 = vadd.f32 0.0, %v2175
      %v2177 = vpop.f32.mrb[0].mxu0
      %v2178 = vpop.f32.mrb[0].mxu0
      %v2179 = vadd.f32 0.0, %v2178
      %v2180 = vpop.f32.mrb[0].mxu0
      %2181 = vmatprep.mubr.bf16.mxu0 0
      %2182 = vmatmul.mubr.bf16.gmra.mrb[0].mxu0 %v983
      %v2183 = vpop.f32.mrb[0].mxu0
      %v2184 = vadd.f32 0.0, %v2183
      %v2185 = vpop.f32.mrb[0].mxu0
      %v2186 = vpop.f32.mrb[0].mxu0
      %v2187 = vadd.f32 0.0, %v2186
      %v2188 = vpop.f32.mrb[0].mxu0
      %2189 = vmatprep.mubr.bf16.mxu0 0
      %2190 = vmatmul.mubr.bf16.gmra.mrb[0].mxu0 %v986
      %v2191 = vpop.f32.mrb[0].mxu0
      %v2192 = vadd.f32 0.0, %v2191
      %v2193 = vpop.f32.mrb[0].mxu0
      %v2194 = vpop.f32.mrb[0].mxu0
      %v2195 = vadd.f32 0.0, %v2194
      %v2196 = vpop.f32.mrb[0].mxu0
      %2197 = vmatprep.mubr.bf16.mxu0 0
      %2198 = vmatmul.mubr.bf16.gmra.mrb[0].mxu0 %v989
      %v2199 = vpop.f32.mrb[0].mxu0
      %v2200 = vadd.f32 0.0, %v2199
      %v2201 = vpop.f32.mrb[0].mxu0
      %v2202 = vpop.f32.mrb[0].mxu0
      %v2203 = vadd.f32 0.0, %v2202
      %v2204 = vpop.f32.mrb[0].mxu0
      %2205 = vmatprep.mubr.bf16.mxu0 0
      %2206 = vmatmul.mubr.bf16.gmra.mrb[0].mxu0 %v992
      %v2207 = vpop.f32.mrb[0].mxu0
      %v2208 = vadd.f32 0.0, %v2207
      %v2209 = vpop.f32.mrb[0].mxu0
      %v2210 = vpop.f32.mrb[0].mxu0
      %v2211 = vadd.f32 0.0, %v2210
      %v2212 = vpop.f32.mrb[0].mxu0
      %2213 = vmatprep.mubr.bf16.mxu0 0
      %2214 = vmatmul.mubr.bf16.gmra.mrb[0].mxu0 %v995
      %v2215 = vpop.f32.mrb[0].mxu0
      %v2216 = vadd.f32 0.0, %v2215
      %v2217 = vpop.f32.mrb[0].mxu0
      %v2218 = vpop.f32.mrb[0].mxu0
      %v2219 = vadd.f32 0.0, %v2218
      %v2220 = vpop.f32.mrb[0].mxu0
      %2221 = vmatprep.mubr.bf16.mxu0 0
      %2222 = vmatmul.mubr.bf16.gmra.mrb[0].mxu0 %v998
      %v2223 = vpop.f32.mrb[0].mxu0
      %v2224 = vadd.f32 0.0, %v2223
      %v2225 = vpop.f32.mrb[0].mxu0
      %v2226 = vpop.f32.mrb[0].mxu0
      %v2227 = vadd.f32 0.0, %v2226
      %v2228 = vpop.f32.mrb[0].mxu0
      %2229 = vmatprep.mubr.bf16.mxu0 0
      %2230 = vmatmul.mubr.bf16.gmra.mrb[0].mxu0 %v1001
      %v2231 = vpop.f32.mrb[0].mxu0
      %v2232 = vadd.f32 0.0, %v2231
      %v2233 = vpop.f32.mrb[0].mxu0
      %v2234 = vpop.f32.mrb[0].mxu0
      %v2235 = vadd.f32 0.0, %v2234
      %v2236 = vpop.f32.mrb[0].mxu0
      %2237 = vmatprep.mubr.bf16.mxu0 0
      %2238 = vmatmul.mubr.bf16.gmra.mrb[0].mxu0 %v1004
      %v2239 = vpop.f32.mrb[0].mxu0
      %v2240 = vadd.f32 0.0, %v2239
      %v2241 = vpop.f32.mrb[0].mxu0
      %v2242 = vpop.f32.mrb[0].mxu0
      %v2243 = vadd.f32 0.0, %v2242
      %v2244 = vpop.f32.mrb[0].mxu0
      %2245 = vmatprep.mubr.bf16.mxu0 0
      %2246 = vmatmul.mubr.bf16.gmra.mrb[0].mxu0 %v2088
      %v2247 = vpop.f32.mrb[0].mxu0
      %v2248 = vadd.f32 0.0, %v2247
      %v2249 = vpop.f32.mrb[0].mxu0
      %v2250 = vpop.f32.mrb[0].mxu0
      %v2251 = vadd.f32 0.0, %v2250
      %v2252 = vpop.f32.mrb[0].mxu0
      %2253 = vdwg.mxu0
      %v2254 = vadd.f32 %v2022, %v2128
      %v2255 = vadd.f32 %v2023, %v2131
      %v2256 = vadd.f32 %v2024, %v2136
      %v2257 = vadd.f32 %v2025, %v2139
      %v2258 = vadd.f32 %v2026, %v2144
      %v2259 = vadd.f32 %v2027, %v2147
      %v2260 = vadd.f32 %v2028, %v2152
      %v2261 = vadd.f32 %v2029, %v2155
      %v2262 = vadd.f32 %v2030, %v2160
      %v2263 = vadd.f32 %v2031, %v2163
      %v2264 = vadd.f32 %v2032, %v2168
      %v2265 = vadd.f32 %v2033, %v2171
      %v2266 = vadd.f32 %v2034, %v2176
      %v2267 = vadd.f32 %v2035, %v2179
      %v2268 = vadd.f32 %v2036, %v2184
      %v2269 = vadd.f32 %v2037, %v2187
      %v2270 = vadd.f32 %v2038, %v2192
      %v2271 = vadd.f32 %v2039, %v2195
      %v2272 = vadd.f32 %v2040, %v2200
      %v2273 = vadd.f32 %v2041, %v2203
      %v2274 = vadd.f32 %v2042, %v2208
      %v2275 = vadd.f32 %v2043, %v2211
      %v2276 = vadd.f32 %v2044, %v2216
      %v2277 = vadd.f32 %v2045, %v2219
      %v2278 = vadd.f32 %v2046, %v2224
      %v2279 = vadd.f32 %v2047, %v2227
      %v2280 = vadd.f32 %v2048, %v2232
      %v2281 = vadd.f32 %v2049, %v2235
      %v2282 = vadd.f32 %v2050, %v2240
      %v2283 = vadd.f32 %v2051, %v2243
      %v2284 = vadd.f32 %v2052, %v2248
      %v2285 = vadd.f32 %v2053, %v2251
      %v2286 = vrot.slane %v280, 6
      %v2287 = vrot.slane %v2286, 4
      %v2288 = vrot.slane %v281, 6
      %v2289 = vsel %vm1433, %v2287, %v2288
      %v2290 = vrot.slane %v2288, 4
      %v2291 = vrot.slane %v282, 6
      %v2292 = vsel %vm1433, %v2290, %v2291
      %s2293 = scalar_lea.vmem %s1, 10
      %v2294 = vld [vmem:[%s2293] sm:$0x3]
      %v2295 = vunpack.c.l.b16 %v2289
      %v2296 = vunpack.c.l.b16 %v2292
      %v2297 = vpack.c.b16 %v2296, %v2295
      %v2299 = vsel %vm957, %v2297, 0
      %v2302 = vsel %vm1006, %v2294, 0
      %2304 = vmatprep.subr.bf16.mxu0 0
      %2305 = vmatpush1.bf16.msra.mxu0 %v2302
      %2306 = vmatprep.subr.bf16.mxu0 0
      %2307 = vmatpush1.bf16.msra.mxu0 0
      %2308 = vmatprep.subr.bf16.mxu0 0
      %2309 = vmatpush1.bf16.msra.mxu0 0
      %2310 = vmatprep.subr.bf16.mxu0 0
      %2311 = vmatpush1.bf16.msra.mxu0 0
      %2312 = vmatprep.subr.bf16.mxu0 0
      %2313 = vmatpush1.bf16.msra.mxu0 0
      %2314 = vmatprep.subr.bf16.mxu0 0
      %2315 = vmatpush1.bf16.msra.mxu0 0
      %2316 = vmatprep.subr.bf16.mxu0 0
      %2317 = vmatpush1.bf16.msra.mxu0 0
      %2318 = vmatprep.subr.bf16.mxu0 0
      %2319 = vmatpush1.bf16.msra.mxu0 0
      %2320 = vmatprep.subr.bf16.mxu0 0
      %2321 = vmatpush1.bf16.msra.mxu0 0
      %2322 = vmatprep.subr.bf16.mxu0 0
      %2323 = vmatpush1.bf16.msra.mxu0 0
      %2324 = vmatprep.subr.bf16.mxu0 0
      %2325 = vmatpush1.bf16.msra.mxu0 0
      %2326 = vmatprep.subr.bf16.mxu0 0
      %2327 = vmatpush1.bf16.msra.mxu0 0
      %2328 = vmatprep.subr.bf16.mxu0 0
      %2329 = vmatpush1.bf16.msra.mxu0 0
      %2330 = vmatprep.subr.bf16.mxu0 0
      %2331 = vmatpush1.bf16.msra.mxu0 0
      %2332 = vmatprep.subr.bf16.mxu0 0
      %2333 = vmatpush1.bf16.msra.mxu0 0
      %2334 = vmatprep.subr.bf16.mxu0 0
      %2335 = vmatpush1.bf16.msra.mxu0 0
      %2336 = vmatprep.mubr.bf16.mxu0 0
      %2337 = vmatmul.mubr.bf16.gmra.mrb[0].mxu0 %v1600
      %v2338 = vpop.f32.mrb[0].mxu0
      %v2339 = vadd.f32 0.0, %v2338
      %v2340 = vpop.f32.mrb[0].mxu0
      %v2341 = vpop.f32.mrb[0].mxu0
      %v2342 = vadd.f32 0.0, %v2341
      %v2343 = vpop.f32.mrb[0].mxu0
      %2344 = vmatprep.mubr.bf16.mxu0 0
      %2345 = vmatmul.mubr.bf16.gmra.mrb[0].mxu0 %v1603
      %v2346 = vpop.f32.mrb[0].mxu0
      %v2347 = vadd.f32 0.0, %v2346
      %v2348 = vpop.f32.mrb[0].mxu0
      %v2349 = vpop.f32.mrb[0].mxu0
      %v2350 = vadd.f32 0.0, %v2349
      %v2351 = vpop.f32.mrb[0].mxu0
      %2352 = vmatprep.mubr.bf16.mxu0 0
      %2353 = vmatmul.mubr.bf16.gmra.mrb[0].mxu0 %v1606
      %v2354 = vpop.f32.mrb[0].mxu0
      %v2355 = vadd.f32 0.0, %v2354
      %v2356 = vpop.f32.mrb[0].mxu0
      %v2357 = vpop.f32.mrb[0].mxu0
      %v2358 = vadd.f32 0.0, %v2357
      %v2359 = vpop.f32.mrb[0].mxu0
      %2360 = vmatprep.mubr.bf16.mxu0 0
      %2361 = vmatmul.mubr.bf16.gmra.mrb[0].mxu0 %v1609
      %v2362 = vpop.f32.mrb[0].mxu0
      %v2363 = vadd.f32 0.0, %v2362
      %v2364 = vpop.f32.mrb[0].mxu0
      %v2365 = vpop.f32.mrb[0].mxu0
      %v2366 = vadd.f32 0.0, %v2365
      %v2367 = vpop.f32.mrb[0].mxu0
      %2368 = vmatprep.mubr.bf16.mxu0 0
      %2369 = vmatmul.mubr.bf16.gmra.mrb[0].mxu0 %v1612
      %v2370 = vpop.f32.mrb[0].mxu0
      %v2371 = vadd.f32 0.0, %v2370
      %v2372 = vpop.f32.mrb[0].mxu0
      %v2373 = vpop.f32.mrb[0].mxu0
      %v2374 = vadd.f32 0.0, %v2373
      %v2375 = vpop.f32.mrb[0].mxu0
      %2376 = vmatprep.mubr.bf16.mxu0 0
      %2377 = vmatmul.mubr.bf16.gmra.mrb[0].mxu0 %v1615
      %v2378 = vpop.f32.mrb[0].mxu0
      %v2379 = vadd.f32 0.0, %v2378
      %v2380 = vpop.f32.mrb[0].mxu0
      %v2381 = vpop.f32.mrb[0].mxu0
      %v2382 = vadd.f32 0.0, %v2381
      %v2383 = vpop.f32.mrb[0].mxu0
      %2384 = vmatprep.mubr.bf16.mxu0 0
      %2385 = vmatmul.mubr.bf16.gmra.mrb[0].mxu0 %v1618
      %v2386 = vpop.f32.mrb[0].mxu0
      %v2387 = vadd.f32 0.0, %v2386
      %v2388 = vpop.f32.mrb[0].mxu0
      %v2389 = vpop.f32.mrb[0].mxu0
      %v2390 = vadd.f32 0.0, %v2389
      %v2391 = vpop.f32.mrb[0].mxu0
      %2392 = vmatprep.mubr.bf16.mxu0 0
      %2393 = vmatmul.mubr.bf16.gmra.mrb[0].mxu0 %v1621
      %v2394 = vpop.f32.mrb[0].mxu0
      %v2395 = vadd.f32 0.0, %v2394
      %v2396 = vpop.f32.mrb[0].mxu0
      %v2397 = vpop.f32.mrb[0].mxu0
      %v2398 = vadd.f32 0.0, %v2397
      %v2399 = vpop.f32.mrb[0].mxu0
      %2400 = vmatprep.mubr.bf16.mxu0 0
      %2401 = vmatmul.mubr.bf16.gmra.mrb[0].mxu0 %v1624
      %v2402 = vpop.f32.mrb[0].mxu0
      %v2403 = vadd.f32 0.0, %v2402
      %v2404 = vpop.f32.mrb[0].mxu0
      %v2405 = vpop.f32.mrb[0].mxu0
      %v2406 = vadd.f32 0.0, %v2405
      %v2407 = vpop.f32.mrb[0].mxu0
      %2408 = vmatprep.mubr.bf16.mxu0 0
      %2409 = vmatmul.mubr.bf16.gmra.mrb[0].mxu0 %v1627
      %v2410 = vpop.f32.mrb[0].mxu0
      %v2411 = vadd.f32 0.0, %v2410
      %v2412 = vpop.f32.mrb[0].mxu0
      %v2413 = vpop.f32.mrb[0].mxu0
      %v2414 = vadd.f32 0.0, %v2413
      %v2415 = vpop.f32.mrb[0].mxu0
      %2416 = vmatprep.mubr.bf16.mxu0 0
      %2417 = vmatmul.mubr.bf16.gmra.mrb[0].mxu0 %v1630
      %v2418 = vpop.f32.mrb[0].mxu0
      %v2419 = vadd.f32 0.0, %v2418
      %v2420 = vpop.f32.mrb[0].mxu0
      %v2421 = vpop.f32.mrb[0].mxu0
      %v2422 = vadd.f32 0.0, %v2421
      %v2423 = vpop.f32.mrb[0].mxu0
      %2424 = vmatprep.mubr.bf16.mxu0 0
      %2425 = vmatmul.mubr.bf16.gmra.mrb[0].mxu0 %v1633
      %v2426 = vpop.f32.mrb[0].mxu0
      %v2427 = vadd.f32 0.0, %v2426
      %v2428 = vpop.f32.mrb[0].mxu0
      %v2429 = vpop.f32.mrb[0].mxu0
      %v2430 = vadd.f32 0.0, %v2429
      %v2431 = vpop.f32.mrb[0].mxu0
      %2432 = vmatprep.mubr.bf16.mxu0 0
      %2433 = vmatmul.mubr.bf16.gmra.mrb[0].mxu0 %v1636
      %v2434 = vpop.f32.mrb[0].mxu0
      %v2435 = vadd.f32 0.0, %v2434
      %v2436 = vpop.f32.mrb[0].mxu0
      %v2437 = vpop.f32.mrb[0].mxu0
      %v2438 = vadd.f32 0.0, %v2437
      %v2439 = vpop.f32.mrb[0].mxu0
      %2440 = vmatprep.mubr.bf16.mxu0 0
      %2441 = vmatmul.mubr.bf16.gmra.mrb[0].mxu0 %v1639
      %v2442 = vpop.f32.mrb[0].mxu0
      %v2443 = vadd.f32 0.0, %v2442
      %v2444 = vpop.f32.mrb[0].mxu0
      %v2445 = vpop.f32.mrb[0].mxu0
      %v2446 = vadd.f32 0.0, %v2445
      %v2447 = vpop.f32.mrb[0].mxu0
      %2448 = vmatprep.mubr.bf16.mxu0 0
      %2449 = vmatmul.mubr.bf16.gmra.mrb[0].mxu0 %v1642
      %v2450 = vpop.f32.mrb[0].mxu0
      %v2451 = vadd.f32 0.0, %v2450
      %v2452 = vpop.f32.mrb[0].mxu0
      %v2453 = vpop.f32.mrb[0].mxu0
      %v2454 = vadd.f32 0.0, %v2453
      %v2455 = vpop.f32.mrb[0].mxu0
      %2456 = vmatprep.mubr.bf16.mxu0 0
      %2457 = vmatmul.mubr.bf16.gmra.mrb[0].mxu0 %v2299
      %v2458 = vpop.f32.mrb[0].mxu0
      %v2459 = vadd.f32 0.0, %v2458
      %v2460 = vpop.f32.mrb[0].mxu0
      %v2461 = vpop.f32.mrb[0].mxu0
      %v2462 = vadd.f32 0.0, %v2461
      %v2463 = vpop.f32.mrb[0].mxu0
      %2464 = vdwg.mxu0
      %v2465 = vadd.f32 %v2254, %v2339
      %v2466 = vadd.f32 %v2255, %v2342
      %v2467 = vadd.f32 %v2256, %v2347
      %v2468 = vadd.f32 %v2257, %v2350
      %v2469 = vadd.f32 %v2258, %v2355
      %v2470 = vadd.f32 %v2259, %v2358
      %v2471 = vadd.f32 %v2260, %v2363
      %v2472 = vadd.f32 %v2261, %v2366
      %v2473 = vadd.f32 %v2262, %v2371
      %v2474 = vadd.f32 %v2263, %v2374
      %v2475 = vadd.f32 %v2264, %v2379
      %v2476 = vadd.f32 %v2265, %v2382
      %v2477 = vadd.f32 %v2266, %v2387
      %v2478 = vadd.f32 %v2267, %v2390
      %v2479 = vadd.f32 %v2268, %v2395
      %v2480 = vadd.f32 %v2269, %v2398
      %v2481 = vadd.f32 %v2270, %v2403
      %v2482 = vadd.f32 %v2271, %v2406
      %v2483 = vadd.f32 %v2272, %v2411
      %v2484 = vadd.f32 %v2273, %v2414
      %v2485 = vadd.f32 %v2274, %v2419
      %v2486 = vadd.f32 %v2275, %v2422
      %v2487 = vadd.f32 %v2276, %v2427
      %v2488 = vadd.f32 %v2277, %v2430
      %v2489 = vadd.f32 %v2278, %v2435
      %v2490 = vadd.f32 %v2279, %v2438
      %v2491 = vadd.f32 %v2280, %v2443
      %v2492 = vadd.f32 %v2281, %v2446
      %v2493 = vadd.f32 %v2282, %v2451
      %v2494 = vadd.f32 %v2283, %v2454
      %v2495 = vadd.f32 %v2284, %v2459
      %v2496 = vadd.f32 %v2285, %v2462
      %v2500 = vrot.slane %v283, 5
      %v2501 = vrot.slane %v2500, 4
      %v2502 = vrot.slane %v284, 5
      %v2503 = vsel %vm342, %v2501, %v2502
      %v2504 = vrot.slane %v2502, 4
      %v2505 = vrot.slane %v285, 5
      %v2506 = vsel %vm342, %v2504, %v2505
      %s2507 = scalar_lea.vmem %s1, 12
      %v2508 = vld [vmem:[%s2507] sm:$0x3]
      %v2509 = vunpack.c.l.b16 %v2503
      %v2510 = vunpack.c.l.b16 %v2506
      %v2511 = vpack.c.b16 %v2510, %v2509
      %v2513 = vsel %vm957, %v2511, 0
      %v2516 = vsel %vm1006, %v2508, 0
      %2518 = vmatprep.subr.bf16.mxu0 0
      %2519 = vmatpush1.bf16.msra.mxu0 %v2516
      %2520 = vmatprep.subr.bf16.mxu0 0
      %2521 = vmatpush1.bf16.msra.mxu0 0
      %2522 = vmatprep.subr.bf16.mxu0 0
      %2523 = vmatpush1.bf16.msra.mxu0 0
      %2524 = vmatprep.subr.bf16.mxu0 0
      %2525 = vmatpush1.bf16.msra.mxu0 0
      %2526 = vmatprep.subr.bf16.mxu0 0
      %2527 = vmatpush1.bf16.msra.mxu0 0
      %2528 = vmatprep.subr.bf16.mxu0 0
      %2529 = vmatpush1.bf16.msra.mxu0 0
      %2530 = vmatprep.subr.bf16.mxu0 0
      %2531 = vmatpush1.bf16.msra.mxu0 0
      %2532 = vmatprep.subr.bf16.mxu0 0
      %2533 = vmatpush1.bf16.msra.mxu0 0
      %2534 = vmatprep.subr.bf16.mxu0 0
      %2535 = vmatpush1.bf16.msra.mxu0 0
      %2536 = vmatprep.subr.bf16.mxu0 0
      %2537 = vmatpush1.bf16.msra.mxu0 0
      %2538 = vmatprep.subr.bf16.mxu0 0
      %2539 = vmatpush1.bf16.msra.mxu0 0
      %2540 = vmatprep.subr.bf16.mxu0 0
      %2541 = vmatpush1.bf16.msra.mxu0 0
      %2542 = vmatprep.subr.bf16.mxu0 0
      %2543 = vmatpush1.bf16.msra.mxu0 0
      %2544 = vmatprep.subr.bf16.mxu0 0
      %2545 = vmatpush1.bf16.msra.mxu0 0
      %2546 = vmatprep.subr.bf16.mxu0 0
      %2547 = vmatpush1.bf16.msra.mxu0 0
      %2548 = vmatprep.subr.bf16.mxu0 0
      %2549 = vmatpush1.bf16.msra.mxu0 0
      %2550 = vmatprep.mubr.bf16.mxu0 0
      %2551 = vmatmul.mubr.bf16.gmra.mrb[0].mxu0 %v1226
      %v2552 = vpop.f32.mrb[0].mxu0
      %v2553 = vadd.f32 0.0, %v2552
      %v2554 = vpop.f32.mrb[0].mxu0
      %v2555 = vpop.f32.mrb[0].mxu0
      %v2556 = vadd.f32 0.0, %v2555
      %v2557 = vpop.f32.mrb[0].mxu0
      %2558 = vmatprep.mubr.bf16.mxu0 0
      %2559 = vmatmul.mubr.bf16.gmra.mrb[0].mxu0 %v1229
      %v2560 = vpop.f32.mrb[0].mxu0
      %v2561 = vadd.f32 0.0, %v2560
      %v2562 = vpop.f32.mrb[0].mxu0
      %v2563 = vpop.f32.mrb[0].mxu0
      %v2564 = vadd.f32 0.0, %v2563
      %v2565 = vpop.f32.mrb[0].mxu0
      %2566 = vmatprep.mubr.bf16.mxu0 0
      %2567 = vmatmul.mubr.bf16.gmra.mrb[0].mxu0 %v1232
      %v2568 = vpop.f32.mrb[0].mxu0
      %v2569 = vadd.f32 0.0, %v2568
      %v2570 = vpop.f32.mrb[0].mxu0
      %v2571 = vpop.f32.mrb[0].mxu0
      %v2572 = vadd.f32 0.0, %v2571
      %v2573 = vpop.f32.mrb[0].mxu0
      %2574 = vmatprep.mubr.bf16.mxu0 0
      %2575 = vmatmul.mubr.bf16.gmra.mrb[0].mxu0 %v1235
      %v2576 = vpop.f32.mrb[0].mxu0
      %v2577 = vadd.f32 0.0, %v2576
      %v2578 = vpop.f32.mrb[0].mxu0
      %v2579 = vpop.f32.mrb[0].mxu0
      %v2580 = vadd.f32 0.0, %v2579
      %v2581 = vpop.f32.mrb[0].mxu0
      %2582 = vmatprep.mubr.bf16.mxu0 0
      %2583 = vmatmul.mubr.bf16.gmra.mrb[0].mxu0 %v1238
      %v2584 = vpop.f32.mrb[0].mxu0
      %v2585 = vadd.f32 0.0, %v2584
      %v2586 = vpop.f32.mrb[0].mxu0
      %v2587 = vpop.f32.mrb[0].mxu0
      %v2588 = vadd.f32 0.0, %v2587
      %v2589 = vpop.f32.mrb[0].mxu0
      %2590 = vmatprep.mubr.bf16.mxu0 0
      %2591 = vmatmul.mubr.bf16.gmra.mrb[0].mxu0 %v1241
      %v2592 = vpop.f32.mrb[0].mxu0
      %v2593 = vadd.f32 0.0, %v2592
      %v2594 = vpop.f32.mrb[0].mxu0
      %v2595 = vpop.f32.mrb[0].mxu0
      %v2596 = vadd.f32 0.0, %v2595
      %v2597 = vpop.f32.mrb[0].mxu0
      %2598 = vmatprep.mubr.bf16.mxu0 0
      %2599 = vmatmul.mubr.bf16.gmra.mrb[0].mxu0 %v1244
      %v2600 = vpop.f32.mrb[0].mxu0
      %v2601 = vadd.f32 0.0, %v2600
      %v2602 = vpop.f32.mrb[0].mxu0
      %v2603 = vpop.f32.mrb[0].mxu0
      %v2604 = vadd.f32 0.0, %v2603
      %v2605 = vpop.f32.mrb[0].mxu0
      %2606 = vmatprep.mubr.bf16.mxu0 0
      %2607 = vmatmul.mubr.bf16.gmra.mrb[0].mxu0 %v1247
      %v2608 = vpop.f32.mrb[0].mxu0
      %v2609 = vadd.f32 0.0, %v2608
      %v2610 = vpop.f32.mrb[0].mxu0
      %v2611 = vpop.f32.mrb[0].mxu0
      %v2612 = vadd.f32 0.0, %v2611
      %v2613 = vpop.f32.mrb[0].mxu0
      %2614 = vmatprep.mubr.bf16.mxu0 0
      %2615 = vmatmul.mubr.bf16.gmra.mrb[0].mxu0 %v1250
      %v2616 = vpop.f32.mrb[0].mxu0
      %v2617 = vadd.f32 0.0, %v2616
      %v2618 = vpop.f32.mrb[0].mxu0
      %v2619 = vpop.f32.mrb[0].mxu0
      %v2620 = vadd.f32 0.0, %v2619
      %v2621 = vpop.f32.mrb[0].mxu0
      %2622 = vmatprep.mubr.bf16.mxu0 0
      %2623 = vmatmul.mubr.bf16.gmra.mrb[0].mxu0 %v1253
      %v2624 = vpop.f32.mrb[0].mxu0
      %v2625 = vadd.f32 0.0, %v2624
      %v2626 = vpop.f32.mrb[0].mxu0
      %v2627 = vpop.f32.mrb[0].mxu0
      %v2628 = vadd.f32 0.0, %v2627
      %v2629 = vpop.f32.mrb[0].mxu0
      %2630 = vmatprep.mubr.bf16.mxu0 0
      %2631 = vmatmul.mubr.bf16.gmra.mrb[0].mxu0 %v1256
      %v2632 = vpop.f32.mrb[0].mxu0
      %v2633 = vadd.f32 0.0, %v2632
      %v2634 = vpop.f32.mrb[0].mxu0
      %v2635 = vpop.f32.mrb[0].mxu0
      %v2636 = vadd.f32 0.0, %v2635
      %v2637 = vpop.f32.mrb[0].mxu0
      %2638 = vmatprep.mubr.bf16.mxu0 0
      %2639 = vmatmul.mubr.bf16.gmra.mrb[0].mxu0 %v1259
      %v2640 = vpop.f32.mrb[0].mxu0
      %v2641 = vadd.f32 0.0, %v2640
      %v2642 = vpop.f32.mrb[0].mxu0
      %v2643 = vpop.f32.mrb[0].mxu0
      %v2644 = vadd.f32 0.0, %v2643
      %v2645 = vpop.f32.mrb[0].mxu0
      %2646 = vmatprep.mubr.bf16.mxu0 0
      %2647 = vmatmul.mubr.bf16.gmra.mrb[0].mxu0 %v1262
      %v2648 = vpop.f32.mrb[0].mxu0
      %v2649 = vadd.f32 0.0, %v2648
      %v2650 = vpop.f32.mrb[0].mxu0
      %v2651 = vpop.f32.mrb[0].mxu0
      %v2652 = vadd.f32 0.0, %v2651
      %v2653 = vpop.f32.mrb[0].mxu0
      %2654 = vmatprep.mubr.bf16.mxu0 0
      %2655 = vmatmul.mubr.bf16.gmra.mrb[0].mxu0 %v1265
      %v2656 = vpop.f32.mrb[0].mxu0
      %v2657 = vadd.f32 0.0, %v2656
      %v2658 = vpop.f32.mrb[0].mxu0
      %v2659 = vpop.f32.mrb[0].mxu0
      %v2660 = vadd.f32 0.0, %v2659
      %v2661 = vpop.f32.mrb[0].mxu0
      %2662 = vmatprep.mubr.bf16.mxu0 0
      %2663 = vmatmul.mubr.bf16.gmra.mrb[0].mxu0 %v1856
      %v2664 = vpop.f32.mrb[0].mxu0
      %v2665 = vadd.f32 0.0, %v2664
      %v2666 = vpop.f32.mrb[0].mxu0
      %v2667 = vpop.f32.mrb[0].mxu0
      %v2668 = vadd.f32 0.0, %v2667
      %v2669 = vpop.f32.mrb[0].mxu0
      %2670 = vmatprep.mubr.bf16.mxu0 0
      %2671 = vmatmul.mubr.bf16.gmra.mrb[0].mxu0 %v2513
      %v2672 = vpop.f32.mrb[0].mxu0
      %v2673 = vadd.f32 0.0, %v2672
      %v2674 = vpop.f32.mrb[0].mxu0
      %v2675 = vpop.f32.mrb[0].mxu0
      %v2676 = vadd.f32 0.0, %v2675
      %v2677 = vpop.f32.mrb[0].mxu0
      %2678 = vdwg.mxu0
      %v2679 = vadd.f32 %v2465, %v2553
      %v2680 = vadd.f32 %v2466, %v2556
      %v2681 = vadd.f32 %v2467, %v2561
      %v2682 = vadd.f32 %v2468, %v2564
      %v2683 = vadd.f32 %v2469, %v2569
      %v2684 = vadd.f32 %v2470, %v2572
      %v2685 = vadd.f32 %v2471, %v2577
      %v2686 = vadd.f32 %v2472, %v2580
      %v2687 = vadd.f32 %v2473, %v2585
      %v2688 = vadd.f32 %v2474, %v2588
      %v2689 = vadd.f32 %v2475, %v2593
      %v2690 = vadd.f32 %v2476, %v2596
      %v2691 = vadd.f32 %v2477, %v2601
      %v2692 = vadd.f32 %v2478, %v2604
      %v2693 = vadd.f32 %v2479, %v2609
      %v2694 = vadd.f32 %v2480, %v2612
      %v2695 = vadd.f32 %v2481, %v2617
      %v2696 = vadd.f32 %v2482, %v2620
      %v2697 = vadd.f32 %v2483, %v2625
      %v2698 = vadd.f32 %v2484, %v2628
      %v2699 = vadd.f32 %v2485, %v2633
      %v2700 = vadd.f32 %v2486, %v2636
      %v2701 = vadd.f32 %v2487, %v2641
      %v2702 = vadd.f32 %v2488, %v2644
      %v2703 = vadd.f32 %v2489, %v2649
      %v2704 = vadd.f32 %v2490, %v2652
      %v2705 = vadd.f32 %v2491, %v2657
      %v2706 = vadd.f32 %v2492, %v2660
      %v2707 = vadd.f32 %v2493, %v2665
      %v2708 = vadd.f32 %v2494, %v2668
      %v2709 = vadd.f32 %v2495, %v2673
      %v2710 = vadd.f32 %v2496, %v2676
      %v2712 = vshrl.u32 %v283, 16
      %v2714 = vrot.slane %v2712, 5
      %v2715 = vshll.u32 %v283, 16
      %v2717 = vrot.slane %v2715, 6
      %v2718 = vor.u32 %v2714, %v2717
      %v2719 = vrot.slane %v2718, 4
      %v2721 = vshrl.u32 %v284, 16
      %v2723 = vrot.slane %v2721, 5
      %v2724 = vshll.u32 %v284, 16
      %v2726 = vrot.slane %v2724, 6
      %v2727 = vor.u32 %v2723, %v2726
      %v2728 = vsel %vm458, %v2719, %v2727
      %v2729 = vrot.slane %v2727, 4
      %v2731 = vshrl.u32 %v285, 16
      %v2733 = vrot.slane %v2731, 5
      %v2734 = vshll.u32 %v285, 16
      %v2736 = vrot.slane %v2734, 6
      %v2737 = vor.u32 %v2733, %v2736
      %v2738 = vsel %vm458, %v2729, %v2737
      %s2739 = scalar_lea.vmem %s1, 14
      %v2740 = vld [vmem:[%s2739] sm:$0x3]
      %v2741 = vunpack.c.l.b16 %v2728
      %v2742 = vunpack.c.l.b16 %v2738
      %v2743 = vpack.c.b16 %v2742, %v2741
      %v2745 = vsel %vm957, %v2743, 0
      %v2748 = vsel %vm1006, %v2740, 0
      %2750 = vmatprep.subr.bf16.mxu0 0
      %2751 = vmatpush1.bf16.msra.mxu0 %v2748
      %2752 = vmatprep.subr.bf16.mxu0 0
      %2753 = vmatpush1.bf16.msra.mxu0 0
      %2754 = vmatprep.subr.bf16.mxu0 0
      %2755 = vmatpush1.bf16.msra.mxu0 0
      %2756 = vmatprep.subr.bf16.mxu0 0
      %2757 = vmatpush1.bf16.msra.mxu0 0
      %2758 = vmatprep.subr.bf16.mxu0 0
      %2759 = vmatpush1.bf16.msra.mxu0 0
      %2760 = vmatprep.subr.bf16.mxu0 0
      %2761 = vmatpush1.bf16.msra.mxu0 0
      %2762 = vmatprep.subr.bf16.mxu0 0
      %2763 = vmatpush1.bf16.msra.mxu0 0
      %2764 = vmatprep.subr.bf16.mxu0 0
      %2765 = vmatpush1.bf16.msra.mxu0 0
      %2766 = vmatprep.subr.bf16.mxu0 0
      %2767 = vmatpush1.bf16.msra.mxu0 0
      %2768 = vmatprep.subr.bf16.mxu0 0
      %2769 = vmatpush1.bf16.msra.mxu0 0
      %2770 = vmatprep.subr.bf16.mxu0 0
      %2771 = vmatpush1.bf16.msra.mxu0 0
      %2772 = vmatprep.subr.bf16.mxu0 0
      %2773 = vmatpush1.bf16.msra.mxu0 0
      %2774 = vmatprep.subr.bf16.mxu0 0
      %2775 = vmatpush1.bf16.msra.mxu0 0
      %2776 = vmatprep.subr.bf16.mxu0 0
      %2777 = vmatpush1.bf16.msra.mxu0 0
      %2778 = vmatprep.subr.bf16.mxu0 0
      %2779 = vmatpush1.bf16.msra.mxu0 0
      %2780 = vmatprep.subr.bf16.mxu0 0
      %2781 = vmatpush1.bf16.msra.mxu0 0
      %2782 = vmatprep.mubr.bf16.mxu0 0
      %2783 = vmatmul.mubr.bf16.gmra.mrb[0].mxu0 %v965
      %v2784 = vpop.f32.mrb[0].mxu0
      %v2785 = vadd.f32 0.0, %v2784
      %v2786 = vpop.f32.mrb[0].mxu0
      %v2787 = vpop.f32.mrb[0].mxu0
      %v2788 = vadd.f32 0.0, %v2787
      %v2789 = vpop.f32.mrb[0].mxu0
      %2790 = vmatprep.mubr.bf16.mxu0 0
      %2791 = vmatmul.mubr.bf16.gmra.mrb[0].mxu0 %v968
      %v2792 = vpop.f32.mrb[0].mxu0
      %v2793 = vadd.f32 0.0, %v2792
      %v2794 = vpop.f32.mrb[0].mxu0
      %v2795 = vpop.f32.mrb[0].mxu0
      %v2796 = vadd.f32 0.0, %v2795
      %v2797 = vpop.f32.mrb[0].mxu0
      %2798 = vmatprep.mubr.bf16.mxu0 0
      %2799 = vmatmul.mubr.bf16.gmra.mrb[0].mxu0 %v971
      %v2800 = vpop.f32.mrb[0].mxu0
      %v2801 = vadd.f32 0.0, %v2800
      %v2802 = vpop.f32.mrb[0].mxu0
      %v2803 = vpop.f32.mrb[0].mxu0
      %v2804 = vadd.f32 0.0, %v2803
      %v2805 = vpop.f32.mrb[0].mxu0
      %2806 = vmatprep.mubr.bf16.mxu0 0
      %2807 = vmatmul.mubr.bf16.gmra.mrb[0].mxu0 %v974
      %v2808 = vpop.f32.mrb[0].mxu0
      %v2809 = vadd.f32 0.0, %v2808
      %v2810 = vpop.f32.mrb[0].mxu0
      %v2811 = vpop.f32.mrb[0].mxu0
      %v2812 = vadd.f32 0.0, %v2811
      %v2813 = vpop.f32.mrb[0].mxu0
      %2814 = vmatprep.mubr.bf16.mxu0 0
      %2815 = vmatmul.mubr.bf16.gmra.mrb[0].mxu0 %v977
      %v2816 = vpop.f32.mrb[0].mxu0
      %v2817 = vadd.f32 0.0, %v2816
      %v2818 = vpop.f32.mrb[0].mxu0
      %v2819 = vpop.f32.mrb[0].mxu0
      %v2820 = vadd.f32 0.0, %v2819
      %v2821 = vpop.f32.mrb[0].mxu0
      %2822 = vmatprep.mubr.bf16.mxu0 0
      %2823 = vmatmul.mubr.bf16.gmra.mrb[0].mxu0 %v980
      %v2824 = vpop.f32.mrb[0].mxu0
      %v2825 = vadd.f32 0.0, %v2824
      %v2826 = vpop.f32.mrb[0].mxu0
      %v2827 = vpop.f32.mrb[0].mxu0
      %v2828 = vadd.f32 0.0, %v2827
      %v2829 = vpop.f32.mrb[0].mxu0
      %2830 = vmatprep.mubr.bf16.mxu0 0
      %2831 = vmatmul.mubr.bf16.gmra.mrb[0].mxu0 %v983
      %v2832 = vpop.f32.mrb[0].mxu0
      %v2833 = vadd.f32 0.0, %v2832
      %v2834 = vpop.f32.mrb[0].mxu0
      %v2835 = vpop.f32.mrb[0].mxu0
      %v2836 = vadd.f32 0.0, %v2835
      %v2837 = vpop.f32.mrb[0].mxu0
      %2838 = vmatprep.mubr.bf16.mxu0 0
      %2839 = vmatmul.mubr.bf16.gmra.mrb[0].mxu0 %v986
      %v2840 = vpop.f32.mrb[0].mxu0
      %v2841 = vadd.f32 0.0, %v2840
      %v2842 = vpop.f32.mrb[0].mxu0
      %v2843 = vpop.f32.mrb[0].mxu0
      %v2844 = vadd.f32 0.0, %v2843
      %v2845 = vpop.f32.mrb[0].mxu0
      %2846 = vmatprep.mubr.bf16.mxu0 0
      %2847 = vmatmul.mubr.bf16.gmra.mrb[0].mxu0 %v989
      %v2848 = vpop.f32.mrb[0].mxu0
      %v2849 = vadd.f32 0.0, %v2848
      %v2850 = vpop.f32.mrb[0].mxu0
      %v2851 = vpop.f32.mrb[0].mxu0
      %v2852 = vadd.f32 0.0, %v2851
      %v2853 = vpop.f32.mrb[0].mxu0
      %2854 = vmatprep.mubr.bf16.mxu0 0
      %2855 = vmatmul.mubr.bf16.gmra.mrb[0].mxu0 %v992
      %v2856 = vpop.f32.mrb[0].mxu0
      %v2857 = vadd.f32 0.0, %v2856
      %v2858 = vpop.f32.mrb[0].mxu0
      %v2859 = vpop.f32.mrb[0].mxu0
      %v2860 = vadd.f32 0.0, %v2859
      %v2861 = vpop.f32.mrb[0].mxu0
      %2862 = vmatprep.mubr.bf16.mxu0 0
      %2863 = vmatmul.mubr.bf16.gmra.mrb[0].mxu0 %v995
      %v2864 = vpop.f32.mrb[0].mxu0
      %v2865 = vadd.f32 0.0, %v2864
      %v2866 = vpop.f32.mrb[0].mxu0
      %v2867 = vpop.f32.mrb[0].mxu0
      %v2868 = vadd.f32 0.0, %v2867
      %v2869 = vpop.f32.mrb[0].mxu0
      %2870 = vmatprep.mubr.bf16.mxu0 0
      %2871 = vmatmul.mubr.bf16.gmra.mrb[0].mxu0 %v998
      %v2872 = vpop.f32.mrb[0].mxu0
      %v2873 = vadd.f32 0.0, %v2872
      %v2874 = vpop.f32.mrb[0].mxu0
      %v2875 = vpop.f32.mrb[0].mxu0
      %v2876 = vadd.f32 0.0, %v2875
      %v2877 = vpop.f32.mrb[0].mxu0
      %2878 = vmatprep.mubr.bf16.mxu0 0
      %2879 = vmatmul.mubr.bf16.gmra.mrb[0].mxu0 %v1001
      %v2880 = vpop.f32.mrb[0].mxu0
      %v2881 = vadd.f32 0.0, %v2880
      %v2882 = vpop.f32.mrb[0].mxu0
      %v2883 = vpop.f32.mrb[0].mxu0
      %v2884 = vadd.f32 0.0, %v2883
      %v2885 = vpop.f32.mrb[0].mxu0
      %2886 = vmatprep.mubr.bf16.mxu0 0
      %2887 = vmatmul.mubr.bf16.gmra.mrb[0].mxu0 %v1004
      %v2888 = vpop.f32.mrb[0].mxu0
      %v2889 = vadd.f32 0.0, %v2888
      %v2890 = vpop.f32.mrb[0].mxu0
      %v2891 = vpop.f32.mrb[0].mxu0
      %v2892 = vadd.f32 0.0, %v2891
      %v2893 = vpop.f32.mrb[0].mxu0
      %2894 = vmatprep.mubr.bf16.mxu0 0
      %2895 = vmatmul.mubr.bf16.gmra.mrb[0].mxu0 %v2088
      %v2896 = vpop.f32.mrb[0].mxu0
      %v2897 = vadd.f32 0.0, %v2896
      %v2898 = vpop.f32.mrb[0].mxu0
      %v2899 = vpop.f32.mrb[0].mxu0
      %v2900 = vadd.f32 0.0, %v2899
      %v2901 = vpop.f32.mrb[0].mxu0
      %2902 = vmatprep.mubr.bf16.mxu0 0
      %2903 = vmatmul.mubr.bf16.gmra.mrb[0].mxu0 %v2745
      %v2904 = vpop.f32.mrb[0].mxu0
      %v2905 = vadd.f32 0.0, %v2904
      %v2906 = vpop.f32.mrb[0].mxu0
      %v2907 = vpop.f32.mrb[0].mxu0
      %v2908 = vadd.f32 0.0, %v2907
      %v2909 = vpop.f32.mrb[0].mxu0
      %2910 = vdwg.mxu0
      %v2911 = vadd.f32 %v2679, %v2785
      %v2912 = vadd.f32 %v2680, %v2788
      %v2913 = vadd.f32 %v2681, %v2793
      %v2914 = vadd.f32 %v2682, %v2796
      %v2915 = vadd.f32 %v2683, %v2801
      %v2916 = vadd.f32 %v2684, %v2804
      %v2917 = vadd.f32 %v2685, %v2809
      %v2918 = vadd.f32 %v2686, %v2812
      %v2919 = vadd.f32 %v2687, %v2817
      %v2920 = vadd.f32 %v2688, %v2820
      %v2921 = vadd.f32 %v2689, %v2825
      %v2922 = vadd.f32 %v2690, %v2828
      %v2923 = vadd.f32 %v2691, %v2833
      %v2924 = vadd.f32 %v2692, %v2836
      %v2925 = vadd.f32 %v2693, %v2841
      %v2926 = vadd.f32 %v2694, %v2844
      %v2927 = vadd.f32 %v2695, %v2849
      %v2928 = vadd.f32 %v2696, %v2852
      %v2929 = vadd.f32 %v2697, %v2857
      %v2930 = vadd.f32 %v2698, %v2860
      %v2931 = vadd.f32 %v2699, %v2865
      %v2932 = vadd.f32 %v2700, %v2868
      %v2933 = vadd.f32 %v2701, %v2873
      %v2934 = vadd.f32 %v2702, %v2876
      %v2935 = vadd.f32 %v2703, %v2881
      %v2936 = vadd.f32 %v2704, %v2884
      %v2937 = vadd.f32 %v2705, %v2889
      %v2938 = vadd.f32 %v2706, %v2892
      %v2939 = vadd.f32 %v2707, %v2897
      %v2940 = vadd.f32 %v2708, %v2900
      %v2941 = vadd.f32 %v2709, %v2905
      %v2942 = vadd.f32 %v2710, %v2908
      %v2943 = vrot.slane %v283, 6
      %v2944 = vrot.slane %v2943, 4
      %v2945 = vrot.slane %v284, 6
      %v2946 = vsel %vm1433, %v2944, %v2945
      %v2947 = vrot.slane %v2945, 4
      %v2948 = vrot.slane %v285, 6
      %v2949 = vsel %vm1433, %v2947, %v2948
      %s2950 = scalar_lea.vmem %s1, 16
      %v2951 = vld [vmem:[%s2950] sm:$0x3]
      %v2952 = vunpack.c.l.b16 %v2946
      %v2953 = vunpack.c.l.b16 %v2949
      %v2954 = vpack.c.b16 %v2953, %v2952
      %v2956 = vsel %vm957, %v2954, 0
      %v2959 = vsel %vm1006, %v2951, 0
      %2961 = vmatprep.subr.bf16.mxu0 0
      %2962 = vmatpush1.bf16.msra.mxu0 %v2959
      %2963 = vmatprep.subr.bf16.mxu0 0
      %2964 = vmatpush1.bf16.msra.mxu0 0
      %2965 = vmatprep.subr.bf16.mxu0 0
      %2966 = vmatpush1.bf16.msra.mxu0 0
      %2967 = vmatprep.subr.bf16.mxu0 0
      %2968 = vmatpush1.bf16.msra.mxu0 0
      %2969 = vmatprep.subr.bf16.mxu0 0
      %2970 = vmatpush1.bf16.msra.mxu0 0
      %2971 = vmatprep.subr.bf16.mxu0 0
      %2972 = vmatpush1.bf16.msra.mxu0 0
      %2973 = vmatprep.subr.bf16.mxu0 0
      %2974 = vmatpush1.bf16.msra.mxu0 0
      %2975 = vmatprep.subr.bf16.mxu0 0
      %2976 = vmatpush1.bf16.msra.mxu0 0
      %2977 = vmatprep.subr.bf16.mxu0 0
      %2978 = vmatpush1.bf16.msra.mxu0 0
      %2979 = vmatprep.subr.bf16.mxu0 0
      %2980 = vmatpush1.bf16.msra.mxu0 0
      %2981 = vmatprep.subr.bf16.mxu0 0
      %2982 = vmatpush1.bf16.msra.mxu0 0
      %2983 = vmatprep.subr.bf16.mxu0 0
      %2984 = vmatpush1.bf16.msra.mxu0 0
      %2985 = vmatprep.subr.bf16.mxu0 0
      %2986 = vmatpush1.bf16.msra.mxu0 0
      %2987 = vmatprep.subr.bf16.mxu0 0
      %2988 = vmatpush1.bf16.msra.mxu0 0
      %2989 = vmatprep.subr.bf16.mxu0 0
      %2990 = vmatpush1.bf16.msra.mxu0 0
      %2991 = vmatprep.subr.bf16.mxu0 0
      %2992 = vmatpush1.bf16.msra.mxu0 0
      %2993 = vmatprep.mubr.bf16.mxu0 0
      %2994 = vmatmul.mubr.bf16.gmra.mrb[0].mxu0 %v1603
      %v2995 = vpop.f32.mrb[0].mxu0
      %v2996 = vadd.f32 0.0, %v2995
      %v2997 = vpop.f32.mrb[0].mxu0
      %v2998 = vpop.f32.mrb[0].mxu0
      %v2999 = vadd.f32 0.0, %v2998
      %v3000 = vpop.f32.mrb[0].mxu0
      %3001 = vmatprep.mubr.bf16.mxu0 0
      %3002 = vmatmul.mubr.bf16.gmra.mrb[0].mxu0 %v1606
      %v3003 = vpop.f32.mrb[0].mxu0
      %v3004 = vadd.f32 0.0, %v3003
      %v3005 = vpop.f32.mrb[0].mxu0
      %v3006 = vpop.f32.mrb[0].mxu0
      %v3007 = vadd.f32 0.0, %v3006
      %v3008 = vpop.f32.mrb[0].mxu0
      %3009 = vmatprep.mubr.bf16.mxu0 0
      %3010 = vmatmul.mubr.bf16.gmra.mrb[0].mxu0 %v1609
      %v3011 = vpop.f32.mrb[0].mxu0
      %v3012 = vadd.f32 0.0, %v3011
      %v3013 = vpop.f32.mrb[0].mxu0
      %v3014 = vpop.f32.mrb[0].mxu0
      %v3015 = vadd.f32 0.0, %v3014
      %v3016 = vpop.f32.mrb[0].mxu0
      %3017 = vmatprep.mubr.bf16.mxu0 0
      %3018 = vmatmul.mubr.bf16.gmra.mrb[0].mxu0 %v1612
      %v3019 = vpop.f32.mrb[0].mxu0
      %v3020 = vadd.f32 0.0, %v3019
      %v3021 = vpop.f32.mrb[0].mxu0
      %v3022 = vpop.f32.mrb[0].mxu0
      %v3023 = vadd.f32 0.0, %v3022
      %v3024 = vpop.f32.mrb[0].mxu0
      %3025 = vmatprep.mubr.bf16.mxu0 0
      %3026 = vmatmul.mubr.bf16.gmra.mrb[0].mxu0 %v1615
      %v3027 = vpop.f32.mrb[0].mxu0
      %v3028 = vadd.f32 0.0, %v3027
      %v3029 = vpop.f32.mrb[0].mxu0
      %v3030 = vpop.f32.mrb[0].mxu0
      %v3031 = vadd.f32 0.0, %v3030
      %v3032 = vpop.f32.mrb[0].mxu0
      %3033 = vmatprep.mubr.bf16.mxu0 0
      %3034 = vmatmul.mubr.bf16.gmra.mrb[0].mxu0 %v1618
      %v3035 = vpop.f32.mrb[0].mxu0
      %v3036 = vadd.f32 0.0, %v3035
      %v3037 = vpop.f32.mrb[0].mxu0
      %v3038 = vpop.f32.mrb[0].mxu0
      %v3039 = vadd.f32 0.0, %v3038
      %v3040 = vpop.f32.mrb[0].mxu0
      %3041 = vmatprep.mubr.bf16.mxu0 0
      %3042 = vmatmul.mubr.bf16.gmra.mrb[0].mxu0 %v1621
      %v3043 = vpop.f32.mrb[0].mxu0
      %v3044 = vadd.f32 0.0, %v3043
      %v3045 = vpop.f32.mrb[0].mxu0
      %v3046 = vpop.f32.mrb[0].mxu0
      %v3047 = vadd.f32 0.0, %v3046
      %v3048 = vpop.f32.mrb[0].mxu0
      %3049 = vmatprep.mubr.bf16.mxu0 0
      %3050 = vmatmul.mubr.bf16.gmra.mrb[0].mxu0 %v1624
      %v3051 = vpop.f32.mrb[0].mxu0
      %v3052 = vadd.f32 0.0, %v3051
      %v3053 = vpop.f32.mrb[0].mxu0
      %v3054 = vpop.f32.mrb[0].mxu0
      %v3055 = vadd.f32 0.0, %v3054
      %v3056 = vpop.f32.mrb[0].mxu0
      %3057 = vmatprep.mubr.bf16.mxu0 0
      %3058 = vmatmul.mubr.bf16.gmra.mrb[0].mxu0 %v1627
      %v3059 = vpop.f32.mrb[0].mxu0
      %v3060 = vadd.f32 0.0, %v3059
      %v3061 = vpop.f32.mrb[0].mxu0
      %v3062 = vpop.f32.mrb[0].mxu0
      %v3063 = vadd.f32 0.0, %v3062
      %v3064 = vpop.f32.mrb[0].mxu0
      %3065 = vmatprep.mubr.bf16.mxu0 0
      %3066 = vmatmul.mubr.bf16.gmra.mrb[0].mxu0 %v1630
      %v3067 = vpop.f32.mrb[0].mxu0
      %v3068 = vadd.f32 0.0, %v3067
      %v3069 = vpop.f32.mrb[0].mxu0
      %v3070 = vpop.f32.mrb[0].mxu0
      %v3071 = vadd.f32 0.0, %v3070
      %v3072 = vpop.f32.mrb[0].mxu0
      %3073 = vmatprep.mubr.bf16.mxu0 0
      %3074 = vmatmul.mubr.bf16.gmra.mrb[0].mxu0 %v1633
      %v3075 = vpop.f32.mrb[0].mxu0
      %v3076 = vadd.f32 0.0, %v3075
      %v3077 = vpop.f32.mrb[0].mxu0
      %v3078 = vpop.f32.mrb[0].mxu0
      %v3079 = vadd.f32 0.0, %v3078
      %v3080 = vpop.f32.mrb[0].mxu0
      %3081 = vmatprep.mubr.bf16.mxu0 0
      %3082 = vmatmul.mubr.bf16.gmra.mrb[0].mxu0 %v1636
      %v3083 = vpop.f32.mrb[0].mxu0
      %v3084 = vadd.f32 0.0, %v3083
      %v3085 = vpop.f32.mrb[0].mxu0
      %v3086 = vpop.f32.mrb[0].mxu0
      %v3087 = vadd.f32 0.0, %v3086
      %v3088 = vpop.f32.mrb[0].mxu0
      %3089 = vmatprep.mubr.bf16.mxu0 0
      %3090 = vmatmul.mubr.bf16.gmra.mrb[0].mxu0 %v1639
      %v3091 = vpop.f32.mrb[0].mxu0
      %v3092 = vadd.f32 0.0, %v3091
      %v3093 = vpop.f32.mrb[0].mxu0
      %v3094 = vpop.f32.mrb[0].mxu0
      %v3095 = vadd.f32 0.0, %v3094
      %v3096 = vpop.f32.mrb[0].mxu0
      %3097 = vmatprep.mubr.bf16.mxu0 0
      %3098 = vmatmul.mubr.bf16.gmra.mrb[0].mxu0 %v1642
      %v3099 = vpop.f32.mrb[0].mxu0
      %v3100 = vadd.f32 0.0, %v3099
      %v3101 = vpop.f32.mrb[0].mxu0
      %v3102 = vpop.f32.mrb[0].mxu0
      %v3103 = vadd.f32 0.0, %v3102
      %v3104 = vpop.f32.mrb[0].mxu0
      %3105 = vmatprep.mubr.bf16.mxu0 0
      %3106 = vmatmul.mubr.bf16.gmra.mrb[0].mxu0 %v2299
      %v3107 = vpop.f32.mrb[0].mxu0
      %v3108 = vadd.f32 0.0, %v3107
      %v3109 = vpop.f32.mrb[0].mxu0
      %v3110 = vpop.f32.mrb[0].mxu0
      %v3111 = vadd.f32 0.0, %v3110
      %v3112 = vpop.f32.mrb[0].mxu0
      %3113 = vmatprep.mubr.bf16.mxu0 0
      %3114 = vmatmul.mubr.bf16.gmra.mrb[0].mxu0 %v2956
      %v3115 = vpop.f32.mrb[0].mxu0
      %v3116 = vadd.f32 0.0, %v3115
      %v3117 = vpop.f32.mrb[0].mxu0
      %v3118 = vpop.f32.mrb[0].mxu0
      %v3119 = vadd.f32 0.0, %v3118
      %v3120 = vpop.f32.mrb[0].mxu0
      %3121 = vdwg.mxu0
      %v3122 = vadd.f32 %v2911, %v2996
      %v3123 = vadd.f32 %v2912, %v2999
      %v3124 = vadd.f32 %v2913, %v3004
      %v3125 = vadd.f32 %v2914, %v3007
      %v3126 = vadd.f32 %v2915, %v3012
      %v3127 = vadd.f32 %v2916, %v3015
      %v3128 = vadd.f32 %v2917, %v3020
      %v3129 = vadd.f32 %v2918, %v3023
      %v3130 = vadd.f32 %v2919, %v3028
      %v3131 = vadd.f32 %v2920, %v3031
      %v3132 = vadd.f32 %v2921, %v3036
      %v3133 = vadd.f32 %v2922, %v3039
      %v3134 = vadd.f32 %v2923, %v3044
      %v3135 = vadd.f32 %v2924, %v3047
      %v3136 = vadd.f32 %v2925, %v3052
      %v3137 = vadd.f32 %v2926, %v3055
      %v3138 = vadd.f32 %v2927, %v3060
      %v3139 = vadd.f32 %v2928, %v3063
      %v3140 = vadd.f32 %v2929, %v3068
      %v3141 = vadd.f32 %v2930, %v3071
      %v3142 = vadd.f32 %v2931, %v3076
      %v3143 = vadd.f32 %v2932, %v3079
      %v3144 = vadd.f32 %v2933, %v3084
      %v3145 = vadd.f32 %v2934, %v3087
      %v3146 = vadd.f32 %v2935, %v3092
      %v3147 = vadd.f32 %v2936, %v3095
      %v3148 = vadd.f32 %v2937, %v3100
      %v3149 = vadd.f32 %v2938, %v3103
      %v3150 = vadd.f32 %v2939, %v3108
      %v3151 = vadd.f32 %v2940, %v3111
      %v3152 = vadd.f32 %v2941, %v3116
      %v3153 = vadd.f32 %v2942, %v3119
      %v3154 = vld [vmem:[%s4] sm:$0x1]
      %v3155 = vlaneseq
      %v3156 = vshrl.u32 %v3155, 7
      %v3157 = vsub.s32 0, %v3156
      %v3158 = vrot.slane %v3154, %v3157
      %v3159 = vadd.f32 %v3122, %v3158
      %v3160 = vadd.f32 %v3123, %v3158
      %v3161 = vadd.f32 %v3124, %v3158
      %v3162 = vadd.f32 %v3125, %v3158
      %v3163 = vadd.f32 %v3126, %v3158
      %v3164 = vadd.f32 %v3127, %v3158
      %v3165 = vadd.f32 %v3128, %v3158
      %v3166 = vadd.f32 %v3129, %v3158
      %v3167 = vadd.f32 %v3130, %v3158
      %v3168 = vadd.f32 %v3131, %v3158
      %v3169 = vadd.f32 %v3132, %v3158
      %v3170 = vadd.f32 %v3133, %v3158
      %v3171 = vadd.f32 %v3134, %v3158
      %v3172 = vadd.f32 %v3135, %v3158
      %v3173 = vadd.f32 %v3136, %v3158
      %v3174 = vadd.f32 %v3137, %v3158
      %v3175 = vadd.f32 %v3138, %v3158
      %v3176 = vadd.f32 %v3139, %v3158
      %v3177 = vadd.f32 %v3140, %v3158
      %v3178 = vadd.f32 %v3141, %v3158
      %v3179 = vadd.f32 %v3142, %v3158
      %v3180 = vadd.f32 %v3143, %v3158
      %v3181 = vadd.f32 %v3144, %v3158
      %v3182 = vadd.f32 %v3145, %v3158
      %v3183 = vadd.f32 %v3146, %v3158
      %v3184 = vadd.f32 %v3147, %v3158
      %v3185 = vadd.f32 %v3148, %v3158
      %v3186 = vadd.f32 %v3149, %v3158
      %v3187 = vadd.f32 %v3150, %v3158
      %v3188 = vadd.f32 %v3151, %v3158
      %v3189 = vadd.f32 %v3152, %v3158
      %v3190 = vadd.f32 %v3153, %v3158
      %v3191 = vld [vmem:[%s2] sm:$0x3]
      %v3193 = vshrl.u32 %v226, 16
      %v3195 = vrot.slane %v3193, 5
      %v3196 = vshll.u32 %v226, 16
      %v3198 = vrot.slane %v3196, 6
      %v3199 = vor.u32 %v3195, %v3198
      %v3200 = vrot.slane %v3199, 4
      %v3202 = vshrl.u32 %v227, 16
      %v3204 = vrot.slane %v3202, 5
      %v3205 = vshll.u32 %v227, 16
      %v3207 = vrot.slane %v3205, 6
      %v3208 = vor.u32 %v3204, %v3207
      %v3209 = vsel %vm458, %v3200, %v3208
      %v3210 = vrot.slane %v3208, 4
      %v3212 = vshrl.u32 %v228, 16
      %v3214 = vrot.slane %v3212, 5
      %v3215 = vshll.u32 %v228, 16
      %v3217 = vrot.slane %v3215, 6
      %v3218 = vor.u32 %v3214, %v3217
      %v3219 = vsel %vm458, %v3210, %v3218
      %v3221 = vshrl.u32 %v229, 16
      %v3223 = vrot.slane %v3221, 5
      %v3224 = vshll.u32 %v229, 16
      %v3226 = vrot.slane %v3224, 6
      %v3227 = vor.u32 %v3223, %v3226
      %v3228 = vrot.slane %v3227, 4
      %v3230 = vshrl.u32 %v230, 16
      %v3232 = vrot.slane %v3230, 5
      %v3233 = vshll.u32 %v230, 16
      %v3235 = vrot.slane %v3233, 6
      %v3236 = vor.u32 %v3232, %v3235
      %v3237 = vsel %vm458, %v3228, %v3236
      %v3238 = vrot.slane %v3236, 4
      %v3240 = vshrl.u32 %v231, 16
      %v3242 = vrot.slane %v3240, 5
      %v3243 = vshll.u32 %v231, 16
      %v3245 = vrot.slane %v3243, 6
      %v3246 = vor.u32 %v3242, %v3245
      %v3247 = vsel %vm458, %v3238, %v3246
      %s3248 = scalar_lea.vmem %s2, 2
      %v3249 = vld [vmem:[%s3248] sm:$0x3]
      %v3250 = vunpack.c.l.b16 %v3209
      %v3251 = vunpack.c.l.b16 %v3219
      %v3252 = vunpack.c.l.b16 %v3237
      %v3253 = vunpack.c.l.b16 %v3247
      %v3254 = vpack.c.b16 %v3251, %v3250
      %v3255 = vpack.c.b16 %v3253, %v3252
      %v3257 = vsel %vm957, %v3254, 0
      %v3260 = vsel %vm957, %v3255, 0
      %v3263 = vsel %vm1006, %v3249, 0
      %3265 = vmatprep.subr.bf16.mxu0 0
      %3266 = vmatpush1.bf16.msra.mxu0 %v3263
      %3267 = vmatprep.subr.bf16.mxu0 0
      %3268 = vmatpush1.bf16.msra.mxu0 0
      %3269 = vmatprep.subr.bf16.mxu0 0
      %3270 = vmatpush1.bf16.msra.mxu0 0
      %3271 = vmatprep.subr.bf16.mxu0 0
      %3272 = vmatpush1.bf16.msra.mxu0 0
      %3273 = vmatprep.subr.bf16.mxu0 0
      %3274 = vmatpush1.bf16.msra.mxu0 0
      %3275 = vmatprep.subr.bf16.mxu0 0
      %3276 = vmatpush1.bf16.msra.mxu0 0
      %3277 = vmatprep.subr.bf16.mxu0 0
      %3278 = vmatpush1.bf16.msra.mxu0 0
      %3279 = vmatprep.subr.bf16.mxu0 0
      %3280 = vmatpush1.bf16.msra.mxu0 0
      %3281 = vmatprep.subr.bf16.mxu0 0
      %3282 = vmatpush1.bf16.msra.mxu0 0
      %3283 = vmatprep.subr.bf16.mxu0 0
      %3284 = vmatpush1.bf16.msra.mxu0 0
      %3285 = vmatprep.subr.bf16.mxu0 0
      %3286 = vmatpush1.bf16.msra.mxu0 0
      %3287 = vmatprep.subr.bf16.mxu0 0
      %3288 = vmatpush1.bf16.msra.mxu0 0
      %3289 = vmatprep.subr.bf16.mxu0 0
      %3290 = vmatpush1.bf16.msra.mxu0 0
      %3291 = vmatprep.subr.bf16.mxu0 0
      %3292 = vmatpush1.bf16.msra.mxu0 0
      %3293 = vmatprep.subr.bf16.mxu0 0
      %3294 = vmatpush1.bf16.msra.mxu0 0
      %3295 = vmatprep.subr.bf16.mxu0 0
      %3296 = vmatpush1.bf16.msra.mxu0 0
      %3297 = vmatprep.mubr.bf16.mxu0 0
      %3298 = vmatmul.mubr.bf16.gmra.mrb[0].mxu0 %v3257
      %v3299 = vpop.f32.mrb[0].mxu0
      %v3300 = vadd.f32 0.0, %v3299
      %v3301 = vpop.f32.mrb[0].mxu0
      %v3302 = vpop.f32.mrb[0].mxu0
      %v3303 = vadd.f32 0.0, %v3302
      %v3304 = vpop.f32.mrb[0].mxu0
      %3305 = vmatprep.mubr.bf16.mxu0 0
      %3306 = vmatmul.mubr.bf16.gmra.mrb[0].mxu0 %v3260
      %v3307 = vpop.f32.mrb[0].mxu0
      %v3308 = vadd.f32 0.0, %v3307
      %v3309 = vpop.f32.mrb[0].mxu0
      %v3310 = vpop.f32.mrb[0].mxu0
      %v3311 = vadd.f32 0.0, %v3310
      %v3312 = vpop.f32.mrb[0].mxu0
      %3313 = vmatprep.mubr.bf16.mxu0 0
      %3314 = vmatmul.mubr.bf16.gmra.mrb[0].mxu0 %v959
      %v3315 = vpop.f32.mrb[0].mxu0
      %v3316 = vadd.f32 0.0, %v3315
      %v3317 = vpop.f32.mrb[0].mxu0
      %v3318 = vpop.f32.mrb[0].mxu0
      %v3319 = vadd.f32 0.0, %v3318
      %v3320 = vpop.f32.mrb[0].mxu0
      %3321 = vmatprep.mubr.bf16.mxu0 0
      %3322 = vmatmul.mubr.bf16.gmra.mrb[0].mxu0 %v962
      %v3323 = vpop.f32.mrb[0].mxu0
      %v3324 = vadd.f32 0.0, %v3323
      %v3325 = vpop.f32.mrb[0].mxu0
      %v3326 = vpop.f32.mrb[0].mxu0
      %v3327 = vadd.f32 0.0, %v3326
      %v3328 = vpop.f32.mrb[0].mxu0
      %3329 = vmatprep.mubr.bf16.mxu0 0
      %3330 = vmatmul.mubr.bf16.gmra.mrb[0].mxu0 %v965
      %v3331 = vpop.f32.mrb[0].mxu0
      %v3332 = vadd.f32 0.0, %v3331
      %v3333 = vpop.f32.mrb[0].mxu0
      %v3334 = vpop.f32.mrb[0].mxu0
      %v3335 = vadd.f32 0.0, %v3334
      %v3336 = vpop.f32.mrb[0].mxu0
      %3337 = vmatprep.mubr.bf16.mxu0 0
      %3338 = vmatmul.mubr.bf16.gmra.mrb[0].mxu0 %v968
      %v3339 = vpop.f32.mrb[0].mxu0
      %v3340 = vadd.f32 0.0, %v3339
      %v3341 = vpop.f32.mrb[0].mxu0
      %v3342 = vpop.f32.mrb[0].mxu0
      %v3343 = vadd.f32 0.0, %v3342
      %v3344 = vpop.f32.mrb[0].mxu0
      %3345 = vmatprep.mubr.bf16.mxu0 0
      %3346 = vmatmul.mubr.bf16.gmra.mrb[0].mxu0 %v971
      %v3347 = vpop.f32.mrb[0].mxu0
      %v3348 = vadd.f32 0.0, %v3347
      %v3349 = vpop.f32.mrb[0].mxu0
      %v3350 = vpop.f32.mrb[0].mxu0
      %v3351 = vadd.f32 0.0, %v3350
      %v3352 = vpop.f32.mrb[0].mxu0
      %3353 = vmatprep.mubr.bf16.mxu0 0
      %3354 = vmatmul.mubr.bf16.gmra.mrb[0].mxu0 %v974
      %v3355 = vpop.f32.mrb[0].mxu0
      %v3356 = vadd.f32 0.0, %v3355
      %v3357 = vpop.f32.mrb[0].mxu0
      %v3358 = vpop.f32.mrb[0].mxu0
      %v3359 = vadd.f32 0.0, %v3358
      %v3360 = vpop.f32.mrb[0].mxu0
      %3361 = vmatprep.mubr.bf16.mxu0 0
      %3362 = vmatmul.mubr.bf16.gmra.mrb[0].mxu0 %v977
      %v3363 = vpop.f32.mrb[0].mxu0
      %v3364 = vadd.f32 0.0, %v3363
      %v3365 = vpop.f32.mrb[0].mxu0
      %v3366 = vpop.f32.mrb[0].mxu0
      %v3367 = vadd.f32 0.0, %v3366
      %v3368 = vpop.f32.mrb[0].mxu0
      %3369 = vmatprep.mubr.bf16.mxu0 0
      %3370 = vmatmul.mubr.bf16.gmra.mrb[0].mxu0 %v980
      %v3371 = vpop.f32.mrb[0].mxu0
      %v3372 = vadd.f32 0.0, %v3371
      %v3373 = vpop.f32.mrb[0].mxu0
      %v3374 = vpop.f32.mrb[0].mxu0
      %v3375 = vadd.f32 0.0, %v3374
      %v3376 = vpop.f32.mrb[0].mxu0
      %3377 = vmatprep.mubr.bf16.mxu0 0
      %3378 = vmatmul.mubr.bf16.gmra.mrb[0].mxu0 %v983
      %v3379 = vpop.f32.mrb[0].mxu0
      %v3380 = vadd.f32 0.0, %v3379
      %v3381 = vpop.f32.mrb[0].mxu0
      %v3382 = vpop.f32.mrb[0].mxu0
      %v3383 = vadd.f32 0.0, %v3382
      %v3384 = vpop.f32.mrb[0].mxu0
      %3385 = vmatprep.mubr.bf16.mxu0 0
      %3386 = vmatmul.mubr.bf16.gmra.mrb[0].mxu0 %v986
      %v3387 = vpop.f32.mrb[0].mxu0
      %v3388 = vadd.f32 0.0, %v3387
      %v3389 = vpop.f32.mrb[0].mxu0
      %v3390 = vpop.f32.mrb[0].mxu0
      %v3391 = vadd.f32 0.0, %v3390
      %v3392 = vpop.f32.mrb[0].mxu0
      %3393 = vmatprep.mubr.bf16.mxu0 0
      %3394 = vmatmul.mubr.bf16.gmra.mrb[0].mxu0 %v989
      %v3395 = vpop.f32.mrb[0].mxu0
      %v3396 = vadd.f32 0.0, %v3395
      %v3397 = vpop.f32.mrb[0].mxu0
      %v3398 = vpop.f32.mrb[0].mxu0
      %v3399 = vadd.f32 0.0, %v3398
      %v3400 = vpop.f32.mrb[0].mxu0
      %3401 = vmatprep.mubr.bf16.mxu0 0
      %3402 = vmatmul.mubr.bf16.gmra.mrb[0].mxu0 %v992
      %v3403 = vpop.f32.mrb[0].mxu0
      %v3404 = vadd.f32 0.0, %v3403
      %v3405 = vpop.f32.mrb[0].mxu0
      %v3406 = vpop.f32.mrb[0].mxu0
      %v3407 = vadd.f32 0.0, %v3406
      %v3408 = vpop.f32.mrb[0].mxu0
      %3409 = vmatprep.mubr.bf16.mxu0 0
      %3410 = vmatmul.mubr.bf16.gmra.mrb[0].mxu0 %v995
      %v3411 = vpop.f32.mrb[0].mxu0
      %v3412 = vadd.f32 0.0, %v3411
      %v3413 = vpop.f32.mrb[0].mxu0
      %v3414 = vpop.f32.mrb[0].mxu0
      %v3415 = vadd.f32 0.0, %v3414
      %v3416 = vpop.f32.mrb[0].mxu0
      %3417 = vmatprep.mubr.bf16.mxu0 0
      %3418 = vmatmul.mubr.bf16.gmra.mrb[0].mxu0 %v998
      %v3419 = vpop.f32.mrb[0].mxu0
      %v3420 = vadd.f32 0.0, %v3419
      %v3421 = vpop.f32.mrb[0].mxu0
      %v3422 = vpop.f32.mrb[0].mxu0
      %v3423 = vadd.f32 0.0, %v3422
      %v3424 = vpop.f32.mrb[0].mxu0
      %3425 = vdwg.mxu0
      %v3430 = vunpack.c.l.b16 %v226
      %v3431 = vunpack.c.l.b16 %v227
      %v3432 = vunpack.c.l.b16 %v229
      %v3433 = vunpack.c.l.b16 %v230
      %v3434 = vunpack.c.l.b16 %v232
      %v3435 = vunpack.c.l.b16 %v233
      %v3436 = vunpack.c.l.b16 %v235
      %v3437 = vunpack.c.l.b16 %v236
      %v3438 = vunpack.c.l.b16 %v238
      %v3439 = vunpack.c.l.b16 %v239
      %v3440 = vunpack.c.l.b16 %v241
      %v3441 = vunpack.c.l.b16 %v242
      %v3442 = vunpack.c.l.b16 %v244
      %v3443 = vunpack.c.l.b16 %v245
      %v3444 = vunpack.c.l.b16 %v247
      %v3445 = vunpack.c.l.b16 %v248
      %v3446 = vunpack.c.l.b16 %v250
      %v3447 = vunpack.c.l.b16 %v251
      %v3448 = vunpack.c.l.b16 %v253
      %v3449 = vunpack.c.l.b16 %v254
      %v3450 = vunpack.c.l.b16 %v256
      %v3451 = vunpack.c.l.b16 %v257
      %v3452 = vunpack.c.l.b16 %v259
      %v3453 = vunpack.c.l.b16 %v260
      %v3454 = vunpack.c.l.b16 %v262
      %v3455 = vunpack.c.l.b16 %v263
      %v3456 = vunpack.c.l.b16 %v265
      %v3457 = vunpack.c.l.b16 %v266
      %v3458 = vunpack.c.l.b16 %v268
      %v3459 = vunpack.c.l.b16 %v269
      %v3460 = vunpack.c.l.b16 %v271
      %v3461 = vunpack.c.l.b16 %v272
      %v3462 = vpack.c.b16 %v3431, %v3430
      %v3463 = vpack.c.b16 %v3433, %v3432
      %v3464 = vpack.c.b16 %v3435, %v3434
      %v3465 = vpack.c.b16 %v3437, %v3436
      %v3466 = vpack.c.b16 %v3439, %v3438
      %v3467 = vpack.c.b16 %v3441, %v3440
      %v3468 = vpack.c.b16 %v3443, %v3442
      %v3469 = vpack.c.b16 %v3445, %v3444
      %v3470 = vpack.c.b16 %v3447, %v3446
      %v3471 = vpack.c.b16 %v3449, %v3448
      %v3472 = vpack.c.b16 %v3451, %v3450
      %v3473 = vpack.c.b16 %v3453, %v3452
      %v3474 = vpack.c.b16 %v3455, %v3454
      %v3475 = vpack.c.b16 %v3457, %v3456
      %v3476 = vpack.c.b16 %v3459, %v3458
      %v3477 = vpack.c.b16 %v3461, %v3460
      %v3479 = vsel %vm957, %v3462, 0
      %v3482 = vsel %vm957, %v3463, 0
      %v3485 = vsel %vm957, %v3464, 0
      %v3488 = vsel %vm957, %v3465, 0
      %v3491 = vsel %vm957, %v3466, 0
      %v3494 = vsel %vm957, %v3467, 0
      %v3497 = vsel %vm957, %v3468, 0
      %v3500 = vsel %vm957, %v3469, 0
      %v3503 = vsel %vm957, %v3470, 0
      %v3506 = vsel %vm957, %v3471, 0
      %v3509 = vsel %vm957, %v3472, 0
      %v3512 = vsel %vm957, %v3473, 0
      %v3515 = vsel %vm957, %v3474, 0
      %v3518 = vsel %vm957, %v3475, 0
      %v3521 = vsel %vm957, %v3476, 0
      %v3524 = vsel %vm957, %v3477, 0
      %v3527 = vsel %vm1006, %v3191, 0
      %3529 = vmatprep.subr.bf16.mxu0 0
      %3530 = vmatpush1.bf16.msra.mxu0 %v3527
      %3531 = vmatprep.subr.bf16.mxu0 0
      %3532 = vmatpush1.bf16.msra.mxu0 0
      %3533 = vmatprep.subr.bf16.mxu0 0
      %3534 = vmatpush1.bf16.msra.mxu0 0
      %3535 = vmatprep.subr.bf16.mxu0 0
      %3536 = vmatpush1.bf16.msra.mxu0 0
      %3537 = vmatprep.subr.bf16.mxu0 0
      %3538 = vmatpush1.bf16.msra.mxu0 0
      %3539 = vmatprep.subr.bf16.mxu0 0
      %3540 = vmatpush1.bf16.msra.mxu0 0
      %3541 = vmatprep.subr.bf16.mxu0 0
      %3542 = vmatpush1.bf16.msra.mxu0 0
      %3543 = vmatprep.subr.bf16.mxu0 0
      %3544 = vmatpush1.bf16.msra.mxu0 0
      %3545 = vmatprep.subr.bf16.mxu0 0
      %3546 = vmatpush1.bf16.msra.mxu0 0
      %3547 = vmatprep.subr.bf16.mxu0 0
      %3548 = vmatpush1.bf16.msra.mxu0 0
      %3549 = vmatprep.subr.bf16.mxu0 0
      %3550 = vmatpush1.bf16.msra.mxu0 0
      %3551 = vmatprep.subr.bf16.mxu0 0
      %3552 = vmatpush1.bf16.msra.mxu0 0
      %3553 = vmatprep.subr.bf16.mxu0 0
      %3554 = vmatpush1.bf16.msra.mxu0 0
      %3555 = vmatprep.subr.bf16.mxu0 0
      %3556 = vmatpush1.bf16.msra.mxu0 0
      %3557 = vmatprep.subr.bf16.mxu0 0
      %3558 = vmatpush1.bf16.msra.mxu0 0
      %3559 = vmatprep.subr.bf16.mxu0 0
      %3560 = vmatpush1.bf16.msra.mxu0 0
      %3561 = vmatprep.mubr.bf16.mxu0 0
      %3562 = vmatmul.mubr.bf16.gmra.mrb[0].mxu0 %v3479
      %v3563 = vpop.f32.mrb[0].mxu0
      %v3564 = vadd.f32 %v3300, %v3563
      %v3565 = vpop.f32.mrb[0].mxu0
      %v3566 = vpop.f32.mrb[0].mxu0
      %v3567 = vadd.f32 %v3303, %v3566
      %v3568 = vpop.f32.mrb[0].mxu0
      %3569 = vmatprep.mubr.bf16.mxu0 0
      %3570 = vmatmul.mubr.bf16.gmra.mrb[0].mxu0 %v3482
      %v3571 = vpop.f32.mrb[0].mxu0
      %v3572 = vadd.f32 %v3308, %v3571
      %v3573 = vpop.f32.mrb[0].mxu0
      %v3574 = vpop.f32.mrb[0].mxu0
      %v3575 = vadd.f32 %v3311, %v3574
      %v3576 = vpop.f32.mrb[0].mxu0
      %3577 = vmatprep.mubr.bf16.mxu0 0
      %3578 = vmatmul.mubr.bf16.gmra.mrb[0].mxu0 %v3485
      %v3579 = vpop.f32.mrb[0].mxu0
      %v3580 = vadd.f32 %v3316, %v3579
      %v3581 = vpop.f32.mrb[0].mxu0
      %v3582 = vpop.f32.mrb[0].mxu0
      %v3583 = vadd.f32 %v3319, %v3582
      %v3584 = vpop.f32.mrb[0].mxu0
      %3585 = vmatprep.mubr.bf16.mxu0 0
      %3586 = vmatmul.mubr.bf16.gmra.mrb[0].mxu0 %v3488
      %v3587 = vpop.f32.mrb[0].mxu0
      %v3588 = vadd.f32 %v3324, %v3587
      %v3589 = vpop.f32.mrb[0].mxu0
      %v3590 = vpop.f32.mrb[0].mxu0
      %v3591 = vadd.f32 %v3327, %v3590
      %v3592 = vpop.f32.mrb[0].mxu0
      %3593 = vmatprep.mubr.bf16.mxu0 0
      %3594 = vmatmul.mubr.bf16.gmra.mrb[0].mxu0 %v3491
      %v3595 = vpop.f32.mrb[0].mxu0
      %v3596 = vadd.f32 %v3332, %v3595
      %v3597 = vpop.f32.mrb[0].mxu0
      %v3598 = vpop.f32.mrb[0].mxu0
      %v3599 = vadd.f32 %v3335, %v3598
      %v3600 = vpop.f32.mrb[0].mxu0
      %3601 = vmatprep.mubr.bf16.mxu0 0
      %3602 = vmatmul.mubr.bf16.gmra.mrb[0].mxu0 %v3494
      %v3603 = vpop.f32.mrb[0].mxu0
      %v3604 = vadd.f32 %v3340, %v3603
      %v3605 = vpop.f32.mrb[0].mxu0
      %v3606 = vpop.f32.mrb[0].mxu0
      %v3607 = vadd.f32 %v3343, %v3606
      %v3608 = vpop.f32.mrb[0].mxu0
      %3609 = vmatprep.mubr.bf16.mxu0 0
      %3610 = vmatmul.mubr.bf16.gmra.mrb[0].mxu0 %v3497
      %v3611 = vpop.f32.mrb[0].mxu0
      %v3612 = vadd.f32 %v3348, %v3611
      %v3613 = vpop.f32.mrb[0].mxu0
      %v3614 = vpop.f32.mrb[0].mxu0
      %v3615 = vadd.f32 %v3351, %v3614
      %v3616 = vpop.f32.mrb[0].mxu0
      %3617 = vmatprep.mubr.bf16.mxu0 0
      %3618 = vmatmul.mubr.bf16.gmra.mrb[0].mxu0 %v3500
      %v3619 = vpop.f32.mrb[0].mxu0
      %v3620 = vadd.f32 %v3356, %v3619
      %v3621 = vpop.f32.mrb[0].mxu0
      %v3622 = vpop.f32.mrb[0].mxu0
      %v3623 = vadd.f32 %v3359, %v3622
      %v3624 = vpop.f32.mrb[0].mxu0
      %3625 = vmatprep.mubr.bf16.mxu0 0
      %3626 = vmatmul.mubr.bf16.gmra.mrb[0].mxu0 %v3503
      %v3627 = vpop.f32.mrb[0].mxu0
      %v3628 = vadd.f32 %v3364, %v3627
      %v3629 = vpop.f32.mrb[0].mxu0
      %v3630 = vpop.f32.mrb[0].mxu0
      %v3631 = vadd.f32 %v3367, %v3630
      %v3632 = vpop.f32.mrb[0].mxu0
      %3633 = vmatprep.mubr.bf16.mxu0 0
      %3634 = vmatmul.mubr.bf16.gmra.mrb[0].mxu0 %v3506
      %v3635 = vpop.f32.mrb[0].mxu0
      %v3636 = vadd.f32 %v3372, %v3635
      %v3637 = vpop.f32.mrb[0].mxu0
      %v3638 = vpop.f32.mrb[0].mxu0
      %v3639 = vadd.f32 %v3375, %v3638
      %v3640 = vpop.f32.mrb[0].mxu0
      %3641 = vmatprep.mubr.bf16.mxu0 0
      %3642 = vmatmul.mubr.bf16.gmra.mrb[0].mxu0 %v3509
      %v3643 = vpop.f32.mrb[0].mxu0
      %v3644 = vadd.f32 %v3380, %v3643
      %v3645 = vpop.f32.mrb[0].mxu0
      %v3646 = vpop.f32.mrb[0].mxu0
      %v3647 = vadd.f32 %v3383, %v3646
      %v3648 = vpop.f32.mrb[0].mxu0
      %3649 = vmatprep.mubr.bf16.mxu0 0
      %3650 = vmatmul.mubr.bf16.gmra.mrb[0].mxu0 %v3512
      %v3651 = vpop.f32.mrb[0].mxu0
      %v3652 = vadd.f32 %v3388, %v3651
      %v3653 = vpop.f32.mrb[0].mxu0
      %v3654 = vpop.f32.mrb[0].mxu0
      %v3655 = vadd.f32 %v3391, %v3654
      %v3656 = vpop.f32.mrb[0].mxu0
      %3657 = vmatprep.mubr.bf16.mxu0 0
      %3658 = vmatmul.mubr.bf16.gmra.mrb[0].mxu0 %v3515
      %v3659 = vpop.f32.mrb[0].mxu0
      %v3660 = vadd.f32 %v3396, %v3659
      %v3661 = vpop.f32.mrb[0].mxu0
      %v3662 = vpop.f32.mrb[0].mxu0
      %v3663 = vadd.f32 %v3399, %v3662
      %v3664 = vpop.f32.mrb[0].mxu0
      %3665 = vmatprep.mubr.bf16.mxu0 0
      %3666 = vmatmul.mubr.bf16.gmra.mrb[0].mxu0 %v3518
      %v3667 = vpop.f32.mrb[0].mxu0
      %v3668 = vadd.f32 %v3404, %v3667
      %v3669 = vpop.f32.mrb[0].mxu0
      %v3670 = vpop.f32.mrb[0].mxu0
      %v3671 = vadd.f32 %v3407, %v3670
      %v3672 = vpop.f32.mrb[0].mxu0
      %3673 = vmatprep.mubr.bf16.mxu0 0
      %3674 = vmatmul.mubr.bf16.gmra.mrb[0].mxu0 %v3521
      %v3675 = vpop.f32.mrb[0].mxu0
      %v3676 = vadd.f32 %v3412, %v3675
      %v3677 = vpop.f32.mrb[0].mxu0
      %v3678 = vpop.f32.mrb[0].mxu0
      %v3679 = vadd.f32 %v3415, %v3678
      %v3680 = vpop.f32.mrb[0].mxu0
      %3681 = vmatprep.mubr.bf16.mxu0 0
      %3682 = vmatmul.mubr.bf16.gmra.mrb[0].mxu0 %v3524
      %v3683 = vpop.f32.mrb[0].mxu0
      %v3684 = vadd.f32 %v3420, %v3683
      %v3685 = vpop.f32.mrb[0].mxu0
      %v3686 = vpop.f32.mrb[0].mxu0
      %v3687 = vadd.f32 %v3423, %v3686
      %v3688 = vpop.f32.mrb[0].mxu0
      %3689 = vdwg.mxu0
      %vm3692 = vcmask 1040384
      %vm3693 = vcmask 1044484
      %vm3694 = vmor %vm3692, %vm3693
      %v3695 = vrot.slane %v226, 7
      %v3696 = vrot.slane %v3695, 4
      %v3697 = vrot.slane %v227, 7
      %v3698 = vsel %vm3694, %v3696, %v3697
      %v3699 = vrot.slane %v3697, 4
      %v3700 = vrot.slane %v228, 7
      %v3701 = vsel %vm3694, %v3699, %v3700
      %v3702 = vrot.slane %v229, 7
      %v3703 = vrot.slane %v3702, 4
      %v3704 = vrot.slane %v230, 7
      %v3705 = vsel %vm3694, %v3703, %v3704
      %v3706 = vrot.slane %v3704, 4
      %v3707 = vrot.slane %v231, 7
      %v3708 = vsel %vm3694, %v3706, %v3707
      %v3709 = vrot.slane %v232, 7
      %v3710 = vrot.slane %v3709, 4
      %v3711 = vrot.slane %v233, 7
      %v3712 = vsel %vm3694, %v3710, %v3711
      %v3713 = vrot.slane %v3711, 4
      %v3714 = vrot.slane %v234, 7
      %v3715 = vsel %vm3694, %v3713, %v3714
      %v3716 = vrot.slane %v235, 7
      %v3717 = vrot.slane %v3716, 4
      %v3718 = vrot.slane %v236, 7
      %v3719 = vsel %vm3694, %v3717, %v3718
      %v3720 = vrot.slane %v3718, 4
      %v3721 = vrot.slane %v237, 7
      %v3722 = vsel %vm3694, %v3720, %v3721
      %v3723 = vrot.slane %v238, 7
      %v3724 = vrot.slane %v3723, 4
      %v3725 = vrot.slane %v239, 7
      %v3726 = vsel %vm3694, %v3724, %v3725
      %v3727 = vrot.slane %v3725, 4
      %v3728 = vrot.slane %v240, 7
      %v3729 = vsel %vm3694, %v3727, %v3728
      %v3730 = vrot.slane %v241, 7
      %v3731 = vrot.slane %v3730, 4
      %v3732 = vrot.slane %v242, 7
      %v3733 = vsel %vm3694, %v3731, %v3732
      %v3734 = vrot.slane %v3732, 4
      %v3735 = vrot.slane %v243, 7
      %v3736 = vsel %vm3694, %v3734, %v3735
      %v3737 = vrot.slane %v244, 7
      %v3738 = vrot.slane %v3737, 4
      %v3739 = vrot.slane %v245, 7
      %v3740 = vsel %vm3694, %v3738, %v3739
      %v3741 = vrot.slane %v3739, 4
      %v3742 = vrot.slane %v246, 7
      %v3743 = vsel %vm3694, %v3741, %v3742
      %v3744 = vrot.slane %v247, 7
      %v3745 = vrot.slane %v3744, 4
      %v3746 = vrot.slane %v248, 7
      %v3747 = vsel %vm3694, %v3745, %v3746
      %v3748 = vrot.slane %v3746, 4
      %v3749 = vrot.slane %v249, 7
      %v3750 = vsel %vm3694, %v3748, %v3749
      %v3751 = vrot.slane %v250, 7
      %v3752 = vrot.slane %v3751, 4
      %v3753 = vrot.slane %v251, 7
      %v3754 = vsel %vm3694, %v3752, %v3753
      %v3755 = vrot.slane %v3753, 4
      %v3756 = vrot.slane %v252, 7
      %v3757 = vsel %vm3694, %v3755, %v3756
      %v3758 = vrot.slane %v253, 7
      %v3759 = vrot.slane %v3758, 4
      %v3760 = vrot.slane %v254, 7
      %v3761 = vsel %vm3694, %v3759, %v3760
      %v3762 = vrot.slane %v3760, 4
      %v3763 = vrot.slane %v255, 7
      %v3764 = vsel %vm3694, %v3762, %v3763
      %v3765 = vrot.slane %v256, 7
      %v3766 = vrot.slane %v3765, 4
      %v3767 = vrot.slane %v257, 7
      %v3768 = vsel %vm3694, %v3766, %v3767
      %v3769 = vrot.slane %v3767, 4
      %v3770 = vrot.slane %v258, 7
      %v3771 = vsel %vm3694, %v3769, %v3770
      %v3772 = vrot.slane %v259, 7
      %v3773 = vrot.slane %v3772, 4
      %v3774 = vrot.slane %v260, 7
      %v3775 = vsel %vm3694, %v3773, %v3774
      %v3776 = vrot.slane %v3774, 4
      %v3777 = vrot.slane %v261, 7
      %v3778 = vsel %vm3694, %v3776, %v3777
      %v3779 = vrot.slane %v262, 7
      %v3780 = vrot.slane %v3779, 4
      %v3781 = vrot.slane %v263, 7
      %v3782 = vsel %vm3694, %v3780, %v3781
      %v3783 = vrot.slane %v3781, 4
      %v3784 = vrot.slane %v264, 7
      %v3785 = vsel %vm3694, %v3783, %v3784
      %v3786 = vrot.slane %v265, 7
      %v3787 = vrot.slane %v3786, 4
      %v3788 = vrot.slane %v266, 7
      %v3789 = vsel %vm3694, %v3787, %v3788
      %v3790 = vrot.slane %v3788, 4
      %v3791 = vrot.slane %v267, 7
      %v3792 = vsel %vm3694, %v3790, %v3791
      %v3793 = vrot.slane %v268, 7
      %v3794 = vrot.slane %v3793, 4
      %v3795 = vrot.slane %v269, 7
      %v3796 = vsel %vm3694, %v3794, %v3795
      %v3797 = vrot.slane %v3795, 4
      %v3798 = vrot.slane %v270, 7
      %v3799 = vsel %vm3694, %v3797, %v3798
      %v3800 = vrot.slane %v271, 7
      %v3801 = vrot.slane %v3800, 4
      %v3802 = vrot.slane %v272, 7
      %v3803 = vsel %vm3694, %v3801, %v3802
      %v3804 = vrot.slane %v3802, 4
      %v3805 = vrot.slane %v273, 7
      %v3806 = vsel %vm3694, %v3804, %v3805
      %s3807 = scalar_lea.vmem %s2, 4
      %v3808 = vld [vmem:[%s3807] sm:$0x3]
      %v3809 = vunpack.c.l.b16 %v3698
      %v3810 = vunpack.c.l.b16 %v3701
      %v3811 = vunpack.c.l.b16 %v3705
      %v3812 = vunpack.c.l.b16 %v3708
      %v3813 = vunpack.c.l.b16 %v3712
      %v3814 = vunpack.c.l.b16 %v3715
      %v3815 = vunpack.c.l.b16 %v3719
      %v3816 = vunpack.c.l.b16 %v3722
      %v3817 = vunpack.c.l.b16 %v3726
      %v3818 = vunpack.c.l.b16 %v3729
      %v3819 = vunpack.c.l.b16 %v3733
      %v3820 = vunpack.c.l.b16 %v3736
      %v3821 = vunpack.c.l.b16 %v3740
      %v3822 = vunpack.c.l.b16 %v3743
      %v3823 = vunpack.c.l.b16 %v3747
      %v3824 = vunpack.c.l.b16 %v3750
      %v3825 = vunpack.c.l.b16 %v3754
      %v3826 = vunpack.c.l.b16 %v3757
      %v3827 = vunpack.c.l.b16 %v3761
      %v3828 = vunpack.c.l.b16 %v3764
      %v3829 = vunpack.c.l.b16 %v3768
      %v3830 = vunpack.c.l.b16 %v3771
      %v3831 = vunpack.c.l.b16 %v3775
      %v3832 = vunpack.c.l.b16 %v3778
      %v3833 = vunpack.c.l.b16 %v3782
      %v3834 = vunpack.c.l.b16 %v3785
      %v3835 = vunpack.c.l.b16 %v3789
      %v3836 = vunpack.c.l.b16 %v3792
      %v3837 = vunpack.c.l.b16 %v3796
      %v3838 = vunpack.c.l.b16 %v3799
      %v3839 = vunpack.c.l.b16 %v3803
      %v3840 = vunpack.c.l.b16 %v3806
      %v3841 = vpack.c.b16 %v3810, %v3809
      %v3842 = vpack.c.b16 %v3812, %v3811
      %v3843 = vpack.c.b16 %v3814, %v3813
      %v3844 = vpack.c.b16 %v3816, %v3815
      %v3845 = vpack.c.b16 %v3818, %v3817
      %v3846 = vpack.c.b16 %v3820, %v3819
      %v3847 = vpack.c.b16 %v3822, %v3821
      %v3848 = vpack.c.b16 %v3824, %v3823
      %v3849 = vpack.c.b16 %v3826, %v3825
      %v3850 = vpack.c.b16 %v3828, %v3827
      %v3851 = vpack.c.b16 %v3830, %v3829
      %v3852 = vpack.c.b16 %v3832, %v3831
      %v3853 = vpack.c.b16 %v3834, %v3833
      %v3854 = vpack.c.b16 %v3836, %v3835
      %v3855 = vpack.c.b16 %v3838, %v3837
      %v3856 = vpack.c.b16 %v3840, %v3839
      %v3858 = vsel %vm957, %v3841, 0
      %v3861 = vsel %vm957, %v3842, 0
      %v3864 = vsel %vm957, %v3843, 0
      %v3867 = vsel %vm957, %v3844, 0
      %v3870 = vsel %vm957, %v3845, 0
      %v3873 = vsel %vm957, %v3846, 0
      %v3876 = vsel %vm957, %v3847, 0
      %v3879 = vsel %vm957, %v3848, 0
      %v3882 = vsel %vm957, %v3849, 0
      %v3885 = vsel %vm957, %v3850, 0
      %v3888 = vsel %vm957, %v3851, 0
      %v3891 = vsel %vm957, %v3852, 0
      %v3894 = vsel %vm957, %v3853, 0
      %v3897 = vsel %vm957, %v3854, 0
      %v3900 = vsel %vm957, %v3855, 0
      %v3903 = vsel %vm957, %v3856, 0
      %v3906 = vsel %vm1006, %v3808, 0
      %3908 = vmatprep.subr.bf16.mxu0 0
      %3909 = vmatpush1.bf16.msra.mxu0 %v3906
      %3910 = vmatprep.subr.bf16.mxu0 0
      %3911 = vmatpush1.bf16.msra.mxu0 0
      %3912 = vmatprep.subr.bf16.mxu0 0
      %3913 = vmatpush1.bf16.msra.mxu0 0
      %3914 = vmatprep.subr.bf16.mxu0 0
      %3915 = vmatpush1.bf16.msra.mxu0 0
      %3916 = vmatprep.subr.bf16.mxu0 0
      %3917 = vmatpush1.bf16.msra.mxu0 0
      %3918 = vmatprep.subr.bf16.mxu0 0
      %3919 = vmatpush1.bf16.msra.mxu0 0
      %3920 = vmatprep.subr.bf16.mxu0 0
      %3921 = vmatpush1.bf16.msra.mxu0 0
      %3922 = vmatprep.subr.bf16.mxu0 0
      %3923 = vmatpush1.bf16.msra.mxu0 0
      %3924 = vmatprep.subr.bf16.mxu0 0
      %3925 = vmatpush1.bf16.msra.mxu0 0
      %3926 = vmatprep.subr.bf16.mxu0 0
      %3927 = vmatpush1.bf16.msra.mxu0 0
      %3928 = vmatprep.subr.bf16.mxu0 0
      %3929 = vmatpush1.bf16.msra.mxu0 0
      %3930 = vmatprep.subr.bf16.mxu0 0
      %3931 = vmatpush1.bf16.msra.mxu0 0
      %3932 = vmatprep.subr.bf16.mxu0 0
      %3933 = vmatpush1.bf16.msra.mxu0 0
      %3934 = vmatprep.subr.bf16.mxu0 0
      %3935 = vmatpush1.bf16.msra.mxu0 0
      %3936 = vmatprep.subr.bf16.mxu0 0
      %3937 = vmatpush1.bf16.msra.mxu0 0
      %3938 = vmatprep.subr.bf16.mxu0 0
      %3939 = vmatpush1.bf16.msra.mxu0 0
      %3940 = vmatprep.mubr.bf16.mxu0 0
      %3941 = vmatmul.mubr.bf16.gmra.mrb[0].mxu0 %v3858
      %v3942 = vpop.f32.mrb[0].mxu0
      %v3943 = vadd.f32 0.0, %v3942
      %v3944 = vpop.f32.mrb[0].mxu0
      %v3945 = vpop.f32.mrb[0].mxu0
      %v3946 = vadd.f32 0.0, %v3945
      %v3947 = vpop.f32.mrb[0].mxu0
      %3948 = vmatprep.mubr.bf16.mxu0 0
      %3949 = vmatmul.mubr.bf16.gmra.mrb[0].mxu0 %v3861
      %v3950 = vpop.f32.mrb[0].mxu0
      %v3951 = vadd.f32 0.0, %v3950
      %v3952 = vpop.f32.mrb[0].mxu0
      %v3953 = vpop.f32.mrb[0].mxu0
      %v3954 = vadd.f32 0.0, %v3953
      %v3955 = vpop.f32.mrb[0].mxu0
      %3956 = vmatprep.mubr.bf16.mxu0 0
      %3957 = vmatmul.mubr.bf16.gmra.mrb[0].mxu0 %v3864
      %v3958 = vpop.f32.mrb[0].mxu0
      %v3959 = vadd.f32 0.0, %v3958
      %v3960 = vpop.f32.mrb[0].mxu0
      %v3961 = vpop.f32.mrb[0].mxu0
      %v3962 = vadd.f32 0.0, %v3961
      %v3963 = vpop.f32.mrb[0].mxu0
      %3964 = vmatprep.mubr.bf16.mxu0 0
      %3965 = vmatmul.mubr.bf16.gmra.mrb[0].mxu0 %v3867
      %v3966 = vpop.f32.mrb[0].mxu0
      %v3967 = vadd.f32 0.0, %v3966
      %v3968 = vpop.f32.mrb[0].mxu0
      %v3969 = vpop.f32.mrb[0].mxu0
      %v3970 = vadd.f32 0.0, %v3969
      %v3971 = vpop.f32.mrb[0].mxu0
      %3972 = vmatprep.mubr.bf16.mxu0 0
      %3973 = vmatmul.mubr.bf16.gmra.mrb[0].mxu0 %v3870
      %v3974 = vpop.f32.mrb[0].mxu0
      %v3975 = vadd.f32 0.0, %v3974
      %v3976 = vpop.f32.mrb[0].mxu0
      %v3977 = vpop.f32.mrb[0].mxu0
      %v3978 = vadd.f32 0.0, %v3977
      %v3979 = vpop.f32.mrb[0].mxu0
      %3980 = vmatprep.mubr.bf16.mxu0 0
      %3981 = vmatmul.mubr.bf16.gmra.mrb[0].mxu0 %v3873
      %v3982 = vpop.f32.mrb[0].mxu0
      %v3983 = vadd.f32 0.0, %v3982
      %v3984 = vpop.f32.mrb[0].mxu0
      %v3985 = vpop.f32.mrb[0].mxu0
      %v3986 = vadd.f32 0.0, %v3985
      %v3987 = vpop.f32.mrb[0].mxu0
      %3988 = vmatprep.mubr.bf16.mxu0 0
      %3989 = vmatmul.mubr.bf16.gmra.mrb[0].mxu0 %v3876
      %v3990 = vpop.f32.mrb[0].mxu0
      %v3991 = vadd.f32 0.0, %v3990
      %v3992 = vpop.f32.mrb[0].mxu0
      %v3993 = vpop.f32.mrb[0].mxu0
      %v3994 = vadd.f32 0.0, %v3993
      %v3995 = vpop.f32.mrb[0].mxu0
      %3996 = vmatprep.mubr.bf16.mxu0 0
      %3997 = vmatmul.mubr.bf16.gmra.mrb[0].mxu0 %v3879
      %v3998 = vpop.f32.mrb[0].mxu0
      %v3999 = vadd.f32 0.0, %v3998
      %v4000 = vpop.f32.mrb[0].mxu0
      %v4001 = vpop.f32.mrb[0].mxu0
      %v4002 = vadd.f32 0.0, %v4001
      %v4003 = vpop.f32.mrb[0].mxu0
      %4004 = vmatprep.mubr.bf16.mxu0 0
      %4005 = vmatmul.mubr.bf16.gmra.mrb[0].mxu0 %v3882
      %v4006 = vpop.f32.mrb[0].mxu0
      %v4007 = vadd.f32 0.0, %v4006
      %v4008 = vpop.f32.mrb[0].mxu0
      %v4009 = vpop.f32.mrb[0].mxu0
      %v4010 = vadd.f32 0.0, %v4009
      %v4011 = vpop.f32.mrb[0].mxu0
      %4012 = vmatprep.mubr.bf16.mxu0 0
      %4013 = vmatmul.mubr.bf16.gmra.mrb[0].mxu0 %v3885
      %v4014 = vpop.f32.mrb[0].mxu0
      %v4015 = vadd.f32 0.0, %v4014
      %v4016 = vpop.f32.mrb[0].mxu0
      %v4017 = vpop.f32.mrb[0].mxu0
      %v4018 = vadd.f32 0.0, %v4017
      %v4019 = vpop.f32.mrb[0].mxu0
      %4020 = vmatprep.mubr.bf16.mxu0 0
      %4021 = vmatmul.mubr.bf16.gmra.mrb[0].mxu0 %v3888
      %v4022 = vpop.f32.mrb[0].mxu0
      %v4023 = vadd.f32 0.0, %v4022
      %v4024 = vpop.f32.mrb[0].mxu0
      %v4025 = vpop.f32.mrb[0].mxu0
      %v4026 = vadd.f32 0.0, %v4025
      %v4027 = vpop.f32.mrb[0].mxu0
      %4028 = vmatprep.mubr.bf16.mxu0 0
      %4029 = vmatmul.mubr.bf16.gmra.mrb[0].mxu0 %v3891
      %v4030 = vpop.f32.mrb[0].mxu0
      %v4031 = vadd.f32 0.0, %v4030
      %v4032 = vpop.f32.mrb[0].mxu0
      %v4033 = vpop.f32.mrb[0].mxu0
      %v4034 = vadd.f32 0.0, %v4033
      %v4035 = vpop.f32.mrb[0].mxu0
      %4036 = vmatprep.mubr.bf16.mxu0 0
      %4037 = vmatmul.mubr.bf16.gmra.mrb[0].mxu0 %v3894
      %v4038 = vpop.f32.mrb[0].mxu0
      %v4039 = vadd.f32 0.0, %v4038
      %v4040 = vpop.f32.mrb[0].mxu0
      %v4041 = vpop.f32.mrb[0].mxu0
      %v4042 = vadd.f32 0.0, %v4041
      %v4043 = vpop.f32.mrb[0].mxu0
      %4044 = vmatprep.mubr.bf16.mxu0 0
      %4045 = vmatmul.mubr.bf16.gmra.mrb[0].mxu0 %v3897
      %v4046 = vpop.f32.mrb[0].mxu0
      %v4047 = vadd.f32 0.0, %v4046
      %v4048 = vpop.f32.mrb[0].mxu0
      %v4049 = vpop.f32.mrb[0].mxu0
      %v4050 = vadd.f32 0.0, %v4049
      %v4051 = vpop.f32.mrb[0].mxu0
      %4052 = vmatprep.mubr.bf16.mxu0 0
      %4053 = vmatmul.mubr.bf16.gmra.mrb[0].mxu0 %v3900
      %v4054 = vpop.f32.mrb[0].mxu0
      %v4055 = vadd.f32 0.0, %v4054
      %v4056 = vpop.f32.mrb[0].mxu0
      %v4057 = vpop.f32.mrb[0].mxu0
      %v4058 = vadd.f32 0.0, %v4057
      %v4059 = vpop.f32.mrb[0].mxu0
      %4060 = vmatprep.mubr.bf16.mxu0 0
      %4061 = vmatmul.mubr.bf16.gmra.mrb[0].mxu0 %v3903
      %v4062 = vpop.f32.mrb[0].mxu0
      %v4063 = vadd.f32 0.0, %v4062
      %v4064 = vpop.f32.mrb[0].mxu0
      %v4065 = vpop.f32.mrb[0].mxu0
      %v4066 = vadd.f32 0.0, %v4065
      %v4067 = vpop.f32.mrb[0].mxu0
      %4068 = vdwg.mxu0
      %v4069 = vadd.f32 %v3564, %v3943
      %v4070 = vadd.f32 %v3567, %v3946
      %v4071 = vadd.f32 %v3572, %v3951
      %v4072 = vadd.f32 %v3575, %v3954
      %v4073 = vadd.f32 %v3580, %v3959
      %v4074 = vadd.f32 %v3583, %v3962
      %v4075 = vadd.f32 %v3588, %v3967
      %v4076 = vadd.f32 %v3591, %v3970
      %v4077 = vadd.f32 %v3596, %v3975
      %v4078 = vadd.f32 %v3599, %v3978
      %v4079 = vadd.f32 %v3604, %v3983
      %v4080 = vadd.f32 %v3607, %v3986
      %v4081 = vadd.f32 %v3612, %v3991
      %v4082 = vadd.f32 %v3615, %v3994
      %v4083 = vadd.f32 %v3620, %v3999
      %v4084 = vadd.f32 %v3623, %v4002
      %v4085 = vadd.f32 %v3628, %v4007
      %v4086 = vadd.f32 %v3631, %v4010
      %v4087 = vadd.f32 %v3636, %v4015
      %v4088 = vadd.f32 %v3639, %v4018
      %v4089 = vadd.f32 %v3644, %v4023
      %v4090 = vadd.f32 %v3647, %v4026
      %v4091 = vadd.f32 %v3652, %v4031
      %v4092 = vadd.f32 %v3655, %v4034
      %v4093 = vadd.f32 %v3660, %v4039
      %v4094 = vadd.f32 %v3663, %v4042
      %v4095 = vadd.f32 %v3668, %v4047
      %v4096 = vadd.f32 %v3671, %v4050
      %v4097 = vadd.f32 %v3676, %v4055
      %v4098 = vadd.f32 %v3679, %v4058
      %v4099 = vadd.f32 %v3684, %v4063
      %v4100 = vadd.f32 %v3687, %v4066
      %s4101 = scalar_lea.vmem %s2, 6
      %v4102 = vld [vmem:[%s4101] sm:$0x3]
      %v4103 = vunpack.c.l.b16 %v274
      %v4104 = vunpack.c.l.b16 %v275
      %v4105 = vunpack.c.l.b16 %v277
      %v4106 = vunpack.c.l.b16 %v278
      %v4107 = vunpack.c.l.b16 %v280
      %v4108 = vunpack.c.l.b16 %v281
      %v4109 = vpack.c.b16 %v4104, %v4103
      %v4110 = vpack.c.b16 %v4106, %v4105
      %v4111 = vpack.c.b16 %v4108, %v4107
      %v4113 = vsel %vm957, %v4109, 0
      %v4116 = vsel %vm957, %v4110, 0
      %v4119 = vsel %vm957, %v4111, 0
      %v4122 = vsel %vm1006, %v4102, 0
      %4124 = vmatprep.subr.bf16.mxu0 0
      %4125 = vmatpush1.bf16.msra.mxu0 %v4122
      %4126 = vmatprep.subr.bf16.mxu0 0
      %4127 = vmatpush1.bf16.msra.mxu0 0
      %4128 = vmatprep.subr.bf16.mxu0 0
      %4129 = vmatpush1.bf16.msra.mxu0 0
      %4130 = vmatprep.subr.bf16.mxu0 0
      %4131 = vmatpush1.bf16.msra.mxu0 0
      %4132 = vmatprep.subr.bf16.mxu0 0
      %4133 = vmatpush1.bf16.msra.mxu0 0
      %4134 = vmatprep.subr.bf16.mxu0 0
      %4135 = vmatpush1.bf16.msra.mxu0 0
      %4136 = vmatprep.subr.bf16.mxu0 0
      %4137 = vmatpush1.bf16.msra.mxu0 0
      %4138 = vmatprep.subr.bf16.mxu0 0
      %4139 = vmatpush1.bf16.msra.mxu0 0
      %4140 = vmatprep.subr.bf16.mxu0 0
      %4141 = vmatpush1.bf16.msra.mxu0 0
      %4142 = vmatprep.subr.bf16.mxu0 0
      %4143 = vmatpush1.bf16.msra.mxu0 0
      %4144 = vmatprep.subr.bf16.mxu0 0
      %4145 = vmatpush1.bf16.msra.mxu0 0
      %4146 = vmatprep.subr.bf16.mxu0 0
      %4147 = vmatpush1.bf16.msra.mxu0 0
      %4148 = vmatprep.subr.bf16.mxu0 0
      %4149 = vmatpush1.bf16.msra.mxu0 0
      %4150 = vmatprep.subr.bf16.mxu0 0
      %4151 = vmatpush1.bf16.msra.mxu0 0
      %4152 = vmatprep.subr.bf16.mxu0 0
      %4153 = vmatpush1.bf16.msra.mxu0 0
      %4154 = vmatprep.subr.bf16.mxu0 0
      %4155 = vmatpush1.bf16.msra.mxu0 0
      %4156 = vmatprep.mubr.bf16.mxu0 0
      %4157 = vmatmul.mubr.bf16.gmra.mrb[0].mxu0 %v3488
      %v4158 = vpop.f32.mrb[0].mxu0
      %v4159 = vadd.f32 0.0, %v4158
      %v4160 = vpop.f32.mrb[0].mxu0
      %v4161 = vpop.f32.mrb[0].mxu0
      %v4162 = vadd.f32 0.0, %v4161
      %v4163 = vpop.f32.mrb[0].mxu0
      %4164 = vmatprep.mubr.bf16.mxu0 0
      %4165 = vmatmul.mubr.bf16.gmra.mrb[0].mxu0 %v3491
      %v4166 = vpop.f32.mrb[0].mxu0
      %v4167 = vadd.f32 0.0, %v4166
      %v4168 = vpop.f32.mrb[0].mxu0
      %v4169 = vpop.f32.mrb[0].mxu0
      %v4170 = vadd.f32 0.0, %v4169
      %v4171 = vpop.f32.mrb[0].mxu0
      %4172 = vmatprep.mubr.bf16.mxu0 0
      %4173 = vmatmul.mubr.bf16.gmra.mrb[0].mxu0 %v3494
      %v4174 = vpop.f32.mrb[0].mxu0
      %v4175 = vadd.f32 0.0, %v4174
      %v4176 = vpop.f32.mrb[0].mxu0
      %v4177 = vpop.f32.mrb[0].mxu0
      %v4178 = vadd.f32 0.0, %v4177
      %v4179 = vpop.f32.mrb[0].mxu0
      %4180 = vmatprep.mubr.bf16.mxu0 0
      %4181 = vmatmul.mubr.bf16.gmra.mrb[0].mxu0 %v3497
      %v4182 = vpop.f32.mrb[0].mxu0
      %v4183 = vadd.f32 0.0, %v4182
      %v4184 = vpop.f32.mrb[0].mxu0
      %v4185 = vpop.f32.mrb[0].mxu0
      %v4186 = vadd.f32 0.0, %v4185
      %v4187 = vpop.f32.mrb[0].mxu0
      %4188 = vmatprep.mubr.bf16.mxu0 0
      %4189 = vmatmul.mubr.bf16.gmra.mrb[0].mxu0 %v3500
      %v4190 = vpop.f32.mrb[0].mxu0
      %v4191 = vadd.f32 0.0, %v4190
      %v4192 = vpop.f32.mrb[0].mxu0
      %v4193 = vpop.f32.mrb[0].mxu0
      %v4194 = vadd.f32 0.0, %v4193
      %v4195 = vpop.f32.mrb[0].mxu0
      %4196 = vmatprep.mubr.bf16.mxu0 0
      %4197 = vmatmul.mubr.bf16.gmra.mrb[0].mxu0 %v3503
      %v4198 = vpop.f32.mrb[0].mxu0
      %v4199 = vadd.f32 0.0, %v4198
      %v4200 = vpop.f32.mrb[0].mxu0
      %v4201 = vpop.f32.mrb[0].mxu0
      %v4202 = vadd.f32 0.0, %v4201
      %v4203 = vpop.f32.mrb[0].mxu0
      %4204 = vmatprep.mubr.bf16.mxu0 0
      %4205 = vmatmul.mubr.bf16.gmra.mrb[0].mxu0 %v3506
      %v4206 = vpop.f32.mrb[0].mxu0
      %v4207 = vadd.f32 0.0, %v4206
      %v4208 = vpop.f32.mrb[0].mxu0
      %v4209 = vpop.f32.mrb[0].mxu0
      %v4210 = vadd.f32 0.0, %v4209
      %v4211 = vpop.f32.mrb[0].mxu0
      %4212 = vmatprep.mubr.bf16.mxu0 0
      %4213 = vmatmul.mubr.bf16.gmra.mrb[0].mxu0 %v3509
      %v4214 = vpop.f32.mrb[0].mxu0
      %v4215 = vadd.f32 0.0, %v4214
      %v4216 = vpop.f32.mrb[0].mxu0
      %v4217 = vpop.f32.mrb[0].mxu0
      %v4218 = vadd.f32 0.0, %v4217
      %v4219 = vpop.f32.mrb[0].mxu0
      %4220 = vmatprep.mubr.bf16.mxu0 0
      %4221 = vmatmul.mubr.bf16.gmra.mrb[0].mxu0 %v3512
      %v4222 = vpop.f32.mrb[0].mxu0
      %v4223 = vadd.f32 0.0, %v4222
      %v4224 = vpop.f32.mrb[0].mxu0
      %v4225 = vpop.f32.mrb[0].mxu0
      %v4226 = vadd.f32 0.0, %v4225
      %v4227 = vpop.f32.mrb[0].mxu0
      %4228 = vmatprep.mubr.bf16.mxu0 0
      %4229 = vmatmul.mubr.bf16.gmra.mrb[0].mxu0 %v3515
      %v4230 = vpop.f32.mrb[0].mxu0
      %v4231 = vadd.f32 0.0, %v4230
      %v4232 = vpop.f32.mrb[0].mxu0
      %v4233 = vpop.f32.mrb[0].mxu0
      %v4234 = vadd.f32 0.0, %v4233
      %v4235 = vpop.f32.mrb[0].mxu0
      %4236 = vmatprep.mubr.bf16.mxu0 0
      %4237 = vmatmul.mubr.bf16.gmra.mrb[0].mxu0 %v3518
      %v4238 = vpop.f32.mrb[0].mxu0
      %v4239 = vadd.f32 0.0, %v4238
      %v4240 = vpop.f32.mrb[0].mxu0
      %v4241 = vpop.f32.mrb[0].mxu0
      %v4242 = vadd.f32 0.0, %v4241
      %v4243 = vpop.f32.mrb[0].mxu0
      %4244 = vmatprep.mubr.bf16.mxu0 0
      %4245 = vmatmul.mubr.bf16.gmra.mrb[0].mxu0 %v3521
      %v4246 = vpop.f32.mrb[0].mxu0
      %v4247 = vadd.f32 0.0, %v4246
      %v4248 = vpop.f32.mrb[0].mxu0
      %v4249 = vpop.f32.mrb[0].mxu0
      %v4250 = vadd.f32 0.0, %v4249
      %v4251 = vpop.f32.mrb[0].mxu0
      %4252 = vmatprep.mubr.bf16.mxu0 0
      %4253 = vmatmul.mubr.bf16.gmra.mrb[0].mxu0 %v3524
      %v4254 = vpop.f32.mrb[0].mxu0
      %v4255 = vadd.f32 0.0, %v4254
      %v4256 = vpop.f32.mrb[0].mxu0
      %v4257 = vpop.f32.mrb[0].mxu0
      %v4258 = vadd.f32 0.0, %v4257
      %v4259 = vpop.f32.mrb[0].mxu0
      %4260 = vmatprep.mubr.bf16.mxu0 0
      %4261 = vmatmul.mubr.bf16.gmra.mrb[0].mxu0 %v4113
      %v4262 = vpop.f32.mrb[0].mxu0
      %v4263 = vadd.f32 0.0, %v4262
      %v4264 = vpop.f32.mrb[0].mxu0
      %v4265 = vpop.f32.mrb[0].mxu0
      %v4266 = vadd.f32 0.0, %v4265
      %v4267 = vpop.f32.mrb[0].mxu0
      %4268 = vmatprep.mubr.bf16.mxu0 0
      %4269 = vmatmul.mubr.bf16.gmra.mrb[0].mxu0 %v4116
      %v4270 = vpop.f32.mrb[0].mxu0
      %v4271 = vadd.f32 0.0, %v4270
      %v4272 = vpop.f32.mrb[0].mxu0
      %v4273 = vpop.f32.mrb[0].mxu0
      %v4274 = vadd.f32 0.0, %v4273
      %v4275 = vpop.f32.mrb[0].mxu0
      %4276 = vmatprep.mubr.bf16.mxu0 0
      %4277 = vmatmul.mubr.bf16.gmra.mrb[0].mxu0 %v4119
      %v4278 = vpop.f32.mrb[0].mxu0
      %v4279 = vadd.f32 0.0, %v4278
      %v4280 = vpop.f32.mrb[0].mxu0
      %v4281 = vpop.f32.mrb[0].mxu0
      %v4282 = vadd.f32 0.0, %v4281
      %v4283 = vpop.f32.mrb[0].mxu0
      %4284 = vdwg.mxu0
      %v4285 = vadd.f32 %v4069, %v4159
      %v4286 = vadd.f32 %v4070, %v4162
      %v4287 = vadd.f32 %v4071, %v4167
      %v4288 = vadd.f32 %v4072, %v4170
      %v4289 = vadd.f32 %v4073, %v4175
      %v4290 = vadd.f32 %v4074, %v4178
      %v4291 = vadd.f32 %v4075, %v4183
      %v4292 = vadd.f32 %v4076, %v4186
      %v4293 = vadd.f32 %v4077, %v4191
      %v4294 = vadd.f32 %v4078, %v4194
      %v4295 = vadd.f32 %v4079, %v4199
      %v4296 = vadd.f32 %v4080, %v4202
      %v4297 = vadd.f32 %v4081, %v4207
      %v4298 = vadd.f32 %v4082, %v4210
      %v4299 = vadd.f32 %v4083, %v4215
      %v4300 = vadd.f32 %v4084, %v4218
      %v4301 = vadd.f32 %v4085, %v4223
      %v4302 = vadd.f32 %v4086, %v4226
      %v4303 = vadd.f32 %v4087, %v4231
      %v4304 = vadd.f32 %v4088, %v4234
      %v4305 = vadd.f32 %v4089, %v4239
      %v4306 = vadd.f32 %v4090, %v4242
      %v4307 = vadd.f32 %v4091, %v4247
      %v4308 = vadd.f32 %v4092, %v4250
      %v4309 = vadd.f32 %v4093, %v4255
      %v4310 = vadd.f32 %v4094, %v4258
      %v4311 = vadd.f32 %v4095, %v4263
      %v4312 = vadd.f32 %v4096, %v4266
      %v4313 = vadd.f32 %v4097, %v4271
      %v4314 = vadd.f32 %v4098, %v4274
      %v4315 = vadd.f32 %v4099, %v4279
      %v4316 = vadd.f32 %v4100, %v4282
      %s4317 = scalar_lea.vmem %s2, 8
      %v4318 = vld [vmem:[%s4317] sm:$0x3]
      %v4320 = vsel %vm1006, %v4318, 0
      %4322 = vmatprep.subr.bf16.mxu0 0
      %4323 = vmatpush1.bf16.msra.mxu0 %v4320
      %4324 = vmatprep.subr.bf16.mxu0 0
      %4325 = vmatpush1.bf16.msra.mxu0 0
      %4326 = vmatprep.subr.bf16.mxu0 0
      %4327 = vmatpush1.bf16.msra.mxu0 0
      %4328 = vmatprep.subr.bf16.mxu0 0
      %4329 = vmatpush1.bf16.msra.mxu0 0
      %4330 = vmatprep.subr.bf16.mxu0 0
      %4331 = vmatpush1.bf16.msra.mxu0 0
      %4332 = vmatprep.subr.bf16.mxu0 0
      %4333 = vmatpush1.bf16.msra.mxu0 0
      %4334 = vmatprep.subr.bf16.mxu0 0
      %4335 = vmatpush1.bf16.msra.mxu0 0
      %4336 = vmatprep.subr.bf16.mxu0 0
      %4337 = vmatpush1.bf16.msra.mxu0 0
      %4338 = vmatprep.subr.bf16.mxu0 0
      %4339 = vmatpush1.bf16.msra.mxu0 0
      %4340 = vmatprep.subr.bf16.mxu0 0
      %4341 = vmatpush1.bf16.msra.mxu0 0
      %4342 = vmatprep.subr.bf16.mxu0 0
      %4343 = vmatpush1.bf16.msra.mxu0 0
      %4344 = vmatprep.subr.bf16.mxu0 0
      %4345 = vmatpush1.bf16.msra.mxu0 0
      %4346 = vmatprep.subr.bf16.mxu0 0
      %4347 = vmatpush1.bf16.msra.mxu0 0
      %4348 = vmatprep.subr.bf16.mxu0 0
      %4349 = vmatpush1.bf16.msra.mxu0 0
      %4350 = vmatprep.subr.bf16.mxu0 0
      %4351 = vmatpush1.bf16.msra.mxu0 0
      %4352 = vmatprep.subr.bf16.mxu0 0
      %4353 = vmatpush1.bf16.msra.mxu0 0
      %4354 = vmatprep.mubr.bf16.mxu0 0
      %4355 = vmatmul.mubr.bf16.gmra.mrb[0].mxu0 %v962
      %v4356 = vpop.f32.mrb[0].mxu0
      %v4357 = vadd.f32 0.0, %v4356
      %v4358 = vpop.f32.mrb[0].mxu0
      %v4359 = vpop.f32.mrb[0].mxu0
      %v4360 = vadd.f32 0.0, %v4359
      %v4361 = vpop.f32.mrb[0].mxu0
      %4362 = vmatprep.mubr.bf16.mxu0 0
      %4363 = vmatmul.mubr.bf16.gmra.mrb[0].mxu0 %v965
      %v4364 = vpop.f32.mrb[0].mxu0
      %v4365 = vadd.f32 0.0, %v4364
      %v4366 = vpop.f32.mrb[0].mxu0
      %v4367 = vpop.f32.mrb[0].mxu0
      %v4368 = vadd.f32 0.0, %v4367
      %v4369 = vpop.f32.mrb[0].mxu0
      %4370 = vmatprep.mubr.bf16.mxu0 0
      %4371 = vmatmul.mubr.bf16.gmra.mrb[0].mxu0 %v968
      %v4372 = vpop.f32.mrb[0].mxu0
      %v4373 = vadd.f32 0.0, %v4372
      %v4374 = vpop.f32.mrb[0].mxu0
      %v4375 = vpop.f32.mrb[0].mxu0
      %v4376 = vadd.f32 0.0, %v4375
      %v4377 = vpop.f32.mrb[0].mxu0
      %4378 = vmatprep.mubr.bf16.mxu0 0
      %4379 = vmatmul.mubr.bf16.gmra.mrb[0].mxu0 %v971
      %v4380 = vpop.f32.mrb[0].mxu0
      %v4381 = vadd.f32 0.0, %v4380
      %v4382 = vpop.f32.mrb[0].mxu0
      %v4383 = vpop.f32.mrb[0].mxu0
      %v4384 = vadd.f32 0.0, %v4383
      %v4385 = vpop.f32.mrb[0].mxu0
      %4386 = vmatprep.mubr.bf16.mxu0 0
      %4387 = vmatmul.mubr.bf16.gmra.mrb[0].mxu0 %v974
      %v4388 = vpop.f32.mrb[0].mxu0
      %v4389 = vadd.f32 0.0, %v4388
      %v4390 = vpop.f32.mrb[0].mxu0
      %v4391 = vpop.f32.mrb[0].mxu0
      %v4392 = vadd.f32 0.0, %v4391
      %v4393 = vpop.f32.mrb[0].mxu0
      %4394 = vmatprep.mubr.bf16.mxu0 0
      %4395 = vmatmul.mubr.bf16.gmra.mrb[0].mxu0 %v977
      %v4396 = vpop.f32.mrb[0].mxu0
      %v4397 = vadd.f32 0.0, %v4396
      %v4398 = vpop.f32.mrb[0].mxu0
      %v4399 = vpop.f32.mrb[0].mxu0
      %v4400 = vadd.f32 0.0, %v4399
      %v4401 = vpop.f32.mrb[0].mxu0
      %4402 = vmatprep.mubr.bf16.mxu0 0
      %4403 = vmatmul.mubr.bf16.gmra.mrb[0].mxu0 %v980
      %v4404 = vpop.f32.mrb[0].mxu0
      %v4405 = vadd.f32 0.0, %v4404
      %v4406 = vpop.f32.mrb[0].mxu0
      %v4407 = vpop.f32.mrb[0].mxu0
      %v4408 = vadd.f32 0.0, %v4407
      %v4409 = vpop.f32.mrb[0].mxu0
      %4410 = vmatprep.mubr.bf16.mxu0 0
      %4411 = vmatmul.mubr.bf16.gmra.mrb[0].mxu0 %v983
      %v4412 = vpop.f32.mrb[0].mxu0
      %v4413 = vadd.f32 0.0, %v4412
      %v4414 = vpop.f32.mrb[0].mxu0
      %v4415 = vpop.f32.mrb[0].mxu0
      %v4416 = vadd.f32 0.0, %v4415
      %v4417 = vpop.f32.mrb[0].mxu0
      %4418 = vmatprep.mubr.bf16.mxu0 0
      %4419 = vmatmul.mubr.bf16.gmra.mrb[0].mxu0 %v986
      %v4420 = vpop.f32.mrb[0].mxu0
      %v4421 = vadd.f32 0.0, %v4420
      %v4422 = vpop.f32.mrb[0].mxu0
      %v4423 = vpop.f32.mrb[0].mxu0
      %v4424 = vadd.f32 0.0, %v4423
      %v4425 = vpop.f32.mrb[0].mxu0
      %4426 = vmatprep.mubr.bf16.mxu0 0
      %4427 = vmatmul.mubr.bf16.gmra.mrb[0].mxu0 %v989
      %v4428 = vpop.f32.mrb[0].mxu0
      %v4429 = vadd.f32 0.0, %v4428
      %v4430 = vpop.f32.mrb[0].mxu0
      %v4431 = vpop.f32.mrb[0].mxu0
      %v4432 = vadd.f32 0.0, %v4431
      %v4433 = vpop.f32.mrb[0].mxu0
      %4434 = vmatprep.mubr.bf16.mxu0 0
      %4435 = vmatmul.mubr.bf16.gmra.mrb[0].mxu0 %v992
      %v4436 = vpop.f32.mrb[0].mxu0
      %v4437 = vadd.f32 0.0, %v4436
      %v4438 = vpop.f32.mrb[0].mxu0
      %v4439 = vpop.f32.mrb[0].mxu0
      %v4440 = vadd.f32 0.0, %v4439
      %v4441 = vpop.f32.mrb[0].mxu0
      %4442 = vmatprep.mubr.bf16.mxu0 0
      %4443 = vmatmul.mubr.bf16.gmra.mrb[0].mxu0 %v995
      %v4444 = vpop.f32.mrb[0].mxu0
      %v4445 = vadd.f32 0.0, %v4444
      %v4446 = vpop.f32.mrb[0].mxu0
      %v4447 = vpop.f32.mrb[0].mxu0
      %v4448 = vadd.f32 0.0, %v4447
      %v4449 = vpop.f32.mrb[0].mxu0
      %4450 = vmatprep.mubr.bf16.mxu0 0
      %4451 = vmatmul.mubr.bf16.gmra.mrb[0].mxu0 %v998
      %v4452 = vpop.f32.mrb[0].mxu0
      %v4453 = vadd.f32 0.0, %v4452
      %v4454 = vpop.f32.mrb[0].mxu0
      %v4455 = vpop.f32.mrb[0].mxu0
      %v4456 = vadd.f32 0.0, %v4455
      %v4457 = vpop.f32.mrb[0].mxu0
      %4458 = vmatprep.mubr.bf16.mxu0 0
      %4459 = vmatmul.mubr.bf16.gmra.mrb[0].mxu0 %v1001
      %v4460 = vpop.f32.mrb[0].mxu0
      %v4461 = vadd.f32 0.0, %v4460
      %v4462 = vpop.f32.mrb[0].mxu0
      %v4463 = vpop.f32.mrb[0].mxu0
      %v4464 = vadd.f32 0.0, %v4463
      %v4465 = vpop.f32.mrb[0].mxu0
      %4466 = vmatprep.mubr.bf16.mxu0 0
      %4467 = vmatmul.mubr.bf16.gmra.mrb[0].mxu0 %v1004
      %v4468 = vpop.f32.mrb[0].mxu0
      %v4469 = vadd.f32 0.0, %v4468
      %v4470 = vpop.f32.mrb[0].mxu0
      %v4471 = vpop.f32.mrb[0].mxu0
      %v4472 = vadd.f32 0.0, %v4471
      %v4473 = vpop.f32.mrb[0].mxu0
      %4474 = vmatprep.mubr.bf16.mxu0 0
      %4475 = vmatmul.mubr.bf16.gmra.mrb[0].mxu0 %v2088
      %v4476 = vpop.f32.mrb[0].mxu0
      %v4477 = vadd.f32 0.0, %v4476
      %v4478 = vpop.f32.mrb[0].mxu0
      %v4479 = vpop.f32.mrb[0].mxu0
      %v4480 = vadd.f32 0.0, %v4479
      %v4481 = vpop.f32.mrb[0].mxu0
      %4482 = vdwg.mxu0
      %v4483 = vadd.f32 %v4285, %v4357
      %v4484 = vadd.f32 %v4286, %v4360
      %v4485 = vadd.f32 %v4287, %v4365
      %v4486 = vadd.f32 %v4288, %v4368
      %v4487 = vadd.f32 %v4289, %v4373
      %v4488 = vadd.f32 %v4290, %v4376
      %v4489 = vadd.f32 %v4291, %v4381
      %v4490 = vadd.f32 %v4292, %v4384
      %v4491 = vadd.f32 %v4293, %v4389
      %v4492 = vadd.f32 %v4294, %v4392
      %v4493 = vadd.f32 %v4295, %v4397
      %v4494 = vadd.f32 %v4296, %v4400
      %v4495 = vadd.f32 %v4297, %v4405
      %v4496 = vadd.f32 %v4298, %v4408
      %v4497 = vadd.f32 %v4299, %v4413
      %v4498 = vadd.f32 %v4300, %v4416
      %v4499 = vadd.f32 %v4301, %v4421
      %v4500 = vadd.f32 %v4302, %v4424
      %v4501 = vadd.f32 %v4303, %v4429
      %v4502 = vadd.f32 %v4304, %v4432
      %v4503 = vadd.f32 %v4305, %v4437
      %v4504 = vadd.f32 %v4306, %v4440
      %v4505 = vadd.f32 %v4307, %v4445
      %v4506 = vadd.f32 %v4308, %v4448
      %v4507 = vadd.f32 %v4309, %v4453
      %v4508 = vadd.f32 %v4310, %v4456
      %v4509 = vadd.f32 %v4311, %v4461
      %v4510 = vadd.f32 %v4312, %v4464
      %v4511 = vadd.f32 %v4313, %v4469
      %v4512 = vadd.f32 %v4314, %v4472
      %v4513 = vadd.f32 %v4315, %v4477
      %v4514 = vadd.f32 %v4316, %v4480
      %v4515 = vrot.slane %v274, 7
      %v4516 = vrot.slane %v4515, 4
      %v4517 = vrot.slane %v275, 7
      %v4518 = vsel %vm3694, %v4516, %v4517
      %v4519 = vrot.slane %v4517, 4
      %v4520 = vrot.slane %v276, 7
      %v4521 = vsel %vm3694, %v4519, %v4520
      %v4522 = vrot.slane %v277, 7
      %v4523 = vrot.slane %v4522, 4
      %v4524 = vrot.slane %v278, 7
      %v4525 = vsel %vm3694, %v4523, %v4524
      %v4526 = vrot.slane %v4524, 4
      %v4527 = vrot.slane %v279, 7
      %v4528 = vsel %vm3694, %v4526, %v4527
      %v4529 = vrot.slane %v280, 7
      %v4530 = vrot.slane %v4529, 4
      %v4531 = vrot.slane %v281, 7
      %v4532 = vsel %vm3694, %v4530, %v4531
      %v4533 = vrot.slane %v4531, 4
      %v4534 = vrot.slane %v282, 7
      %v4535 = vsel %vm3694, %v4533, %v4534
      %s4536 = scalar_lea.vmem %s2, 10
      %v4537 = vld [vmem:[%s4536] sm:$0x3]
      %v4538 = vunpack.c.l.b16 %v4518
      %v4539 = vunpack.c.l.b16 %v4521
      %v4540 = vunpack.c.l.b16 %v4525
      %v4541 = vunpack.c.l.b16 %v4528
      %v4542 = vunpack.c.l.b16 %v4532
      %v4543 = vunpack.c.l.b16 %v4535
      %v4544 = vpack.c.b16 %v4539, %v4538
      %v4545 = vpack.c.b16 %v4541, %v4540
      %v4546 = vpack.c.b16 %v4543, %v4542
      %v4548 = vsel %vm957, %v4544, 0
      %v4551 = vsel %vm957, %v4545, 0
      %v4554 = vsel %vm957, %v4546, 0
      %v4557 = vsel %vm1006, %v4537, 0
      %4559 = vmatprep.subr.bf16.mxu0 0
      %4560 = vmatpush1.bf16.msra.mxu0 %v4557
      %4561 = vmatprep.subr.bf16.mxu0 0
      %4562 = vmatpush1.bf16.msra.mxu0 0
      %4563 = vmatprep.subr.bf16.mxu0 0
      %4564 = vmatpush1.bf16.msra.mxu0 0
      %4565 = vmatprep.subr.bf16.mxu0 0
      %4566 = vmatpush1.bf16.msra.mxu0 0
      %4567 = vmatprep.subr.bf16.mxu0 0
      %4568 = vmatpush1.bf16.msra.mxu0 0
      %4569 = vmatprep.subr.bf16.mxu0 0
      %4570 = vmatpush1.bf16.msra.mxu0 0
      %4571 = vmatprep.subr.bf16.mxu0 0
      %4572 = vmatpush1.bf16.msra.mxu0 0
      %4573 = vmatprep.subr.bf16.mxu0 0
      %4574 = vmatpush1.bf16.msra.mxu0 0
      %4575 = vmatprep.subr.bf16.mxu0 0
      %4576 = vmatpush1.bf16.msra.mxu0 0
      %4577 = vmatprep.subr.bf16.mxu0 0
      %4578 = vmatpush1.bf16.msra.mxu0 0
      %4579 = vmatprep.subr.bf16.mxu0 0
      %4580 = vmatpush1.bf16.msra.mxu0 0
      %4581 = vmatprep.subr.bf16.mxu0 0
      %4582 = vmatpush1.bf16.msra.mxu0 0
      %4583 = vmatprep.subr.bf16.mxu0 0
      %4584 = vmatpush1.bf16.msra.mxu0 0
      %4585 = vmatprep.subr.bf16.mxu0 0
      %4586 = vmatpush1.bf16.msra.mxu0 0
      %4587 = vmatprep.subr.bf16.mxu0 0
      %4588 = vmatpush1.bf16.msra.mxu0 0
      %4589 = vmatprep.subr.bf16.mxu0 0
      %4590 = vmatpush1.bf16.msra.mxu0 0
      %4591 = vmatprep.mubr.bf16.mxu0 0
      %4592 = vmatmul.mubr.bf16.gmra.mrb[0].mxu0 %v3867
      %v4593 = vpop.f32.mrb[0].mxu0
      %v4594 = vadd.f32 0.0, %v4593
      %v4595 = vpop.f32.mrb[0].mxu0
      %v4596 = vpop.f32.mrb[0].mxu0
      %v4597 = vadd.f32 0.0, %v4596
      %v4598 = vpop.f32.mrb[0].mxu0
      %4599 = vmatprep.mubr.bf16.mxu0 0
      %4600 = vmatmul.mubr.bf16.gmra.mrb[0].mxu0 %v3870
      %v4601 = vpop.f32.mrb[0].mxu0
      %v4602 = vadd.f32 0.0, %v4601
      %v4603 = vpop.f32.mrb[0].mxu0
      %v4604 = vpop.f32.mrb[0].mxu0
      %v4605 = vadd.f32 0.0, %v4604
      %v4606 = vpop.f32.mrb[0].mxu0
      %4607 = vmatprep.mubr.bf16.mxu0 0
      %4608 = vmatmul.mubr.bf16.gmra.mrb[0].mxu0 %v3873
      %v4609 = vpop.f32.mrb[0].mxu0
      %v4610 = vadd.f32 0.0, %v4609
      %v4611 = vpop.f32.mrb[0].mxu0
      %v4612 = vpop.f32.mrb[0].mxu0
      %v4613 = vadd.f32 0.0, %v4612
      %v4614 = vpop.f32.mrb[0].mxu0
      %4615 = vmatprep.mubr.bf16.mxu0 0
      %4616 = vmatmul.mubr.bf16.gmra.mrb[0].mxu0 %v3876
      %v4617 = vpop.f32.mrb[0].mxu0
      %v4618 = vadd.f32 0.0, %v4617
      %v4619 = vpop.f32.mrb[0].mxu0
      %v4620 = vpop.f32.mrb[0].mxu0
      %v4621 = vadd.f32 0.0, %v4620
      %v4622 = vpop.f32.mrb[0].mxu0
      %4623 = vmatprep.mubr.bf16.mxu0 0
      %4624 = vmatmul.mubr.bf16.gmra.mrb[0].mxu0 %v3879
      %v4625 = vpop.f32.mrb[0].mxu0
      %v4626 = vadd.f32 0.0, %v4625
      %v4627 = vpop.f32.mrb[0].mxu0
      %v4628 = vpop.f32.mrb[0].mxu0
      %v4629 = vadd.f32 0.0, %v4628
      %v4630 = vpop.f32.mrb[0].mxu0
      %4631 = vmatprep.mubr.bf16.mxu0 0
      %4632 = vmatmul.mubr.bf16.gmra.mrb[0].mxu0 %v3882
      %v4633 = vpop.f32.mrb[0].mxu0
      %v4634 = vadd.f32 0.0, %v4633
      %v4635 = vpop.f32.mrb[0].mxu0
      %v4636 = vpop.f32.mrb[0].mxu0
      %v4637 = vadd.f32 0.0, %v4636
      %v4638 = vpop.f32.mrb[0].mxu0
      %4639 = vmatprep.mubr.bf16.mxu0 0
      %4640 = vmatmul.mubr.bf16.gmra.mrb[0].mxu0 %v3885
      %v4641 = vpop.f32.mrb[0].mxu0
      %v4642 = vadd.f32 0.0, %v4641
      %v4643 = vpop.f32.mrb[0].mxu0
      %v4644 = vpop.f32.mrb[0].mxu0
      %v4645 = vadd.f32 0.0, %v4644
      %v4646 = vpop.f32.mrb[0].mxu0
      %4647 = vmatprep.mubr.bf16.mxu0 0
      %4648 = vmatmul.mubr.bf16.gmra.mrb[0].mxu0 %v3888
      %v4649 = vpop.f32.mrb[0].mxu0
      %v4650 = vadd.f32 0.0, %v4649
      %v4651 = vpop.f32.mrb[0].mxu0
      %v4652 = vpop.f32.mrb[0].mxu0
      %v4653 = vadd.f32 0.0, %v4652
      %v4654 = vpop.f32.mrb[0].mxu0
      %4655 = vmatprep.mubr.bf16.mxu0 0
      %4656 = vmatmul.mubr.bf16.gmra.mrb[0].mxu0 %v3891
      %v4657 = vpop.f32.mrb[0].mxu0
      %v4658 = vadd.f32 0.0, %v4657
      %v4659 = vpop.f32.mrb[0].mxu0
      %v4660 = vpop.f32.mrb[0].mxu0
      %v4661 = vadd.f32 0.0, %v4660
      %v4662 = vpop.f32.mrb[0].mxu0
      %4663 = vmatprep.mubr.bf16.mxu0 0
      %4664 = vmatmul.mubr.bf16.gmra.mrb[0].mxu0 %v3894
      %v4665 = vpop.f32.mrb[0].mxu0
      %v4666 = vadd.f32 0.0, %v4665
      %v4667 = vpop.f32.mrb[0].mxu0
      %v4668 = vpop.f32.mrb[0].mxu0
      %v4669 = vadd.f32 0.0, %v4668
      %v4670 = vpop.f32.mrb[0].mxu0
      %4671 = vmatprep.mubr.bf16.mxu0 0
      %4672 = vmatmul.mubr.bf16.gmra.mrb[0].mxu0 %v3897
      %v4673 = vpop.f32.mrb[0].mxu0
      %v4674 = vadd.f32 0.0, %v4673
      %v4675 = vpop.f32.mrb[0].mxu0
      %v4676 = vpop.f32.mrb[0].mxu0
      %v4677 = vadd.f32 0.0, %v4676
      %v4678 = vpop.f32.mrb[0].mxu0
      %4679 = vmatprep.mubr.bf16.mxu0 0
      %4680 = vmatmul.mubr.bf16.gmra.mrb[0].mxu0 %v3900
      %v4681 = vpop.f32.mrb[0].mxu0
      %v4682 = vadd.f32 0.0, %v4681
      %v4683 = vpop.f32.mrb[0].mxu0
      %v4684 = vpop.f32.mrb[0].mxu0
      %v4685 = vadd.f32 0.0, %v4684
      %v4686 = vpop.f32.mrb[0].mxu0
      %4687 = vmatprep.mubr.bf16.mxu0 0
      %4688 = vmatmul.mubr.bf16.gmra.mrb[0].mxu0 %v3903
      %v4689 = vpop.f32.mrb[0].mxu0
      %v4690 = vadd.f32 0.0, %v4689
      %v4691 = vpop.f32.mrb[0].mxu0
      %v4692 = vpop.f32.mrb[0].mxu0
      %v4693 = vadd.f32 0.0, %v4692
      %v4694 = vpop.f32.mrb[0].mxu0
      %4695 = vmatprep.mubr.bf16.mxu0 0
      %4696 = vmatmul.mubr.bf16.gmra.mrb[0].mxu0 %v4548
      %v4697 = vpop.f32.mrb[0].mxu0
      %v4698 = vadd.f32 0.0, %v4697
      %v4699 = vpop.f32.mrb[0].mxu0
      %v4700 = vpop.f32.mrb[0].mxu0
      %v4701 = vadd.f32 0.0, %v4700
      %v4702 = vpop.f32.mrb[0].mxu0
      %4703 = vmatprep.mubr.bf16.mxu0 0
      %4704 = vmatmul.mubr.bf16.gmra.mrb[0].mxu0 %v4551
      %v4705 = vpop.f32.mrb[0].mxu0
      %v4706 = vadd.f32 0.0, %v4705
      %v4707 = vpop.f32.mrb[0].mxu0
      %v4708 = vpop.f32.mrb[0].mxu0
      %v4709 = vadd.f32 0.0, %v4708
      %v4710 = vpop.f32.mrb[0].mxu0
      %4711 = vmatprep.mubr.bf16.mxu0 0
      %4712 = vmatmul.mubr.bf16.gmra.mrb[0].mxu0 %v4554
      %v4713 = vpop.f32.mrb[0].mxu0
      %v4714 = vadd.f32 0.0, %v4713
      %v4715 = vpop.f32.mrb[0].mxu0
      %v4716 = vpop.f32.mrb[0].mxu0
      %v4717 = vadd.f32 0.0, %v4716
      %v4718 = vpop.f32.mrb[0].mxu0
      %4719 = vdwg.mxu0
      %v4720 = vadd.f32 %v4483, %v4594
      %v4721 = vadd.f32 %v4484, %v4597
      %v4722 = vadd.f32 %v4485, %v4602
      %v4723 = vadd.f32 %v4486, %v4605
      %v4724 = vadd.f32 %v4487, %v4610
      %v4725 = vadd.f32 %v4488, %v4613
      %v4726 = vadd.f32 %v4489, %v4618
      %v4727 = vadd.f32 %v4490, %v4621
      %v4728 = vadd.f32 %v4491, %v4626
      %v4729 = vadd.f32 %v4492, %v4629
      %v4730 = vadd.f32 %v4493, %v4634
      %v4731 = vadd.f32 %v4494, %v4637
      %v4732 = vadd.f32 %v4495, %v4642
      %v4733 = vadd.f32 %v4496, %v4645
      %v4734 = vadd.f32 %v4497, %v4650
      %v4735 = vadd.f32 %v4498, %v4653
      %v4736 = vadd.f32 %v4499, %v4658
      %v4737 = vadd.f32 %v4500, %v4661
      %v4738 = vadd.f32 %v4501, %v4666
      %v4739 = vadd.f32 %v4502, %v4669
      %v4740 = vadd.f32 %v4503, %v4674
      %v4741 = vadd.f32 %v4504, %v4677
      %v4742 = vadd.f32 %v4505, %v4682
      %v4743 = vadd.f32 %v4506, %v4685
      %v4744 = vadd.f32 %v4507, %v4690
      %v4745 = vadd.f32 %v4508, %v4693
      %v4746 = vadd.f32 %v4509, %v4698
      %v4747 = vadd.f32 %v4510, %v4701
      %v4748 = vadd.f32 %v4511, %v4706
      %v4749 = vadd.f32 %v4512, %v4709
      %v4750 = vadd.f32 %v4513, %v4714
      %v4751 = vadd.f32 %v4514, %v4717
      %s4752 = scalar_lea.vmem %s2, 12
      %v4753 = vld [vmem:[%s4752] sm:$0x3]
      %v4758 = vunpack.c.l.b16 %v283
      %v4759 = vunpack.c.l.b16 %v284
      %v4760 = vunpack.c.l.b16 %v286
      %v4761 = vunpack.c.l.b16 %v287
      %v4762 = vunpack.c.l.b16 %v289
      %v4763 = vunpack.c.l.b16 %v290
      %v4764 = vpack.c.b16 %v4759, %v4758
      %v4765 = vpack.c.b16 %v4761, %v4760
      %v4766 = vpack.c.b16 %v4763, %v4762
      %v4768 = vsel %vm957, %v4764, 0
      %v4771 = vsel %vm957, %v4765, 0
      %v4774 = vsel %vm957, %v4766, 0
      %v4777 = vsel %vm1006, %v4753, 0
      %4779 = vmatprep.subr.bf16.mxu0 0
      %4780 = vmatpush1.bf16.msra.mxu0 %v4777
      %4781 = vmatprep.subr.bf16.mxu0 0
      %4782 = vmatpush1.bf16.msra.mxu0 0
      %4783 = vmatprep.subr.bf16.mxu0 0
      %4784 = vmatpush1.bf16.msra.mxu0 0
      %4785 = vmatprep.subr.bf16.mxu0 0
      %4786 = vmatpush1.bf16.msra.mxu0 0
      %4787 = vmatprep.subr.bf16.mxu0 0
      %4788 = vmatpush1.bf16.msra.mxu0 0
      %4789 = vmatprep.subr.bf16.mxu0 0
      %4790 = vmatpush1.bf16.msra.mxu0 0
      %4791 = vmatprep.subr.bf16.mxu0 0
      %4792 = vmatpush1.bf16.msra.mxu0 0
      %4793 = vmatprep.subr.bf16.mxu0 0
      %4794 = vmatpush1.bf16.msra.mxu0 0
      %4795 = vmatprep.subr.bf16.mxu0 0
      %4796 = vmatpush1.bf16.msra.mxu0 0
      %4797 = vmatprep.subr.bf16.mxu0 0
      %4798 = vmatpush1.bf16.msra.mxu0 0
      %4799 = vmatprep.subr.bf16.mxu0 0
      %4800 = vmatpush1.bf16.msra.mxu0 0
      %4801 = vmatprep.subr.bf16.mxu0 0
      %4802 = vmatpush1.bf16.msra.mxu0 0
      %4803 = vmatprep.subr.bf16.mxu0 0
      %4804 = vmatpush1.bf16.msra.mxu0 0
      %4805 = vmatprep.subr.bf16.mxu0 0
      %4806 = vmatpush1.bf16.msra.mxu0 0
      %4807 = vmatprep.subr.bf16.mxu0 0
      %4808 = vmatpush1.bf16.msra.mxu0 0
      %4809 = vmatprep.subr.bf16.mxu0 0
      %4810 = vmatpush1.bf16.msra.mxu0 0
      %4811 = vmatprep.mubr.bf16.mxu0 0
      %4812 = vmatmul.mubr.bf16.gmra.mrb[0].mxu0 %v3497
      %v4813 = vpop.f32.mrb[0].mxu0
      %v4814 = vadd.f32 0.0, %v4813
      %v4815 = vpop.f32.mrb[0].mxu0
      %v4816 = vpop.f32.mrb[0].mxu0
      %v4817 = vadd.f32 0.0, %v4816
      %v4818 = vpop.f32.mrb[0].mxu0
      %4819 = vmatprep.mubr.bf16.mxu0 0
      %4820 = vmatmul.mubr.bf16.gmra.mrb[0].mxu0 %v3500
      %v4821 = vpop.f32.mrb[0].mxu0
      %v4822 = vadd.f32 0.0, %v4821
      %v4823 = vpop.f32.mrb[0].mxu0
      %v4824 = vpop.f32.mrb[0].mxu0
      %v4825 = vadd.f32 0.0, %v4824
      %v4826 = vpop.f32.mrb[0].mxu0
      %4827 = vmatprep.mubr.bf16.mxu0 0
      %4828 = vmatmul.mubr.bf16.gmra.mrb[0].mxu0 %v3503
      %v4829 = vpop.f32.mrb[0].mxu0
      %v4830 = vadd.f32 0.0, %v4829
      %v4831 = vpop.f32.mrb[0].mxu0
      %v4832 = vpop.f32.mrb[0].mxu0
      %v4833 = vadd.f32 0.0, %v4832
      %v4834 = vpop.f32.mrb[0].mxu0
      %4835 = vmatprep.mubr.bf16.mxu0 0
      %4836 = vmatmul.mubr.bf16.gmra.mrb[0].mxu0 %v3506
      %v4837 = vpop.f32.mrb[0].mxu0
      %v4838 = vadd.f32 0.0, %v4837
      %v4839 = vpop.f32.mrb[0].mxu0
      %v4840 = vpop.f32.mrb[0].mxu0
      %v4841 = vadd.f32 0.0, %v4840
      %v4842 = vpop.f32.mrb[0].mxu0
      %4843 = vmatprep.mubr.bf16.mxu0 0
      %4844 = vmatmul.mubr.bf16.gmra.mrb[0].mxu0 %v3509
      %v4845 = vpop.f32.mrb[0].mxu0
      %v4846 = vadd.f32 0.0, %v4845
      %v4847 = vpop.f32.mrb[0].mxu0
      %v4848 = vpop.f32.mrb[0].mxu0
      %v4849 = vadd.f32 0.0, %v4848
      %v4850 = vpop.f32.mrb[0].mxu0
      %4851 = vmatprep.mubr.bf16.mxu0 0
      %4852 = vmatmul.mubr.bf16.gmra.mrb[0].mxu0 %v3512
      %v4853 = vpop.f32.mrb[0].mxu0
      %v4854 = vadd.f32 0.0, %v4853
      %v4855 = vpop.f32.mrb[0].mxu0
      %v4856 = vpop.f32.mrb[0].mxu0
      %v4857 = vadd.f32 0.0, %v4856
      %v4858 = vpop.f32.mrb[0].mxu0
      %4859 = vmatprep.mubr.bf16.mxu0 0
      %4860 = vmatmul.mubr.bf16.gmra.mrb[0].mxu0 %v3515
      %v4861 = vpop.f32.mrb[0].mxu0
      %v4862 = vadd.f32 0.0, %v4861
      %v4863 = vpop.f32.mrb[0].mxu0
      %v4864 = vpop.f32.mrb[0].mxu0
      %v4865 = vadd.f32 0.0, %v4864
      %v4866 = vpop.f32.mrb[0].mxu0
      %4867 = vmatprep.mubr.bf16.mxu0 0
      %4868 = vmatmul.mubr.bf16.gmra.mrb[0].mxu0 %v3518
      %v4869 = vpop.f32.mrb[0].mxu0
      %v4870 = vadd.f32 0.0, %v4869
      %v4871 = vpop.f32.mrb[0].mxu0
      %v4872 = vpop.f32.mrb[0].mxu0
      %v4873 = vadd.f32 0.0, %v4872
      %v4874 = vpop.f32.mrb[0].mxu0
      %4875 = vmatprep.mubr.bf16.mxu0 0
      %4876 = vmatmul.mubr.bf16.gmra.mrb[0].mxu0 %v3521
      %v4877 = vpop.f32.mrb[0].mxu0
      %v4878 = vadd.f32 0.0, %v4877
      %v4879 = vpop.f32.mrb[0].mxu0
      %v4880 = vpop.f32.mrb[0].mxu0
      %v4881 = vadd.f32 0.0, %v4880
      %v4882 = vpop.f32.mrb[0].mxu0
      %4883 = vmatprep.mubr.bf16.mxu0 0
      %4884 = vmatmul.mubr.bf16.gmra.mrb[0].mxu0 %v3524
      %v4885 = vpop.f32.mrb[0].mxu0
      %v4886 = vadd.f32 0.0, %v4885
      %v4887 = vpop.f32.mrb[0].mxu0
      %v4888 = vpop.f32.mrb[0].mxu0
      %v4889 = vadd.f32 0.0, %v4888
      %v4890 = vpop.f32.mrb[0].mxu0
      %4891 = vmatprep.mubr.bf16.mxu0 0
      %4892 = vmatmul.mubr.bf16.gmra.mrb[0].mxu0 %v4113
      %v4893 = vpop.f32.mrb[0].mxu0
      %v4894 = vadd.f32 0.0, %v4893
      %v4895 = vpop.f32.mrb[0].mxu0
      %v4896 = vpop.f32.mrb[0].mxu0
      %v4897 = vadd.f32 0.0, %v4896
      %v4898 = vpop.f32.mrb[0].mxu0
      %4899 = vmatprep.mubr.bf16.mxu0 0
      %4900 = vmatmul.mubr.bf16.gmra.mrb[0].mxu0 %v4116
      %v4901 = vpop.f32.mrb[0].mxu0
      %v4902 = vadd.f32 0.0, %v4901
      %v4903 = vpop.f32.mrb[0].mxu0
      %v4904 = vpop.f32.mrb[0].mxu0
      %v4905 = vadd.f32 0.0, %v4904
      %v4906 = vpop.f32.mrb[0].mxu0
      %4907 = vmatprep.mubr.bf16.mxu0 0
      %4908 = vmatmul.mubr.bf16.gmra.mrb[0].mxu0 %v4119
      %v4909 = vpop.f32.mrb[0].mxu0
      %v4910 = vadd.f32 0.0, %v4909
      %v4911 = vpop.f32.mrb[0].mxu0
      %v4912 = vpop.f32.mrb[0].mxu0
      %v4913 = vadd.f32 0.0, %v4912
      %v4914 = vpop.f32.mrb[0].mxu0
      %4915 = vmatprep.mubr.bf16.mxu0 0
      %4916 = vmatmul.mubr.bf16.gmra.mrb[0].mxu0 %v4768
      %v4917 = vpop.f32.mrb[0].mxu0
      %v4918 = vadd.f32 0.0, %v4917
      %v4919 = vpop.f32.mrb[0].mxu0
      %v4920 = vpop.f32.mrb[0].mxu0
      %v4921 = vadd.f32 0.0, %v4920
      %v4922 = vpop.f32.mrb[0].mxu0
      %4923 = vmatprep.mubr.bf16.mxu0 0
      %4924 = vmatmul.mubr.bf16.gmra.mrb[0].mxu0 %v4771
      %v4925 = vpop.f32.mrb[0].mxu0
      %v4926 = vadd.f32 0.0, %v4925
      %v4927 = vpop.f32.mrb[0].mxu0
      %v4928 = vpop.f32.mrb[0].mxu0
      %v4929 = vadd.f32 0.0, %v4928
      %v4930 = vpop.f32.mrb[0].mxu0
      %4931 = vmatprep.mubr.bf16.mxu0 0
      %4932 = vmatmul.mubr.bf16.gmra.mrb[0].mxu0 %v4774
      %v4933 = vpop.f32.mrb[0].mxu0
      %v4934 = vadd.f32 0.0, %v4933
      %v4935 = vpop.f32.mrb[0].mxu0
      %v4936 = vpop.f32.mrb[0].mxu0
      %v4937 = vadd.f32 0.0, %v4936
      %v4938 = vpop.f32.mrb[0].mxu0
      %4939 = vdwg.mxu0
      %v4940 = vadd.f32 %v4720, %v4814
      %v4941 = vadd.f32 %v4721, %v4817
      %v4942 = vadd.f32 %v4722, %v4822
      %v4943 = vadd.f32 %v4723, %v4825
      %v4944 = vadd.f32 %v4724, %v4830
      %v4945 = vadd.f32 %v4725, %v4833
      %v4946 = vadd.f32 %v4726, %v4838
      %v4947 = vadd.f32 %v4727, %v4841
      %v4948 = vadd.f32 %v4728, %v4846
      %v4949 = vadd.f32 %v4729, %v4849
      %v4950 = vadd.f32 %v4730, %v4854
      %v4951 = vadd.f32 %v4731, %v4857
      %v4952 = vadd.f32 %v4732, %v4862
      %v4953 = vadd.f32 %v4733, %v4865
      %v4954 = vadd.f32 %v4734, %v4870
      %v4955 = vadd.f32 %v4735, %v4873
      %v4956 = vadd.f32 %v4736, %v4878
      %v4957 = vadd.f32 %v4737, %v4881
      %v4958 = vadd.f32 %v4738, %v4886
      %v4959 = vadd.f32 %v4739, %v4889
      %v4960 = vadd.f32 %v4740, %v4894
      %v4961 = vadd.f32 %v4741, %v4897
      %v4962 = vadd.f32 %v4742, %v4902
      %v4963 = vadd.f32 %v4743, %v4905
      %v4964 = vadd.f32 %v4744, %v4910
      %v4965 = vadd.f32 %v4745, %v4913
      %v4966 = vadd.f32 %v4746, %v4918
      %v4967 = vadd.f32 %v4747, %v4921
      %v4968 = vadd.f32 %v4748, %v4926
      %v4969 = vadd.f32 %v4749, %v4929
      %v4970 = vadd.f32 %v4750, %v4934
      %v4971 = vadd.f32 %v4751, %v4937
      %v4973 = vshrl.u32 %v286, 16
      %v4975 = vrot.slane %v4973, 5
      %v4976 = vshll.u32 %v286, 16
      %v4978 = vrot.slane %v4976, 6
      %v4979 = vor.u32 %v4975, %v4978
      %v4980 = vrot.slane %v4979, 4
      %v4982 = vshrl.u32 %v287, 16
      %v4984 = vrot.slane %v4982, 5
      %v4985 = vshll.u32 %v287, 16
      %v4987 = vrot.slane %v4985, 6
      %v4988 = vor.u32 %v4984, %v4987
      %v4989 = vsel %vm458, %v4980, %v4988
      %v4990 = vrot.slane %v4988, 4
      %v4992 = vshrl.u32 %v288, 16
      %v4994 = vrot.slane %v4992, 5
      %v4995 = vshll.u32 %v288, 16
      %v4997 = vrot.slane %v4995, 6
      %v4998 = vor.u32 %v4994, %v4997
      %v4999 = vsel %vm458, %v4990, %v4998
      %v5001 = vshrl.u32 %v289, 16
      %v5003 = vrot.slane %v5001, 5
      %v5004 = vshll.u32 %v289, 16
      %v5006 = vrot.slane %v5004, 6
      %v5007 = vor.u32 %v5003, %v5006
      %v5008 = vrot.slane %v5007, 4
      %v5010 = vshrl.u32 %v290, 16
      %v5012 = vrot.slane %v5010, 5
      %v5013 = vshll.u32 %v290, 16
      %v5015 = vrot.slane %v5013, 6
      %v5016 = vor.u32 %v5012, %v5015
      %v5017 = vsel %vm458, %v5008, %v5016
      %v5018 = vrot.slane %v5016, 4
      %v5020 = vshrl.u32 %v291, 16
      %v5022 = vrot.slane %v5020, 5
      %v5023 = vshll.u32 %v291, 16
      %v5025 = vrot.slane %v5023, 6
      %v5026 = vor.u32 %v5022, %v5025
      %v5027 = vsel %vm458, %v5018, %v5026
      %s5028 = scalar_lea.vmem %s2, 14
      %v5029 = vld [vmem:[%s5028] sm:$0x3]
      %v5030 = vunpack.c.l.b16 %v4989
      %v5031 = vunpack.c.l.b16 %v4999
      %v5032 = vunpack.c.l.b16 %v5017
      %v5033 = vunpack.c.l.b16 %v5027
      %v5034 = vpack.c.b16 %v5031, %v5030
      %v5035 = vpack.c.b16 %v5033, %v5032
      %v5037 = vsel %vm957, %v5034, 0
      %v5040 = vsel %vm957, %v5035, 0
      %v5043 = vsel %vm1006, %v5029, 0
      %5045 = vmatprep.subr.bf16.mxu0 0
      %5046 = vmatpush1.bf16.msra.mxu0 %v5043
      %5047 = vmatprep.subr.bf16.mxu0 0
      %5048 = vmatpush1.bf16.msra.mxu0 0
      %5049 = vmatprep.subr.bf16.mxu0 0
      %5050 = vmatpush1.bf16.msra.mxu0 0
      %5051 = vmatprep.subr.bf16.mxu0 0
      %5052 = vmatpush1.bf16.msra.mxu0 0
      %5053 = vmatprep.subr.bf16.mxu0 0
      %5054 = vmatpush1.bf16.msra.mxu0 0
      %5055 = vmatprep.subr.bf16.mxu0 0
      %5056 = vmatpush1.bf16.msra.mxu0 0
      %5057 = vmatprep.subr.bf16.mxu0 0
      %5058 = vmatpush1.bf16.msra.mxu0 0
      %5059 = vmatprep.subr.bf16.mxu0 0
      %5060 = vmatpush1.bf16.msra.mxu0 0
      %5061 = vmatprep.subr.bf16.mxu0 0
      %5062 = vmatpush1.bf16.msra.mxu0 0
      %5063 = vmatprep.subr.bf16.mxu0 0
      %5064 = vmatpush1.bf16.msra.mxu0 0
      %5065 = vmatprep.subr.bf16.mxu0 0
      %5066 = vmatpush1.bf16.msra.mxu0 0
      %5067 = vmatprep.subr.bf16.mxu0 0
      %5068 = vmatpush1.bf16.msra.mxu0 0
      %5069 = vmatprep.subr.bf16.mxu0 0
      %5070 = vmatpush1.bf16.msra.mxu0 0
      %5071 = vmatprep.subr.bf16.mxu0 0
      %5072 = vmatpush1.bf16.msra.mxu0 0
      %5073 = vmatprep.subr.bf16.mxu0 0
      %5074 = vmatpush1.bf16.msra.mxu0 0
      %5075 = vmatprep.subr.bf16.mxu0 0
      %5076 = vmatpush1.bf16.msra.mxu0 0
      %5077 = vmatprep.mubr.bf16.mxu0 0
      %5078 = vmatmul.mubr.bf16.gmra.mrb[0].mxu0 %v971
      %v5079 = vpop.f32.mrb[0].mxu0
      %v5080 = vadd.f32 0.0, %v5079
      %v5081 = vpop.f32.mrb[0].mxu0
      %v5082 = vpop.f32.mrb[0].mxu0
      %v5083 = vadd.f32 0.0, %v5082
      %v5084 = vpop.f32.mrb[0].mxu0
      %5085 = vmatprep.mubr.bf16.mxu0 0
      %5086 = vmatmul.mubr.bf16.gmra.mrb[0].mxu0 %v974
      %v5087 = vpop.f32.mrb[0].mxu0
      %v5088 = vadd.f32 0.0, %v5087
      %v5089 = vpop.f32.mrb[0].mxu0
      %v5090 = vpop.f32.mrb[0].mxu0
      %v5091 = vadd.f32 0.0, %v5090
      %v5092 = vpop.f32.mrb[0].mxu0
      %5093 = vmatprep.mubr.bf16.mxu0 0
      %5094 = vmatmul.mubr.bf16.gmra.mrb[0].mxu0 %v977
      %v5095 = vpop.f32.mrb[0].mxu0
      %v5096 = vadd.f32 0.0, %v5095
      %v5097 = vpop.f32.mrb[0].mxu0
      %v5098 = vpop.f32.mrb[0].mxu0
      %v5099 = vadd.f32 0.0, %v5098
      %v5100 = vpop.f32.mrb[0].mxu0
      %5101 = vmatprep.mubr.bf16.mxu0 0
      %5102 = vmatmul.mubr.bf16.gmra.mrb[0].mxu0 %v980
      %v5103 = vpop.f32.mrb[0].mxu0
      %v5104 = vadd.f32 0.0, %v5103
      %v5105 = vpop.f32.mrb[0].mxu0
      %v5106 = vpop.f32.mrb[0].mxu0
      %v5107 = vadd.f32 0.0, %v5106
      %v5108 = vpop.f32.mrb[0].mxu0
      %5109 = vmatprep.mubr.bf16.mxu0 0
      %5110 = vmatmul.mubr.bf16.gmra.mrb[0].mxu0 %v983
      %v5111 = vpop.f32.mrb[0].mxu0
      %v5112 = vadd.f32 0.0, %v5111
      %v5113 = vpop.f32.mrb[0].mxu0
      %v5114 = vpop.f32.mrb[0].mxu0
      %v5115 = vadd.f32 0.0, %v5114
      %v5116 = vpop.f32.mrb[0].mxu0
      %5117 = vmatprep.mubr.bf16.mxu0 0
      %5118 = vmatmul.mubr.bf16.gmra.mrb[0].mxu0 %v986
      %v5119 = vpop.f32.mrb[0].mxu0
      %v5120 = vadd.f32 0.0, %v5119
      %v5121 = vpop.f32.mrb[0].mxu0
      %v5122 = vpop.f32.mrb[0].mxu0
      %v5123 = vadd.f32 0.0, %v5122
      %v5124 = vpop.f32.mrb[0].mxu0
      %5125 = vmatprep.mubr.bf16.mxu0 0
      %5126 = vmatmul.mubr.bf16.gmra.mrb[0].mxu0 %v989
      %v5127 = vpop.f32.mrb[0].mxu0
      %v5128 = vadd.f32 0.0, %v5127
      %v5129 = vpop.f32.mrb[0].mxu0
      %v5130 = vpop.f32.mrb[0].mxu0
      %v5131 = vadd.f32 0.0, %v5130
      %v5132 = vpop.f32.mrb[0].mxu0
      %5133 = vmatprep.mubr.bf16.mxu0 0
      %5134 = vmatmul.mubr.bf16.gmra.mrb[0].mxu0 %v992
      %v5135 = vpop.f32.mrb[0].mxu0
      %v5136 = vadd.f32 0.0, %v5135
      %v5137 = vpop.f32.mrb[0].mxu0
      %v5138 = vpop.f32.mrb[0].mxu0
      %v5139 = vadd.f32 0.0, %v5138
      %v5140 = vpop.f32.mrb[0].mxu0
      %5141 = vmatprep.mubr.bf16.mxu0 0
      %5142 = vmatmul.mubr.bf16.gmra.mrb[0].mxu0 %v995
      %v5143 = vpop.f32.mrb[0].mxu0
      %v5144 = vadd.f32 0.0, %v5143
      %v5145 = vpop.f32.mrb[0].mxu0
      %v5146 = vpop.f32.mrb[0].mxu0
      %v5147 = vadd.f32 0.0, %v5146
      %v5148 = vpop.f32.mrb[0].mxu0
      %5149 = vmatprep.mubr.bf16.mxu0 0
      %5150 = vmatmul.mubr.bf16.gmra.mrb[0].mxu0 %v998
      %v5151 = vpop.f32.mrb[0].mxu0
      %v5152 = vadd.f32 0.0, %v5151
      %v5153 = vpop.f32.mrb[0].mxu0
      %v5154 = vpop.f32.mrb[0].mxu0
      %v5155 = vadd.f32 0.0, %v5154
      %v5156 = vpop.f32.mrb[0].mxu0
      %5157 = vmatprep.mubr.bf16.mxu0 0
      %5158 = vmatmul.mubr.bf16.gmra.mrb[0].mxu0 %v1001
      %v5159 = vpop.f32.mrb[0].mxu0
      %v5160 = vadd.f32 0.0, %v5159
      %v5161 = vpop.f32.mrb[0].mxu0
      %v5162 = vpop.f32.mrb[0].mxu0
      %v5163 = vadd.f32 0.0, %v5162
      %v5164 = vpop.f32.mrb[0].mxu0
      %5165 = vmatprep.mubr.bf16.mxu0 0
      %5166 = vmatmul.mubr.bf16.gmra.mrb[0].mxu0 %v1004
      %v5167 = vpop.f32.mrb[0].mxu0
      %v5168 = vadd.f32 0.0, %v5167
      %v5169 = vpop.f32.mrb[0].mxu0
      %v5170 = vpop.f32.mrb[0].mxu0
      %v5171 = vadd.f32 0.0, %v5170
      %v5172 = vpop.f32.mrb[0].mxu0
      %5173 = vmatprep.mubr.bf16.mxu0 0
      %5174 = vmatmul.mubr.bf16.gmra.mrb[0].mxu0 %v2088
      %v5175 = vpop.f32.mrb[0].mxu0
      %v5176 = vadd.f32 0.0, %v5175
      %v5177 = vpop.f32.mrb[0].mxu0
      %v5178 = vpop.f32.mrb[0].mxu0
      %v5179 = vadd.f32 0.0, %v5178
      %v5180 = vpop.f32.mrb[0].mxu0
      %5181 = vmatprep.mubr.bf16.mxu0 0
      %5182 = vmatmul.mubr.bf16.gmra.mrb[0].mxu0 %v2745
      %v5183 = vpop.f32.mrb[0].mxu0
      %v5184 = vadd.f32 0.0, %v5183
      %v5185 = vpop.f32.mrb[0].mxu0
      %v5186 = vpop.f32.mrb[0].mxu0
      %v5187 = vadd.f32 0.0, %v5186
      %v5188 = vpop.f32.mrb[0].mxu0
      %5189 = vmatprep.mubr.bf16.mxu0 0
      %5190 = vmatmul.mubr.bf16.gmra.mrb[0].mxu0 %v5037
      %v5191 = vpop.f32.mrb[0].mxu0
      %v5192 = vadd.f32 0.0, %v5191
      %v5193 = vpop.f32.mrb[0].mxu0
      %v5194 = vpop.f32.mrb[0].mxu0
      %v5195 = vadd.f32 0.0, %v5194
      %v5196 = vpop.f32.mrb[0].mxu0
      %5197 = vmatprep.mubr.bf16.mxu0 0
      %5198 = vmatmul.mubr.bf16.gmra.mrb[0].mxu0 %v5040
      %v5199 = vpop.f32.mrb[0].mxu0
      %v5200 = vadd.f32 0.0, %v5199
      %v5201 = vpop.f32.mrb[0].mxu0
      %v5202 = vpop.f32.mrb[0].mxu0
      %v5203 = vadd.f32 0.0, %v5202
      %v5204 = vpop.f32.mrb[0].mxu0
      %5205 = vdwg.mxu0
      %v5206 = vadd.f32 %v4940, %v5080
      %v5207 = vadd.f32 %v4941, %v5083
      %v5208 = vadd.f32 %v4942, %v5088
      %v5209 = vadd.f32 %v4943, %v5091
      %v5210 = vadd.f32 %v4944, %v5096
      %v5211 = vadd.f32 %v4945, %v5099
      %v5212 = vadd.f32 %v4946, %v5104
      %v5213 = vadd.f32 %v4947, %v5107
      %v5214 = vadd.f32 %v4948, %v5112
      %v5215 = vadd.f32 %v4949, %v5115
      %v5216 = vadd.f32 %v4950, %v5120
      %v5217 = vadd.f32 %v4951, %v5123
      %v5218 = vadd.f32 %v4952, %v5128
      %v5219 = vadd.f32 %v4953, %v5131
      %v5220 = vadd.f32 %v4954, %v5136
      %v5221 = vadd.f32 %v4955, %v5139
      %v5222 = vadd.f32 %v4956, %v5144
      %v5223 = vadd.f32 %v4957, %v5147
      %v5224 = vadd.f32 %v4958, %v5152
      %v5225 = vadd.f32 %v4959, %v5155
      %v5226 = vadd.f32 %v4960, %v5160
      %v5227 = vadd.f32 %v4961, %v5163
      %v5228 = vadd.f32 %v4962, %v5168
      %v5229 = vadd.f32 %v4963, %v5171
      %v5230 = vadd.f32 %v4964, %v5176
      %v5231 = vadd.f32 %v4965, %v5179
      %v5232 = vadd.f32 %v4966, %v5184
      %v5233 = vadd.f32 %v4967, %v5187
      %v5234 = vadd.f32 %v4968, %v5192
      %v5235 = vadd.f32 %v4969, %v5195
      %v5236 = vadd.f32 %v4970, %v5200
      %v5237 = vadd.f32 %v4971, %v5203
      %v5240 = vrot.slane %v283, 7
      %v5241 = vrot.slane %v5240, 4
      %v5242 = vrot.slane %v284, 7
      %v5243 = vsel %vm3694, %v5241, %v5242
      %v5244 = vrot.slane %v5242, 4
      %v5245 = vrot.slane %v285, 7
      %v5246 = vsel %vm3694, %v5244, %v5245
      %v5247 = vrot.slane %v286, 7
      %v5248 = vrot.slane %v5247, 4
      %v5249 = vrot.slane %v287, 7
      %v5250 = vsel %vm3694, %v5248, %v5249
      %v5251 = vrot.slane %v5249, 4
      %v5252 = vrot.slane %v288, 7
      %v5253 = vsel %vm3694, %v5251, %v5252
      %v5254 = vrot.slane %v289, 7
      %v5255 = vrot.slane %v5254, 4
      %v5256 = vrot.slane %v290, 7
      %v5257 = vsel %vm3694, %v5255, %v5256
      %v5258 = vrot.slane %v5256, 4
      %v5259 = vrot.slane %v291, 7
      %v5260 = vsel %vm3694, %v5258, %v5259
      %s5261 = scalar_lea.vmem %s2, 16
      %v5262 = vld [vmem:[%s5261] sm:$0x3]
      %v5263 = vunpack.c.l.b16 %v5243
      %v5264 = vunpack.c.l.b16 %v5246
      %v5265 = vunpack.c.l.b16 %v5250
      %v5266 = vunpack.c.l.b16 %v5253
      %v5267 = vunpack.c.l.b16 %v5257
      %v5268 = vunpack.c.l.b16 %v5260
      %v5269 = vpack.c.b16 %v5264, %v5263
      %v5270 = vpack.c.b16 %v5266, %v5265
      %v5271 = vpack.c.b16 %v5268, %v5267
      %v5273 = vsel %vm957, %v5269, 0
      %v5276 = vsel %vm957, %v5270, 0
      %v5279 = vsel %vm957, %v5271, 0
      %v5282 = vsel %vm1006, %v5262, 0
      %5284 = vmatprep.subr.bf16.mxu0 0
      %5285 = vmatpush1.bf16.msra.mxu0 %v5282
      %5286 = vmatprep.subr.bf16.mxu0 0
      %5287 = vmatpush1.bf16.msra.mxu0 0
      %5288 = vmatprep.subr.bf16.mxu0 0
      %5289 = vmatpush1.bf16.msra.mxu0 0
      %5290 = vmatprep.subr.bf16.mxu0 0
      %5291 = vmatpush1.bf16.msra.mxu0 0
      %5292 = vmatprep.subr.bf16.mxu0 0
      %5293 = vmatpush1.bf16.msra.mxu0 0
      %5294 = vmatprep.subr.bf16.mxu0 0
      %5295 = vmatpush1.bf16.msra.mxu0 0
      %5296 = vmatprep.subr.bf16.mxu0 0
      %5297 = vmatpush1.bf16.msra.mxu0 0
      %5298 = vmatprep.subr.bf16.mxu0 0
      %5299 = vmatpush1.bf16.msra.mxu0 0
      %5300 = vmatprep.subr.bf16.mxu0 0
      %5301 = vmatpush1.bf16.msra.mxu0 0
      %5302 = vmatprep.subr.bf16.mxu0 0
      %5303 = vmatpush1.bf16.msra.mxu0 0
      %5304 = vmatprep.subr.bf16.mxu0 0
      %5305 = vmatpush1.bf16.msra.mxu0 0
      %5306 = vmatprep.subr.bf16.mxu0 0
      %5307 = vmatpush1.bf16.msra.mxu0 0
      %5308 = vmatprep.subr.bf16.mxu0 0
      %5309 = vmatpush1.bf16.msra.mxu0 0
      %5310 = vmatprep.subr.bf16.mxu0 0
      %5311 = vmatpush1.bf16.msra.mxu0 0
      %5312 = vmatprep.subr.bf16.mxu0 0
      %5313 = vmatpush1.bf16.msra.mxu0 0
      %5314 = vmatprep.subr.bf16.mxu0 0
      %5315 = vmatpush1.bf16.msra.mxu0 0
      %5316 = vmatprep.mubr.bf16.mxu0 0
      %5317 = vmatmul.mubr.bf16.gmra.mrb[0].mxu0 %v3876
      %v5318 = vpop.f32.mrb[0].mxu0
      %v5319 = vadd.f32 0.0, %v5318
      %v5320 = vpop.f32.mrb[0].mxu0
      %v5321 = vpop.f32.mrb[0].mxu0
      %v5322 = vadd.f32 0.0, %v5321
      %v5323 = vpop.f32.mrb[0].mxu0
      %5324 = vmatprep.mubr.bf16.mxu0 0
      %5325 = vmatmul.mubr.bf16.gmra.mrb[0].mxu0 %v3879
      %v5326 = vpop.f32.mrb[0].mxu0
      %v5327 = vadd.f32 0.0, %v5326
      %v5328 = vpop.f32.mrb[0].mxu0
      %v5329 = vpop.f32.mrb[0].mxu0
      %v5330 = vadd.f32 0.0, %v5329
      %v5331 = vpop.f32.mrb[0].mxu0
      %5332 = vmatprep.mubr.bf16.mxu0 0
      %5333 = vmatmul.mubr.bf16.gmra.mrb[0].mxu0 %v3882
      %v5334 = vpop.f32.mrb[0].mxu0
      %v5335 = vadd.f32 0.0, %v5334
      %v5336 = vpop.f32.mrb[0].mxu0
      %v5337 = vpop.f32.mrb[0].mxu0
      %v5338 = vadd.f32 0.0, %v5337
      %v5339 = vpop.f32.mrb[0].mxu0
      %5340 = vmatprep.mubr.bf16.mxu0 0
      %5341 = vmatmul.mubr.bf16.gmra.mrb[0].mxu0 %v3885
      %v5342 = vpop.f32.mrb[0].mxu0
      %v5343 = vadd.f32 0.0, %v5342
      %v5344 = vpop.f32.mrb[0].mxu0
      %v5345 = vpop.f32.mrb[0].mxu0
      %v5346 = vadd.f32 0.0, %v5345
      %v5347 = vpop.f32.mrb[0].mxu0
      %5348 = vmatprep.mubr.bf16.mxu0 0
      %5349 = vmatmul.mubr.bf16.gmra.mrb[0].mxu0 %v3888
      %v5350 = vpop.f32.mrb[0].mxu0
      %v5351 = vadd.f32 0.0, %v5350
      %v5352 = vpop.f32.mrb[0].mxu0
      %v5353 = vpop.f32.mrb[0].mxu0
      %v5354 = vadd.f32 0.0, %v5353
      %v5355 = vpop.f32.mrb[0].mxu0
      %5356 = vmatprep.mubr.bf16.mxu0 0
      %5357 = vmatmul.mubr.bf16.gmra.mrb[0].mxu0 %v3891
      %v5358 = vpop.f32.mrb[0].mxu0
      %v5359 = vadd.f32 0.0, %v5358
      %v5360 = vpop.f32.mrb[0].mxu0
      %v5361 = vpop.f32.mrb[0].mxu0
      %v5362 = vadd.f32 0.0, %v5361
      %v5363 = vpop.f32.mrb[0].mxu0
      %5364 = vmatprep.mubr.bf16.mxu0 0
      %5365 = vmatmul.mubr.bf16.gmra.mrb[0].mxu0 %v3894
      %v5366 = vpop.f32.mrb[0].mxu0
      %v5367 = vadd.f32 0.0, %v5366
      %v5368 = vpop.f32.mrb[0].mxu0
      %v5369 = vpop.f32.mrb[0].mxu0
      %v5370 = vadd.f32 0.0, %v5369
      %v5371 = vpop.f32.mrb[0].mxu0
      %5372 = vmatprep.mubr.bf16.mxu0 0
      %5373 = vmatmul.mubr.bf16.gmra.mrb[0].mxu0 %v3897
      %v5374 = vpop.f32.mrb[0].mxu0
      %v5375 = vadd.f32 0.0, %v5374
      %v5376 = vpop.f32.mrb[0].mxu0
      %v5377 = vpop.f32.mrb[0].mxu0
      %v5378 = vadd.f32 0.0, %v5377
      %v5379 = vpop.f32.mrb[0].mxu0
      %5380 = vmatprep.mubr.bf16.mxu0 0
      %5381 = vmatmul.mubr.bf16.gmra.mrb[0].mxu0 %v3900
      %v5382 = vpop.f32.mrb[0].mxu0
      %v5383 = vadd.f32 0.0, %v5382
      %v5384 = vpop.f32.mrb[0].mxu0
      %v5385 = vpop.f32.mrb[0].mxu0
      %v5386 = vadd.f32 0.0, %v5385
      %v5387 = vpop.f32.mrb[0].mxu0
      %5388 = vmatprep.mubr.bf16.mxu0 0
      %5389 = vmatmul.mubr.bf16.gmra.mrb[0].mxu0 %v3903
      %v5390 = vpop.f32.mrb[0].mxu0
      %v5391 = vadd.f32 0.0, %v5390
      %v5392 = vpop.f32.mrb[0].mxu0
      %v5393 = vpop.f32.mrb[0].mxu0
      %v5394 = vadd.f32 0.0, %v5393
      %v5395 = vpop.f32.mrb[0].mxu0
      %5396 = vmatprep.mubr.bf16.mxu0 0
      %5397 = vmatmul.mubr.bf16.gmra.mrb[0].mxu0 %v4548
      %v5398 = vpop.f32.mrb[0].mxu0
      %v5399 = vadd.f32 0.0, %v5398
      %v5400 = vpop.f32.mrb[0].mxu0
      %v5401 = vpop.f32.mrb[0].mxu0
      %v5402 = vadd.f32 0.0, %v5401
      %v5403 = vpop.f32.mrb[0].mxu0
      %5404 = vmatprep.mubr.bf16.mxu0 0
      %5405 = vmatmul.mubr.bf16.gmra.mrb[0].mxu0 %v4551
      %v5406 = vpop.f32.mrb[0].mxu0
      %v5407 = vadd.f32 0.0, %v5406
      %v5408 = vpop.f32.mrb[0].mxu0
      %v5409 = vpop.f32.mrb[0].mxu0
      %v5410 = vadd.f32 0.0, %v5409
      %v5411 = vpop.f32.mrb[0].mxu0
      %5412 = vmatprep.mubr.bf16.mxu0 0
      %5413 = vmatmul.mubr.bf16.gmra.mrb[0].mxu0 %v4554
      %v5414 = vpop.f32.mrb[0].mxu0
      %v5415 = vadd.f32 0.0, %v5414
      %v5416 = vpop.f32.mrb[0].mxu0
      %v5417 = vpop.f32.mrb[0].mxu0
      %v5418 = vadd.f32 0.0, %v5417
      %v5419 = vpop.f32.mrb[0].mxu0
      %5420 = vmatprep.mubr.bf16.mxu0 0
      %5421 = vmatmul.mubr.bf16.gmra.mrb[0].mxu0 %v5273
      %v5422 = vpop.f32.mrb[0].mxu0
      %v5423 = vadd.f32 0.0, %v5422
      %v5424 = vpop.f32.mrb[0].mxu0
      %v5425 = vpop.f32.mrb[0].mxu0
      %v5426 = vadd.f32 0.0, %v5425
      %v5427 = vpop.f32.mrb[0].mxu0
      %5428 = vmatprep.mubr.bf16.mxu0 0
      %5429 = vmatmul.mubr.bf16.gmra.mrb[0].mxu0 %v5276
      %v5430 = vpop.f32.mrb[0].mxu0
      %v5431 = vadd.f32 0.0, %v5430
      %v5432 = vpop.f32.mrb[0].mxu0
      %v5433 = vpop.f32.mrb[0].mxu0
      %v5434 = vadd.f32 0.0, %v5433
      %v5435 = vpop.f32.mrb[0].mxu0
      %5436 = vmatprep.mubr.bf16.mxu0 0
      %5437 = vmatmul.mubr.bf16.gmra.mrb[0].mxu0 %v5279
      %v5438 = vpop.f32.mrb[0].mxu0
      %v5439 = vadd.f32 0.0, %v5438
      %v5440 = vpop.f32.mrb[0].mxu0
      %v5441 = vpop.f32.mrb[0].mxu0
      %v5442 = vadd.f32 0.0, %v5441
      %v5443 = vpop.f32.mrb[0].mxu0
      %5444 = vdwg.mxu0
      %v5445 = vadd.f32 %v5206, %v5319
      %v5446 = vadd.f32 %v5207, %v5322
      %v5447 = vadd.f32 %v5208, %v5327
      %v5448 = vadd.f32 %v5209, %v5330
      %v5449 = vadd.f32 %v5210, %v5335
      %v5450 = vadd.f32 %v5211, %v5338
      %v5451 = vadd.f32 %v5212, %v5343
      %v5452 = vadd.f32 %v5213, %v5346
      %v5453 = vadd.f32 %v5214, %v5351
      %v5454 = vadd.f32 %v5215, %v5354
      %v5455 = vadd.f32 %v5216, %v5359
      %v5456 = vadd.f32 %v5217, %v5362
      %v5457 = vadd.f32 %v5218, %v5367
      %v5458 = vadd.f32 %v5219, %v5370
      %v5459 = vadd.f32 %v5220, %v5375
      %v5460 = vadd.f32 %v5221, %v5378
      %v5461 = vadd.f32 %v5222, %v5383
      %v5462 = vadd.f32 %v5223, %v5386
      %v5463 = vadd.f32 %v5224, %v5391
      %v5464 = vadd.f32 %v5225, %v5394
      %v5465 = vadd.f32 %v5226, %v5399
      %v5466 = vadd.f32 %v5227, %v5402
      %v5467 = vadd.f32 %v5228, %v5407
      %v5468 = vadd.f32 %v5229, %v5410
      %v5469 = vadd.f32 %v5230, %v5415
      %v5470 = vadd.f32 %v5231, %v5418
      %v5471 = vadd.f32 %v5232, %v5423
      %v5472 = vadd.f32 %v5233, %v5426
      %v5473 = vadd.f32 %v5234, %v5431
      %v5474 = vadd.f32 %v5235, %v5434
      %v5475 = vadd.f32 %v5236, %v5439
      %v5476 = vadd.f32 %v5237, %v5442
      %v5477 = vld [vmem:[%s4 + $0x1] sm:$0x1]
      %v5478 = vlaneseq
      %v5479 = vshrl.u32 %v5478, 7
      %v5480 = vsub.s32 0, %v5479
      %v5481 = vrot.slane %v5477, %v5480
      %v5482 = vadd.f32 %v5445, %v5481
      %v5483 = vadd.f32 %v5446, %v5481
      %v5484 = vadd.f32 %v5447, %v5481
      %v5485 = vadd.f32 %v5448, %v5481
      %v5486 = vadd.f32 %v5449, %v5481
      %v5487 = vadd.f32 %v5450, %v5481
      %v5488 = vadd.f32 %v5451, %v5481
      %v5489 = vadd.f32 %v5452, %v5481
      %v5490 = vadd.f32 %v5453, %v5481
      %v5491 = vadd.f32 %v5454, %v5481
      %v5492 = vadd.f32 %v5455, %v5481
      %v5493 = vadd.f32 %v5456, %v5481
      %v5494 = vadd.f32 %v5457, %v5481
      %v5495 = vadd.f32 %v5458, %v5481
      %v5496 = vadd.f32 %v5459, %v5481
      %v5497 = vadd.f32 %v5460, %v5481
      %v5498 = vadd.f32 %v5461, %v5481
      %v5499 = vadd.f32 %v5462, %v5481
      %v5500 = vadd.f32 %v5463, %v5481
      %v5501 = vadd.f32 %v5464, %v5481
      %v5502 = vadd.f32 %v5465, %v5481
      %v5503 = vadd.f32 %v5466, %v5481
      %v5504 = vadd.f32 %v5467, %v5481
      %v5505 = vadd.f32 %v5468, %v5481
      %v5506 = vadd.f32 %v5469, %v5481
      %v5507 = vadd.f32 %v5470, %v5481
      %v5508 = vadd.f32 %v5471, %v5481
      %v5509 = vadd.f32 %v5472, %v5481
      %v5510 = vadd.f32 %v5473, %v5481
      %v5511 = vadd.f32 %v5474, %v5481
      %v5512 = vadd.f32 %v5475, %v5481
      %v5513 = vadd.f32 %v5476, %v5481
      %vm5514 = vcmp.gt.f32.partialorder %v5482, 0.0
      %vm5515 = vcmp.gt.f32.partialorder %v5483, 0.0
      %vm5516 = vcmp.gt.f32.partialorder %v5484, 0.0
      %vm5517 = vcmp.gt.f32.partialorder %v5485, 0.0
      %vm5518 = vcmp.gt.f32.partialorder %v5486, 0.0
      %vm5519 = vcmp.gt.f32.partialorder %v5487, 0.0
      %vm5520 = vcmp.gt.f32.partialorder %v5488, 0.0
      %vm5521 = vcmp.gt.f32.partialorder %v5489, 0.0
      %vm5522 = vcmp.gt.f32.partialorder %v5490, 0.0
      %vm5523 = vcmp.gt.f32.partialorder %v5491, 0.0
      %vm5524 = vcmp.gt.f32.partialorder %v5492, 0.0
      %vm5525 = vcmp.gt.f32.partialorder %v5493, 0.0
      %vm5526 = vcmp.gt.f32.partialorder %v5494, 0.0
      %vm5527 = vcmp.gt.f32.partialorder %v5495, 0.0
      %vm5528 = vcmp.gt.f32.partialorder %v5496, 0.0
      %vm5529 = vcmp.gt.f32.partialorder %v5497, 0.0
      %vm5530 = vcmp.gt.f32.partialorder %v5498, 0.0
      %vm5531 = vcmp.gt.f32.partialorder %v5499, 0.0
      %vm5532 = vcmp.gt.f32.partialorder %v5500, 0.0
      %vm5533 = vcmp.gt.f32.partialorder %v5501, 0.0
      %vm5534 = vcmp.gt.f32.partialorder %v5502, 0.0
      %vm5535 = vcmp.gt.f32.partialorder %v5503, 0.0
      %vm5536 = vcmp.gt.f32.partialorder %v5504, 0.0
      %vm5537 = vcmp.gt.f32.partialorder %v5505, 0.0
      %vm5538 = vcmp.gt.f32.partialorder %v5506, 0.0
      %vm5539 = vcmp.gt.f32.partialorder %v5507, 0.0
      %vm5540 = vcmp.gt.f32.partialorder %v5508, 0.0
      %vm5541 = vcmp.gt.f32.partialorder %v5509, 0.0
      %vm5542 = vcmp.gt.f32.partialorder %v5510, 0.0
      %vm5543 = vcmp.gt.f32.partialorder %v5511, 0.0
      %vm5544 = vcmp.gt.f32.partialorder %v5512, 0.0
      %vm5545 = vcmp.gt.f32.partialorder %v5513, 0.0
      %v5546 = vld [vmem:[%s4 + $0x3] sm:$0x1]
      %v5547 = vlaneseq
      %v5548 = vshrl.u32 %v5547, 7
      %v5549 = vsub.s32 0, %v5548
      %v5550 = vrot.slane %v5546, %v5549
      %v5551 = vmul.f32 %v5550, %v5482
      %v5552 = vmul.f32 %v5550, %v5483
      %v5553 = vmul.f32 %v5550, %v5484
      %v5554 = vmul.f32 %v5550, %v5485
      %v5555 = vmul.f32 %v5550, %v5486
      %v5556 = vmul.f32 %v5550, %v5487
      %v5557 = vmul.f32 %v5550, %v5488
      %v5558 = vmul.f32 %v5550, %v5489
      %v5559 = vmul.f32 %v5550, %v5490
      %v5560 = vmul.f32 %v5550, %v5491
      %v5561 = vmul.f32 %v5550, %v5492
      %v5562 = vmul.f32 %v5550, %v5493
      %v5563 = vmul.f32 %v5550, %v5494
      %v5564 = vmul.f32 %v5550, %v5495
      %v5565 = vmul.f32 %v5550, %v5496
      %v5566 = vmul.f32 %v5550, %v5497
      %v5567 = vmul.f32 %v5550, %v5498
      %v5568 = vmul.f32 %v5550, %v5499
      %v5569 = vmul.f32 %v5550, %v5500
      %v5570 = vmul.f32 %v5550, %v5501
      %v5571 = vmul.f32 %v5550, %v5502
      %v5572 = vmul.f32 %v5550, %v5503
      %v5573 = vmul.f32 %v5550, %v5504
      %v5574 = vmul.f32 %v5550, %v5505
      %v5575 = vmul.f32 %v5550, %v5506
      %v5576 = vmul.f32 %v5550, %v5507
      %v5577 = vmul.f32 %v5550, %v5508
      %v5578 = vmul.f32 %v5550, %v5509
      %v5579 = vmul.f32 %v5550, %v5510
      %v5580 = vmul.f32 %v5550, %v5511
      %v5581 = vmul.f32 %v5550, %v5512
      %v5582 = vmul.f32 %v5550, %v5513
      %v5583 = vsel %vm5514, %v5482, %v5551
      %v5584 = vsel %vm5515, %v5483, %v5552
      %v5585 = vsel %vm5516, %v5484, %v5553
      %v5586 = vsel %vm5517, %v5485, %v5554
      %v5587 = vsel %vm5518, %v5486, %v5555
      %v5588 = vsel %vm5519, %v5487, %v5556
      %v5589 = vsel %vm5520, %v5488, %v5557
      %v5590 = vsel %vm5521, %v5489, %v5558
      %v5591 = vsel %vm5522, %v5490, %v5559
      %v5592 = vsel %vm5523, %v5491, %v5560
      %v5593 = vsel %vm5524, %v5492, %v5561
      %v5594 = vsel %vm5525, %v5493, %v5562
      %v5595 = vsel %vm5526, %v5494, %v5563
      %v5596 = vsel %vm5527, %v5495, %v5564
      %v5597 = vsel %vm5528, %v5496, %v5565
      %v5598 = vsel %vm5529, %v5497, %v5566
      %v5599 = vsel %vm5530, %v5498, %v5567
      %v5600 = vsel %vm5531, %v5499, %v5568
      %v5601 = vsel %vm5532, %v5500, %v5569
      %v5602 = vsel %vm5533, %v5501, %v5570
      %v5603 = vsel %vm5534, %v5502, %v5571
      %v5604 = vsel %vm5535, %v5503, %v5572
      %v5605 = vsel %vm5536, %v5504, %v5573
      %v5606 = vsel %vm5537, %v5505, %v5574
      %v5607 = vsel %vm5538, %v5506, %v5575
      %v5608 = vsel %vm5539, %v5507, %v5576
      %v5609 = vsel %vm5540, %v5508, %v5577
      %v5610 = vsel %vm5541, %v5509, %v5578
      %v5611 = vsel %vm5542, %v5510, %v5579
      %v5612 = vsel %vm5543, %v5511, %v5580
      %v5613 = vsel %vm5544, %v5512, %v5581
      %v5614 = vsel %vm5545, %v5513, %v5582
      %vm5615 = vcmask 125952
      %5616 = vst.msk [vmem:[#allocation2] sm:$0xf] %vm5615, 0
      %5617 = vst.msk [vmem:[#allocation2 + $0x4] sm:$0xf] %vm5615, 0
      %vm5618 = vcmask 122880
      %5619 = vst.msk [vmem:[#allocation2 + $0x8] sm:$0x1] %vm5618, 0
      %5620 = vst.msk [vmem:[#allocation2 + $0xc] sm:$0xf] %vm5615, 0
      %5621 = vst.msk [vmem:[#allocation2 + $0x10] sm:$0xf] %vm5615, 0
      %5622 = vst.msk [vmem:[#allocation2 + $0x14] sm:$0x1] %vm5618, 0
      %5623 = vst.msk [vmem:[#allocation2 + $0x18] sm:$0xf] %vm5615, 0
      %5624 = vst.msk [vmem:[#allocation2 + $0x1c] sm:$0xf] %vm5615, 0
      %5625 = vst.msk [vmem:[#allocation2 + $0x20] sm:$0x1] %vm5618, 0
      %5626 = vst.msk [vmem:[#allocation2 + $0x24] sm:$0xf] %vm5615, 0
      %5627 = vst.msk [vmem:[#allocation2 + $0x28] sm:$0xf] %vm5615, 0
      %5628 = vst.msk [vmem:[#allocation2 + $0x2c] sm:$0x1] %vm5618, 0
      %5629 = vst.msk [vmem:[#allocation2 + $0x30] sm:$0xf] %vm5615, 0
      %5630 = vst.msk [vmem:[#allocation2 + $0x34] sm:$0xf] %vm5615, 0
      %5631 = vst.msk [vmem:[#allocation2 + $0x38] sm:$0x1] %vm5618, 0
      %5632 = vst.msk [vmem:[#allocation2 + $0x3c] sm:$0xf] %vm5615, 0
      %5633 = vst.msk [vmem:[#allocation2 + $0x40] sm:$0xf] %vm5615, 0
      %5634 = vst.msk [vmem:[#allocation2 + $0x44] sm:$0x1] %vm5618, 0
      %5635 = vst.msk [vmem:[#allocation2 + $0x48] sm:$0xf] %vm5615, 0
      %5636 = vst.msk [vmem:[#allocation2 + $0x4c] sm:$0xf] %vm5615, 0
      %5637 = vst.msk [vmem:[#allocation2 + $0x50] sm:$0x1] %vm5618, 0
      %5638 = vst.msk [vmem:[#allocation2 + $0x54] sm:$0xf] %vm5615, 0
      %5639 = vst.msk [vmem:[#allocation2 + $0x58] sm:$0xf] %vm5615, 0
      %5640 = vst.msk [vmem:[#allocation2 + $0x5c] sm:$0x1] %vm5618, 0
      %5641 = vst.msk [vmem:[#allocation2 + $0x60] sm:$0xf] %vm5615, 0
      %5642 = vst.msk [vmem:[#allocation2 + $0x64] sm:$0xf] %vm5615, 0
      %5643 = vst.msk [vmem:[#allocation2 + $0x68] sm:$0x1] %vm5618, 0
      %5644 = vst.msk [vmem:[#allocation2 + $0x6c] sm:$0xf] %vm5615, 0
      %5645 = vst.msk [vmem:[#allocation2 + $0x70] sm:$0xf] %vm5615, 0
      %5646 = vst.msk [vmem:[#allocation2 + $0x74] sm:$0x1] %vm5618, 0
      %5647 = vst.msk [vmem:[#allocation2 + $0x78] sm:$0xf] %vm5615, 0
      %5648 = vst.msk [vmem:[#allocation2 + $0x7c] sm:$0xf] %vm5615, 0
      %5649 = vst.msk [vmem:[#allocation2 + $0x80] sm:$0x1] %vm5618, 0
      %5650 = vst.msk [vmem:[#allocation2 + $0x84] sm:$0xf] %vm5615, 0
      %5651 = vst.msk [vmem:[#allocation2 + $0x88] sm:$0xf] %vm5615, 0
      %5652 = vst.msk [vmem:[#allocation2 + $0x8c] sm:$0x1] %vm5618, 0
      %5653 = vst.msk [vmem:[#allocation2 + $0x90] sm:$0xf] %vm5615, 0
      %5654 = vst.msk [vmem:[#allocation2 + $0x94] sm:$0xf] %vm5615, 0
      %5655 = vst.msk [vmem:[#allocation2 + $0x98] sm:$0x1] %vm5618, 0
      %5656 = vst.msk [vmem:[#allocation2 + $0x9c] sm:$0xf] %vm5615, 0
      %5657 = vst.msk [vmem:[#allocation2 + $0xa0] sm:$0xf] %vm5615, 0
      %5658 = vst.msk [vmem:[#allocation2 + $0xa4] sm:$0x1] %vm5618, 0
      %5659 = vst.msk [vmem:[#allocation2 + $0xa8] sm:$0xf] %vm5615, 0
      %5660 = vst.msk [vmem:[#allocation2 + $0xac] sm:$0xf] %vm5615, 0
      %5661 = vst.msk [vmem:[#allocation2 + $0xb0] sm:$0x1] %vm5618, 0
      %5662 = vst.msk [vmem:[#allocation2 + $0xb4] sm:$0xf] %vm5615, 0
      %5663 = vst.msk [vmem:[#allocation2 + $0xb8] sm:$0xf] %vm5615, 0
      %5664 = vst.msk [vmem:[#allocation2 + $0xbc] sm:$0x1] %vm5618, 0
      %5665 = vst.msk [vmem:[#allocation2 + $0xc0] sm:$0xf] %vm5615, 0
      %5666 = vst.msk [vmem:[#allocation2 + $0xc4] sm:$0xf] %vm5615, 0
      %5667 = vst.msk [vmem:[#allocation2 + $0xc8] sm:$0x1] %vm5618, 0
      %5668 = vst.msk [vmem:[#allocation2 + $0xcc] sm:$0xf] %vm5615, 0
      %5669 = vst.msk [vmem:[#allocation2 + $0xd0] sm:$0xf] %vm5615, 0
      %5670 = vst.msk [vmem:[#allocation2 + $0xd4] sm:$0x1] %vm5618, 0
      %v5671 = vpack.c.bf16 %v3160, %v3159
      %v5672 = vpack.c.bf16 %v3162, %v3161
      %v5673 = vpack.c.bf16 %v3164, %v3163
      %v5674 = vpack.c.bf16 %v3166, %v3165
      %v5675 = vpack.c.bf16 %v3168, %v3167
      %v5676 = vpack.c.bf16 %v3170, %v3169
      %v5677 = vpack.c.bf16 %v3172, %v3171
      %v5678 = vpack.c.bf16 %v3174, %v3173
      %v5679 = vpack.c.bf16 %v3176, %v3175
      %v5680 = vpack.c.bf16 %v3178, %v3177
      %v5681 = vpack.c.bf16 %v3180, %v3179
      %v5682 = vpack.c.bf16 %v3182, %v3181
      %v5683 = vpack.c.bf16 %v3184, %v3183
      %v5684 = vpack.c.bf16 %v3186, %v3185
      %v5685 = vpack.c.bf16 %v3188, %v3187
      %v5686 = vpack.c.bf16 %v3190, %v3189
      %v5703 = vunpack.c.l.b16 %v5671
      %v5704 = vunpack.c.h.b16 %v5671
      %v5705 = vunpack.c.l.b16 %v5672
      %v5706 = vunpack.c.h.b16 %v5672
      %v5707 = vunpack.c.l.b16 %v5673
      %v5708 = vunpack.c.h.b16 %v5673
      %v5709 = vunpack.c.l.b16 %v5674
      %v5710 = vunpack.c.h.b16 %v5674
      %v5711 = vunpack.c.l.b16 %v5675
      %v5712 = vunpack.c.h.b16 %v5675
      %v5713 = vunpack.c.l.b16 %v5676
      %v5714 = vunpack.c.h.b16 %v5676
      %v5715 = vunpack.c.l.b16 %v5677
      %v5716 = vunpack.c.h.b16 %v5677
      %v5717 = vunpack.c.l.b16 %v5678
      %v5718 = vunpack.c.h.b16 %v5678
      %v5719 = vunpack.c.l.b16 %v5679
      %v5720 = vunpack.c.h.b16 %v5679
      %v5721 = vunpack.c.l.b16 %v5680
      %v5722 = vunpack.c.h.b16 %v5680
      %v5723 = vunpack.c.l.b16 %v5681
      %v5724 = vunpack.c.h.b16 %v5681
      %v5725 = vunpack.c.l.b16 %v5682
      %v5726 = vunpack.c.h.b16 %v5682
      %v5727 = vunpack.c.l.b16 %v5683
      %v5728 = vunpack.c.h.b16 %v5683
      %v5729 = vunpack.c.l.b16 %v5684
      %v5730 = vunpack.c.h.b16 %v5684
      %v5731 = vunpack.c.l.b16 %v5685
      %v5732 = vunpack.c.h.b16 %v5685
      %v5733 = vunpack.c.l.b16 %v5686
      %v5734 = vunpack.c.h.b16 %v5686
      %v5735 = vpack.c.b16 %v5703, %v5703
      %v5736 = vpack.c.b16 %v5704, %v5704
      %v5737 = vpack.c.b16 %v5705, %v5705
      %v5738 = vpack.c.b16 %v5706, %v5706
      %v5739 = vpack.c.b16 %v5707, %v5707
      %v5740 = vpack.c.b16 %v5708, %v5708
      %v5741 = vpack.c.b16 %v5709, %v5709
      %v5742 = vpack.c.b16 %v5710, %v5710
      %v5743 = vpack.c.b16 %v5711, %v5711
      %v5744 = vpack.c.b16 %v5712, %v5712
      %v5745 = vpack.c.b16 %v5713, %v5713
      %v5746 = vpack.c.b16 %v5714, %v5714
      %v5747 = vpack.c.b16 %v5715, %v5715
      %v5748 = vpack.c.b16 %v5716, %v5716
      %v5749 = vpack.c.b16 %v5717, %v5717
      %v5750 = vpack.c.b16 %v5718, %v5718
      %v5751 = vpack.c.b16 %v5719, %v5719
      %v5752 = vpack.c.b16 %v5720, %v5720
      %v5753 = vpack.c.b16 %v5721, %v5721
      %v5754 = vpack.c.b16 %v5722, %v5722
      %v5755 = vpack.c.b16 %v5723, %v5723
      %v5756 = vpack.c.b16 %v5724, %v5724
      %v5757 = vpack.c.b16 %v5725, %v5725
      %v5758 = vpack.c.b16 %v5726, %v5726
      %v5759 = vpack.c.b16 %v5727, %v5727
      %v5760 = vpack.c.b16 %v5728, %v5728
      %v5761 = vpack.c.b16 %v5729, %v5729
      %v5762 = vpack.c.b16 %v5730, %v5730
      %v5763 = vpack.c.b16 %v5731, %v5731
      %v5764 = vpack.c.b16 %v5732, %v5732
      %v5765 = vpack.c.b16 %v5733, %v5733
      %v5766 = vpack.c.b16 %v5734, %v5734
      %vm5767 = vsmask.f32 256
      %vm5768 = vsmask.f32 4368
      %vm5769 = vmor %vm5767, %vm5768
      %v5771 = vshrl.u32 %v5735, 16
      %v5773 = vrot.slane %v5771, 7
      %v5774 = vshll.u32 %v5735, 16
      %v5776 = vor.u32 %v5773, %v5774
      %v5777 = vrot.slane %v5773, 4
      %v5779 = vshrl.u32 %v5736, 16
      %v5781 = vrot.slane %v5779, 7
      %v5782 = vshll.u32 %v5736, 16
      %v5784 = vor.u32 %v5781, %v5782
      %v5785 = vsel %vm5769, %v5777, %v5784
      %v5786 = vrot.slane %v5781, 4
      %v5788 = vshrl.u32 %v5737, 16
      %v5790 = vrot.slane %v5788, 7
      %v5791 = vshll.u32 %v5737, 16
      %v5793 = vor.u32 %v5790, %v5791
      %v5794 = vrot.slane %v5790, 4
      %v5796 = vshrl.u32 %v5738, 16
      %v5798 = vrot.slane %v5796, 7
      %v5799 = vshll.u32 %v5738, 16
      %v5801 = vor.u32 %v5798, %v5799
      %v5802 = vsel %vm5769, %v5794, %v5801
      %v5803 = vrot.slane %v5798, 4
      %v5805 = vshrl.u32 %v5739, 16
      %v5807 = vrot.slane %v5805, 7
      %v5808 = vshll.u32 %v5739, 16
      %v5810 = vor.u32 %v5807, %v5808
      %v5811 = vrot.slane %v5807, 4
      %v5813 = vshrl.u32 %v5740, 16
      %v5815 = vrot.slane %v5813, 7
      %v5816 = vshll.u32 %v5740, 16
      %v5818 = vor.u32 %v5815, %v5816
      %v5819 = vsel %vm5769, %v5811, %v5818
      %v5820 = vrot.slane %v5815, 4
      %v5822 = vshrl.u32 %v5741, 16
      %v5824 = vrot.slane %v5822, 7
      %v5825 = vshll.u32 %v5741, 16
      %v5827 = vor.u32 %v5824, %v5825
      %v5828 = vrot.slane %v5824, 4
      %v5830 = vshrl.u32 %v5742, 16
      %v5832 = vrot.slane %v5830, 7
      %v5833 = vshll.u32 %v5742, 16
      %v5835 = vor.u32 %v5832, %v5833
      %v5836 = vsel %vm5769, %v5828, %v5835
      %v5837 = vrot.slane %v5832, 4
      %v5839 = vshrl.u32 %v5743, 16
      %v5841 = vrot.slane %v5839, 7
      %v5842 = vshll.u32 %v5743, 16
      %v5844 = vor.u32 %v5841, %v5842
      %v5845 = vrot.slane %v5841, 4
      %v5847 = vshrl.u32 %v5744, 16
      %v5849 = vrot.slane %v5847, 7
      %v5850 = vshll.u32 %v5744, 16
      %v5852 = vor.u32 %v5849, %v5850
      %v5853 = vsel %vm5769, %v5845, %v5852
      %v5854 = vrot.slane %v5849, 4
      %v5856 = vshrl.u32 %v5745, 16
      %v5858 = vrot.slane %v5856, 7
      %v5859 = vshll.u32 %v5745, 16
      %v5861 = vor.u32 %v5858, %v5859
      %v5862 = vrot.slane %v5858, 4
      %v5864 = vshrl.u32 %v5746, 16
      %v5866 = vrot.slane %v5864, 7
      %v5867 = vshll.u32 %v5746, 16
      %v5869 = vor.u32 %v5866, %v5867
      %v5870 = vsel %vm5769, %v5862, %v5869
      %v5871 = vrot.slane %v5866, 4
      %v5873 = vshrl.u32 %v5747, 16
      %v5875 = vrot.slane %v5873, 7
      %v5876 = vshll.u32 %v5747, 16
      %v5878 = vor.u32 %v5875, %v5876
      %v5879 = vrot.slane %v5875, 4
      %v5881 = vshrl.u32 %v5748, 16
      %v5883 = vrot.slane %v5881, 7
      %v5884 = vshll.u32 %v5748, 16
      %v5886 = vor.u32 %v5883, %v5884
      %v5887 = vsel %vm5769, %v5879, %v5886
      %v5888 = vrot.slane %v5883, 4
      %v5890 = vshrl.u32 %v5749, 16
      %v5892 = vrot.slane %v5890, 7
      %v5893 = vshll.u32 %v5749, 16
      %v5895 = vor.u32 %v5892, %v5893
      %v5896 = vrot.slane %v5892, 4
      %v5898 = vshrl.u32 %v5750, 16
      %v5900 = vrot.slane %v5898, 7
      %v5901 = vshll.u32 %v5750, 16
      %v5903 = vor.u32 %v5900, %v5901
      %v5904 = vsel %vm5769, %v5896, %v5903
      %v5905 = vrot.slane %v5900, 4
      %v5907 = vshrl.u32 %v5751, 16
      %v5909 = vrot.slane %v5907, 7
      %v5910 = vshll.u32 %v5751, 16
      %v5912 = vor.u32 %v5909, %v5910
      %v5913 = vrot.slane %v5909, 4
      %v5915 = vshrl.u32 %v5752, 16
      %v5917 = vrot.slane %v5915, 7
      %v5918 = vshll.u32 %v5752, 16
      %v5920 = vor.u32 %v5917, %v5918
      %v5921 = vsel %vm5769, %v5913, %v5920
      %v5922 = vrot.slane %v5917, 4
      %v5924 = vshrl.u32 %v5753, 16
      %v5926 = vrot.slane %v5924, 7
      %v5927 = vshll.u32 %v5753, 16
      %v5929 = vor.u32 %v5926, %v5927
      %v5930 = vrot.slane %v5926, 4
      %v5932 = vshrl.u32 %v5754, 16
      %v5934 = vrot.slane %v5932, 7
      %v5935 = vshll.u32 %v5754, 16
      %v5937 = vor.u32 %v5934, %v5935
      %v5938 = vsel %vm5769, %v5930, %v5937
      %v5939 = vrot.slane %v5934, 4
      %v5941 = vshrl.u32 %v5755, 16
      %v5943 = vrot.slane %v5941, 7
      %v5944 = vshll.u32 %v5755, 16
      %v5946 = vor.u32 %v5943, %v5944
      %v5947 = vrot.slane %v5943, 4
      %v5949 = vshrl.u32 %v5756, 16
      %v5951 = vrot.slane %v5949, 7
      %v5952 = vshll.u32 %v5756, 16
      %v5954 = vor.u32 %v5951, %v5952
      %v5955 = vsel %vm5769, %v5947, %v5954
      %v5956 = vrot.slane %v5951, 4
      %v5958 = vshrl.u32 %v5757, 16
      %v5960 = vrot.slane %v5958, 7
      %v5961 = vshll.u32 %v5757, 16
      %v5963 = vor.u32 %v5960, %v5961
      %v5964 = vrot.slane %v5960, 4
      %v5966 = vshrl.u32 %v5758, 16
      %v5968 = vrot.slane %v5966, 7
      %v5969 = vshll.u32 %v5758, 16
      %v5971 = vor.u32 %v5968, %v5969
      %v5972 = vsel %vm5769, %v5964, %v5971
      %v5973 = vrot.slane %v5968, 4
      %v5975 = vshrl.u32 %v5759, 16
      %v5977 = vrot.slane %v5975, 7
      %v5978 = vshll.u32 %v5759, 16
      %v5980 = vor.u32 %v5977, %v5978
      %v5981 = vrot.slane %v5977, 4
      %v5983 = vshrl.u32 %v5760, 16
      %v5985 = vrot.slane %v5983, 7
      %v5986 = vshll.u32 %v5760, 16
      %v5988 = vor.u32 %v5985, %v5986
      %v5989 = vsel %vm5769, %v5981, %v5988
      %v5990 = vrot.slane %v5985, 4
      %v5992 = vshrl.u32 %v5761, 16
      %v5994 = vrot.slane %v5992, 7
      %v5995 = vshll.u32 %v5761, 16
      %v5997 = vor.u32 %v5994, %v5995
      %v5998 = vrot.slane %v5994, 4
      %v6000 = vshrl.u32 %v5762, 16
      %v6002 = vrot.slane %v6000, 7
      %v6003 = vshll.u32 %v5762, 16
      %v6005 = vor.u32 %v6002, %v6003
      %v6006 = vsel %vm5769, %v5998, %v6005
      %v6007 = vrot.slane %v6002, 4
      %v6009 = vshrl.u32 %v5763, 16
      %v6011 = vrot.slane %v6009, 7
      %v6012 = vshll.u32 %v5763, 16
      %v6014 = vor.u32 %v6011, %v6012
      %v6015 = vrot.slane %v6011, 4
      %v6017 = vshrl.u32 %v5764, 16
      %v6019 = vrot.slane %v6017, 7
      %v6020 = vshll.u32 %v5764, 16
      %v6022 = vor.u32 %v6019, %v6020
      %v6023 = vsel %vm5769, %v6015, %v6022
      %v6024 = vrot.slane %v6019, 4
      %v6026 = vshrl.u32 %v5765, 16
      %v6028 = vrot.slane %v6026, 7
      %v6029 = vshll.u32 %v5765, 16
      %v6031 = vor.u32 %v6028, %v6029
      %v6032 = vrot.slane %v6028, 4
      %v6034 = vshrl.u32 %v5766, 16
      %v6036 = vrot.slane %v6034, 7
      %v6037 = vshll.u32 %v5766, 16
      %v6039 = vor.u32 %v6036, %v6037
      %v6040 = vsel %vm5769, %v6032, %v6039
      %v6041 = vrot.slane %v6036, 4
      %s6090 = scalar_lea.vmem [#allocation2], 12
      %vm6091 = vcmask 60416
      %vm6092 = vsmask.f32 7938
      %vm6093 = vmand %vm6091, %vm6092
      %v6094 = vld [vmem:[%s6090] sm:$0xf]
      %v6095 = vsel %vm6093, %v5776, %v6094
      %6096 = vst [vmem:[%s6090] sm:$0xf] %v6095
      %vm6097 = vcmask 60416
      %6098 = vst.msk [vmem:[%s6090 + $0x4] sm:$0xf] %vm6097, %v5785
      %vm6099 = vcmask 57344
      %vm6100 = vmand %vm6099, %vm5767
      %v6101 = vld [vmem:[%s6090 + $0x8] sm:$0x1]
      %v6102 = vsel %vm6100, %v5786, %v6101
      %6103 = vst [vmem:[%s6090 + $0x8] sm:$0x1] %v6102
      %v6104 = vld [vmem:[%s6090 + $0xc] sm:$0xf]
      %v6105 = vsel %vm6093, %v5793, %v6104
      %6106 = vst [vmem:[%s6090 + $0xc] sm:$0xf] %v6105
      %6107 = vst.msk [vmem:[%s6090 + $0x10] sm:$0xf] %vm6097, %v5802
      %v6108 = vld [vmem:[%s6090 + $0x14] sm:$0x1]
      %v6109 = vsel %vm6100, %v5803, %v6108
      %6110 = vst [vmem:[%s6090 + $0x14] sm:$0x1] %v6109
      %v6111 = vld [vmem:[%s6090 + $0x18] sm:$0xf]
      %v6112 = vsel %vm6093, %v5810, %v6111
      %6113 = vst [vmem:[%s6090 + $0x18] sm:$0xf] %v6112
      %6114 = vst.msk [vmem:[%s6090 + $0x1c] sm:$0xf] %vm6097, %v5819
      %v6115 = vld [vmem:[%s6090 + $0x20] sm:$0x1]
      %v6116 = vsel %vm6100, %v5820, %v6115
      %6117 = vst [vmem:[%s6090 + $0x20] sm:$0x1] %v6116
      %v6118 = vld [vmem:[%s6090 + $0x24] sm:$0xf]
      %v6119 = vsel %vm6093, %v5827, %v6118
      %6120 = vst [vmem:[%s6090 + $0x24] sm:$0xf] %v6119
      %6121 = vst.msk [vmem:[%s6090 + $0x28] sm:$0xf] %vm6097, %v5836
      %v6122 = vld [vmem:[%s6090 + $0x2c] sm:$0x1]
      %v6123 = vsel %vm6100, %v5837, %v6122
      %6124 = vst [vmem:[%s6090 + $0x2c] sm:$0x1] %v6123
      %v6125 = vld [vmem:[%s6090 + $0x30] sm:$0xf]
      %v6126 = vsel %vm6093, %v5844, %v6125
      %6127 = vst [vmem:[%s6090 + $0x30] sm:$0xf] %v6126
      %6128 = vst.msk [vmem:[%s6090 + $0x34] sm:$0xf] %vm6097, %v5853
      %v6129 = vld [vmem:[%s6090 + $0x38] sm:$0x1]
      %v6130 = vsel %vm6100, %v5854, %v6129
      %6131 = vst [vmem:[%s6090 + $0x38] sm:$0x1] %v6130
      %v6132 = vld [vmem:[%s6090 + $0x3c] sm:$0xf]
      %v6133 = vsel %vm6093, %v5861, %v6132
      %6134 = vst [vmem:[%s6090 + $0x3c] sm:$0xf] %v6133
      %6135 = vst.msk [vmem:[%s6090 + $0x40] sm:$0xf] %vm6097, %v5870
      %v6136 = vld [vmem:[%s6090 + $0x44] sm:$0x1]
      %v6137 = vsel %vm6100, %v5871, %v6136
      %6138 = vst [vmem:[%s6090 + $0x44] sm:$0x1] %v6137
      %v6139 = vld [vmem:[%s6090 + $0x48] sm:$0xf]
      %v6140 = vsel %vm6093, %v5878, %v6139
      %6141 = vst [vmem:[%s6090 + $0x48] sm:$0xf] %v6140
      %6142 = vst.msk [vmem:[%s6090 + $0x4c] sm:$0xf] %vm6097, %v5887
      %v6143 = vld [vmem:[%s6090 + $0x50] sm:$0x1]
      %v6144 = vsel %vm6100, %v5888, %v6143
      %6145 = vst [vmem:[%s6090 + $0x50] sm:$0x1] %v6144
      %v6146 = vld [vmem:[%s6090 + $0x54] sm:$0xf]
      %v6147 = vsel %vm6093, %v5895, %v6146
      %6148 = vst [vmem:[%s6090 + $0x54] sm:$0xf] %v6147
      %6149 = vst.msk [vmem:[%s6090 + $0x58] sm:$0xf] %vm6097, %v5904
      %v6150 = vld [vmem:[%s6090 + $0x5c] sm:$0x1]
      %v6151 = vsel %vm6100, %v5905, %v6150
      %6152 = vst [vmem:[%s6090 + $0x5c] sm:$0x1] %v6151
      %v6153 = vld [vmem:[%s6090 + $0x60] sm:$0xf]
      %v6154 = vsel %vm6093, %v5912, %v6153
      %6155 = vst [vmem:[%s6090 + $0x60] sm:$0xf] %v6154
      %6156 = vst.msk [vmem:[%s6090 + $0x64] sm:$0xf] %vm6097, %v5921
      %v6157 = vld [vmem:[%s6090 + $0x68] sm:$0x1]
      %v6158 = vsel %vm6100, %v5922, %v6157
      %6159 = vst [vmem:[%s6090 + $0x68] sm:$0x1] %v6158
      %v6160 = vld [vmem:[%s6090 + $0x6c] sm:$0xf]
      %v6161 = vsel %vm6093, %v5929, %v6160
      %6162 = vst [vmem:[%s6090 + $0x6c] sm:$0xf] %v6161
      %6163 = vst.msk [vmem:[%s6090 + $0x70] sm:$0xf] %vm6097, %v5938
      %v6164 = vld [vmem:[%s6090 + $0x74] sm:$0x1]
      %v6165 = vsel %vm6100, %v5939, %v6164
      %6166 = vst [vmem:[%s6090 + $0x74] sm:$0x1] %v6165
      %v6167 = vld [vmem:[%s6090 + $0x78] sm:$0xf]
      %v6168 = vsel %vm6093, %v5946, %v6167
      %6169 = vst [vmem:[%s6090 + $0x78] sm:$0xf] %v6168
      %6170 = vst.msk [vmem:[%s6090 + $0x7c] sm:$0xf] %vm6097, %v5955
      %v6171 = vld [vmem:[%s6090 + $0x80] sm:$0x1]
      %v6172 = vsel %vm6100, %v5956, %v6171
      %6173 = vst [vmem:[%s6090 + $0x80] sm:$0x1] %v6172
      %v6174 = vld [vmem:[%s6090 + $0x84] sm:$0xf]
      %v6175 = vsel %vm6093, %v5963, %v6174
      %6176 = vst [vmem:[%s6090 + $0x84] sm:$0xf] %v6175
      %6177 = vst.msk [vmem:[%s6090 + $0x88] sm:$0xf] %vm6097, %v5972
      %v6178 = vld [vmem:[%s6090 + $0x8c] sm:$0x1]
      %v6179 = vsel %vm6100, %v5973, %v6178
      %6180 = vst [vmem:[%s6090 + $0x8c] sm:$0x1] %v6179
      %v6181 = vld [vmem:[%s6090 + $0x90] sm:$0xf]
      %v6182 = vsel %vm6093, %v5980, %v6181
      %6183 = vst [vmem:[%s6090 + $0x90] sm:$0xf] %v6182
      %6184 = vst.msk [vmem:[%s6090 + $0x94] sm:$0xf] %vm6097, %v5989
      %v6185 = vld [vmem:[%s6090 + $0x98] sm:$0x1]
      %v6186 = vsel %vm6100, %v5990, %v6185
      %6187 = vst [vmem:[%s6090 + $0x98] sm:$0x1] %v6186
      %v6188 = vld [vmem:[%s6090 + $0x9c] sm:$0xf]
      %v6189 = vsel %vm6093, %v5997, %v6188
      %6190 = vst [vmem:[%s6090 + $0x9c] sm:$0xf] %v6189
      %6191 = vst.msk [vmem:[%s6090 + $0xa0] sm:$0xf] %vm6097, %v6006
      %v6192 = vld [vmem:[%s6090 + $0xa4] sm:$0x1]
      %v6193 = vsel %vm6100, %v6007, %v6192
      %6194 = vst [vmem:[%s6090 + $0xa4] sm:$0x1] %v6193
      %v6195 = vld [vmem:[%s6090 + $0xa8] sm:$0xf]
      %v6196 = vsel %vm6093, %v6014, %v6195
      %6197 = vst [vmem:[%s6090 + $0xa8] sm:$0xf] %v6196
      %6198 = vst.msk [vmem:[%s6090 + $0xac] sm:$0xf] %vm6097, %v6023
      %v6199 = vld [vmem:[%s6090 + $0xb0] sm:$0x1]
      %v6200 = vsel %vm6100, %v6024, %v6199
      %6201 = vst [vmem:[%s6090 + $0xb0] sm:$0x1] %v6200
      %v6202 = vld [vmem:[%s6090 + $0xb4] sm:$0xf]
      %v6203 = vsel %vm6093, %v6031, %v6202
      %6204 = vst [vmem:[%s6090 + $0xb4] sm:$0xf] %v6203
      %6205 = vst.msk [vmem:[%s6090 + $0xb8] sm:$0xf] %vm6097, %v6040
      %v6206 = vld [vmem:[%s6090 + $0xbc] sm:$0x1]
      %v6207 = vsel %vm6100, %v6041, %v6206
      %6208 = vst [vmem:[%s6090 + $0xbc] sm:$0x1] %v6207
      %v6209 = vpack.c.bf16 %v5584, %v5583
      %v6210 = vpack.c.bf16 %v5586, %v5585
      %v6211 = vpack.c.bf16 %v5588, %v5587
      %v6212 = vpack.c.bf16 %v5590, %v5589
      %v6213 = vpack.c.bf16 %v5592, %v5591
      %v6214 = vpack.c.bf16 %v5594, %v5593
      %v6215 = vpack.c.bf16 %v5596, %v5595
      %v6216 = vpack.c.bf16 %v5598, %v5597
      %v6217 = vpack.c.bf16 %v5600, %v5599
      %v6218 = vpack.c.bf16 %v5602, %v5601
      %v6219 = vpack.c.bf16 %v5604, %v5603
      %v6220 = vpack.c.bf16 %v5606, %v5605
      %v6221 = vpack.c.bf16 %v5608, %v5607
      %v6222 = vpack.c.bf16 %v5610, %v5609
      %v6223 = vpack.c.bf16 %v5612, %v5611
      %v6224 = vpack.c.bf16 %v5614, %v5613
      %v6241 = vunpack.c.l.b16 %v6209
      %v6242 = vunpack.c.h.b16 %v6209
      %v6243 = vunpack.c.l.b16 %v6210
      %v6244 = vunpack.c.h.b16 %v6210
      %v6245 = vunpack.c.l.b16 %v6211
      %v6246 = vunpack.c.h.b16 %v6211
      %v6247 = vunpack.c.l.b16 %v6212
      %v6248 = vunpack.c.h.b16 %v6212
      %v6249 = vunpack.c.l.b16 %v6213
      %v6250 = vunpack.c.h.b16 %v6213
      %v6251 = vunpack.c.l.b16 %v6214
      %v6252 = vunpack.c.h.b16 %v6214
      %v6253 = vunpack.c.l.b16 %v6215
      %v6254 = vunpack.c.h.b16 %v6215
      %v6255 = vunpack.c.l.b16 %v6216
      %v6256 = vunpack.c.h.b16 %v6216
      %v6257 = vunpack.c.l.b16 %v6217
      %v6258 = vunpack.c.h.b16 %v6217
      %v6259 = vunpack.c.l.b16 %v6218
      %v6260 = vunpack.c.h.b16 %v6218
      %v6261 = vunpack.c.l.b16 %v6219
      %v6262 = vunpack.c.h.b16 %v6219
      %v6263 = vunpack.c.l.b16 %v6220
      %v6264 = vunpack.c.h.b16 %v6220
      %v6265 = vunpack.c.l.b16 %v6221
      %v6266 = vunpack.c.h.b16 %v6221
      %v6267 = vunpack.c.l.b16 %v6222
      %v6268 = vunpack.c.h.b16 %v6222
      %v6269 = vunpack.c.l.b16 %v6223
      %v6270 = vunpack.c.h.b16 %v6223
      %v6271 = vunpack.c.l.b16 %v6224
      %v6272 = vunpack.c.h.b16 %v6224
      %v6273 = vpack.c.b16 %v6241, %v6241
      %v6274 = vpack.c.b16 %v6242, %v6242
      %v6275 = vpack.c.b16 %v6243, %v6243
      %v6276 = vpack.c.b16 %v6244, %v6244
      %v6277 = vpack.c.b16 %v6245, %v6245
      %v6278 = vpack.c.b16 %v6246, %v6246
      %v6279 = vpack.c.b16 %v6247, %v6247
      %v6280 = vpack.c.b16 %v6248, %v6248
      %v6281 = vpack.c.b16 %v6249, %v6249
      %v6282 = vpack.c.b16 %v6250, %v6250
      %v6283 = vpack.c.b16 %v6251, %v6251
      %v6284 = vpack.c.b16 %v6252, %v6252
      %v6285 = vpack.c.b16 %v6253, %v6253
      %v6286 = vpack.c.b16 %v6254, %v6254
      %v6287 = vpack.c.b16 %v6255, %v6255
      %v6288 = vpack.c.b16 %v6256, %v6256
      %v6289 = vpack.c.b16 %v6257, %v6257
      %v6290 = vpack.c.b16 %v6258, %v6258
      %v6291 = vpack.c.b16 %v6259, %v6259
      %v6292 = vpack.c.b16 %v6260, %v6260
      %v6293 = vpack.c.b16 %v6261, %v6261
      %v6294 = vpack.c.b16 %v6262, %v6262
      %v6295 = vpack.c.b16 %v6263, %v6263
      %v6296 = vpack.c.b16 %v6264, %v6264
      %v6297 = vpack.c.b16 %v6265, %v6265
      %v6298 = vpack.c.b16 %v6266, %v6266
      %v6299 = vpack.c.b16 %v6267, %v6267
      %v6300 = vpack.c.b16 %v6268, %v6268
      %v6301 = vpack.c.b16 %v6269, %v6269
      %v6302 = vpack.c.b16 %v6270, %v6270
      %v6303 = vpack.c.b16 %v6271, %v6271
      %v6304 = vpack.c.b16 %v6272, %v6272
      %v6306 = vshrl.u32 %v6273, 16
      %v6308 = vrot.slane %v6306, 7
      %v6309 = vshll.u32 %v6273, 16
      %v6311 = vor.u32 %v6308, %v6309
      %v6312 = vrot.slane %v6308, 4
      %v6314 = vshrl.u32 %v6274, 16
      %v6316 = vrot.slane %v6314, 7
      %v6317 = vshll.u32 %v6274, 16
      %v6319 = vor.u32 %v6316, %v6317
      %v6320 = vsel %vm5769, %v6312, %v6319
      %v6321 = vrot.slane %v6316, 4
      %v6323 = vshrl.u32 %v6275, 16
      %v6325 = vrot.slane %v6323, 7
      %v6326 = vshll.u32 %v6275, 16
      %v6328 = vor.u32 %v6325, %v6326
      %v6329 = vrot.slane %v6325, 4
      %v6331 = vshrl.u32 %v6276, 16
      %v6333 = vrot.slane %v6331, 7
      %v6334 = vshll.u32 %v6276, 16
      %v6336 = vor.u32 %v6333, %v6334
      %v6337 = vsel %vm5769, %v6329, %v6336
      %v6338 = vrot.slane %v6333, 4
      %v6340 = vshrl.u32 %v6277, 16
      %v6342 = vrot.slane %v6340, 7
      %v6343 = vshll.u32 %v6277, 16
      %v6345 = vor.u32 %v6342, %v6343
      %v6346 = vrot.slane %v6342, 4
      %v6348 = vshrl.u32 %v6278, 16
      %v6350 = vrot.slane %v6348, 7
      %v6351 = vshll.u32 %v6278, 16
      %v6353 = vor.u32 %v6350, %v6351
      %v6354 = vsel %vm5769, %v6346, %v6353
      %v6355 = vrot.slane %v6350, 4
      %v6357 = vshrl.u32 %v6279, 16
      %v6359 = vrot.slane %v6357, 7
      %v6360 = vshll.u32 %v6279, 16
      %v6362 = vor.u32 %v6359, %v6360
      %v6363 = vrot.slane %v6359, 4
      %v6365 = vshrl.u32 %v6280, 16
      %v6367 = vrot.slane %v6365, 7
      %v6368 = vshll.u32 %v6280, 16
      %v6370 = vor.u32 %v6367, %v6368
      %v6371 = vsel %vm5769, %v6363, %v6370
      %v6372 = vrot.slane %v6367, 4
      %v6374 = vshrl.u32 %v6281, 16
      %v6376 = vrot.slane %v6374, 7
      %v6377 = vshll.u32 %v6281, 16
      %v6379 = vor.u32 %v6376, %v6377
      %v6380 = vrot.slane %v6376, 4
      %v6382 = vshrl.u32 %v6282, 16
      %v6384 = vrot.slane %v6382, 7
      %v6385 = vshll.u32 %v6282, 16
      %v6387 = vor.u32 %v6384, %v6385
      %v6388 = vsel %vm5769, %v6380, %v6387
      %v6389 = vrot.slane %v6384, 4
      %v6391 = vshrl.u32 %v6283, 16
      %v6393 = vrot.slane %v6391, 7
      %v6394 = vshll.u32 %v6283, 16
      %v6396 = vor.u32 %v6393, %v6394
      %v6397 = vrot.slane %v6393, 4
      %v6399 = vshrl.u32 %v6284, 16
      %v6401 = vrot.slane %v6399, 7
      %v6402 = vshll.u32 %v6284, 16
      %v6404 = vor.u32 %v6401, %v6402
      %v6405 = vsel %vm5769, %v6397, %v6404
      %v6406 = vrot.slane %v6401, 4
      %v6408 = vshrl.u32 %v6285, 16
      %v6410 = vrot.slane %v6408, 7
      %v6411 = vshll.u32 %v6285, 16
      %v6413 = vor.u32 %v6410, %v6411
      %v6414 = vrot.slane %v6410, 4
      %v6416 = vshrl.u32 %v6286, 16
      %v6418 = vrot.slane %v6416, 7
      %v6419 = vshll.u32 %v6286, 16
      %v6421 = vor.u32 %v6418, %v6419
      %v6422 = vsel %vm5769, %v6414, %v6421
      %v6423 = vrot.slane %v6418, 4
      %v6425 = vshrl.u32 %v6287, 16
      %v6427 = vrot.slane %v6425, 7
      %v6428 = vshll.u32 %v6287, 16
      %v6430 = vor.u32 %v6427, %v6428
      %v6431 = vrot.slane %v6427, 4
      %v6433 = vshrl.u32 %v6288, 16
      %v6435 = vrot.slane %v6433, 7
      %v6436 = vshll.u32 %v6288, 16
      %v6438 = vor.u32 %v6435, %v6436
      %v6439 = vsel %vm5769, %v6431, %v6438
      %v6440 = vrot.slane %v6435, 4
      %v6442 = vshrl.u32 %v6289, 16
      %v6444 = vrot.slane %v6442, 7
      %v6445 = vshll.u32 %v6289, 16
      %v6447 = vor.u32 %v6444, %v6445
      %v6448 = vrot.slane %v6444, 4
      %v6450 = vshrl.u32 %v6290, 16
      %v6452 = vrot.slane %v6450, 7
      %v6453 = vshll.u32 %v6290, 16
      %v6455 = vor.u32 %v6452, %v6453
      %v6456 = vsel %vm5769, %v6448, %v6455
      %v6457 = vrot.slane %v6452, 4
      %v6459 = vshrl.u32 %v6291, 16
      %v6461 = vrot.slane %v6459, 7
      %v6462 = vshll.u32 %v6291, 16
      %v6464 = vor.u32 %v6461, %v6462
      %v6465 = vrot.slane %v6461, 4
      %v6467 = vshrl.u32 %v6292, 16
      %v6469 = vrot.slane %v6467, 7
      %v6470 = vshll.u32 %v6292, 16
      %v6472 = vor.u32 %v6469, %v6470
      %v6473 = vsel %vm5769, %v6465, %v6472
      %v6474 = vrot.slane %v6469, 4
      %v6476 = vshrl.u32 %v6293, 16
      %v6478 = vrot.slane %v6476, 7
      %v6479 = vshll.u32 %v6293, 16
      %v6481 = vor.u32 %v6478, %v6479
      %v6482 = vrot.slane %v6478, 4
      %v6484 = vshrl.u32 %v6294, 16
      %v6486 = vrot.slane %v6484, 7
      %v6487 = vshll.u32 %v6294, 16
      %v6489 = vor.u32 %v6486, %v6487
      %v6490 = vsel %vm5769, %v6482, %v6489
      %v6491 = vrot.slane %v6486, 4
      %v6493 = vshrl.u32 %v6295, 16
      %v6495 = vrot.slane %v6493, 7
      %v6496 = vshll.u32 %v6295, 16
      %v6498 = vor.u32 %v6495, %v6496
      %v6499 = vrot.slane %v6495, 4
      %v6501 = vshrl.u32 %v6296, 16
      %v6503 = vrot.slane %v6501, 7
      %v6504 = vshll.u32 %v6296, 16
      %v6506 = vor.u32 %v6503, %v6504
      %v6507 = vsel %vm5769, %v6499, %v6506
      %v6508 = vrot.slane %v6503, 4
      %v6510 = vshrl.u32 %v6297, 16
      %v6512 = vrot.slane %v6510, 7
      %v6513 = vshll.u32 %v6297, 16
      %v6515 = vor.u32 %v6512, %v6513
      %v6516 = vrot.slane %v6512, 4
      %v6518 = vshrl.u32 %v6298, 16
      %v6520 = vrot.slane %v6518, 7
      %v6521 = vshll.u32 %v6298, 16
      %v6523 = vor.u32 %v6520, %v6521
      %v6524 = vsel %vm5769, %v6516, %v6523
      %v6525 = vrot.slane %v6520, 4
      %v6527 = vshrl.u32 %v6299, 16
      %v6529 = vrot.slane %v6527, 7
      %v6530 = vshll.u32 %v6299, 16
      %v6532 = vor.u32 %v6529, %v6530
      %v6533 = vrot.slane %v6529, 4
      %v6535 = vshrl.u32 %v6300, 16
      %v6537 = vrot.slane %v6535, 7
      %v6538 = vshll.u32 %v6300, 16
      %v6540 = vor.u32 %v6537, %v6538
      %v6541 = vsel %vm5769, %v6533, %v6540
      %v6542 = vrot.slane %v6537, 4
      %v6544 = vshrl.u32 %v6301, 16
      %v6546 = vrot.slane %v6544, 7
      %v6547 = vshll.u32 %v6301, 16
      %v6549 = vor.u32 %v6546, %v6547
      %v6550 = vrot.slane %v6546, 4
      %v6552 = vshrl.u32 %v6302, 16
      %v6554 = vrot.slane %v6552, 7
      %v6555 = vshll.u32 %v6302, 16
      %v6557 = vor.u32 %v6554, %v6555
      %v6558 = vsel %vm5769, %v6550, %v6557
      %v6559 = vrot.slane %v6554, 4
      %v6561 = vshrl.u32 %v6303, 16
      %v6563 = vrot.slane %v6561, 7
      %v6564 = vshll.u32 %v6303, 16
      %v6566 = vor.u32 %v6563, %v6564
      %v6567 = vrot.slane %v6563, 4
      %v6569 = vshrl.u32 %v6304, 16
      %v6571 = vrot.slane %v6569, 7
      %v6572 = vshll.u32 %v6304, 16
      %v6574 = vor.u32 %v6571, %v6572
      %v6575 = vsel %vm5769, %v6567, %v6574
      %v6576 = vrot.slane %v6571, 4
      %6577 = vrot.lane.b32.xlu0 %v6311, 8
      %v6578 = vpop.permute.xlu0 %6577
      %6579 = vrot.lane.b32.xlu0 %v6320, 8
      %v6580 = vpop.permute.xlu0 %6579
      %6581 = vrot.lane.b32.xlu0 %v6321, 8
      %v6582 = vpop.permute.xlu0 %6581
      %6583 = vrot.lane.b32.xlu0 %v6328, 8
      %v6584 = vpop.permute.xlu0 %6583
      %6585 = vrot.lane.b32.xlu0 %v6337, 8
      %v6586 = vpop.permute.xlu0 %6585
      %6587 = vrot.lane.b32.xlu0 %v6338, 8
      %v6588 = vpop.permute.xlu0 %6587
      %6589 = vrot.lane.b32.xlu0 %v6345, 8
      %v6590 = vpop.permute.xlu0 %6589
      %6591 = vrot.lane.b32.xlu0 %v6354, 8
      %v6592 = vpop.permute.xlu0 %6591
      %6593 = vrot.lane.b32.xlu0 %v6355, 8
      %v6594 = vpop.permute.xlu0 %6593
      %6595 = vrot.lane.b32.xlu0 %v6362, 8
      %v6596 = vpop.permute.xlu0 %6595
      %6597 = vrot.lane.b32.xlu0 %v6371, 8
      %v6598 = vpop.permute.xlu0 %6597
      %6599 = vrot.lane.b32.xlu0 %v6372, 8
      %v6600 = vpop.permute.xlu0 %6599
      %6601 = vrot.lane.b32.xlu0 %v6379, 8
      %v6602 = vpop.permute.xlu0 %6601
      %6603 = vrot.lane.b32.xlu0 %v6388, 8
      %v6604 = vpop.permute.xlu0 %6603
      %6605 = vrot.lane.b32.xlu0 %v6389, 8
      %v6606 = vpop.permute.xlu0 %6605
      %6607 = vrot.lane.b32.xlu0 %v6396, 8
      %v6608 = vpop.permute.xlu0 %6607
      %6609 = vrot.lane.b32.xlu0 %v6405, 8
      %v6610 = vpop.permute.xlu0 %6609
      %6611 = vrot.lane.b32.xlu0 %v6406, 8
      %v6612 = vpop.permute.xlu0 %6611
      %6613 = vrot.lane.b32.xlu0 %v6413, 8
      %v6614 = vpop.permute.xlu0 %6613
      %6615 = vrot.lane.b32.xlu0 %v6422, 8
      %v6616 = vpop.permute.xlu0 %6615
      %6617 = vrot.lane.b32.xlu0 %v6423, 8
      %v6618 = vpop.permute.xlu0 %6617
      %6619 = vrot.lane.b32.xlu0 %v6430, 8
      %v6620 = vpop.permute.xlu0 %6619
      %6621 = vrot.lane.b32.xlu0 %v6439, 8
      %v6622 = vpop.permute.xlu0 %6621
      %6623 = vrot.lane.b32.xlu0 %v6440, 8
      %v6624 = vpop.permute.xlu0 %6623
      %6625 = vrot.lane.b32.xlu0 %v6447, 8
      %v6626 = vpop.permute.xlu0 %6625
      %6627 = vrot.lane.b32.xlu0 %v6456, 8
      %v6628 = vpop.permute.xlu0 %6627
      %6629 = vrot.lane.b32.xlu0 %v6457, 8
      %v6630 = vpop.permute.xlu0 %6629
      %6631 = vrot.lane.b32.xlu0 %v6464, 8
      %v6632 = vpop.permute.xlu0 %6631
      %6633 = vrot.lane.b32.xlu0 %v6473, 8
      %v6634 = vpop.permute.xlu0 %6633
      %6635 = vrot.lane.b32.xlu0 %v6474, 8
      %v6636 = vpop.permute.xlu0 %6635
      %6637 = vrot.lane.b32.xlu0 %v6481, 8
      %v6638 = vpop.permute.xlu0 %6637
      %6639 = vrot.lane.b32.xlu0 %v6490, 8
      %v6640 = vpop.permute.xlu0 %6639
      %6641 = vrot.lane.b32.xlu0 %v6491, 8
      %v6642 = vpop.permute.xlu0 %6641
      %6643 = vrot.lane.b32.xlu0 %v6498, 8
      %v6644 = vpop.permute.xlu0 %6643
      %6645 = vrot.lane.b32.xlu0 %v6507, 8
      %v6646 = vpop.permute.xlu0 %6645
      %6647 = vrot.lane.b32.xlu0 %v6508, 8
      %v6648 = vpop.permute.xlu0 %6647
      %6649 = vrot.lane.b32.xlu0 %v6515, 8
      %v6650 = vpop.permute.xlu0 %6649
      %6651 = vrot.lane.b32.xlu0 %v6524, 8
      %v6652 = vpop.permute.xlu0 %6651
      %6653 = vrot.lane.b32.xlu0 %v6525, 8
      %v6654 = vpop.permute.xlu0 %6653
      %6655 = vrot.lane.b32.xlu0 %v6532, 8
      %v6656 = vpop.permute.xlu0 %6655
      %6657 = vrot.lane.b32.xlu0 %v6541, 8
      %v6658 = vpop.permute.xlu0 %6657
      %6659 = vrot.lane.b32.xlu0 %v6542, 8
      %v6660 = vpop.permute.xlu0 %6659
      %6661 = vrot.lane.b32.xlu0 %v6549, 8
      %v6662 = vpop.permute.xlu0 %6661
      %6663 = vrot.lane.b32.xlu0 %v6558, 8
      %v6664 = vpop.permute.xlu0 %6663
      %6665 = vrot.lane.b32.xlu0 %v6559, 8
      %v6666 = vpop.permute.xlu0 %6665
      %6667 = vrot.lane.b32.xlu0 %v6566, 8
      %v6668 = vpop.permute.xlu0 %6667
      %6669 = vrot.lane.b32.xlu0 %v6575, 8
      %v6670 = vpop.permute.xlu0 %6669
      %6671 = vrot.lane.b32.xlu0 %v6576, 8
      %v6672 = vpop.permute.xlu0 %6671
      %vm6721 = vcmask 126016
      %vm6722 = vmand %vm6721, %vm6092
      %v6723 = vld [vmem:[%s6090] sm:$0xf]
      %v6724 = vsel %vm6722, %v6578, %v6723
      %6725 = vst [vmem:[%s6090] sm:$0xf] %v6724
      %vm6726 = vcmask 126016
      %6727 = vst.msk [vmem:[%s6090 + $0x4] sm:$0xf] %vm6726, %v6580
      %vm6728 = vcmask 122944
      %vm6729 = vmand %vm6728, %vm5767
      %v6730 = vld [vmem:[%s6090 + $0x8] sm:$0x1]
      %v6731 = vsel %vm6729, %v6582, %v6730
      %6732 = vst [vmem:[%s6090 + $0x8] sm:$0x1] %v6731
      %v6733 = vld [vmem:[%s6090 + $0xc] sm:$0xf]
      %v6734 = vsel %vm6722, %v6584, %v6733
      %6735 = vst [vmem:[%s6090 + $0xc] sm:$0xf] %v6734
      %6736 = vst.msk [vmem:[%s6090 + $0x10] sm:$0xf] %vm6726, %v6586
      %v6737 = vld [vmem:[%s6090 + $0x14] sm:$0x1]
      %v6738 = vsel %vm6729, %v6588, %v6737
      %6739 = vst [vmem:[%s6090 + $0x14] sm:$0x1] %v6738
      %v6740 = vld [vmem:[%s6090 + $0x18] sm:$0xf]
      %v6741 = vsel %vm6722, %v6590, %v6740
      %6742 = vst [vmem:[%s6090 + $0x18] sm:$0xf] %v6741
      %6743 = vst.msk [vmem:[%s6090 + $0x1c] sm:$0xf] %vm6726, %v6592
      %v6744 = vld [vmem:[%s6090 + $0x20] sm:$0x1]
      %v6745 = vsel %vm6729, %v6594, %v6744
      %6746 = vst [vmem:[%s6090 + $0x20] sm:$0x1] %v6745
      %v6747 = vld [vmem:[%s6090 + $0x24] sm:$0xf]
      %v6748 = vsel %vm6722, %v6596, %v6747
      %6749 = vst [vmem:[%s6090 + $0x24] sm:$0xf] %v6748
      %6750 = vst.msk [vmem:[%s6090 + $0x28] sm:$0xf] %vm6726, %v6598
      %v6751 = vld [vmem:[%s6090 + $0x2c] sm:$0x1]
      %v6752 = vsel %vm6729, %v6600, %v6751
      %6753 = vst [vmem:[%s6090 + $0x2c] sm:$0x1] %v6752
      %v6754 = vld [vmem:[%s6090 + $0x30] sm:$0xf]
      %v6755 = vsel %vm6722, %v6602, %v6754
      %6756 = vst [vmem:[%s6090 + $0x30] sm:$0xf] %v6755
      %6757 = vst.msk [vmem:[%s6090 + $0x34] sm:$0xf] %vm6726, %v6604
      %v6758 = vld [vmem:[%s6090 + $0x38] sm:$0x1]
      %v6759 = vsel %vm6729, %v6606, %v6758
      %6760 = vst [vmem:[%s6090 + $0x38] sm:$0x1] %v6759
      %v6761 = vld [vmem:[%s6090 + $0x3c] sm:$0xf]
      %v6762 = vsel %vm6722, %v6608, %v6761
      %6763 = vst [vmem:[%s6090 + $0x3c] sm:$0xf] %v6762
      %6764 = vst.msk [vmem:[%s6090 + $0x40] sm:$0xf] %vm6726, %v6610
      %v6765 = vld [vmem:[%s6090 + $0x44] sm:$0x1]
      %v6766 = vsel %vm6729, %v6612, %v6765
      %6767 = vst [vmem:[%s6090 + $0x44] sm:$0x1] %v6766
      %v6768 = vld [vmem:[%s6090 + $0x48] sm:$0xf]
      %v6769 = vsel %vm6722, %v6614, %v6768
      %6770 = vst [vmem:[%s6090 + $0x48] sm:$0xf] %v6769
      %6771 = vst.msk [vmem:[%s6090 + $0x4c] sm:$0xf] %vm6726, %v6616
      %v6772 = vld [vmem:[%s6090 + $0x50] sm:$0x1]
      %v6773 = vsel %vm6729, %v6618, %v6772
      %6774 = vst [vmem:[%s6090 + $0x50] sm:$0x1] %v6773
      %v6775 = vld [vmem:[%s6090 + $0x54] sm:$0xf]
      %v6776 = vsel %vm6722, %v6620, %v6775
      %6777 = vst [vmem:[%s6090 + $0x54] sm:$0xf] %v6776
      %6778 = vst.msk [vmem:[%s6090 + $0x58] sm:$0xf] %vm6726, %v6622
      %v6779 = vld [vmem:[%s6090 + $0x5c] sm:$0x1]
      %v6780 = vsel %vm6729, %v6624, %v6779
      %6781 = vst [vmem:[%s6090 + $0x5c] sm:$0x1] %v6780
      %v6782 = vld [vmem:[%s6090 + $0x60] sm:$0xf]
      %v6783 = vsel %vm6722, %v6626, %v6782
      %6784 = vst [vmem:[%s6090 + $0x60] sm:$0xf] %v6783
      %6785 = vst.msk [vmem:[%s6090 + $0x64] sm:$0xf] %vm6726, %v6628
      %v6786 = vld [vmem:[%s6090 + $0x68] sm:$0x1]
      %v6787 = vsel %vm6729, %v6630, %v6786
      %6788 = vst [vmem:[%s6090 + $0x68] sm:$0x1] %v6787
      %v6789 = vld [vmem:[%s6090 + $0x6c] sm:$0xf]
      %v6790 = vsel %vm6722, %v6632, %v6789
      %6791 = vst [vmem:[%s6090 + $0x6c] sm:$0xf] %v6790
      %6792 = vst.msk [vmem:[%s6090 + $0x70] sm:$0xf] %vm6726, %v6634
      %v6793 = vld [vmem:[%s6090 + $0x74] sm:$0x1]
      %v6794 = vsel %vm6729, %v6636, %v6793
      %6795 = vst [vmem:[%s6090 + $0x74] sm:$0x1] %v6794
      %v6796 = vld [vmem:[%s6090 + $0x78] sm:$0xf]
      %v6797 = vsel %vm6722, %v6638, %v6796
      %6798 = vst [vmem:[%s6090 + $0x78] sm:$0xf] %v6797
      %6799 = vst.msk [vmem:[%s6090 + $0x7c] sm:$0xf] %vm6726, %v6640
      %v6800 = vld [vmem:[%s6090 + $0x80] sm:$0x1]
      %v6801 = vsel %vm6729, %v6642, %v6800
      %6802 = vst [vmem:[%s6090 + $0x80] sm:$0x1] %v6801
      %v6803 = vld [vmem:[%s6090 + $0x84] sm:$0xf]
      %v6804 = vsel %vm6722, %v6644, %v6803
      %6805 = vst [vmem:[%s6090 + $0x84] sm:$0xf] %v6804
      %6806 = vst.msk [vmem:[%s6090 + $0x88] sm:$0xf] %vm6726, %v6646
      %v6807 = vld [vmem:[%s6090 + $0x8c] sm:$0x1]
      %v6808 = vsel %vm6729, %v6648, %v6807
      %6809 = vst [vmem:[%s6090 + $0x8c] sm:$0x1] %v6808
      %v6810 = vld [vmem:[%s6090 + $0x90] sm:$0xf]
      %v6811 = vsel %vm6722, %v6650, %v6810
      %6812 = vst [vmem:[%s6090 + $0x90] sm:$0xf] %v6811
      %6813 = vst.msk [vmem:[%s6090 + $0x94] sm:$0xf] %vm6726, %v6652
      %v6814 = vld [vmem:[%s6090 + $0x98] sm:$0x1]
      %v6815 = vsel %vm6729, %v6654, %v6814
      %6816 = vst [vmem:[%s6090 + $0x98] sm:$0x1] %v6815
      %v6817 = vld [vmem:[%s6090 + $0x9c] sm:$0xf]
      %v6818 = vsel %vm6722, %v6656, %v6817
      %6819 = vst [vmem:[%s6090 + $0x9c] sm:$0xf] %v6818
      %6820 = vst.msk [vmem:[%s6090 + $0xa0] sm:$0xf] %vm6726, %v6658
      %v6821 = vld [vmem:[%s6090 + $0xa4] sm:$0x1]
      %v6822 = vsel %vm6729, %v6660, %v6821
      %6823 = vst [vmem:[%s6090 + $0xa4] sm:$0x1] %v6822
      %v6824 = vld [vmem:[%s6090 + $0xa8] sm:$0xf]
      %v6825 = vsel %vm6722, %v6662, %v6824
      %6826 = vst [vmem:[%s6090 + $0xa8] sm:$0xf] %v6825
      %6827 = vst.msk [vmem:[%s6090 + $0xac] sm:$0xf] %vm6726, %v6664
      %v6828 = vld [vmem:[%s6090 + $0xb0] sm:$0x1]
      %v6829 = vsel %vm6729, %v6666, %v6828
      %6830 = vst [vmem:[%s6090 + $0xb0] sm:$0x1] %v6829
      %v6831 = vld [vmem:[%s6090 + $0xb4] sm:$0xf]
      %v6832 = vsel %vm6722, %v6668, %v6831
      %6833 = vst [vmem:[%s6090 + $0xb4] sm:$0xf] %v6832
      %6834 = vst.msk [vmem:[%s6090 + $0xb8] sm:$0xf] %vm6726, %v6670
      %v6835 = vld [vmem:[%s6090 + $0xbc] sm:$0x1]
      %v6836 = vsel %vm6729, %v6672, %v6835
      %6837 = vst [vmem:[%s6090 + $0xbc] sm:$0x1] %v6836
      %v6838 = vld [vmem:[#allocation2] sm:$0xf]
      %v6839 = vld [vmem:[#allocation2 + $0x4] sm:$0xf]
      %v6840 = vld [vmem:[#allocation2 + $0x8] sm:$0x1]
      %v6841 = vld [vmem:[#allocation2 + $0xc] sm:$0xf]
      %v6842 = vld [vmem:[#allocation2 + $0x10] sm:$0xf]
      %v6843 = vld [vmem:[#allocation2 + $0x14] sm:$0x1]
      %v6844 = vld [vmem:[#allocation2 + $0x18] sm:$0xf]
      %v6845 = vld [vmem:[#allocation2 + $0x1c] sm:$0xf]
      %v6846 = vld [vmem:[#allocation2 + $0x20] sm:$0x1]
      %v6847 = vld [vmem:[#allocation2 + $0x24] sm:$0xf]
      %v6848 = vld [vmem:[#allocation2 + $0x28] sm:$0xf]
      %v6849 = vld [vmem:[#allocation2 + $0x2c] sm:$0x1]
      %v6850 = vld [vmem:[#allocation2 + $0x30] sm:$0xf]
      %v6851 = vld [vmem:[#allocation2 + $0x34] sm:$0xf]
      %v6852 = vld [vmem:[#allocation2 + $0x38] sm:$0x1]
      %v6853 = vld [vmem:[#allocation2 + $0x3c] sm:$0xf]
      %v6854 = vld [vmem:[#allocation2 + $0x40] sm:$0xf]
      %v6855 = vld [vmem:[#allocation2 + $0x44] sm:$0x1]
      %v6856 = vld [vmem:[#allocation2 + $0x48] sm:$0xf]
      %v6857 = vld [vmem:[#allocation2 + $0x4c] sm:$0xf]
      %v6858 = vld [vmem:[#allocation2 + $0x50] sm:$0x1]
      %v6859 = vld [vmem:[#allocation2 + $0x54] sm:$0xf]
      %v6860 = vld [vmem:[#allocation2 + $0x58] sm:$0xf]
      %v6861 = vld [vmem:[#allocation2 + $0x5c] sm:$0x1]
      %v6862 = vld [vmem:[#allocation2 + $0x60] sm:$0xf]
      %v6863 = vld [vmem:[#allocation2 + $0x64] sm:$0xf]
      %v6864 = vld [vmem:[#allocation2 + $0x68] sm:$0x1]
      %v6865 = vld [vmem:[#allocation2 + $0x6c] sm:$0xf]
      %v6866 = vld [vmem:[#allocation2 + $0x70] sm:$0xf]
      %v6867 = vld [vmem:[#allocation2 + $0x74] sm:$0x1]
      %v6868 = vld [vmem:[#allocation2 + $0x78] sm:$0xf]
      %v6869 = vld [vmem:[#allocation2 + $0x7c] sm:$0xf]
      %v6870 = vld [vmem:[#allocation2 + $0x80] sm:$0x1]
      %v6871 = vld [vmem:[#allocation2 + $0x84] sm:$0xf]
      %v6872 = vld [vmem:[#allocation2 + $0x88] sm:$0xf]
      %v6873 = vld [vmem:[#allocation2 + $0x8c] sm:$0x1]
      %v6874 = vld [vmem:[#allocation2 + $0x90] sm:$0xf]
      %v6875 = vld [vmem:[#allocation2 + $0x94] sm:$0xf]
      %v6876 = vld [vmem:[#allocation2 + $0x98] sm:$0x1]
      %v6877 = vld [vmem:[#allocation2 + $0x9c] sm:$0xf]
      %v6878 = vld [vmem:[#allocation2 + $0xa0] sm:$0xf]
      %v6879 = vld [vmem:[#allocation2 + $0xa4] sm:$0x1]
      %v6880 = vld [vmem:[#allocation2 + $0xa8] sm:$0xf]
      %v6881 = vld [vmem:[#allocation2 + $0xac] sm:$0xf]
      %v6882 = vld [vmem:[#allocation2 + $0xb0] sm:$0x1]
      %v6883 = vld [vmem:[#allocation2 + $0xb4] sm:$0xf]
      %v6884 = vld [vmem:[#allocation2 + $0xb8] sm:$0xf]
      %v6885 = vld [vmem:[#allocation2 + $0xbc] sm:$0x1]
      %v6886 = vld [vmem:[#allocation2 + $0xc0] sm:$0xf]
      %v6887 = vld [vmem:[#allocation2 + $0xc4] sm:$0xf]
      %v6888 = vld [vmem:[#allocation2 + $0xc8] sm:$0x1]
      %v6889 = vld [vmem:[#allocation2 + $0xcc] sm:$0xf]
      %v6890 = vld [vmem:[#allocation2 + $0xd0] sm:$0xf]
      %v6891 = vld [vmem:[#allocation2 + $0xd4] sm:$0x1]
      %v6892 = vld [vmem:[%s3] sm:$0xf]
      %v6893 = vld [vmem:[%s3 + $0x4] sm:$0xf]
      %vm6894 = vsmask.f32 3328
      %vm6895 = vsmask.f32 7440
      %vm6896 = vmor %vm6894, %vm6895
      %v6898 = vshrl.u32 %v6838, 16
      %v6900 = vrot.slane %v6898, 4
      %v6901 = vshll.u32 %v6838, 16
      %v6903 = vrot.slane %v6901, 5
      %v6904 = vor.u32 %v6900, %v6903
      %v6905 = vrot.slane %v6904, 4
      %v6907 = vshll.u32 %v6839, 16
      %v6909 = vrot.slane %v6907, 5
      %v6910 = vsel %vm6896, %v6905, %v6909
      %v6911 = vshrl.u32 %v6839, 16
      %v6913 = vrot.slane %v6911, 4
      %v6914 = vor.u32 %v6913, %v6909
      %v6915 = vrot.slane %v6914, 4
      %v6917 = vshll.u32 %v6840, 16
      %v6919 = vrot.slane %v6917, 5
      %v6920 = vsel %vm6896, %v6915, %v6919
      %v6922 = vshrl.u32 %v6841, 16
      %v6924 = vrot.slane %v6922, 4
      %v6925 = vshll.u32 %v6841, 16
      %v6927 = vrot.slane %v6925, 5
      %v6928 = vor.u32 %v6924, %v6927
      %v6929 = vrot.slane %v6928, 4
      %v6931 = vshll.u32 %v6842, 16
      %v6933 = vrot.slane %v6931, 5
      %v6934 = vsel %vm6896, %v6929, %v6933
      %v6935 = vshrl.u32 %v6842, 16
      %v6937 = vrot.slane %v6935, 4
      %v6938 = vor.u32 %v6937, %v6933
      %v6939 = vrot.slane %v6938, 4
      %v6941 = vshll.u32 %v6843, 16
      %v6943 = vrot.slane %v6941, 5
      %v6944 = vsel %vm6896, %v6939, %v6943
      %v6946 = vshrl.u32 %v6844, 16
      %v6948 = vrot.slane %v6946, 4
      %v6949 = vshll.u32 %v6844, 16
      %v6951 = vrot.slane %v6949, 5
      %v6952 = vor.u32 %v6948, %v6951
      %v6953 = vrot.slane %v6952, 4
      %v6955 = vshll.u32 %v6845, 16
      %v6957 = vrot.slane %v6955, 5
      %v6958 = vsel %vm6896, %v6953, %v6957
      %v6959 = vshrl.u32 %v6845, 16
      %v6961 = vrot.slane %v6959, 4
      %v6962 = vor.u32 %v6961, %v6957
      %v6963 = vrot.slane %v6962, 4
      %v6965 = vshll.u32 %v6846, 16
      %v6967 = vrot.slane %v6965, 5
      %v6968 = vsel %vm6896, %v6963, %v6967
      %v6970 = vshrl.u32 %v6847, 16
      %v6972 = vrot.slane %v6970, 4
      %v6973 = vshll.u32 %v6847, 16
      %v6975 = vrot.slane %v6973, 5
      %v6976 = vor.u32 %v6972, %v6975
      %v6977 = vrot.slane %v6976, 4
      %v6979 = vshll.u32 %v6848, 16
      %v6981 = vrot.slane %v6979, 5
      %v6982 = vsel %vm6896, %v6977, %v6981
      %v6983 = vshrl.u32 %v6848, 16
      %v6985 = vrot.slane %v6983, 4
      %v6986 = vor.u32 %v6985, %v6981
      %v6987 = vrot.slane %v6986, 4
      %v6989 = vshll.u32 %v6849, 16
      %v6991 = vrot.slane %v6989, 5
      %v6992 = vsel %vm6896, %v6987, %v6991
      %v6994 = vshrl.u32 %v6850, 16
      %v6996 = vrot.slane %v6994, 4
      %v6997 = vshll.u32 %v6850, 16
      %v6999 = vrot.slane %v6997, 5
      %v7000 = vor.u32 %v6996, %v6999
      %v7001 = vrot.slane %v7000, 4
      %v7003 = vshll.u32 %v6851, 16
      %v7005 = vrot.slane %v7003, 5
      %v7006 = vsel %vm6896, %v7001, %v7005
      %v7007 = vshrl.u32 %v6851, 16
      %v7009 = vrot.slane %v7007, 4
      %v7010 = vor.u32 %v7009, %v7005
      %v7011 = vrot.slane %v7010, 4
      %v7013 = vshll.u32 %v6852, 16
      %v7015 = vrot.slane %v7013, 5
      %v7016 = vsel %vm6896, %v7011, %v7015
      %v7018 = vshrl.u32 %v6853, 16
      %v7020 = vrot.slane %v7018, 4
      %v7021 = vshll.u32 %v6853, 16
      %v7023 = vrot.slane %v7021, 5
      %v7024 = vor.u32 %v7020, %v7023
      %v7025 = vrot.slane %v7024, 4
      %v7027 = vshll.u32 %v6854, 16
      %v7029 = vrot.slane %v7027, 5
      %v7030 = vsel %vm6896, %v7025, %v7029
      %v7031 = vshrl.u32 %v6854, 16
      %v7033 = vrot.slane %v7031, 4
      %v7034 = vor.u32 %v7033, %v7029
      %v7035 = vrot.slane %v7034, 4
      %v7037 = vshll.u32 %v6855, 16
      %v7039 = vrot.slane %v7037, 5
      %v7040 = vsel %vm6896, %v7035, %v7039
      %v7042 = vshrl.u32 %v6856, 16
      %v7044 = vrot.slane %v7042, 4
      %v7045 = vshll.u32 %v6856, 16
      %v7047 = vrot.slane %v7045, 5
      %v7048 = vor.u32 %v7044, %v7047
      %v7049 = vrot.slane %v7048, 4
      %v7051 = vshll.u32 %v6857, 16
      %v7053 = vrot.slane %v7051, 5
      %v7054 = vsel %vm6896, %v7049, %v7053
      %v7055 = vshrl.u32 %v6857, 16
      %v7057 = vrot.slane %v7055, 4
      %v7058 = vor.u32 %v7057, %v7053
      %v7059 = vrot.slane %v7058, 4
      %v7061 = vshll.u32 %v6858, 16
      %v7063 = vrot.slane %v7061, 5
      %v7064 = vsel %vm6896, %v7059, %v7063
      %v7066 = vshrl.u32 %v6859, 16
      %v7068 = vrot.slane %v7066, 4
      %v7069 = vshll.u32 %v6859, 16
      %v7071 = vrot.slane %v7069, 5
      %v7072 = vor.u32 %v7068, %v7071
      %v7073 = vrot.slane %v7072, 4
      %v7075 = vshll.u32 %v6860, 16
      %v7077 = vrot.slane %v7075, 5
      %v7078 = vsel %vm6896, %v7073, %v7077
      %v7079 = vshrl.u32 %v6860, 16
      %v7081 = vrot.slane %v7079, 4
      %v7082 = vor.u32 %v7081, %v7077
      %v7083 = vrot.slane %v7082, 4
      %v7085 = vshll.u32 %v6861, 16
      %v7087 = vrot.slane %v7085, 5
      %v7088 = vsel %vm6896, %v7083, %v7087
      %v7090 = vshrl.u32 %v6862, 16
      %v7092 = vrot.slane %v7090, 4
      %v7093 = vshll.u32 %v6862, 16
      %v7095 = vrot.slane %v7093, 5
      %v7096 = vor.u32 %v7092, %v7095
      %v7097 = vrot.slane %v7096, 4
      %v7099 = vshll.u32 %v6863, 16
      %v7101 = vrot.slane %v7099, 5
      %v7102 = vsel %vm6896, %v7097, %v7101
      %v7103 = vshrl.u32 %v6863, 16
      %v7105 = vrot.slane %v7103, 4
      %v7106 = vor.u32 %v7105, %v7101
      %v7107 = vrot.slane %v7106, 4
      %v7109 = vshll.u32 %v6864, 16
      %v7111 = vrot.slane %v7109, 5
      %v7112 = vsel %vm6896, %v7107, %v7111
      %v7114 = vshrl.u32 %v6865, 16
      %v7116 = vrot.slane %v7114, 4
      %v7117 = vshll.u32 %v6865, 16
      %v7119 = vrot.slane %v7117, 5
      %v7120 = vor.u32 %v7116, %v7119
      %v7121 = vrot.slane %v7120, 4
      %v7123 = vshll.u32 %v6866, 16
      %v7125 = vrot.slane %v7123, 5
      %v7126 = vsel %vm6896, %v7121, %v7125
      %v7127 = vshrl.u32 %v6866, 16
      %v7129 = vrot.slane %v7127, 4
      %v7130 = vor.u32 %v7129, %v7125
      %v7131 = vrot.slane %v7130, 4
      %v7133 = vshll.u32 %v6867, 16
      %v7135 = vrot.slane %v7133, 5
      %v7136 = vsel %vm6896, %v7131, %v7135
      %v7138 = vshrl.u32 %v6868, 16
      %v7140 = vrot.slane %v7138, 4
      %v7141 = vshll.u32 %v6868, 16
      %v7143 = vrot.slane %v7141, 5
      %v7144 = vor.u32 %v7140, %v7143
      %v7145 = vrot.slane %v7144, 4
      %v7147 = vshll.u32 %v6869, 16
      %v7149 = vrot.slane %v7147, 5
      %v7150 = vsel %vm6896, %v7145, %v7149
      %v7151 = vshrl.u32 %v6869, 16
      %v7153 = vrot.slane %v7151, 4
      %v7154 = vor.u32 %v7153, %v7149
      %v7155 = vrot.slane %v7154, 4
      %v7157 = vshll.u32 %v6870, 16
      %v7159 = vrot.slane %v7157, 5
      %v7160 = vsel %vm6896, %v7155, %v7159
      %v7162 = vshrl.u32 %v6871, 16
      %v7164 = vrot.slane %v7162, 4
      %v7165 = vshll.u32 %v6871, 16
      %v7167 = vrot.slane %v7165, 5
      %v7168 = vor.u32 %v7164, %v7167
      %v7169 = vrot.slane %v7168, 4
      %v7171 = vshll.u32 %v6872, 16
      %v7173 = vrot.slane %v7171, 5
      %v7174 = vsel %vm6896, %v7169, %v7173
      %v7175 = vshrl.u32 %v6872, 16
      %v7177 = vrot.slane %v7175, 4
      %v7178 = vor.u32 %v7177, %v7173
      %v7179 = vrot.slane %v7178, 4
      %v7181 = vshll.u32 %v6873, 16
      %v7183 = vrot.slane %v7181, 5
      %v7184 = vsel %vm6896, %v7179, %v7183
      %v7186 = vshrl.u32 %v6874, 16
      %v7188 = vrot.slane %v7186, 4
      %v7189 = vshll.u32 %v6874, 16
      %v7191 = vrot.slane %v7189, 5
      %v7192 = vor.u32 %v7188, %v7191
      %v7193 = vrot.slane %v7192, 4
      %v7195 = vshll.u32 %v6875, 16
      %v7197 = vrot.slane %v7195, 5
      %v7198 = vsel %vm6896, %v7193, %v7197
      %v7199 = vshrl.u32 %v6875, 16
      %v7201 = vrot.slane %v7199, 4
      %v7202 = vor.u32 %v7201, %v7197
      %v7203 = vrot.slane %v7202, 4
      %v7205 = vshll.u32 %v6876, 16
      %v7207 = vrot.slane %v7205, 5
      %v7208 = vsel %vm6896, %v7203, %v7207
      %v7210 = vshrl.u32 %v6877, 16
      %v7212 = vrot.slane %v7210, 4
      %v7213 = vshll.u32 %v6877, 16
      %v7215 = vrot.slane %v7213, 5
      %v7216 = vor.u32 %v7212, %v7215
      %v7217 = vrot.slane %v7216, 4
      %v7219 = vshll.u32 %v6878, 16
      %v7221 = vrot.slane %v7219, 5
      %v7222 = vsel %vm6896, %v7217, %v7221
      %v7223 = vshrl.u32 %v6878, 16
      %v7225 = vrot.slane %v7223, 4
      %v7226 = vor.u32 %v7225, %v7221
      %v7227 = vrot.slane %v7226, 4
      %v7229 = vshll.u32 %v6879, 16
      %v7231 = vrot.slane %v7229, 5
      %v7232 = vsel %vm6896, %v7227, %v7231
      %v7234 = vshrl.u32 %v6880, 16
      %v7236 = vrot.slane %v7234, 4
      %v7237 = vshll.u32 %v6880, 16
      %v7239 = vrot.slane %v7237, 5
      %v7240 = vor.u32 %v7236, %v7239
      %v7241 = vrot.slane %v7240, 4
      %v7243 = vshll.u32 %v6881, 16
      %v7245 = vrot.slane %v7243, 5
      %v7246 = vsel %vm6896, %v7241, %v7245
      %v7247 = vshrl.u32 %v6881, 16
      %v7249 = vrot.slane %v7247, 4
      %v7250 = vor.u32 %v7249, %v7245
      %v7251 = vrot.slane %v7250, 4
      %v7253 = vshll.u32 %v6882, 16
      %v7255 = vrot.slane %v7253, 5
      %v7256 = vsel %vm6896, %v7251, %v7255
      %v7258 = vshrl.u32 %v6883, 16
      %v7260 = vrot.slane %v7258, 4
      %v7261 = vshll.u32 %v6883, 16
      %v7263 = vrot.slane %v7261, 5
      %v7264 = vor.u32 %v7260, %v7263
      %v7265 = vrot.slane %v7264, 4
      %v7267 = vshll.u32 %v6884, 16
      %v7269 = vrot.slane %v7267, 5
      %v7270 = vsel %vm6896, %v7265, %v7269
      %v7271 = vshrl.u32 %v6884, 16
      %v7273 = vrot.slane %v7271, 4
      %v7274 = vor.u32 %v7273, %v7269
      %v7275 = vrot.slane %v7274, 4
      %v7277 = vshll.u32 %v6885, 16
      %v7279 = vrot.slane %v7277, 5
      %v7280 = vsel %vm6896, %v7275, %v7279
      %s7281 = scalar_lea.vmem %s3, 8
      %v7282 = vld [vmem:[%s7281] sm:$0xf]
      %v7283 = vld [vmem:[%s7281 + $0x4] sm:$0xf]
      %v7284 = vunpack.c.l.b16 %v6910
      %v7285 = vunpack.c.l.b16 %v6920
      %v7286 = vunpack.c.l.b16 %v6934
      %v7287 = vunpack.c.l.b16 %v6944
      %v7288 = vunpack.c.l.b16 %v6958
      %v7289 = vunpack.c.l.b16 %v6968
      %v7290 = vunpack.c.l.b16 %v6982
      %v7291 = vunpack.c.l.b16 %v6992
      %v7292 = vunpack.c.l.b16 %v7006
      %v7293 = vunpack.c.l.b16 %v7016
      %v7294 = vunpack.c.l.b16 %v7030
      %v7295 = vunpack.c.l.b16 %v7040
      %v7296 = vunpack.c.l.b16 %v7054
      %v7297 = vunpack.c.l.b16 %v7064
      %v7298 = vunpack.c.l.b16 %v7078
      %v7299 = vunpack.c.l.b16 %v7088
      %v7300 = vunpack.c.l.b16 %v7102
      %v7301 = vunpack.c.l.b16 %v7112
      %v7302 = vunpack.c.l.b16 %v7126
      %v7303 = vunpack.c.l.b16 %v7136
      %v7304 = vunpack.c.l.b16 %v7150
      %v7305 = vunpack.c.l.b16 %v7160
      %v7306 = vunpack.c.l.b16 %v7174
      %v7307 = vunpack.c.l.b16 %v7184
      %v7308 = vunpack.c.l.b16 %v7198
      %v7309 = vunpack.c.l.b16 %v7208
      %v7310 = vunpack.c.l.b16 %v7222
      %v7311 = vunpack.c.l.b16 %v7232
      %v7312 = vunpack.c.l.b16 %v7246
      %v7313 = vunpack.c.l.b16 %v7256
      %v7314 = vunpack.c.l.b16 %v7270
      %v7315 = vunpack.c.l.b16 %v7280
      %v7316 = vpack.c.b16 %v7285, %v7284
      %v7317 = vpack.c.b16 %v7287, %v7286
      %v7318 = vpack.c.b16 %v7289, %v7288
      %v7319 = vpack.c.b16 %v7291, %v7290
      %v7320 = vpack.c.b16 %v7293, %v7292
      %v7321 = vpack.c.b16 %v7295, %v7294
      %v7322 = vpack.c.b16 %v7297, %v7296
      %v7323 = vpack.c.b16 %v7299, %v7298
      %v7324 = vpack.c.b16 %v7301, %v7300
      %v7325 = vpack.c.b16 %v7303, %v7302
      %v7326 = vpack.c.b16 %v7305, %v7304
      %v7327 = vpack.c.b16 %v7307, %v7306
      %v7328 = vpack.c.b16 %v7309, %v7308
      %v7329 = vpack.c.b16 %v7311, %v7310
      %v7330 = vpack.c.b16 %v7313, %v7312
      %v7331 = vpack.c.b16 %v7315, %v7314
      %v7334 = vunpack.c.l.b16 %v7282
      %v7335 = vunpack.c.l.b16 %v7283
      %v7336 = vpack.c.b16 %v7335, %v7334
      %vm7338 = vcmask 130048
      %v7340 = vsel %vm7338, %v7316, 0
      %v7343 = vsel %vm7338, %v7317, 0
      %v7346 = vsel %vm7338, %v7318, 0
      %v7349 = vsel %vm7338, %v7319, 0
      %v7352 = vsel %vm7338, %v7320, 0
      %v7355 = vsel %vm7338, %v7321, 0
      %v7358 = vsel %vm7338, %v7322, 0
      %v7361 = vsel %vm7338, %v7323, 0
      %v7364 = vsel %vm7338, %v7324, 0
      %v7367 = vsel %vm7338, %v7325, 0
      %v7370 = vsel %vm7338, %v7326, 0
      %v7373 = vsel %vm7338, %v7327, 0
      %v7376 = vsel %vm7338, %v7328, 0
      %v7379 = vsel %vm7338, %v7329, 0
      %v7382 = vsel %vm7338, %v7330, 0
      %v7385 = vsel %vm7338, %v7331, 0
      %7387 = vmatprep.subr.bf16.mxu0 0
      %7388 = vmatpush1.bf16.msra.mxu0 %v7336
      %7389 = vmatprep.subr.bf16.mxu0 0
      %7390 = vmatpush1.bf16.msra.mxu0 0
      %7391 = vmatprep.subr.bf16.mxu0 0
      %7392 = vmatpush1.bf16.msra.mxu0 0
      %7393 = vmatprep.subr.bf16.mxu0 0
      %7394 = vmatpush1.bf16.msra.mxu0 0
      %7395 = vmatprep.subr.bf16.mxu0 0
      %7396 = vmatpush1.bf16.msra.mxu0 0
      %7397 = vmatprep.subr.bf16.mxu0 0
      %7398 = vmatpush1.bf16.msra.mxu0 0
      %7399 = vmatprep.subr.bf16.mxu0 0
      %7400 = vmatpush1.bf16.msra.mxu0 0
      %7401 = vmatprep.subr.bf16.mxu0 0
      %7402 = vmatpush1.bf16.msra.mxu0 0
      %7403 = vmatprep.subr.bf16.mxu0 0
      %7404 = vmatpush1.bf16.msra.mxu0 0
      %7405 = vmatprep.subr.bf16.mxu0 0
      %7406 = vmatpush1.bf16.msra.mxu0 0
      %7407 = vmatprep.subr.bf16.mxu0 0
      %7408 = vmatpush1.bf16.msra.mxu0 0
      %7409 = vmatprep.subr.bf16.mxu0 0
      %7410 = vmatpush1.bf16.msra.mxu0 0
      %7411 = vmatprep.subr.bf16.mxu0 0
      %7412 = vmatpush1.bf16.msra.mxu0 0
      %7413 = vmatprep.subr.bf16.mxu0 0
      %7414 = vmatpush1.bf16.msra.mxu0 0
      %7415 = vmatprep.subr.bf16.mxu0 0
      %7416 = vmatpush1.bf16.msra.mxu0 0
      %7417 = vmatprep.subr.bf16.mxu0 0
      %7418 = vmatpush1.bf16.msra.mxu0 0
      %7419 = vmatprep.mubr.bf16.mxu0 0
      %7420 = vmatmul.mubr.bf16.gmra.mrb[0].mxu0 %v7340
      %v7421 = vpop.f32.mrb[0].mxu0
      %v7422 = vadd.f32 0.0, %v7421
      %v7423 = vpop.f32.mrb[0].mxu0
      %v7424 = vpop.f32.mrb[0].mxu0
      %v7425 = vadd.f32 0.0, %v7424
      %v7426 = vpop.f32.mrb[0].mxu0
      %7427 = vmatprep.mubr.bf16.mxu0 0
      %7428 = vmatmul.mubr.bf16.gmra.mrb[0].mxu0 %v7343
      %v7429 = vpop.f32.mrb[0].mxu0
      %v7430 = vadd.f32 0.0, %v7429
      %v7431 = vpop.f32.mrb[0].mxu0
      %v7432 = vpop.f32.mrb[0].mxu0
      %v7433 = vadd.f32 0.0, %v7432
      %v7434 = vpop.f32.mrb[0].mxu0
      %7435 = vmatprep.mubr.bf16.mxu0 0
      %7436 = vmatmul.mubr.bf16.gmra.mrb[0].mxu0 %v7346
      %v7437 = vpop.f32.mrb[0].mxu0
      %v7438 = vadd.f32 0.0, %v7437
      %v7439 = vpop.f32.mrb[0].mxu0
      %v7440 = vpop.f32.mrb[0].mxu0
      %v7441 = vadd.f32 0.0, %v7440
      %v7442 = vpop.f32.mrb[0].mxu0
      %7443 = vmatprep.mubr.bf16.mxu0 0
      %7444 = vmatmul.mubr.bf16.gmra.mrb[0].mxu0 %v7349
      %v7445 = vpop.f32.mrb[0].mxu0
      %v7446 = vadd.f32 0.0, %v7445
      %v7447 = vpop.f32.mrb[0].mxu0
      %v7448 = vpop.f32.mrb[0].mxu0
      %v7449 = vadd.f32 0.0, %v7448
      %v7450 = vpop.f32.mrb[0].mxu0
      %7451 = vmatprep.mubr.bf16.mxu0 0
      %7452 = vmatmul.mubr.bf16.gmra.mrb[0].mxu0 %v7352
      %v7453 = vpop.f32.mrb[0].mxu0
      %v7454 = vadd.f32 0.0, %v7453
      %v7455 = vpop.f32.mrb[0].mxu0
      %v7456 = vpop.f32.mrb[0].mxu0
      %v7457 = vadd.f32 0.0, %v7456
      %v7458 = vpop.f32.mrb[0].mxu0
      %7459 = vmatprep.mubr.bf16.mxu0 0
      %7460 = vmatmul.mubr.bf16.gmra.mrb[0].mxu0 %v7355
      %v7461 = vpop.f32.mrb[0].mxu0
      %v7462 = vadd.f32 0.0, %v7461
      %v7463 = vpop.f32.mrb[0].mxu0
      %v7464 = vpop.f32.mrb[0].mxu0
      %v7465 = vadd.f32 0.0, %v7464
      %v7466 = vpop.f32.mrb[0].mxu0
      %7467 = vmatprep.mubr.bf16.mxu0 0
      %7468 = vmatmul.mubr.bf16.gmra.mrb[0].mxu0 %v7358
      %v7469 = vpop.f32.mrb[0].mxu0
      %v7470 = vadd.f32 0.0, %v7469
      %v7471 = vpop.f32.mrb[0].mxu0
      %v7472 = vpop.f32.mrb[0].mxu0
      %v7473 = vadd.f32 0.0, %v7472
      %v7474 = vpop.f32.mrb[0].mxu0
      %7475 = vmatprep.mubr.bf16.mxu0 0
      %7476 = vmatmul.mubr.bf16.gmra.mrb[0].mxu0 %v7361
      %v7477 = vpop.f32.mrb[0].mxu0
      %v7478 = vadd.f32 0.0, %v7477
      %v7479 = vpop.f32.mrb[0].mxu0
      %v7480 = vpop.f32.mrb[0].mxu0
      %v7481 = vadd.f32 0.0, %v7480
      %v7482 = vpop.f32.mrb[0].mxu0
      %7483 = vmatprep.mubr.bf16.mxu0 0
      %7484 = vmatmul.mubr.bf16.gmra.mrb[0].mxu0 %v7364
      %v7485 = vpop.f32.mrb[0].mxu0
      %v7486 = vadd.f32 0.0, %v7485
      %v7487 = vpop.f32.mrb[0].mxu0
      %v7488 = vpop.f32.mrb[0].mxu0
      %v7489 = vadd.f32 0.0, %v7488
      %v7490 = vpop.f32.mrb[0].mxu0
      %7491 = vmatprep.mubr.bf16.mxu0 0
      %7492 = vmatmul.mubr.bf16.gmra.mrb[0].mxu0 %v7367
      %v7493 = vpop.f32.mrb[0].mxu0
      %v7494 = vadd.f32 0.0, %v7493
      %v7495 = vpop.f32.mrb[0].mxu0
      %v7496 = vpop.f32.mrb[0].mxu0
      %v7497 = vadd.f32 0.0, %v7496
      %v7498 = vpop.f32.mrb[0].mxu0
      %7499 = vmatprep.mubr.bf16.mxu0 0
      %7500 = vmatmul.mubr.bf16.gmra.mrb[0].mxu0 %v7370
      %v7501 = vpop.f32.mrb[0].mxu0
      %v7502 = vadd.f32 0.0, %v7501
      %v7503 = vpop.f32.mrb[0].mxu0
      %v7504 = vpop.f32.mrb[0].mxu0
      %v7505 = vadd.f32 0.0, %v7504
      %v7506 = vpop.f32.mrb[0].mxu0
      %7507 = vmatprep.mubr.bf16.mxu0 0
      %7508 = vmatmul.mubr.bf16.gmra.mrb[0].mxu0 %v7373
      %v7509 = vpop.f32.mrb[0].mxu0
      %v7510 = vadd.f32 0.0, %v7509
      %v7511 = vpop.f32.mrb[0].mxu0
      %v7512 = vpop.f32.mrb[0].mxu0
      %v7513 = vadd.f32 0.0, %v7512
      %v7514 = vpop.f32.mrb[0].mxu0
      %7515 = vmatprep.mubr.bf16.mxu0 0
      %7516 = vmatmul.mubr.bf16.gmra.mrb[0].mxu0 %v7376
      %v7517 = vpop.f32.mrb[0].mxu0
      %v7518 = vadd.f32 0.0, %v7517
      %v7519 = vpop.f32.mrb[0].mxu0
      %v7520 = vpop.f32.mrb[0].mxu0
      %v7521 = vadd.f32 0.0, %v7520
      %v7522 = vpop.f32.mrb[0].mxu0
      %7523 = vmatprep.mubr.bf16.mxu0 0
      %7524 = vmatmul.mubr.bf16.gmra.mrb[0].mxu0 %v7379
      %v7525 = vpop.f32.mrb[0].mxu0
      %v7526 = vadd.f32 0.0, %v7525
      %v7527 = vpop.f32.mrb[0].mxu0
      %v7528 = vpop.f32.mrb[0].mxu0
      %v7529 = vadd.f32 0.0, %v7528
      %v7530 = vpop.f32.mrb[0].mxu0
      %7531 = vmatprep.mubr.bf16.mxu0 0
      %7532 = vmatmul.mubr.bf16.gmra.mrb[0].mxu0 %v7382
      %v7533 = vpop.f32.mrb[0].mxu0
      %v7534 = vadd.f32 0.0, %v7533
      %v7535 = vpop.f32.mrb[0].mxu0
      %v7536 = vpop.f32.mrb[0].mxu0
      %v7537 = vadd.f32 0.0, %v7536
      %v7538 = vpop.f32.mrb[0].mxu0
      %7539 = vmatprep.mubr.bf16.mxu0 0
      %7540 = vmatmul.mubr.bf16.gmra.mrb[0].mxu0 %v7385
      %v7541 = vpop.f32.mrb[0].mxu0
      %v7542 = vadd.f32 0.0, %v7541
      %v7543 = vpop.f32.mrb[0].mxu0
      %v7544 = vpop.f32.mrb[0].mxu0
      %v7545 = vadd.f32 0.0, %v7544
      %v7546 = vpop.f32.mrb[0].mxu0
      %7547 = vdwg.mxu0
      %v7580 = vunpack.c.l.b16 %v6838
      %v7581 = vunpack.c.l.b16 %v6839
      %v7582 = vunpack.c.l.b16 %v6841
      %v7583 = vunpack.c.l.b16 %v6842
      %v7584 = vunpack.c.l.b16 %v6844
      %v7585 = vunpack.c.l.b16 %v6845
      %v7586 = vunpack.c.l.b16 %v6847
      %v7587 = vunpack.c.l.b16 %v6848
      %v7588 = vunpack.c.l.b16 %v6850
      %v7589 = vunpack.c.l.b16 %v6851
      %v7590 = vunpack.c.l.b16 %v6853
      %v7591 = vunpack.c.l.b16 %v6854
      %v7592 = vunpack.c.l.b16 %v6856
      %v7593 = vunpack.c.l.b16 %v6857
      %v7594 = vunpack.c.l.b16 %v6859
      %v7595 = vunpack.c.l.b16 %v6860
      %v7596 = vunpack.c.l.b16 %v6862
      %v7597 = vunpack.c.l.b16 %v6863
      %v7598 = vunpack.c.l.b16 %v6865
      %v7599 = vunpack.c.l.b16 %v6866
      %v7600 = vunpack.c.l.b16 %v6868
      %v7601 = vunpack.c.l.b16 %v6869
      %v7602 = vunpack.c.l.b16 %v6871
      %v7603 = vunpack.c.l.b16 %v6872
      %v7604 = vunpack.c.l.b16 %v6874
      %v7605 = vunpack.c.l.b16 %v6875
      %v7606 = vunpack.c.l.b16 %v6877
      %v7607 = vunpack.c.l.b16 %v6878
      %v7608 = vunpack.c.l.b16 %v6880
      %v7609 = vunpack.c.l.b16 %v6881
      %v7610 = vunpack.c.l.b16 %v6883
      %v7611 = vunpack.c.l.b16 %v6884
      %v7612 = vpack.c.b16 %v7581, %v7580
      %v7613 = vpack.c.b16 %v7583, %v7582
      %v7614 = vpack.c.b16 %v7585, %v7584
      %v7615 = vpack.c.b16 %v7587, %v7586
      %v7616 = vpack.c.b16 %v7589, %v7588
      %v7617 = vpack.c.b16 %v7591, %v7590
      %v7618 = vpack.c.b16 %v7593, %v7592
      %v7619 = vpack.c.b16 %v7595, %v7594
      %v7620 = vpack.c.b16 %v7597, %v7596
      %v7621 = vpack.c.b16 %v7599, %v7598
      %v7622 = vpack.c.b16 %v7601, %v7600
      %v7623 = vpack.c.b16 %v7603, %v7602
      %v7624 = vpack.c.b16 %v7605, %v7604
      %v7625 = vpack.c.b16 %v7607, %v7606
      %v7626 = vpack.c.b16 %v7609, %v7608
      %v7627 = vpack.c.b16 %v7611, %v7610
      %v7630 = vunpack.c.l.b16 %v6892
      %v7631 = vunpack.c.l.b16 %v6893
      %v7632 = vpack.c.b16 %v7631, %v7630
      %v7635 = vsel %vm7338, %v7612, 0
      %v7638 = vsel %vm7338, %v7613, 0
      %v7641 = vsel %vm7338, %v7614, 0
      %v7644 = vsel %vm7338, %v7615, 0
      %v7647 = vsel %vm7338, %v7616, 0
      %v7650 = vsel %vm7338, %v7617, 0
      %v7653 = vsel %vm7338, %v7618, 0
      %v7656 = vsel %vm7338, %v7619, 0
      %v7659 = vsel %vm7338, %v7620, 0
      %v7662 = vsel %vm7338, %v7621, 0
      %v7665 = vsel %vm7338, %v7622, 0
      %v7668 = vsel %vm7338, %v7623, 0
      %v7671 = vsel %vm7338, %v7624, 0
      %v7674 = vsel %vm7338, %v7625, 0
      %v7677 = vsel %vm7338, %v7626, 0
      %v7680 = vsel %vm7338, %v7627, 0
      %7682 = vmatprep.subr.bf16.mxu0 0
      %7683 = vmatpush1.bf16.msra.mxu0 %v7632
      %7684 = vmatprep.subr.bf16.mxu0 0
      %7685 = vmatpush1.bf16.msra.mxu0 0
      %7686 = vmatprep.subr.bf16.mxu0 0
      %7687 = vmatpush1.bf16.msra.mxu0 0
      %7688 = vmatprep.subr.bf16.mxu0 0
      %7689 = vmatpush1.bf16.msra.mxu0 0
      %7690 = vmatprep.subr.bf16.mxu0 0
      %7691 = vmatpush1.bf16.msra.mxu0 0
      %7692 = vmatprep.subr.bf16.mxu0 0
      %7693 = vmatpush1.bf16.msra.mxu0 0
      %7694 = vmatprep.subr.bf16.mxu0 0
      %7695 = vmatpush1.bf16.msra.mxu0 0
      %7696 = vmatprep.subr.bf16.mxu0 0
      %7697 = vmatpush1.bf16.msra.mxu0 0
      %7698 = vmatprep.subr.bf16.mxu0 0
      %7699 = vmatpush1.bf16.msra.mxu0 0
      %7700 = vmatprep.subr.bf16.mxu0 0
      %7701 = vmatpush1.bf16.msra.mxu0 0
      %7702 = vmatprep.subr.bf16.mxu0 0
      %7703 = vmatpush1.bf16.msra.mxu0 0
      %7704 = vmatprep.subr.bf16.mxu0 0
      %7705 = vmatpush1.bf16.msra.mxu0 0
      %7706 = vmatprep.subr.bf16.mxu0 0
      %7707 = vmatpush1.bf16.msra.mxu0 0
      %7708 = vmatprep.subr.bf16.mxu0 0
      %7709 = vmatpush1.bf16.msra.mxu0 0
      %7710 = vmatprep.subr.bf16.mxu0 0
      %7711 = vmatpush1.bf16.msra.mxu0 0
      %7712 = vmatprep.subr.bf16.mxu0 0
      %7713 = vmatpush1.bf16.msra.mxu0 0
      %7714 = vmatprep.mubr.bf16.mxu0 0
      %7715 = vmatmul.mubr.bf16.gmra.mrb[0].mxu0 %v7635
      %v7716 = vpop.f32.mrb[0].mxu0
      %v7717 = vadd.f32 %v7422, %v7716
      %v7718 = vpop.f32.mrb[0].mxu0
      %v7719 = vpop.f32.mrb[0].mxu0
      %v7720 = vadd.f32 %v7425, %v7719
      %v7721 = vpop.f32.mrb[0].mxu0
      %7722 = vmatprep.mubr.bf16.mxu0 0
      %7723 = vmatmul.mubr.bf16.gmra.mrb[0].mxu0 %v7638
      %v7724 = vpop.f32.mrb[0].mxu0
      %v7725 = vadd.f32 %v7430, %v7724
      %v7726 = vpop.f32.mrb[0].mxu0
      %v7727 = vpop.f32.mrb[0].mxu0
      %v7728 = vadd.f32 %v7433, %v7727
      %v7729 = vpop.f32.mrb[0].mxu0
      %7730 = vmatprep.mubr.bf16.mxu0 0
      %7731 = vmatmul.mubr.bf16.gmra.mrb[0].mxu0 %v7641
      %v7732 = vpop.f32.mrb[0].mxu0
      %v7733 = vadd.f32 %v7438, %v7732
      %v7734 = vpop.f32.mrb[0].mxu0
      %v7735 = vpop.f32.mrb[0].mxu0
      %v7736 = vadd.f32 %v7441, %v7735
      %v7737 = vpop.f32.mrb[0].mxu0
      %7738 = vmatprep.mubr.bf16.mxu0 0
      %7739 = vmatmul.mubr.bf16.gmra.mrb[0].mxu0 %v7644
      %v7740 = vpop.f32.mrb[0].mxu0
      %v7741 = vadd.f32 %v7446, %v7740
      %v7742 = vpop.f32.mrb[0].mxu0
      %v7743 = vpop.f32.mrb[0].mxu0
      %v7744 = vadd.f32 %v7449, %v7743
      %v7745 = vpop.f32.mrb[0].mxu0
      %7746 = vmatprep.mubr.bf16.mxu0 0
      %7747 = vmatmul.mubr.bf16.gmra.mrb[0].mxu0 %v7647
      %v7748 = vpop.f32.mrb[0].mxu0
      %v7749 = vadd.f32 %v7454, %v7748
      %v7750 = vpop.f32.mrb[0].mxu0
      %v7751 = vpop.f32.mrb[0].mxu0
      %v7752 = vadd.f32 %v7457, %v7751
      %v7753 = vpop.f32.mrb[0].mxu0
      %7754 = vmatprep.mubr.bf16.mxu0 0
      %7755 = vmatmul.mubr.bf16.gmra.mrb[0].mxu0 %v7650
      %v7756 = vpop.f32.mrb[0].mxu0
      %v7757 = vadd.f32 %v7462, %v7756
      %v7758 = vpop.f32.mrb[0].mxu0
      %v7759 = vpop.f32.mrb[0].mxu0
      %v7760 = vadd.f32 %v7465, %v7759
      %v7761 = vpop.f32.mrb[0].mxu0
      %7762 = vmatprep.mubr.bf16.mxu0 0
      %7763 = vmatmul.mubr.bf16.gmra.mrb[0].mxu0 %v7653
      %v7764 = vpop.f32.mrb[0].mxu0
      %v7765 = vadd.f32 %v7470, %v7764
      %v7766 = vpop.f32.mrb[0].mxu0
      %v7767 = vpop.f32.mrb[0].mxu0
      %v7768 = vadd.f32 %v7473, %v7767
      %v7769 = vpop.f32.mrb[0].mxu0
      %7770 = vmatprep.mubr.bf16.mxu0 0
      %7771 = vmatmul.mubr.bf16.gmra.mrb[0].mxu0 %v7656
      %v7772 = vpop.f32.mrb[0].mxu0
      %v7773 = vadd.f32 %v7478, %v7772
      %v7774 = vpop.f32.mrb[0].mxu0
      %v7775 = vpop.f32.mrb[0].mxu0
      %v7776 = vadd.f32 %v7481, %v7775
      %v7777 = vpop.f32.mrb[0].mxu0
      %7778 = vmatprep.mubr.bf16.mxu0 0
      %7779 = vmatmul.mubr.bf16.gmra.mrb[0].mxu0 %v7659
      %v7780 = vpop.f32.mrb[0].mxu0
      %v7781 = vadd.f32 %v7486, %v7780
      %v7782 = vpop.f32.mrb[0].mxu0
      %v7783 = vpop.f32.mrb[0].mxu0
      %v7784 = vadd.f32 %v7489, %v7783
      %v7785 = vpop.f32.mrb[0].mxu0
      %7786 = vmatprep.mubr.bf16.mxu0 0
      %7787 = vmatmul.mubr.bf16.gmra.mrb[0].mxu0 %v7662
      %v7788 = vpop.f32.mrb[0].mxu0
      %v7789 = vadd.f32 %v7494, %v7788
      %v7790 = vpop.f32.mrb[0].mxu0
      %v7791 = vpop.f32.mrb[0].mxu0
      %v7792 = vadd.f32 %v7497, %v7791
      %v7793 = vpop.f32.mrb[0].mxu0
      %7794 = vmatprep.mubr.bf16.mxu0 0
      %7795 = vmatmul.mubr.bf16.gmra.mrb[0].mxu0 %v7665
      %v7796 = vpop.f32.mrb[0].mxu0
      %v7797 = vadd.f32 %v7502, %v7796
      %v7798 = vpop.f32.mrb[0].mxu0
      %v7799 = vpop.f32.mrb[0].mxu0
      %v7800 = vadd.f32 %v7505, %v7799
      %v7801 = vpop.f32.mrb[0].mxu0
      %7802 = vmatprep.mubr.bf16.mxu0 0
      %7803 = vmatmul.mubr.bf16.gmra.mrb[0].mxu0 %v7668
      %v7804 = vpop.f32.mrb[0].mxu0
      %v7805 = vadd.f32 %v7510, %v7804
      %v7806 = vpop.f32.mrb[0].mxu0
      %v7807 = vpop.f32.mrb[0].mxu0
      %v7808 = vadd.f32 %v7513, %v7807
      %v7809 = vpop.f32.mrb[0].mxu0
      %7810 = vmatprep.mubr.bf16.mxu0 0
      %7811 = vmatmul.mubr.bf16.gmra.mrb[0].mxu0 %v7671
      %v7812 = vpop.f32.mrb[0].mxu0
      %v7813 = vadd.f32 %v7518, %v7812
      %v7814 = vpop.f32.mrb[0].mxu0
      %v7815 = vpop.f32.mrb[0].mxu0
      %v7816 = vadd.f32 %v7521, %v7815
      %v7817 = vpop.f32.mrb[0].mxu0
      %7818 = vmatprep.mubr.bf16.mxu0 0
      %7819 = vmatmul.mubr.bf16.gmra.mrb[0].mxu0 %v7674
      %v7820 = vpop.f32.mrb[0].mxu0
      %v7821 = vadd.f32 %v7526, %v7820
      %v7822 = vpop.f32.mrb[0].mxu0
      %v7823 = vpop.f32.mrb[0].mxu0
      %v7824 = vadd.f32 %v7529, %v7823
      %v7825 = vpop.f32.mrb[0].mxu0
      %7826 = vmatprep.mubr.bf16.mxu0 0
      %7827 = vmatmul.mubr.bf16.gmra.mrb[0].mxu0 %v7677
      %v7828 = vpop.f32.mrb[0].mxu0
      %v7829 = vadd.f32 %v7534, %v7828
      %v7830 = vpop.f32.mrb[0].mxu0
      %v7831 = vpop.f32.mrb[0].mxu0
      %v7832 = vadd.f32 %v7537, %v7831
      %v7833 = vpop.f32.mrb[0].mxu0
      %7834 = vmatprep.mubr.bf16.mxu0 0
      %7835 = vmatmul.mubr.bf16.gmra.mrb[0].mxu0 %v7680
      %v7836 = vpop.f32.mrb[0].mxu0
      %v7837 = vadd.f32 %v7542, %v7836
      %v7838 = vpop.f32.mrb[0].mxu0
      %v7839 = vpop.f32.mrb[0].mxu0
      %v7840 = vadd.f32 %v7545, %v7839
      %v7841 = vpop.f32.mrb[0].mxu0
      %7842 = vdwg.mxu0
      %v7859 = vrot.slane %v6838, 5
      %v7860 = vrot.slane %v7859, 4
      %v7861 = vrot.slane %v6839, 5
      %v7862 = vsel %vm342, %v7860, %v7861
      %v7863 = vrot.slane %v7861, 4
      %v7864 = vrot.slane %v6840, 5
      %v7865 = vsel %vm342, %v7863, %v7864
      %v7866 = vrot.slane %v6841, 5
      %v7867 = vrot.slane %v7866, 4
      %v7868 = vrot.slane %v6842, 5
      %v7869 = vsel %vm342, %v7867, %v7868
      %v7870 = vrot.slane %v7868, 4
      %v7871 = vrot.slane %v6843, 5
      %v7872 = vsel %vm342, %v7870, %v7871
      %v7873 = vrot.slane %v6844, 5
      %v7874 = vrot.slane %v7873, 4
      %v7875 = vrot.slane %v6845, 5
      %v7876 = vsel %vm342, %v7874, %v7875
      %v7877 = vrot.slane %v7875, 4
      %v7878 = vrot.slane %v6846, 5
      %v7879 = vsel %vm342, %v7877, %v7878
      %v7880 = vrot.slane %v6847, 5
      %v7881 = vrot.slane %v7880, 4
      %v7882 = vrot.slane %v6848, 5
      %v7883 = vsel %vm342, %v7881, %v7882
      %v7884 = vrot.slane %v7882, 4
      %v7885 = vrot.slane %v6849, 5
      %v7886 = vsel %vm342, %v7884, %v7885
      %v7887 = vrot.slane %v6850, 5
      %v7888 = vrot.slane %v7887, 4
      %v7889 = vrot.slane %v6851, 5
      %v7890 = vsel %vm342, %v7888, %v7889
      %v7891 = vrot.slane %v7889, 4
      %v7892 = vrot.slane %v6852, 5
      %v7893 = vsel %vm342, %v7891, %v7892
      %v7894 = vrot.slane %v6853, 5
      %v7895 = vrot.slane %v7894, 4
      %v7896 = vrot.slane %v6854, 5
      %v7897 = vsel %vm342, %v7895, %v7896
      %v7898 = vrot.slane %v7896, 4
      %v7899 = vrot.slane %v6855, 5
      %v7900 = vsel %vm342, %v7898, %v7899
      %v7901 = vrot.slane %v6856, 5
      %v7902 = vrot.slane %v7901, 4
      %v7903 = vrot.slane %v6857, 5
      %v7904 = vsel %vm342, %v7902, %v7903
      %v7905 = vrot.slane %v7903, 4
      %v7906 = vrot.slane %v6858, 5
      %v7907 = vsel %vm342, %v7905, %v7906
      %v7908 = vrot.slane %v6859, 5
      %v7909 = vrot.slane %v7908, 4
      %v7910 = vrot.slane %v6860, 5
      %v7911 = vsel %vm342, %v7909, %v7910
      %v7912 = vrot.slane %v7910, 4
      %v7913 = vrot.slane %v6861, 5
      %v7914 = vsel %vm342, %v7912, %v7913
      %v7915 = vrot.slane %v6862, 5
      %v7916 = vrot.slane %v7915, 4
      %v7917 = vrot.slane %v6863, 5
      %v7918 = vsel %vm342, %v7916, %v7917
      %v7919 = vrot.slane %v7917, 4
      %v7920 = vrot.slane %v6864, 5
      %v7921 = vsel %vm342, %v7919, %v7920
      %v7922 = vrot.slane %v6865, 5
      %v7923 = vrot.slane %v7922, 4
      %v7924 = vrot.slane %v6866, 5
      %v7925 = vsel %vm342, %v7923, %v7924
      %v7926 = vrot.slane %v7924, 4
      %v7927 = vrot.slane %v6867, 5
      %v7928 = vsel %vm342, %v7926, %v7927
      %v7929 = vrot.slane %v6868, 5
      %v7930 = vrot.slane %v7929, 4
      %v7931 = vrot.slane %v6869, 5
      %v7932 = vsel %vm342, %v7930, %v7931
      %v7933 = vrot.slane %v7931, 4
      %v7934 = vrot.slane %v6870, 5
      %v7935 = vsel %vm342, %v7933, %v7934
      %v7936 = vrot.slane %v6871, 5
      %v7937 = vrot.slane %v7936, 4
      %v7938 = vrot.slane %v6872, 5
      %v7939 = vsel %vm342, %v7937, %v7938
      %v7940 = vrot.slane %v7938, 4
      %v7941 = vrot.slane %v6873, 5
      %v7942 = vsel %vm342, %v7940, %v7941
      %v7943 = vrot.slane %v6874, 5
      %v7944 = vrot.slane %v7943, 4
      %v7945 = vrot.slane %v6875, 5
      %v7946 = vsel %vm342, %v7944, %v7945
      %v7947 = vrot.slane %v7945, 4
      %v7948 = vrot.slane %v6876, 5
      %v7949 = vsel %vm342, %v7947, %v7948
      %v7950 = vrot.slane %v6877, 5
      %v7951 = vrot.slane %v7950, 4
      %v7952 = vrot.slane %v6878, 5
      %v7953 = vsel %vm342, %v7951, %v7952
      %v7954 = vrot.slane %v7952, 4
      %v7955 = vrot.slane %v6879, 5
      %v7956 = vsel %vm342, %v7954, %v7955
      %v7957 = vrot.slane %v6880, 5
      %v7958 = vrot.slane %v7957, 4
      %v7959 = vrot.slane %v6881, 5
      %v7960 = vsel %vm342, %v7958, %v7959
      %v7961 = vrot.slane %v7959, 4
      %v7962 = vrot.slane %v6882, 5
      %v7963 = vsel %vm342, %v7961, %v7962
      %v7964 = vrot.slane %v6883, 5
      %v7965 = vrot.slane %v7964, 4
      %v7966 = vrot.slane %v6884, 5
      %v7967 = vsel %vm342, %v7965, %v7966
      %v7968 = vrot.slane %v7966, 4
      %v7969 = vrot.slane %v6885, 5
      %v7970 = vsel %vm342, %v7968, %v7969
      %s7971 = scalar_lea.vmem %s3, 16
      %v7972 = vld [vmem:[%s7971] sm:$0xf]
      %v7973 = vld [vmem:[%s7971 + $0x4] sm:$0xf]
      %v7974 = vunpack.c.l.b16 %v7862
      %v7975 = vunpack.c.l.b16 %v7865
      %v7976 = vunpack.c.l.b16 %v7869
      %v7977 = vunpack.c.l.b16 %v7872
      %v7978 = vunpack.c.l.b16 %v7876
      %v7979 = vunpack.c.l.b16 %v7879
      %v7980 = vunpack.c.l.b16 %v7883
      %v7981 = vunpack.c.l.b16 %v7886
      %v7982 = vunpack.c.l.b16 %v7890
      %v7983 = vunpack.c.l.b16 %v7893
      %v7984 = vunpack.c.l.b16 %v7897
      %v7985 = vunpack.c.l.b16 %v7900
      %v7986 = vunpack.c.l.b16 %v7904
      %v7987 = vunpack.c.l.b16 %v7907
      %v7988 = vunpack.c.l.b16 %v7911
      %v7989 = vunpack.c.l.b16 %v7914
      %v7990 = vunpack.c.l.b16 %v7918
      %v7991 = vunpack.c.l.b16 %v7921
      %v7992 = vunpack.c.l.b16 %v7925
      %v7993 = vunpack.c.l.b16 %v7928
      %v7994 = vunpack.c.l.b16 %v7932
      %v7995 = vunpack.c.l.b16 %v7935
      %v7996 = vunpack.c.l.b16 %v7939
      %v7997 = vunpack.c.l.b16 %v7942
      %v7998 = vunpack.c.l.b16 %v7946
      %v7999 = vunpack.c.l.b16 %v7949
      %v8000 = vunpack.c.l.b16 %v7953
      %v8001 = vunpack.c.l.b16 %v7956
      %v8002 = vunpack.c.l.b16 %v7960
      %v8003 = vunpack.c.l.b16 %v7963
      %v8004 = vunpack.c.l.b16 %v7967
      %v8005 = vunpack.c.l.b16 %v7970
      %v8006 = vpack.c.b16 %v7975, %v7974
      %v8007 = vpack.c.b16 %v7977, %v7976
      %v8008 = vpack.c.b16 %v7979, %v7978
      %v8009 = vpack.c.b16 %v7981, %v7980
      %v8010 = vpack.c.b16 %v7983, %v7982
      %v8011 = vpack.c.b16 %v7985, %v7984
      %v8012 = vpack.c.b16 %v7987, %v7986
      %v8013 = vpack.c.b16 %v7989, %v7988
      %v8014 = vpack.c.b16 %v7991, %v7990
      %v8015 = vpack.c.b16 %v7993, %v7992
      %v8016 = vpack.c.b16 %v7995, %v7994
      %v8017 = vpack.c.b16 %v7997, %v7996
      %v8018 = vpack.c.b16 %v7999, %v7998
      %v8019 = vpack.c.b16 %v8001, %v8000
      %v8020 = vpack.c.b16 %v8003, %v8002
      %v8021 = vpack.c.b16 %v8005, %v8004
      %v8024 = vunpack.c.l.b16 %v7972
      %v8025 = vunpack.c.l.b16 %v7973
      %v8026 = vpack.c.b16 %v8025, %v8024
      %v8029 = vsel %vm7338, %v8006, 0
      %v8032 = vsel %vm7338, %v8007, 0
      %v8035 = vsel %vm7338, %v8008, 0
      %v8038 = vsel %vm7338, %v8009, 0
      %v8041 = vsel %vm7338, %v8010, 0
      %v8044 = vsel %vm7338, %v8011, 0
      %v8047 = vsel %vm7338, %v8012, 0
      %v8050 = vsel %vm7338, %v8013, 0
      %v8053 = vsel %vm7338, %v8014, 0
      %v8056 = vsel %vm7338, %v8015, 0
      %v8059 = vsel %vm7338, %v8016, 0
      %v8062 = vsel %vm7338, %v8017, 0
      %v8065 = vsel %vm7338, %v8018, 0
      %v8068 = vsel %vm7338, %v8019, 0
      %v8071 = vsel %vm7338, %v8020, 0
      %v8074 = vsel %vm7338, %v8021, 0
      %8076 = vmatprep.subr.bf16.mxu0 0
      %8077 = vmatpush1.bf16.msra.mxu0 %v8026
      %8078 = vmatprep.subr.bf16.mxu0 0
      %8079 = vmatpush1.bf16.msra.mxu0 0
      %8080 = vmatprep.subr.bf16.mxu0 0
      %8081 = vmatpush1.bf16.msra.mxu0 0
      %8082 = vmatprep.subr.bf16.mxu0 0
      %8083 = vmatpush1.bf16.msra.mxu0 0
      %8084 = vmatprep.subr.bf16.mxu0 0
      %8085 = vmatpush1.bf16.msra.mxu0 0
      %8086 = vmatprep.subr.bf16.mxu0 0
      %8087 = vmatpush1.bf16.msra.mxu0 0
      %8088 = vmatprep.subr.bf16.mxu0 0
      %8089 = vmatpush1.bf16.msra.mxu0 0
      %8090 = vmatprep.subr.bf16.mxu0 0
      %8091 = vmatpush1.bf16.msra.mxu0 0
      %8092 = vmatprep.subr.bf16.mxu0 0
      %8093 = vmatpush1.bf16.msra.mxu0 0
      %8094 = vmatprep.subr.bf16.mxu0 0
      %8095 = vmatpush1.bf16.msra.mxu0 0
      %8096 = vmatprep.subr.bf16.mxu0 0
      %8097 = vmatpush1.bf16.msra.mxu0 0
      %8098 = vmatprep.subr.bf16.mxu0 0
      %8099 = vmatpush1.bf16.msra.mxu0 0
      %8100 = vmatprep.subr.bf16.mxu0 0
      %8101 = vmatpush1.bf16.msra.mxu0 0
      %8102 = vmatprep.subr.bf16.mxu0 0
      %8103 = vmatpush1.bf16.msra.mxu0 0
      %8104 = vmatprep.subr.bf16.mxu0 0
      %8105 = vmatpush1.bf16.msra.mxu0 0
      %8106 = vmatprep.subr.bf16.mxu0 0
      %8107 = vmatpush1.bf16.msra.mxu0 0
      %8108 = vmatprep.mubr.bf16.mxu0 0
      %8109 = vmatmul.mubr.bf16.gmra.mrb[0].mxu0 %v8029
      %v8110 = vpop.f32.mrb[0].mxu0
      %v8111 = vadd.f32 0.0, %v8110
      %v8112 = vpop.f32.mrb[0].mxu0
      %v8113 = vpop.f32.mrb[0].mxu0
      %v8114 = vadd.f32 0.0, %v8113
      %v8115 = vpop.f32.mrb[0].mxu0
      %8116 = vmatprep.mubr.bf16.mxu0 0
      %8117 = vmatmul.mubr.bf16.gmra.mrb[0].mxu0 %v8032
      %v8118 = vpop.f32.mrb[0].mxu0
      %v8119 = vadd.f32 0.0, %v8118
      %v8120 = vpop.f32.mrb[0].mxu0
      %v8121 = vpop.f32.mrb[0].mxu0
      %v8122 = vadd.f32 0.0, %v8121
      %v8123 = vpop.f32.mrb[0].mxu0
      %8124 = vmatprep.mubr.bf16.mxu0 0
      %8125 = vmatmul.mubr.bf16.gmra.mrb[0].mxu0 %v8035
      %v8126 = vpop.f32.mrb[0].mxu0
      %v8127 = vadd.f32 0.0, %v8126
      %v8128 = vpop.f32.mrb[0].mxu0
      %v8129 = vpop.f32.mrb[0].mxu0
      %v8130 = vadd.f32 0.0, %v8129
      %v8131 = vpop.f32.mrb[0].mxu0
      %8132 = vmatprep.mubr.bf16.mxu0 0
      %8133 = vmatmul.mubr.bf16.gmra.mrb[0].mxu0 %v8038
      %v8134 = vpop.f32.mrb[0].mxu0
      %v8135 = vadd.f32 0.0, %v8134
      %v8136 = vpop.f32.mrb[0].mxu0
      %v8137 = vpop.f32.mrb[0].mxu0
      %v8138 = vadd.f32 0.0, %v8137
      %v8139 = vpop.f32.mrb[0].mxu0
      %8140 = vmatprep.mubr.bf16.mxu0 0
      %8141 = vmatmul.mubr.bf16.gmra.mrb[0].mxu0 %v8041
      %v8142 = vpop.f32.mrb[0].mxu0
      %v8143 = vadd.f32 0.0, %v8142
      %v8144 = vpop.f32.mrb[0].mxu0
      %v8145 = vpop.f32.mrb[0].mxu0
      %v8146 = vadd.f32 0.0, %v8145
      %v8147 = vpop.f32.mrb[0].mxu0
      %8148 = vmatprep.mubr.bf16.mxu0 0
      %8149 = vmatmul.mubr.bf16.gmra.mrb[0].mxu0 %v8044
      %v8150 = vpop.f32.mrb[0].mxu0
      %v8151 = vadd.f32 0.0, %v8150
      %v8152 = vpop.f32.mrb[0].mxu0
      %v8153 = vpop.f32.mrb[0].mxu0
      %v8154 = vadd.f32 0.0, %v8153
      %v8155 = vpop.f32.mrb[0].mxu0
      %8156 = vmatprep.mubr.bf16.mxu0 0
      %8157 = vmatmul.mubr.bf16.gmra.mrb[0].mxu0 %v8047
      %v8158 = vpop.f32.mrb[0].mxu0
      %v8159 = vadd.f32 0.0, %v8158
      %v8160 = vpop.f32.mrb[0].mxu0
      %v8161 = vpop.f32.mrb[0].mxu0
      %v8162 = vadd.f32 0.0, %v8161
      %v8163 = vpop.f32.mrb[0].mxu0
      %8164 = vmatprep.mubr.bf16.mxu0 0
      %8165 = vmatmul.mubr.bf16.gmra.mrb[0].mxu0 %v8050
      %v8166 = vpop.f32.mrb[0].mxu0
      %v8167 = vadd.f32 0.0, %v8166
      %v8168 = vpop.f32.mrb[0].mxu0
      %v8169 = vpop.f32.mrb[0].mxu0
      %v8170 = vadd.f32 0.0, %v8169
      %v8171 = vpop.f32.mrb[0].mxu0
      %8172 = vmatprep.mubr.bf16.mxu0 0
      %8173 = vmatmul.mubr.bf16.gmra.mrb[0].mxu0 %v8053
      %v8174 = vpop.f32.mrb[0].mxu0
      %v8175 = vadd.f32 0.0, %v8174
      %v8176 = vpop.f32.mrb[0].mxu0
      %v8177 = vpop.f32.mrb[0].mxu0
      %v8178 = vadd.f32 0.0, %v8177
      %v8179 = vpop.f32.mrb[0].mxu0
      %8180 = vmatprep.mubr.bf16.mxu0 0
      %8181 = vmatmul.mubr.bf16.gmra.mrb[0].mxu0 %v8056
      %v8182 = vpop.f32.mrb[0].mxu0
      %v8183 = vadd.f32 0.0, %v8182
      %v8184 = vpop.f32.mrb[0].mxu0
      %v8185 = vpop.f32.mrb[0].mxu0
      %v8186 = vadd.f32 0.0, %v8185
      %v8187 = vpop.f32.mrb[0].mxu0
      %8188 = vmatprep.mubr.bf16.mxu0 0
      %8189 = vmatmul.mubr.bf16.gmra.mrb[0].mxu0 %v8059
      %v8190 = vpop.f32.mrb[0].mxu0
      %v8191 = vadd.f32 0.0, %v8190
      %v8192 = vpop.f32.mrb[0].mxu0
      %v8193 = vpop.f32.mrb[0].mxu0
      %v8194 = vadd.f32 0.0, %v8193
      %v8195 = vpop.f32.mrb[0].mxu0
      %8196 = vmatprep.mubr.bf16.mxu0 0
      %8197 = vmatmul.mubr.bf16.gmra.mrb[0].mxu0 %v8062
      %v8198 = vpop.f32.mrb[0].mxu0
      %v8199 = vadd.f32 0.0, %v8198
      %v8200 = vpop.f32.mrb[0].mxu0
      %v8201 = vpop.f32.mrb[0].mxu0
      %v8202 = vadd.f32 0.0, %v8201
      %v8203 = vpop.f32.mrb[0].mxu0
      %8204 = vmatprep.mubr.bf16.mxu0 0
      %8205 = vmatmul.mubr.bf16.gmra.mrb[0].mxu0 %v8065
      %v8206 = vpop.f32.mrb[0].mxu0
      %v8207 = vadd.f32 0.0, %v8206
      %v8208 = vpop.f32.mrb[0].mxu0
      %v8209 = vpop.f32.mrb[0].mxu0
      %v8210 = vadd.f32 0.0, %v8209
      %v8211 = vpop.f32.mrb[0].mxu0
      %8212 = vmatprep.mubr.bf16.mxu0 0
      %8213 = vmatmul.mubr.bf16.gmra.mrb[0].mxu0 %v8068
      %v8214 = vpop.f32.mrb[0].mxu0
      %v8215 = vadd.f32 0.0, %v8214
      %v8216 = vpop.f32.mrb[0].mxu0
      %v8217 = vpop.f32.mrb[0].mxu0
      %v8218 = vadd.f32 0.0, %v8217
      %v8219 = vpop.f32.mrb[0].mxu0
      %8220 = vmatprep.mubr.bf16.mxu0 0
      %8221 = vmatmul.mubr.bf16.gmra.mrb[0].mxu0 %v8071
      %v8222 = vpop.f32.mrb[0].mxu0
      %v8223 = vadd.f32 0.0, %v8222
      %v8224 = vpop.f32.mrb[0].mxu0
      %v8225 = vpop.f32.mrb[0].mxu0
      %v8226 = vadd.f32 0.0, %v8225
      %v8227 = vpop.f32.mrb[0].mxu0
      %8228 = vmatprep.mubr.bf16.mxu0 0
      %8229 = vmatmul.mubr.bf16.gmra.mrb[0].mxu0 %v8074
      %v8230 = vpop.f32.mrb[0].mxu0
      %v8231 = vadd.f32 0.0, %v8230
      %v8232 = vpop.f32.mrb[0].mxu0
      %v8233 = vpop.f32.mrb[0].mxu0
      %v8234 = vadd.f32 0.0, %v8233
      %v8235 = vpop.f32.mrb[0].mxu0
      %8236 = vdwg.mxu0
      %v8237 = vadd.f32 %v7717, %v8111
      %v8238 = vadd.f32 %v7720, %v8114
      %v8239 = vadd.f32 %v7725, %v8119
      %v8240 = vadd.f32 %v7728, %v8122
      %v8241 = vadd.f32 %v7733, %v8127
      %v8242 = vadd.f32 %v7736, %v8130
      %v8243 = vadd.f32 %v7741, %v8135
      %v8244 = vadd.f32 %v7744, %v8138
      %v8245 = vadd.f32 %v7749, %v8143
      %v8246 = vadd.f32 %v7752, %v8146
      %v8247 = vadd.f32 %v7757, %v8151
      %v8248 = vadd.f32 %v7760, %v8154
      %v8249 = vadd.f32 %v7765, %v8159
      %v8250 = vadd.f32 %v7768, %v8162
      %v8251 = vadd.f32 %v7773, %v8167
      %v8252 = vadd.f32 %v7776, %v8170
      %v8253 = vadd.f32 %v7781, %v8175
      %v8254 = vadd.f32 %v7784, %v8178
      %v8255 = vadd.f32 %v7789, %v8183
      %v8256 = vadd.f32 %v7792, %v8186
      %v8257 = vadd.f32 %v7797, %v8191
      %v8258 = vadd.f32 %v7800, %v8194
      %v8259 = vadd.f32 %v7805, %v8199
      %v8260 = vadd.f32 %v7808, %v8202
      %v8261 = vadd.f32 %v7813, %v8207
      %v8262 = vadd.f32 %v7816, %v8210
      %v8263 = vadd.f32 %v7821, %v8215
      %v8264 = vadd.f32 %v7824, %v8218
      %v8265 = vadd.f32 %v7829, %v8223
      %v8266 = vadd.f32 %v7832, %v8226
      %v8267 = vadd.f32 %v7837, %v8231
      %v8268 = vadd.f32 %v7840, %v8234
      %s8269 = scalar_lea.vmem %s3, 24
      %v8270 = vld [vmem:[%s8269] sm:$0xf]
      %v8271 = vld [vmem:[%s8269 + $0x4] sm:$0xf]
      %v8274 = vunpack.c.l.b16 %v6886
      %v8275 = vunpack.c.l.b16 %v6887
      %v8276 = vpack.c.b16 %v8275, %v8274
      %v8279 = vunpack.c.l.b16 %v8270
      %v8280 = vunpack.c.l.b16 %v8271
      %v8281 = vpack.c.b16 %v8280, %v8279
      %v8284 = vsel %vm7338, %v8276, 0
      %8286 = vmatprep.subr.bf16.mxu0 0
      %8287 = vmatpush1.bf16.msra.mxu0 %v8281
      %8288 = vmatprep.subr.bf16.mxu0 0
      %8289 = vmatpush1.bf16.msra.mxu0 0
      %8290 = vmatprep.subr.bf16.mxu0 0
      %8291 = vmatpush1.bf16.msra.mxu0 0
      %8292 = vmatprep.subr.bf16.mxu0 0
      %8293 = vmatpush1.bf16.msra.mxu0 0
      %8294 = vmatprep.subr.bf16.mxu0 0
      %8295 = vmatpush1.bf16.msra.mxu0 0
      %8296 = vmatprep.subr.bf16.mxu0 0
      %8297 = vmatpush1.bf16.msra.mxu0 0
      %8298 = vmatprep.subr.bf16.mxu0 0
      %8299 = vmatpush1.bf16.msra.mxu0 0
      %8300 = vmatprep.subr.bf16.mxu0 0
      %8301 = vmatpush1.bf16.msra.mxu0 0
      %8302 = vmatprep.subr.bf16.mxu0 0
      %8303 = vmatpush1.bf16.msra.mxu0 0
      %8304 = vmatprep.subr.bf16.mxu0 0
      %8305 = vmatpush1.bf16.msra.mxu0 0
      %8306 = vmatprep.subr.bf16.mxu0 0
      %8307 = vmatpush1.bf16.msra.mxu0 0
      %8308 = vmatprep.subr.bf16.mxu0 0
      %8309 = vmatpush1.bf16.msra.mxu0 0
      %8310 = vmatprep.subr.bf16.mxu0 0
      %8311 = vmatpush1.bf16.msra.mxu0 0
      %8312 = vmatprep.subr.bf16.mxu0 0
      %8313 = vmatpush1.bf16.msra.mxu0 0
      %8314 = vmatprep.subr.bf16.mxu0 0
      %8315 = vmatpush1.bf16.msra.mxu0 0
      %8316 = vmatprep.subr.bf16.mxu0 0
      %8317 = vmatpush1.bf16.msra.mxu0 0
      %8318 = vmatprep.mubr.bf16.mxu0 0
      %8319 = vmatmul.mubr.bf16.gmra.mrb[0].mxu0 %v7638
      %v8320 = vpop.f32.mrb[0].mxu0
      %v8321 = vadd.f32 0.0, %v8320
      %v8322 = vpop.f32.mrb[0].mxu0
      %v8323 = vpop.f32.mrb[0].mxu0
      %v8324 = vadd.f32 0.0, %v8323
      %v8325 = vpop.f32.mrb[0].mxu0
      %8326 = vmatprep.mubr.bf16.mxu0 0
      %8327 = vmatmul.mubr.bf16.gmra.mrb[0].mxu0 %v7641
      %v8328 = vpop.f32.mrb[0].mxu0
      %v8329 = vadd.f32 0.0, %v8328
      %v8330 = vpop.f32.mrb[0].mxu0
      %v8331 = vpop.f32.mrb[0].mxu0
      %v8332 = vadd.f32 0.0, %v8331
      %v8333 = vpop.f32.mrb[0].mxu0
      %8334 = vmatprep.mubr.bf16.mxu0 0
      %8335 = vmatmul.mubr.bf16.gmra.mrb[0].mxu0 %v7644
      %v8336 = vpop.f32.mrb[0].mxu0
      %v8337 = vadd.f32 0.0, %v8336
      %v8338 = vpop.f32.mrb[0].mxu0
      %v8339 = vpop.f32.mrb[0].mxu0
      %v8340 = vadd.f32 0.0, %v8339
      %v8341 = vpop.f32.mrb[0].mxu0
      %8342 = vmatprep.mubr.bf16.mxu0 0
      %8343 = vmatmul.mubr.bf16.gmra.mrb[0].mxu0 %v7647
      %v8344 = vpop.f32.mrb[0].mxu0
      %v8345 = vadd.f32 0.0, %v8344
      %v8346 = vpop.f32.mrb[0].mxu0
      %v8347 = vpop.f32.mrb[0].mxu0
      %v8348 = vadd.f32 0.0, %v8347
      %v8349 = vpop.f32.mrb[0].mxu0
      %8350 = vmatprep.mubr.bf16.mxu0 0
      %8351 = vmatmul.mubr.bf16.gmra.mrb[0].mxu0 %v7650
      %v8352 = vpop.f32.mrb[0].mxu0
      %v8353 = vadd.f32 0.0, %v8352
      %v8354 = vpop.f32.mrb[0].mxu0
      %v8355 = vpop.f32.mrb[0].mxu0
      %v8356 = vadd.f32 0.0, %v8355
      %v8357 = vpop.f32.mrb[0].mxu0
      %8358 = vmatprep.mubr.bf16.mxu0 0
      %8359 = vmatmul.mubr.bf16.gmra.mrb[0].mxu0 %v7653
      %v8360 = vpop.f32.mrb[0].mxu0
      %v8361 = vadd.f32 0.0, %v8360
      %v8362 = vpop.f32.mrb[0].mxu0
      %v8363 = vpop.f32.mrb[0].mxu0
      %v8364 = vadd.f32 0.0, %v8363
      %v8365 = vpop.f32.mrb[0].mxu0
      %8366 = vmatprep.mubr.bf16.mxu0 0
      %8367 = vmatmul.mubr.bf16.gmra.mrb[0].mxu0 %v7656
      %v8368 = vpop.f32.mrb[0].mxu0
      %v8369 = vadd.f32 0.0, %v8368
      %v8370 = vpop.f32.mrb[0].mxu0
      %v8371 = vpop.f32.mrb[0].mxu0
      %v8372 = vadd.f32 0.0, %v8371
      %v8373 = vpop.f32.mrb[0].mxu0
      %8374 = vmatprep.mubr.bf16.mxu0 0
      %8375 = vmatmul.mubr.bf16.gmra.mrb[0].mxu0 %v7659
      %v8376 = vpop.f32.mrb[0].mxu0
      %v8377 = vadd.f32 0.0, %v8376
      %v8378 = vpop.f32.mrb[0].mxu0
      %v8379 = vpop.f32.mrb[0].mxu0
      %v8380 = vadd.f32 0.0, %v8379
      %v8381 = vpop.f32.mrb[0].mxu0
      %8382 = vmatprep.mubr.bf16.mxu0 0
      %8383 = vmatmul.mubr.bf16.gmra.mrb[0].mxu0 %v7662
      %v8384 = vpop.f32.mrb[0].mxu0
      %v8385 = vadd.f32 0.0, %v8384
      %v8386 = vpop.f32.mrb[0].mxu0
      %v8387 = vpop.f32.mrb[0].mxu0
      %v8388 = vadd.f32 0.0, %v8387
      %v8389 = vpop.f32.mrb[0].mxu0
      %8390 = vmatprep.mubr.bf16.mxu0 0
      %8391 = vmatmul.mubr.bf16.gmra.mrb[0].mxu0 %v7665
      %v8392 = vpop.f32.mrb[0].mxu0
      %v8393 = vadd.f32 0.0, %v8392
      %v8394 = vpop.f32.mrb[0].mxu0
      %v8395 = vpop.f32.mrb[0].mxu0
      %v8396 = vadd.f32 0.0, %v8395
      %v8397 = vpop.f32.mrb[0].mxu0
      %8398 = vmatprep.mubr.bf16.mxu0 0
      %8399 = vmatmul.mubr.bf16.gmra.mrb[0].mxu0 %v7668
      %v8400 = vpop.f32.mrb[0].mxu0
      %v8401 = vadd.f32 0.0, %v8400
      %v8402 = vpop.f32.mrb[0].mxu0
      %v8403 = vpop.f32.mrb[0].mxu0
      %v8404 = vadd.f32 0.0, %v8403
      %v8405 = vpop.f32.mrb[0].mxu0
      %8406 = vmatprep.mubr.bf16.mxu0 0
      %8407 = vmatmul.mubr.bf16.gmra.mrb[0].mxu0 %v7671
      %v8408 = vpop.f32.mrb[0].mxu0
      %v8409 = vadd.f32 0.0, %v8408
      %v8410 = vpop.f32.mrb[0].mxu0
      %v8411 = vpop.f32.mrb[0].mxu0
      %v8412 = vadd.f32 0.0, %v8411
      %v8413 = vpop.f32.mrb[0].mxu0
      %8414 = vmatprep.mubr.bf16.mxu0 0
      %8415 = vmatmul.mubr.bf16.gmra.mrb[0].mxu0 %v7674
      %v8416 = vpop.f32.mrb[0].mxu0
      %v8417 = vadd.f32 0.0, %v8416
      %v8418 = vpop.f32.mrb[0].mxu0
      %v8419 = vpop.f32.mrb[0].mxu0
      %v8420 = vadd.f32 0.0, %v8419
      %v8421 = vpop.f32.mrb[0].mxu0
      %8422 = vmatprep.mubr.bf16.mxu0 0
      %8423 = vmatmul.mubr.bf16.gmra.mrb[0].mxu0 %v7677
      %v8424 = vpop.f32.mrb[0].mxu0
      %v8425 = vadd.f32 0.0, %v8424
      %v8426 = vpop.f32.mrb[0].mxu0
      %v8427 = vpop.f32.mrb[0].mxu0
      %v8428 = vadd.f32 0.0, %v8427
      %v8429 = vpop.f32.mrb[0].mxu0
      %8430 = vmatprep.mubr.bf16.mxu0 0
      %8431 = vmatmul.mubr.bf16.gmra.mrb[0].mxu0 %v7680
      %v8432 = vpop.f32.mrb[0].mxu0
      %v8433 = vadd.f32 0.0, %v8432
      %v8434 = vpop.f32.mrb[0].mxu0
      %v8435 = vpop.f32.mrb[0].mxu0
      %v8436 = vadd.f32 0.0, %v8435
      %v8437 = vpop.f32.mrb[0].mxu0
      %8438 = vmatprep.mubr.bf16.mxu0 0
      %8439 = vmatmul.mubr.bf16.gmra.mrb[0].mxu0 %v8284
      %v8440 = vpop.f32.mrb[0].mxu0
      %v8441 = vadd.f32 0.0, %v8440
      %v8442 = vpop.f32.mrb[0].mxu0
      %v8443 = vpop.f32.mrb[0].mxu0
      %v8444 = vadd.f32 0.0, %v8443
      %v8445 = vpop.f32.mrb[0].mxu0
      %8446 = vdwg.mxu0
      %v8447 = vadd.f32 %v8237, %v8321
      %v8448 = vadd.f32 %v8238, %v8324
      %v8449 = vadd.f32 %v8239, %v8329
      %v8450 = vadd.f32 %v8240, %v8332
      %v8451 = vadd.f32 %v8241, %v8337
      %v8452 = vadd.f32 %v8242, %v8340
      %v8453 = vadd.f32 %v8243, %v8345
      %v8454 = vadd.f32 %v8244, %v8348
      %v8455 = vadd.f32 %v8245, %v8353
      %v8456 = vadd.f32 %v8246, %v8356
      %v8457 = vadd.f32 %v8247, %v8361
      %v8458 = vadd.f32 %v8248, %v8364
      %v8459 = vadd.f32 %v8249, %v8369
      %v8460 = vadd.f32 %v8250, %v8372
      %v8461 = vadd.f32 %v8251, %v8377
      %v8462 = vadd.f32 %v8252, %v8380
      %v8463 = vadd.f32 %v8253, %v8385
      %v8464 = vadd.f32 %v8254, %v8388
      %v8465 = vadd.f32 %v8255, %v8393
      %v8466 = vadd.f32 %v8256, %v8396
      %v8467 = vadd.f32 %v8257, %v8401
      %v8468 = vadd.f32 %v8258, %v8404
      %v8469 = vadd.f32 %v8259, %v8409
      %v8470 = vadd.f32 %v8260, %v8412
      %v8471 = vadd.f32 %v8261, %v8417
      %v8472 = vadd.f32 %v8262, %v8420
      %v8473 = vadd.f32 %v8263, %v8425
      %v8474 = vadd.f32 %v8264, %v8428
      %v8475 = vadd.f32 %v8265, %v8433
      %v8476 = vadd.f32 %v8266, %v8436
      %v8477 = vadd.f32 %v8267, %v8441
      %v8478 = vadd.f32 %v8268, %v8444
      %v8480 = vshrl.u32 %v6886, 16
      %v8482 = vrot.slane %v8480, 4
      %v8483 = vshll.u32 %v6886, 16
      %v8485 = vrot.slane %v8483, 5
      %v8486 = vor.u32 %v8482, %v8485
      %v8487 = vrot.slane %v8486, 4
      %v8489 = vshll.u32 %v6887, 16
      %v8491 = vrot.slane %v8489, 5
      %v8492 = vsel %vm6896, %v8487, %v8491
      %v8493 = vshrl.u32 %v6887, 16
      %v8495 = vrot.slane %v8493, 4
      %v8496 = vor.u32 %v8495, %v8491
      %v8497 = vrot.slane %v8496, 4
      %v8499 = vshll.u32 %v6888, 16
      %v8501 = vrot.slane %v8499, 5
      %v8502 = vsel %vm6896, %v8497, %v8501
      %s8503 = scalar_lea.vmem %s3, 32
      %v8504 = vld [vmem:[%s8503] sm:$0xf]
      %v8505 = vld [vmem:[%s8503 + $0x4] sm:$0xf]
      %v8506 = vunpack.c.l.b16 %v8492
      %v8507 = vunpack.c.l.b16 %v8502
      %v8508 = vpack.c.b16 %v8507, %v8506
      %v8511 = vunpack.c.l.b16 %v8504
      %v8512 = vunpack.c.l.b16 %v8505
      %v8513 = vpack.c.b16 %v8512, %v8511
      %v8516 = vsel %vm7338, %v8508, 0
      %8518 = vmatprep.subr.bf16.mxu0 0
      %8519 = vmatpush1.bf16.msra.mxu0 %v8513
      %8520 = vmatprep.subr.bf16.mxu0 0
      %8521 = vmatpush1.bf16.msra.mxu0 0
      %8522 = vmatprep.subr.bf16.mxu0 0
      %8523 = vmatpush1.bf16.msra.mxu0 0
      %8524 = vmatprep.subr.bf16.mxu0 0
      %8525 = vmatpush1.bf16.msra.mxu0 0
      %8526 = vmatprep.subr.bf16.mxu0 0
      %8527 = vmatpush1.bf16.msra.mxu0 0
      %8528 = vmatprep.subr.bf16.mxu0 0
      %8529 = vmatpush1.bf16.msra.mxu0 0
      %8530 = vmatprep.subr.bf16.mxu0 0
      %8531 = vmatpush1.bf16.msra.mxu0 0
      %8532 = vmatprep.subr.bf16.mxu0 0
      %8533 = vmatpush1.bf16.msra.mxu0 0
      %8534 = vmatprep.subr.bf16.mxu0 0
      %8535 = vmatpush1.bf16.msra.mxu0 0
      %8536 = vmatprep.subr.bf16.mxu0 0
      %8537 = vmatpush1.bf16.msra.mxu0 0
      %8538 = vmatprep.subr.bf16.mxu0 0
      %8539 = vmatpush1.bf16.msra.mxu0 0
      %8540 = vmatprep.subr.bf16.mxu0 0
      %8541 = vmatpush1.bf16.msra.mxu0 0
      %8542 = vmatprep.subr.bf16.mxu0 0
      %8543 = vmatpush1.bf16.msra.mxu0 0
      %8544 = vmatprep.subr.bf16.mxu0 0
      %8545 = vmatpush1.bf16.msra.mxu0 0
      %8546 = vmatprep.subr.bf16.mxu0 0
      %8547 = vmatpush1.bf16.msra.mxu0 0
      %8548 = vmatprep.subr.bf16.mxu0 0
      %8549 = vmatpush1.bf16.msra.mxu0 0
      %8550 = vmatprep.mubr.bf16.mxu0 0
      %8551 = vmatmul.mubr.bf16.gmra.mrb[0].mxu0 %v7343
      %v8552 = vpop.f32.mrb[0].mxu0
      %v8553 = vadd.f32 0.0, %v8552
      %v8554 = vpop.f32.mrb[0].mxu0
      %v8555 = vpop.f32.mrb[0].mxu0
      %v8556 = vadd.f32 0.0, %v8555
      %v8557 = vpop.f32.mrb[0].mxu0
      %8558 = vmatprep.mubr.bf16.mxu0 0
      %8559 = vmatmul.mubr.bf16.gmra.mrb[0].mxu0 %v7346
      %v8560 = vpop.f32.mrb[0].mxu0
      %v8561 = vadd.f32 0.0, %v8560
      %v8562 = vpop.f32.mrb[0].mxu0
      %v8563 = vpop.f32.mrb[0].mxu0
      %v8564 = vadd.f32 0.0, %v8563
      %v8565 = vpop.f32.mrb[0].mxu0
      %8566 = vmatprep.mubr.bf16.mxu0 0
      %8567 = vmatmul.mubr.bf16.gmra.mrb[0].mxu0 %v7349
      %v8568 = vpop.f32.mrb[0].mxu0
      %v8569 = vadd.f32 0.0, %v8568
      %v8570 = vpop.f32.mrb[0].mxu0
      %v8571 = vpop.f32.mrb[0].mxu0
      %v8572 = vadd.f32 0.0, %v8571
      %v8573 = vpop.f32.mrb[0].mxu0
      %8574 = vmatprep.mubr.bf16.mxu0 0
      %8575 = vmatmul.mubr.bf16.gmra.mrb[0].mxu0 %v7352
      %v8576 = vpop.f32.mrb[0].mxu0
      %v8577 = vadd.f32 0.0, %v8576
      %v8578 = vpop.f32.mrb[0].mxu0
      %v8579 = vpop.f32.mrb[0].mxu0
      %v8580 = vadd.f32 0.0, %v8579
      %v8581 = vpop.f32.mrb[0].mxu0
      %8582 = vmatprep.mubr.bf16.mxu0 0
      %8583 = vmatmul.mubr.bf16.gmra.mrb[0].mxu0 %v7355
      %v8584 = vpop.f32.mrb[0].mxu0
      %v8585 = vadd.f32 0.0, %v8584
      %v8586 = vpop.f32.mrb[0].mxu0
      %v8587 = vpop.f32.mrb[0].mxu0
      %v8588 = vadd.f32 0.0, %v8587
      %v8589 = vpop.f32.mrb[0].mxu0
      %8590 = vmatprep.mubr.bf16.mxu0 0
      %8591 = vmatmul.mubr.bf16.gmra.mrb[0].mxu0 %v7358
      %v8592 = vpop.f32.mrb[0].mxu0
      %v8593 = vadd.f32 0.0, %v8592
      %v8594 = vpop.f32.mrb[0].mxu0
      %v8595 = vpop.f32.mrb[0].mxu0
      %v8596 = vadd.f32 0.0, %v8595
      %v8597 = vpop.f32.mrb[0].mxu0
      %8598 = vmatprep.mubr.bf16.mxu0 0
      %8599 = vmatmul.mubr.bf16.gmra.mrb[0].mxu0 %v7361
      %v8600 = vpop.f32.mrb[0].mxu0
      %v8601 = vadd.f32 0.0, %v8600
      %v8602 = vpop.f32.mrb[0].mxu0
      %v8603 = vpop.f32.mrb[0].mxu0
      %v8604 = vadd.f32 0.0, %v8603
      %v8605 = vpop.f32.mrb[0].mxu0
      %8606 = vmatprep.mubr.bf16.mxu0 0
      %8607 = vmatmul.mubr.bf16.gmra.mrb[0].mxu0 %v7364
      %v8608 = vpop.f32.mrb[0].mxu0
      %v8609 = vadd.f32 0.0, %v8608
      %v8610 = vpop.f32.mrb[0].mxu0
      %v8611 = vpop.f32.mrb[0].mxu0
      %v8612 = vadd.f32 0.0, %v8611
      %v8613 = vpop.f32.mrb[0].mxu0
      %8614 = vmatprep.mubr.bf16.mxu0 0
      %8615 = vmatmul.mubr.bf16.gmra.mrb[0].mxu0 %v7367
      %v8616 = vpop.f32.mrb[0].mxu0
      %v8617 = vadd.f32 0.0, %v8616
      %v8618 = vpop.f32.mrb[0].mxu0
      %v8619 = vpop.f32.mrb[0].mxu0
      %v8620 = vadd.f32 0.0, %v8619
      %v8621 = vpop.f32.mrb[0].mxu0
      %8622 = vmatprep.mubr.bf16.mxu0 0
      %8623 = vmatmul.mubr.bf16.gmra.mrb[0].mxu0 %v7370
      %v8624 = vpop.f32.mrb[0].mxu0
      %v8625 = vadd.f32 0.0, %v8624
      %v8626 = vpop.f32.mrb[0].mxu0
      %v8627 = vpop.f32.mrb[0].mxu0
      %v8628 = vadd.f32 0.0, %v8627
      %v8629 = vpop.f32.mrb[0].mxu0
      %8630 = vmatprep.mubr.bf16.mxu0 0
      %8631 = vmatmul.mubr.bf16.gmra.mrb[0].mxu0 %v7373
      %v8632 = vpop.f32.mrb[0].mxu0
      %v8633 = vadd.f32 0.0, %v8632
      %v8634 = vpop.f32.mrb[0].mxu0
      %v8635 = vpop.f32.mrb[0].mxu0
      %v8636 = vadd.f32 0.0, %v8635
      %v8637 = vpop.f32.mrb[0].mxu0
      %8638 = vmatprep.mubr.bf16.mxu0 0
      %8639 = vmatmul.mubr.bf16.gmra.mrb[0].mxu0 %v7376
      %v8640 = vpop.f32.mrb[0].mxu0
      %v8641 = vadd.f32 0.0, %v8640
      %v8642 = vpop.f32.mrb[0].mxu0
      %v8643 = vpop.f32.mrb[0].mxu0
      %v8644 = vadd.f32 0.0, %v8643
      %v8645 = vpop.f32.mrb[0].mxu0
      %8646 = vmatprep.mubr.bf16.mxu0 0
      %8647 = vmatmul.mubr.bf16.gmra.mrb[0].mxu0 %v7379
      %v8648 = vpop.f32.mrb[0].mxu0
      %v8649 = vadd.f32 0.0, %v8648
      %v8650 = vpop.f32.mrb[0].mxu0
      %v8651 = vpop.f32.mrb[0].mxu0
      %v8652 = vadd.f32 0.0, %v8651
      %v8653 = vpop.f32.mrb[0].mxu0
      %8654 = vmatprep.mubr.bf16.mxu0 0
      %8655 = vmatmul.mubr.bf16.gmra.mrb[0].mxu0 %v7382
      %v8656 = vpop.f32.mrb[0].mxu0
      %v8657 = vadd.f32 0.0, %v8656
      %v8658 = vpop.f32.mrb[0].mxu0
      %v8659 = vpop.f32.mrb[0].mxu0
      %v8660 = vadd.f32 0.0, %v8659
      %v8661 = vpop.f32.mrb[0].mxu0
      %8662 = vmatprep.mubr.bf16.mxu0 0
      %8663 = vmatmul.mubr.bf16.gmra.mrb[0].mxu0 %v7385
      %v8664 = vpop.f32.mrb[0].mxu0
      %v8665 = vadd.f32 0.0, %v8664
      %v8666 = vpop.f32.mrb[0].mxu0
      %v8667 = vpop.f32.mrb[0].mxu0
      %v8668 = vadd.f32 0.0, %v8667
      %v8669 = vpop.f32.mrb[0].mxu0
      %8670 = vmatprep.mubr.bf16.mxu0 0
      %8671 = vmatmul.mubr.bf16.gmra.mrb[0].mxu0 %v8516
      %v8672 = vpop.f32.mrb[0].mxu0
      %v8673 = vadd.f32 0.0, %v8672
      %v8674 = vpop.f32.mrb[0].mxu0
      %v8675 = vpop.f32.mrb[0].mxu0
      %v8676 = vadd.f32 0.0, %v8675
      %v8677 = vpop.f32.mrb[0].mxu0
      %8678 = vdwg.mxu0
      %v8679 = vadd.f32 %v8447, %v8553
      %v8680 = vadd.f32 %v8448, %v8556
      %v8681 = vadd.f32 %v8449, %v8561
      %v8682 = vadd.f32 %v8450, %v8564
      %v8683 = vadd.f32 %v8451, %v8569
      %v8684 = vadd.f32 %v8452, %v8572
      %v8685 = vadd.f32 %v8453, %v8577
      %v8686 = vadd.f32 %v8454, %v8580
      %v8687 = vadd.f32 %v8455, %v8585
      %v8688 = vadd.f32 %v8456, %v8588
      %v8689 = vadd.f32 %v8457, %v8593
      %v8690 = vadd.f32 %v8458, %v8596
      %v8691 = vadd.f32 %v8459, %v8601
      %v8692 = vadd.f32 %v8460, %v8604
      %v8693 = vadd.f32 %v8461, %v8609
      %v8694 = vadd.f32 %v8462, %v8612
      %v8695 = vadd.f32 %v8463, %v8617
      %v8696 = vadd.f32 %v8464, %v8620
      %v8697 = vadd.f32 %v8465, %v8625
      %v8698 = vadd.f32 %v8466, %v8628
      %v8699 = vadd.f32 %v8467, %v8633
      %v8700 = vadd.f32 %v8468, %v8636
      %v8701 = vadd.f32 %v8469, %v8641
      %v8702 = vadd.f32 %v8470, %v8644
      %v8703 = vadd.f32 %v8471, %v8649
      %v8704 = vadd.f32 %v8472, %v8652
      %v8705 = vadd.f32 %v8473, %v8657
      %v8706 = vadd.f32 %v8474, %v8660
      %v8707 = vadd.f32 %v8475, %v8665
      %v8708 = vadd.f32 %v8476, %v8668
      %v8709 = vadd.f32 %v8477, %v8673
      %v8710 = vadd.f32 %v8478, %v8676
      %v8712 = vrot.slane %v6886, 5
      %v8713 = vrot.slane %v8712, 4
      %v8714 = vrot.slane %v6887, 5
      %v8715 = vsel %vm342, %v8713, %v8714
      %v8716 = vrot.slane %v8714, 4
      %v8717 = vrot.slane %v6888, 5
      %v8718 = vsel %vm342, %v8716, %v8717
      %s8719 = scalar_lea.vmem %s3, 40
      %v8720 = vld [vmem:[%s8719] sm:$0xf]
      %v8721 = vld [vmem:[%s8719 + $0x4] sm:$0xf]
      %v8722 = vunpack.c.l.b16 %v8715
      %v8723 = vunpack.c.l.b16 %v8718
      %v8724 = vpack.c.b16 %v8723, %v8722
      %v8727 = vunpack.c.l.b16 %v8720
      %v8728 = vunpack.c.l.b16 %v8721
      %v8729 = vpack.c.b16 %v8728, %v8727
      %v8732 = vsel %vm7338, %v8724, 0
      %8734 = vmatprep.subr.bf16.mxu0 0
      %8735 = vmatpush1.bf16.msra.mxu0 %v8729
      %8736 = vmatprep.subr.bf16.mxu0 0
      %8737 = vmatpush1.bf16.msra.mxu0 0
      %8738 = vmatprep.subr.bf16.mxu0 0
      %8739 = vmatpush1.bf16.msra.mxu0 0
      %8740 = vmatprep.subr.bf16.mxu0 0
      %8741 = vmatpush1.bf16.msra.mxu0 0
      %8742 = vmatprep.subr.bf16.mxu0 0
      %8743 = vmatpush1.bf16.msra.mxu0 0
      %8744 = vmatprep.subr.bf16.mxu0 0
      %8745 = vmatpush1.bf16.msra.mxu0 0
      %8746 = vmatprep.subr.bf16.mxu0 0
      %8747 = vmatpush1.bf16.msra.mxu0 0
      %8748 = vmatprep.subr.bf16.mxu0 0
      %8749 = vmatpush1.bf16.msra.mxu0 0
      %8750 = vmatprep.subr.bf16.mxu0 0
      %8751 = vmatpush1.bf16.msra.mxu0 0
      %8752 = vmatprep.subr.bf16.mxu0 0
      %8753 = vmatpush1.bf16.msra.mxu0 0
      %8754 = vmatprep.subr.bf16.mxu0 0
      %8755 = vmatpush1.bf16.msra.mxu0 0
      %8756 = vmatprep.subr.bf16.mxu0 0
      %8757 = vmatpush1.bf16.msra.mxu0 0
      %8758 = vmatprep.subr.bf16.mxu0 0
      %8759 = vmatpush1.bf16.msra.mxu0 0
      %8760 = vmatprep.subr.bf16.mxu0 0
      %8761 = vmatpush1.bf16.msra.mxu0 0
      %8762 = vmatprep.subr.bf16.mxu0 0
      %8763 = vmatpush1.bf16.msra.mxu0 0
      %8764 = vmatprep.subr.bf16.mxu0 0
      %8765 = vmatpush1.bf16.msra.mxu0 0
      %8766 = vmatprep.mubr.bf16.mxu0 0
      %8767 = vmatmul.mubr.bf16.gmra.mrb[0].mxu0 %v8032
      %v8768 = vpop.f32.mrb[0].mxu0
      %v8769 = vadd.f32 0.0, %v8768
      %v8770 = vpop.f32.mrb[0].mxu0
      %v8771 = vpop.f32.mrb[0].mxu0
      %v8772 = vadd.f32 0.0, %v8771
      %v8773 = vpop.f32.mrb[0].mxu0
      %8774 = vmatprep.mubr.bf16.mxu0 0
      %8775 = vmatmul.mubr.bf16.gmra.mrb[0].mxu0 %v8035
      %v8776 = vpop.f32.mrb[0].mxu0
      %v8777 = vadd.f32 0.0, %v8776
      %v8778 = vpop.f32.mrb[0].mxu0
      %v8779 = vpop.f32.mrb[0].mxu0
      %v8780 = vadd.f32 0.0, %v8779
      %v8781 = vpop.f32.mrb[0].mxu0
      %8782 = vmatprep.mubr.bf16.mxu0 0
      %8783 = vmatmul.mubr.bf16.gmra.mrb[0].mxu0 %v8038
      %v8784 = vpop.f32.mrb[0].mxu0
      %v8785 = vadd.f32 0.0, %v8784
      %v8786 = vpop.f32.mrb[0].mxu0
      %v8787 = vpop.f32.mrb[0].mxu0
      %v8788 = vadd.f32 0.0, %v8787
      %v8789 = vpop.f32.mrb[0].mxu0
      %8790 = vmatprep.mubr.bf16.mxu0 0
      %8791 = vmatmul.mubr.bf16.gmra.mrb[0].mxu0 %v8041
      %v8792 = vpop.f32.mrb[0].mxu0
      %v8793 = vadd.f32 0.0, %v8792
      %v8794 = vpop.f32.mrb[0].mxu0
      %v8795 = vpop.f32.mrb[0].mxu0
      %v8796 = vadd.f32 0.0, %v8795
      %v8797 = vpop.f32.mrb[0].mxu0
      %8798 = vmatprep.mubr.bf16.mxu0 0
      %8799 = vmatmul.mubr.bf16.gmra.mrb[0].mxu0 %v8044
      %v8800 = vpop.f32.mrb[0].mxu0
      %v8801 = vadd.f32 0.0, %v8800
      %v8802 = vpop.f32.mrb[0].mxu0
      %v8803 = vpop.f32.mrb[0].mxu0
      %v8804 = vadd.f32 0.0, %v8803
      %v8805 = vpop.f32.mrb[0].mxu0
      %8806 = vmatprep.mubr.bf16.mxu0 0
      %8807 = vmatmul.mubr.bf16.gmra.mrb[0].mxu0 %v8047
      %v8808 = vpop.f32.mrb[0].mxu0
      %v8809 = vadd.f32 0.0, %v8808
      %v8810 = vpop.f32.mrb[0].mxu0
      %v8811 = vpop.f32.mrb[0].mxu0
      %v8812 = vadd.f32 0.0, %v8811
      %v8813 = vpop.f32.mrb[0].mxu0
      %8814 = vmatprep.mubr.bf16.mxu0 0
      %8815 = vmatmul.mubr.bf16.gmra.mrb[0].mxu0 %v8050
      %v8816 = vpop.f32.mrb[0].mxu0
      %v8817 = vadd.f32 0.0, %v8816
      %v8818 = vpop.f32.mrb[0].mxu0
      %v8819 = vpop.f32.mrb[0].mxu0
      %v8820 = vadd.f32 0.0, %v8819
      %v8821 = vpop.f32.mrb[0].mxu0
      %8822 = vmatprep.mubr.bf16.mxu0 0
      %8823 = vmatmul.mubr.bf16.gmra.mrb[0].mxu0 %v8053
      %v8824 = vpop.f32.mrb[0].mxu0
      %v8825 = vadd.f32 0.0, %v8824
      %v8826 = vpop.f32.mrb[0].mxu0
      %v8827 = vpop.f32.mrb[0].mxu0
      %v8828 = vadd.f32 0.0, %v8827
      %v8829 = vpop.f32.mrb[0].mxu0
      %8830 = vmatprep.mubr.bf16.mxu0 0
      %8831 = vmatmul.mubr.bf16.gmra.mrb[0].mxu0 %v8056
      %v8832 = vpop.f32.mrb[0].mxu0
      %v8833 = vadd.f32 0.0, %v8832
      %v8834 = vpop.f32.mrb[0].mxu0
      %v8835 = vpop.f32.mrb[0].mxu0
      %v8836 = vadd.f32 0.0, %v8835
      %v8837 = vpop.f32.mrb[0].mxu0
      %8838 = vmatprep.mubr.bf16.mxu0 0
      %8839 = vmatmul.mubr.bf16.gmra.mrb[0].mxu0 %v8059
      %v8840 = vpop.f32.mrb[0].mxu0
      %v8841 = vadd.f32 0.0, %v8840
      %v8842 = vpop.f32.mrb[0].mxu0
      %v8843 = vpop.f32.mrb[0].mxu0
      %v8844 = vadd.f32 0.0, %v8843
      %v8845 = vpop.f32.mrb[0].mxu0
      %8846 = vmatprep.mubr.bf16.mxu0 0
      %8847 = vmatmul.mubr.bf16.gmra.mrb[0].mxu0 %v8062
      %v8848 = vpop.f32.mrb[0].mxu0
      %v8849 = vadd.f32 0.0, %v8848
      %v8850 = vpop.f32.mrb[0].mxu0
      %v8851 = vpop.f32.mrb[0].mxu0
      %v8852 = vadd.f32 0.0, %v8851
      %v8853 = vpop.f32.mrb[0].mxu0
      %8854 = vmatprep.mubr.bf16.mxu0 0
      %8855 = vmatmul.mubr.bf16.gmra.mrb[0].mxu0 %v8065
      %v8856 = vpop.f32.mrb[0].mxu0
      %v8857 = vadd.f32 0.0, %v8856
      %v8858 = vpop.f32.mrb[0].mxu0
      %v8859 = vpop.f32.mrb[0].mxu0
      %v8860 = vadd.f32 0.0, %v8859
      %v8861 = vpop.f32.mrb[0].mxu0
      %8862 = vmatprep.mubr.bf16.mxu0 0
      %8863 = vmatmul.mubr.bf16.gmra.mrb[0].mxu0 %v8068
      %v8864 = vpop.f32.mrb[0].mxu0
      %v8865 = vadd.f32 0.0, %v8864
      %v8866 = vpop.f32.mrb[0].mxu0
      %v8867 = vpop.f32.mrb[0].mxu0
      %v8868 = vadd.f32 0.0, %v8867
      %v8869 = vpop.f32.mrb[0].mxu0
      %8870 = vmatprep.mubr.bf16.mxu0 0
      %8871 = vmatmul.mubr.bf16.gmra.mrb[0].mxu0 %v8071
      %v8872 = vpop.f32.mrb[0].mxu0
      %v8873 = vadd.f32 0.0, %v8872
      %v8874 = vpop.f32.mrb[0].mxu0
      %v8875 = vpop.f32.mrb[0].mxu0
      %v8876 = vadd.f32 0.0, %v8875
      %v8877 = vpop.f32.mrb[0].mxu0
      %8878 = vmatprep.mubr.bf16.mxu0 0
      %8879 = vmatmul.mubr.bf16.gmra.mrb[0].mxu0 %v8074
      %v8880 = vpop.f32.mrb[0].mxu0
      %v8881 = vadd.f32 0.0, %v8880
      %v8882 = vpop.f32.mrb[0].mxu0
      %v8883 = vpop.f32.mrb[0].mxu0
      %v8884 = vadd.f32 0.0, %v8883
      %v8885 = vpop.f32.mrb[0].mxu0
      %8886 = vmatprep.mubr.bf16.mxu0 0
      %8887 = vmatmul.mubr.bf16.gmra.mrb[0].mxu0 %v8732
      %v8888 = vpop.f32.mrb[0].mxu0
      %v8889 = vadd.f32 0.0, %v8888
      %v8890 = vpop.f32.mrb[0].mxu0
      %v8891 = vpop.f32.mrb[0].mxu0
      %v8892 = vadd.f32 0.0, %v8891
      %v8893 = vpop.f32.mrb[0].mxu0
      %8894 = vdwg.mxu0
      %v8895 = vadd.f32 %v8679, %v8769
      %v8896 = vadd.f32 %v8680, %v8772
      %v8897 = vadd.f32 %v8681, %v8777
      %v8898 = vadd.f32 %v8682, %v8780
      %v8899 = vadd.f32 %v8683, %v8785
      %v8900 = vadd.f32 %v8684, %v8788
      %v8901 = vadd.f32 %v8685, %v8793
      %v8902 = vadd.f32 %v8686, %v8796
      %v8903 = vadd.f32 %v8687, %v8801
      %v8904 = vadd.f32 %v8688, %v8804
      %v8905 = vadd.f32 %v8689, %v8809
      %v8906 = vadd.f32 %v8690, %v8812
      %v8907 = vadd.f32 %v8691, %v8817
      %v8908 = vadd.f32 %v8692, %v8820
      %v8909 = vadd.f32 %v8693, %v8825
      %v8910 = vadd.f32 %v8694, %v8828
      %v8911 = vadd.f32 %v8695, %v8833
      %v8912 = vadd.f32 %v8696, %v8836
      %v8913 = vadd.f32 %v8697, %v8841
      %v8914 = vadd.f32 %v8698, %v8844
      %v8915 = vadd.f32 %v8699, %v8849
      %v8916 = vadd.f32 %v8700, %v8852
      %v8917 = vadd.f32 %v8701, %v8857
      %v8918 = vadd.f32 %v8702, %v8860
      %v8919 = vadd.f32 %v8703, %v8865
      %v8920 = vadd.f32 %v8704, %v8868
      %v8921 = vadd.f32 %v8705, %v8873
      %v8922 = vadd.f32 %v8706, %v8876
      %v8923 = vadd.f32 %v8707, %v8881
      %v8924 = vadd.f32 %v8708, %v8884
      %v8925 = vadd.f32 %v8709, %v8889
      %v8926 = vadd.f32 %v8710, %v8892
      %s8927 = scalar_lea.vmem %s3, 48
      %v8928 = vld [vmem:[%s8927] sm:$0xf]
      %v8929 = vld [vmem:[%s8927 + $0x4] sm:$0xf]
      %v8932 = vunpack.c.l.b16 %v6889
      %v8933 = vunpack.c.l.b16 %v6890
      %v8934 = vpack.c.b16 %v8933, %v8932
      %v8937 = vunpack.c.l.b16 %v8928
      %v8938 = vunpack.c.l.b16 %v8929
      %v8939 = vpack.c.b16 %v8938, %v8937
      %v8942 = vsel %vm7338, %v8934, 0
      %8944 = vmatprep.subr.bf16.mxu0 0
      %8945 = vmatpush1.bf16.msra.mxu0 %v8939
      %8946 = vmatprep.subr.bf16.mxu0 0
      %8947 = vmatpush1.bf16.msra.mxu0 0
      %8948 = vmatprep.subr.bf16.mxu0 0
      %8949 = vmatpush1.bf16.msra.mxu0 0
      %8950 = vmatprep.subr.bf16.mxu0 0
      %8951 = vmatpush1.bf16.msra.mxu0 0
      %8952 = vmatprep.subr.bf16.mxu0 0
      %8953 = vmatpush1.bf16.msra.mxu0 0
      %8954 = vmatprep.subr.bf16.mxu0 0
      %8955 = vmatpush1.bf16.msra.mxu0 0
      %8956 = vmatprep.subr.bf16.mxu0 0
      %8957 = vmatpush1.bf16.msra.mxu0 0
      %8958 = vmatprep.subr.bf16.mxu0 0
      %8959 = vmatpush1.bf16.msra.mxu0 0
      %8960 = vmatprep.subr.bf16.mxu0 0
      %8961 = vmatpush1.bf16.msra.mxu0 0
      %8962 = vmatprep.subr.bf16.mxu0 0
      %8963 = vmatpush1.bf16.msra.mxu0 0
      %8964 = vmatprep.subr.bf16.mxu0 0
      %8965 = vmatpush1.bf16.msra.mxu0 0
      %8966 = vmatprep.subr.bf16.mxu0 0
      %8967 = vmatpush1.bf16.msra.mxu0 0
      %8968 = vmatprep.subr.bf16.mxu0 0
      %8969 = vmatpush1.bf16.msra.mxu0 0
      %8970 = vmatprep.subr.bf16.mxu0 0
      %8971 = vmatpush1.bf16.msra.mxu0 0
      %8972 = vmatprep.subr.bf16.mxu0 0
      %8973 = vmatpush1.bf16.msra.mxu0 0
      %8974 = vmatprep.subr.bf16.mxu0 0
      %8975 = vmatpush1.bf16.msra.mxu0 0
      %8976 = vmatprep.mubr.bf16.mxu0 0
      %8977 = vmatmul.mubr.bf16.gmra.mrb[0].mxu0 %v7641
      %v8978 = vpop.f32.mrb[0].mxu0
      %v8979 = vadd.f32 0.0, %v8978
      %v8980 = vpop.f32.mrb[0].mxu0
      %v8981 = vpop.f32.mrb[0].mxu0
      %v8982 = vadd.f32 0.0, %v8981
      %v8983 = vpop.f32.mrb[0].mxu0
      %8984 = vmatprep.mubr.bf16.mxu0 0
      %8985 = vmatmul.mubr.bf16.gmra.mrb[0].mxu0 %v7644
      %v8986 = vpop.f32.mrb[0].mxu0
      %v8987 = vadd.f32 0.0, %v8986
      %v8988 = vpop.f32.mrb[0].mxu0
      %v8989 = vpop.f32.mrb[0].mxu0
      %v8990 = vadd.f32 0.0, %v8989
      %v8991 = vpop.f32.mrb[0].mxu0
      %8992 = vmatprep.mubr.bf16.mxu0 0
      %8993 = vmatmul.mubr.bf16.gmra.mrb[0].mxu0 %v7647
      %v8994 = vpop.f32.mrb[0].mxu0
      %v8995 = vadd.f32 0.0, %v8994
      %v8996 = vpop.f32.mrb[0].mxu0
      %v8997 = vpop.f32.mrb[0].mxu0
      %v8998 = vadd.f32 0.0, %v8997
      %v8999 = vpop.f32.mrb[0].mxu0
      %9000 = vmatprep.mubr.bf16.mxu0 0
      %9001 = vmatmul.mubr.bf16.gmra.mrb[0].mxu0 %v7650
      %v9002 = vpop.f32.mrb[0].mxu0
      %v9003 = vadd.f32 0.0, %v9002
      %v9004 = vpop.f32.mrb[0].mxu0
      %v9005 = vpop.f32.mrb[0].mxu0
      %v9006 = vadd.f32 0.0, %v9005
      %v9007 = vpop.f32.mrb[0].mxu0
      %9008 = vmatprep.mubr.bf16.mxu0 0
      %9009 = vmatmul.mubr.bf16.gmra.mrb[0].mxu0 %v7653
      %v9010 = vpop.f32.mrb[0].mxu0
      %v9011 = vadd.f32 0.0, %v9010
      %v9012 = vpop.f32.mrb[0].mxu0
      %v9013 = vpop.f32.mrb[0].mxu0
      %v9014 = vadd.f32 0.0, %v9013
      %v9015 = vpop.f32.mrb[0].mxu0
      %9016 = vmatprep.mubr.bf16.mxu0 0
      %9017 = vmatmul.mubr.bf16.gmra.mrb[0].mxu0 %v7656
      %v9018 = vpop.f32.mrb[0].mxu0
      %v9019 = vadd.f32 0.0, %v9018
      %v9020 = vpop.f32.mrb[0].mxu0
      %v9021 = vpop.f32.mrb[0].mxu0
      %v9022 = vadd.f32 0.0, %v9021
      %v9023 = vpop.f32.mrb[0].mxu0
      %9024 = vmatprep.mubr.bf16.mxu0 0
      %9025 = vmatmul.mubr.bf16.gmra.mrb[0].mxu0 %v7659
      %v9026 = vpop.f32.mrb[0].mxu0
      %v9027 = vadd.f32 0.0, %v9026
      %v9028 = vpop.f32.mrb[0].mxu0
      %v9029 = vpop.f32.mrb[0].mxu0
      %v9030 = vadd.f32 0.0, %v9029
      %v9031 = vpop.f32.mrb[0].mxu0
      %9032 = vmatprep.mubr.bf16.mxu0 0
      %9033 = vmatmul.mubr.bf16.gmra.mrb[0].mxu0 %v7662
      %v9034 = vpop.f32.mrb[0].mxu0
      %v9035 = vadd.f32 0.0, %v9034
      %v9036 = vpop.f32.mrb[0].mxu0
      %v9037 = vpop.f32.mrb[0].mxu0
      %v9038 = vadd.f32 0.0, %v9037
      %v9039 = vpop.f32.mrb[0].mxu0
      %9040 = vmatprep.mubr.bf16.mxu0 0
      %9041 = vmatmul.mubr.bf16.gmra.mrb[0].mxu0 %v7665
      %v9042 = vpop.f32.mrb[0].mxu0
      %v9043 = vadd.f32 0.0, %v9042
      %v9044 = vpop.f32.mrb[0].mxu0
      %v9045 = vpop.f32.mrb[0].mxu0
      %v9046 = vadd.f32 0.0, %v9045
      %v9047 = vpop.f32.mrb[0].mxu0
      %9048 = vmatprep.mubr.bf16.mxu0 0
      %9049 = vmatmul.mubr.bf16.gmra.mrb[0].mxu0 %v7668
      %v9050 = vpop.f32.mrb[0].mxu0
      %v9051 = vadd.f32 0.0, %v9050
      %v9052 = vpop.f32.mrb[0].mxu0
      %v9053 = vpop.f32.mrb[0].mxu0
      %v9054 = vadd.f32 0.0, %v9053
      %v9055 = vpop.f32.mrb[0].mxu0
      %9056 = vmatprep.mubr.bf16.mxu0 0
      %9057 = vmatmul.mubr.bf16.gmra.mrb[0].mxu0 %v7671
      %v9058 = vpop.f32.mrb[0].mxu0
      %v9059 = vadd.f32 0.0, %v9058
      %v9060 = vpop.f32.mrb[0].mxu0
      %v9061 = vpop.f32.mrb[0].mxu0
      %v9062 = vadd.f32 0.0, %v9061
      %v9063 = vpop.f32.mrb[0].mxu0
      %9064 = vmatprep.mubr.bf16.mxu0 0
      %9065 = vmatmul.mubr.bf16.gmra.mrb[0].mxu0 %v7674
      %v9066 = vpop.f32.mrb[0].mxu0
      %v9067 = vadd.f32 0.0, %v9066
      %v9068 = vpop.f32.mrb[0].mxu0
      %v9069 = vpop.f32.mrb[0].mxu0
      %v9070 = vadd.f32 0.0, %v9069
      %v9071 = vpop.f32.mrb[0].mxu0
      %9072 = vmatprep.mubr.bf16.mxu0 0
      %9073 = vmatmul.mubr.bf16.gmra.mrb[0].mxu0 %v7677
      %v9074 = vpop.f32.mrb[0].mxu0
      %v9075 = vadd.f32 0.0, %v9074
      %v9076 = vpop.f32.mrb[0].mxu0
      %v9077 = vpop.f32.mrb[0].mxu0
      %v9078 = vadd.f32 0.0, %v9077
      %v9079 = vpop.f32.mrb[0].mxu0
      %9080 = vmatprep.mubr.bf16.mxu0 0
      %9081 = vmatmul.mubr.bf16.gmra.mrb[0].mxu0 %v7680
      %v9082 = vpop.f32.mrb[0].mxu0
      %v9083 = vadd.f32 0.0, %v9082
      %v9084 = vpop.f32.mrb[0].mxu0
      %v9085 = vpop.f32.mrb[0].mxu0
      %v9086 = vadd.f32 0.0, %v9085
      %v9087 = vpop.f32.mrb[0].mxu0
      %9088 = vmatprep.mubr.bf16.mxu0 0
      %9089 = vmatmul.mubr.bf16.gmra.mrb[0].mxu0 %v8284
      %v9090 = vpop.f32.mrb[0].mxu0
      %v9091 = vadd.f32 0.0, %v9090
      %v9092 = vpop.f32.mrb[0].mxu0
      %v9093 = vpop.f32.mrb[0].mxu0
      %v9094 = vadd.f32 0.0, %v9093
      %v9095 = vpop.f32.mrb[0].mxu0
      %9096 = vmatprep.mubr.bf16.mxu0 0
      %9097 = vmatmul.mubr.bf16.gmra.mrb[0].mxu0 %v8942
      %v9098 = vpop.f32.mrb[0].mxu0
      %v9099 = vadd.f32 0.0, %v9098
      %v9100 = vpop.f32.mrb[0].mxu0
      %v9101 = vpop.f32.mrb[0].mxu0
      %v9102 = vadd.f32 0.0, %v9101
      %v9103 = vpop.f32.mrb[0].mxu0
      %9104 = vdwg.mxu0
      %v9105 = vadd.f32 %v8895, %v8979
      %v9106 = vadd.f32 %v8896, %v8982
      %v9107 = vadd.f32 %v8897, %v8987
      %v9108 = vadd.f32 %v8898, %v8990
      %v9109 = vadd.f32 %v8899, %v8995
      %v9110 = vadd.f32 %v8900, %v8998
      %v9111 = vadd.f32 %v8901, %v9003
      %v9112 = vadd.f32 %v8902, %v9006
      %v9113 = vadd.f32 %v8903, %v9011
      %v9114 = vadd.f32 %v8904, %v9014
      %v9115 = vadd.f32 %v8905, %v9019
      %v9116 = vadd.f32 %v8906, %v9022
      %v9117 = vadd.f32 %v8907, %v9027
      %v9118 = vadd.f32 %v8908, %v9030
      %v9119 = vadd.f32 %v8909, %v9035
      %v9120 = vadd.f32 %v8910, %v9038
      %v9121 = vadd.f32 %v8911, %v9043
      %v9122 = vadd.f32 %v8912, %v9046
      %v9123 = vadd.f32 %v8913, %v9051
      %v9124 = vadd.f32 %v8914, %v9054
      %v9125 = vadd.f32 %v8915, %v9059
      %v9126 = vadd.f32 %v8916, %v9062
      %v9127 = vadd.f32 %v8917, %v9067
      %v9128 = vadd.f32 %v8918, %v9070
      %v9129 = vadd.f32 %v8919, %v9075
      %v9130 = vadd.f32 %v8920, %v9078
      %v9131 = vadd.f32 %v8921, %v9083
      %v9132 = vadd.f32 %v8922, %v9086
      %v9133 = vadd.f32 %v8923, %v9091
      %v9134 = vadd.f32 %v8924, %v9094
      %v9135 = vadd.f32 %v8925, %v9099
      %v9136 = vadd.f32 %v8926, %v9102
      %v9138 = vshrl.u32 %v6889, 16
      %v9140 = vrot.slane %v9138, 4
      %v9141 = vshll.u32 %v6889, 16
      %v9143 = vrot.slane %v9141, 5
      %v9144 = vor.u32 %v9140, %v9143
      %v9145 = vrot.slane %v9144, 4
      %v9147 = vshll.u32 %v6890, 16
      %v9149 = vrot.slane %v9147, 5
      %v9150 = vsel %vm6896, %v9145, %v9149
      %v9151 = vshrl.u32 %v6890, 16
      %v9153 = vrot.slane %v9151, 4
      %v9154 = vor.u32 %v9153, %v9149
      %v9155 = vrot.slane %v9154, 4
      %v9157 = vshll.u32 %v6891, 16
      %v9159 = vrot.slane %v9157, 5
      %v9160 = vsel %vm6896, %v9155, %v9159
      %s9161 = scalar_lea.vmem %s3, 56
      %v9162 = vld [vmem:[%s9161] sm:$0xf]
      %v9163 = vld [vmem:[%s9161 + $0x4] sm:$0xf]
      %v9164 = vunpack.c.l.b16 %v9150
      %v9165 = vunpack.c.l.b16 %v9160
      %v9166 = vpack.c.b16 %v9165, %v9164
      %v9169 = vunpack.c.l.b16 %v9162
      %v9170 = vunpack.c.l.b16 %v9163
      %v9171 = vpack.c.b16 %v9170, %v9169
      %v9174 = vsel %vm7338, %v9166, 0
      %9176 = vmatprep.subr.bf16.mxu0 0
      %9177 = vmatpush1.bf16.msra.mxu0 %v9171
      %9178 = vmatprep.subr.bf16.mxu0 0
      %9179 = vmatpush1.bf16.msra.mxu0 0
      %9180 = vmatprep.subr.bf16.mxu0 0
      %9181 = vmatpush1.bf16.msra.mxu0 0
      %9182 = vmatprep.subr.bf16.mxu0 0
      %9183 = vmatpush1.bf16.msra.mxu0 0
      %9184 = vmatprep.subr.bf16.mxu0 0
      %9185 = vmatpush1.bf16.msra.mxu0 0
      %9186 = vmatprep.subr.bf16.mxu0 0
      %9187 = vmatpush1.bf16.msra.mxu0 0
      %9188 = vmatprep.subr.bf16.mxu0 0
      %9189 = vmatpush1.bf16.msra.mxu0 0
      %9190 = vmatprep.subr.bf16.mxu0 0
      %9191 = vmatpush1.bf16.msra.mxu0 0
      %9192 = vmatprep.subr.bf16.mxu0 0
      %9193 = vmatpush1.bf16.msra.mxu0 0
      %9194 = vmatprep.subr.bf16.mxu0 0
      %9195 = vmatpush1.bf16.msra.mxu0 0
      %9196 = vmatprep.subr.bf16.mxu0 0
      %9197 = vmatpush1.bf16.msra.mxu0 0
      %9198 = vmatprep.subr.bf16.mxu0 0
      %9199 = vmatpush1.bf16.msra.mxu0 0
      %9200 = vmatprep.subr.bf16.mxu0 0
      %9201 = vmatpush1.bf16.msra.mxu0 0
      %9202 = vmatprep.subr.bf16.mxu0 0
      %9203 = vmatpush1.bf16.msra.mxu0 0
      %9204 = vmatprep.subr.bf16.mxu0 0
      %9205 = vmatpush1.bf16.msra.mxu0 0
      %9206 = vmatprep.subr.bf16.mxu0 0
      %9207 = vmatpush1.bf16.msra.mxu0 0
      %9208 = vmatprep.mubr.bf16.mxu0 0
      %9209 = vmatmul.mubr.bf16.gmra.mrb[0].mxu0 %v7346
      %v9210 = vpop.f32.mrb[0].mxu0
      %v9211 = vadd.f32 0.0, %v9210
      %v9212 = vpop.f32.mrb[0].mxu0
      %v9213 = vpop.f32.mrb[0].mxu0
      %v9214 = vadd.f32 0.0, %v9213
      %v9215 = vpop.f32.mrb[0].mxu0
      %9216 = vmatprep.mubr.bf16.mxu0 0
      %9217 = vmatmul.mubr.bf16.gmra.mrb[0].mxu0 %v7349
      %v9218 = vpop.f32.mrb[0].mxu0
      %v9219 = vadd.f32 0.0, %v9218
      %v9220 = vpop.f32.mrb[0].mxu0
      %v9221 = vpop.f32.mrb[0].mxu0
      %v9222 = vadd.f32 0.0, %v9221
      %v9223 = vpop.f32.mrb[0].mxu0
      %9224 = vmatprep.mubr.bf16.mxu0 0
      %9225 = vmatmul.mubr.bf16.gmra.mrb[0].mxu0 %v7352
      %v9226 = vpop.f32.mrb[0].mxu0
      %v9227 = vadd.f32 0.0, %v9226
      %v9228 = vpop.f32.mrb[0].mxu0
      %v9229 = vpop.f32.mrb[0].mxu0
      %v9230 = vadd.f32 0.0, %v9229
      %v9231 = vpop.f32.mrb[0].mxu0
      %9232 = vmatprep.mubr.bf16.mxu0 0
      %9233 = vmatmul.mubr.bf16.gmra.mrb[0].mxu0 %v7355
      %v9234 = vpop.f32.mrb[0].mxu0
      %v9235 = vadd.f32 0.0, %v9234
      %v9236 = vpop.f32.mrb[0].mxu0
      %v9237 = vpop.f32.mrb[0].mxu0
      %v9238 = vadd.f32 0.0, %v9237
      %v9239 = vpop.f32.mrb[0].mxu0
      %9240 = vmatprep.mubr.bf16.mxu0 0
      %9241 = vmatmul.mubr.bf16.gmra.mrb[0].mxu0 %v7358
      %v9242 = vpop.f32.mrb[0].mxu0
      %v9243 = vadd.f32 0.0, %v9242
      %v9244 = vpop.f32.mrb[0].mxu0
      %v9245 = vpop.f32.mrb[0].mxu0
      %v9246 = vadd.f32 0.0, %v9245
      %v9247 = vpop.f32.mrb[0].mxu0
      %9248 = vmatprep.mubr.bf16.mxu0 0
      %9249 = vmatmul.mubr.bf16.gmra.mrb[0].mxu0 %v7361
      %v9250 = vpop.f32.mrb[0].mxu0
      %v9251 = vadd.f32 0.0, %v9250
      %v9252 = vpop.f32.mrb[0].mxu0
      %v9253 = vpop.f32.mrb[0].mxu0
      %v9254 = vadd.f32 0.0, %v9253
      %v9255 = vpop.f32.mrb[0].mxu0
      %9256 = vmatprep.mubr.bf16.mxu0 0
      %9257 = vmatmul.mubr.bf16.gmra.mrb[0].mxu0 %v7364
      %v9258 = vpop.f32.mrb[0].mxu0
      %v9259 = vadd.f32 0.0, %v9258
      %v9260 = vpop.f32.mrb[0].mxu0
      %v9261 = vpop.f32.mrb[0].mxu0
      %v9262 = vadd.f32 0.0, %v9261
      %v9263 = vpop.f32.mrb[0].mxu0
      %9264 = vmatprep.mubr.bf16.mxu0 0
      %9265 = vmatmul.mubr.bf16.gmra.mrb[0].mxu0 %v7367
      %v9266 = vpop.f32.mrb[0].mxu0
      %v9267 = vadd.f32 0.0, %v9266
      %v9268 = vpop.f32.mrb[0].mxu0
      %v9269 = vpop.f32.mrb[0].mxu0
      %v9270 = vadd.f32 0.0, %v9269
      %v9271 = vpop.f32.mrb[0].mxu0
      %9272 = vmatprep.mubr.bf16.mxu0 0
      %9273 = vmatmul.mubr.bf16.gmra.mrb[0].mxu0 %v7370
      %v9274 = vpop.f32.mrb[0].mxu0
      %v9275 = vadd.f32 0.0, %v9274
      %v9276 = vpop.f32.mrb[0].mxu0
      %v9277 = vpop.f32.mrb[0].mxu0
      %v9278 = vadd.f32 0.0, %v9277
      %v9279 = vpop.f32.mrb[0].mxu0
      %9280 = vmatprep.mubr.bf16.mxu0 0
      %9281 = vmatmul.mubr.bf16.gmra.mrb[0].mxu0 %v7373
      %v9282 = vpop.f32.mrb[0].mxu0
      %v9283 = vadd.f32 0.0, %v9282
      %v9284 = vpop.f32.mrb[0].mxu0
      %v9285 = vpop.f32.mrb[0].mxu0
      %v9286 = vadd.f32 0.0, %v9285
      %v9287 = vpop.f32.mrb[0].mxu0
      %9288 = vmatprep.mubr.bf16.mxu0 0
      %9289 = vmatmul.mubr.bf16.gmra.mrb[0].mxu0 %v7376
      %v9290 = vpop.f32.mrb[0].mxu0
      %v9291 = vadd.f32 0.0, %v9290
      %v9292 = vpop.f32.mrb[0].mxu0
      %v9293 = vpop.f32.mrb[0].mxu0
      %v9294 = vadd.f32 0.0, %v9293
      %v9295 = vpop.f32.mrb[0].mxu0
      %9296 = vmatprep.mubr.bf16.mxu0 0
      %9297 = vmatmul.mubr.bf16.gmra.mrb[0].mxu0 %v7379
      %v9298 = vpop.f32.mrb[0].mxu0
      %v9299 = vadd.f32 0.0, %v9298
      %v9300 = vpop.f32.mrb[0].mxu0
      %v9301 = vpop.f32.mrb[0].mxu0
      %v9302 = vadd.f32 0.0, %v9301
      %v9303 = vpop.f32.mrb[0].mxu0
      %9304 = vmatprep.mubr.bf16.mxu0 0
      %9305 = vmatmul.mubr.bf16.gmra.mrb[0].mxu0 %v7382
      %v9306 = vpop.f32.mrb[0].mxu0
      %v9307 = vadd.f32 0.0, %v9306
      %v9308 = vpop.f32.mrb[0].mxu0
      %v9309 = vpop.f32.mrb[0].mxu0
      %v9310 = vadd.f32 0.0, %v9309
      %v9311 = vpop.f32.mrb[0].mxu0
      %9312 = vmatprep.mubr.bf16.mxu0 0
      %9313 = vmatmul.mubr.bf16.gmra.mrb[0].mxu0 %v7385
      %v9314 = vpop.f32.mrb[0].mxu0
      %v9315 = vadd.f32 0.0, %v9314
      %v9316 = vpop.f32.mrb[0].mxu0
      %v9317 = vpop.f32.mrb[0].mxu0
      %v9318 = vadd.f32 0.0, %v9317
      %v9319 = vpop.f32.mrb[0].mxu0
      %9320 = vmatprep.mubr.bf16.mxu0 0
      %9321 = vmatmul.mubr.bf16.gmra.mrb[0].mxu0 %v8516
      %v9322 = vpop.f32.mrb[0].mxu0
      %v9323 = vadd.f32 0.0, %v9322
      %v9324 = vpop.f32.mrb[0].mxu0
      %v9325 = vpop.f32.mrb[0].mxu0
      %v9326 = vadd.f32 0.0, %v9325
      %v9327 = vpop.f32.mrb[0].mxu0
      %9328 = vmatprep.mubr.bf16.mxu0 0
      %9329 = vmatmul.mubr.bf16.gmra.mrb[0].mxu0 %v9174
      %v9330 = vpop.f32.mrb[0].mxu0
      %v9331 = vadd.f32 0.0, %v9330
      %v9332 = vpop.f32.mrb[0].mxu0
      %v9333 = vpop.f32.mrb[0].mxu0
      %v9334 = vadd.f32 0.0, %v9333
      %v9335 = vpop.f32.mrb[0].mxu0
      %9336 = vdwg.mxu0
      %v9337 = vadd.f32 %v9105, %v9211
      %v9338 = vadd.f32 %v9106, %v9214
      %v9339 = vadd.f32 %v9107, %v9219
      %v9340 = vadd.f32 %v9108, %v9222
      %v9341 = vadd.f32 %v9109, %v9227
      %v9342 = vadd.f32 %v9110, %v9230
      %v9343 = vadd.f32 %v9111, %v9235
      %v9344 = vadd.f32 %v9112, %v9238
      %v9345 = vadd.f32 %v9113, %v9243
      %v9346 = vadd.f32 %v9114, %v9246
      %v9347 = vadd.f32 %v9115, %v9251
      %v9348 = vadd.f32 %v9116, %v9254
      %v9349 = vadd.f32 %v9117, %v9259
      %v9350 = vadd.f32 %v9118, %v9262
      %v9351 = vadd.f32 %v9119, %v9267
      %v9352 = vadd.f32 %v9120, %v9270
      %v9353 = vadd.f32 %v9121, %v9275
      %v9354 = vadd.f32 %v9122, %v9278
      %v9355 = vadd.f32 %v9123, %v9283
      %v9356 = vadd.f32 %v9124, %v9286
      %v9357 = vadd.f32 %v9125, %v9291
      %v9358 = vadd.f32 %v9126, %v9294
      %v9359 = vadd.f32 %v9127, %v9299
      %v9360 = vadd.f32 %v9128, %v9302
      %v9361 = vadd.f32 %v9129, %v9307
      %v9362 = vadd.f32 %v9130, %v9310
      %v9363 = vadd.f32 %v9131, %v9315
      %v9364 = vadd.f32 %v9132, %v9318
      %v9365 = vadd.f32 %v9133, %v9323
      %v9366 = vadd.f32 %v9134, %v9326
      %v9367 = vadd.f32 %v9135, %v9331
      %v9368 = vadd.f32 %v9136, %v9334
      %v9370 = vrot.slane %v6889, 5
      %v9371 = vrot.slane %v9370, 4
      %v9372 = vrot.slane %v6890, 5
      %v9373 = vsel %vm342, %v9371, %v9372
      %v9374 = vrot.slane %v9372, 4
      %v9375 = vrot.slane %v6891, 5
      %v9376 = vsel %vm342, %v9374, %v9375
      %s9377 = scalar_lea.vmem %s3, 64
      %v9378 = vld [vmem:[%s9377] sm:$0xf]
      %v9379 = vld [vmem:[%s9377 + $0x4] sm:$0xf]
      %v9380 = vunpack.c.l.b16 %v9373
      %v9381 = vunpack.c.l.b16 %v9376
      %v9382 = vpack.c.b16 %v9381, %v9380
      %v9385 = vunpack.c.l.b16 %v9378
      %v9386 = vunpack.c.l.b16 %v9379
      %v9387 = vpack.c.b16 %v9386, %v9385
      %v9390 = vsel %vm7338, %v9382, 0
      %9392 = vmatprep.subr.bf16.mxu0 0
      %9393 = vmatpush1.bf16.msra.mxu0 %v9387
      %9394 = vmatprep.subr.bf16.mxu0 0
      %9395 = vmatpush1.bf16.msra.mxu0 0
      %9396 = vmatprep.subr.bf16.mxu0 0
      %9397 = vmatpush1.bf16.msra.mxu0 0
      %9398 = vmatprep.subr.bf16.mxu0 0
      %9399 = vmatpush1.bf16.msra.mxu0 0
      %9400 = vmatprep.subr.bf16.mxu0 0
      %9401 = vmatpush1.bf16.msra.mxu0 0
      %9402 = vmatprep.subr.bf16.mxu0 0
      %9403 = vmatpush1.bf16.msra.mxu0 0
      %9404 = vmatprep.subr.bf16.mxu0 0
      %9405 = vmatpush1.bf16.msra.mxu0 0
      %9406 = vmatprep.subr.bf16.mxu0 0
      %9407 = vmatpush1.bf16.msra.mxu0 0
      %9408 = vmatprep.subr.bf16.mxu0 0
      %9409 = vmatpush1.bf16.msra.mxu0 0
      %9410 = vmatprep.subr.bf16.mxu0 0
      %9411 = vmatpush1.bf16.msra.mxu0 0
      %9412 = vmatprep.subr.bf16.mxu0 0
      %9413 = vmatpush1.bf16.msra.mxu0 0
      %9414 = vmatprep.subr.bf16.mxu0 0
      %9415 = vmatpush1.bf16.msra.mxu0 0
      %9416 = vmatprep.subr.bf16.mxu0 0
      %9417 = vmatpush1.bf16.msra.mxu0 0
      %9418 = vmatprep.subr.bf16.mxu0 0
      %9419 = vmatpush1.bf16.msra.mxu0 0
      %9420 = vmatprep.subr.bf16.mxu0 0
      %9421 = vmatpush1.bf16.msra.mxu0 0
      %9422 = vmatprep.subr.bf16.mxu0 0
      %9423 = vmatpush1.bf16.msra.mxu0 0
      %9424 = vmatprep.mubr.bf16.mxu0 0
      %9425 = vmatmul.mubr.bf16.gmra.mrb[0].mxu0 %v8035
      %v9426 = vpop.f32.mrb[0].mxu0
      %v9427 = vadd.f32 0.0, %v9426
      %v9428 = vpop.f32.mrb[0].mxu0
      %v9429 = vpop.f32.mrb[0].mxu0
      %v9430 = vadd.f32 0.0, %v9429
      %v9431 = vpop.f32.mrb[0].mxu0
      %9432 = vmatprep.mubr.bf16.mxu0 0
      %9433 = vmatmul.mubr.bf16.gmra.mrb[0].mxu0 %v8038
      %v9434 = vpop.f32.mrb[0].mxu0
      %v9435 = vadd.f32 0.0, %v9434
      %v9436 = vpop.f32.mrb[0].mxu0
      %v9437 = vpop.f32.mrb[0].mxu0
      %v9438 = vadd.f32 0.0, %v9437
      %v9439 = vpop.f32.mrb[0].mxu0
      %9440 = vmatprep.mubr.bf16.mxu0 0
      %9441 = vmatmul.mubr.bf16.gmra.mrb[0].mxu0 %v8041
      %v9442 = vpop.f32.mrb[0].mxu0
      %v9443 = vadd.f32 0.0, %v9442
      %v9444 = vpop.f32.mrb[0].mxu0
      %v9445 = vpop.f32.mrb[0].mxu0
      %v9446 = vadd.f32 0.0, %v9445
      %v9447 = vpop.f32.mrb[0].mxu0
      %9448 = vmatprep.mubr.bf16.mxu0 0
      %9449 = vmatmul.mubr.bf16.gmra.mrb[0].mxu0 %v8044
      %v9450 = vpop.f32.mrb[0].mxu0
      %v9451 = vadd.f32 0.0, %v9450
      %v9452 = vpop.f32.mrb[0].mxu0
      %v9453 = vpop.f32.mrb[0].mxu0
      %v9454 = vadd.f32 0.0, %v9453
      %v9455 = vpop.f32.mrb[0].mxu0
      %9456 = vmatprep.mubr.bf16.mxu0 0
      %9457 = vmatmul.mubr.bf16.gmra.mrb[0].mxu0 %v8047
      %v9458 = vpop.f32.mrb[0].mxu0
      %v9459 = vadd.f32 0.0, %v9458
      %v9460 = vpop.f32.mrb[0].mxu0
      %v9461 = vpop.f32.mrb[0].mxu0
      %v9462 = vadd.f32 0.0, %v9461
      %v9463 = vpop.f32.mrb[0].mxu0
      %9464 = vmatprep.mubr.bf16.mxu0 0
      %9465 = vmatmul.mubr.bf16.gmra.mrb[0].mxu0 %v8050
      %v9466 = vpop.f32.mrb[0].mxu0
      %v9467 = vadd.f32 0.0, %v9466
      %v9468 = vpop.f32.mrb[0].mxu0
      %v9469 = vpop.f32.mrb[0].mxu0
      %v9470 = vadd.f32 0.0, %v9469
      %v9471 = vpop.f32.mrb[0].mxu0
      %9472 = vmatprep.mubr.bf16.mxu0 0
      %9473 = vmatmul.mubr.bf16.gmra.mrb[0].mxu0 %v8053
      %v9474 = vpop.f32.mrb[0].mxu0
      %v9475 = vadd.f32 0.0, %v9474
      %v9476 = vpop.f32.mrb[0].mxu0
      %v9477 = vpop.f32.mrb[0].mxu0
      %v9478 = vadd.f32 0.0, %v9477
      %v9479 = vpop.f32.mrb[0].mxu0
      %9480 = vmatprep.mubr.bf16.mxu0 0
      %9481 = vmatmul.mubr.bf16.gmra.mrb[0].mxu0 %v8056
      %v9482 = vpop.f32.mrb[0].mxu0
      %v9483 = vadd.f32 0.0, %v9482
      %v9484 = vpop.f32.mrb[0].mxu0
      %v9485 = vpop.f32.mrb[0].mxu0
      %v9486 = vadd.f32 0.0, %v9485
      %v9487 = vpop.f32.mrb[0].mxu0
      %9488 = vmatprep.mubr.bf16.mxu0 0
      %9489 = vmatmul.mubr.bf16.gmra.mrb[0].mxu0 %v8059
      %v9490 = vpop.f32.mrb[0].mxu0
      %v9491 = vadd.f32 0.0, %v9490
      %v9492 = vpop.f32.mrb[0].mxu0
      %v9493 = vpop.f32.mrb[0].mxu0
      %v9494 = vadd.f32 0.0, %v9493
      %v9495 = vpop.f32.mrb[0].mxu0
      %9496 = vmatprep.mubr.bf16.mxu0 0
      %9497 = vmatmul.mubr.bf16.gmra.mrb[0].mxu0 %v8062
      %v9498 = vpop.f32.mrb[0].mxu0
      %v9499 = vadd.f32 0.0, %v9498
      %v9500 = vpop.f32.mrb[0].mxu0
      %v9501 = vpop.f32.mrb[0].mxu0
      %v9502 = vadd.f32 0.0, %v9501
      %v9503 = vpop.f32.mrb[0].mxu0
      %9504 = vmatprep.mubr.bf16.mxu0 0
      %9505 = vmatmul.mubr.bf16.gmra.mrb[0].mxu0 %v8065
      %v9506 = vpop.f32.mrb[0].mxu0
      %v9507 = vadd.f32 0.0, %v9506
      %v9508 = vpop.f32.mrb[0].mxu0
      %v9509 = vpop.f32.mrb[0].mxu0
      %v9510 = vadd.f32 0.0, %v9509
      %v9511 = vpop.f32.mrb[0].mxu0
      %9512 = vmatprep.mubr.bf16.mxu0 0
      %9513 = vmatmul.mubr.bf16.gmra.mrb[0].mxu0 %v8068
      %v9514 = vpop.f32.mrb[0].mxu0
      %v9515 = vadd.f32 0.0, %v9514
      %v9516 = vpop.f32.mrb[0].mxu0
      %v9517 = vpop.f32.mrb[0].mxu0
      %v9518 = vadd.f32 0.0, %v9517
      %v9519 = vpop.f32.mrb[0].mxu0
      %9520 = vmatprep.mubr.bf16.mxu0 0
      %9521 = vmatmul.mubr.bf16.gmra.mrb[0].mxu0 %v8071
      %v9522 = vpop.f32.mrb[0].mxu0
      %v9523 = vadd.f32 0.0, %v9522
      %v9524 = vpop.f32.mrb[0].mxu0
      %v9525 = vpop.f32.mrb[0].mxu0
      %v9526 = vadd.f32 0.0, %v9525
      %v9527 = vpop.f32.mrb[0].mxu0
      %9528 = vmatprep.mubr.bf16.mxu0 0
      %9529 = vmatmul.mubr.bf16.gmra.mrb[0].mxu0 %v8074
      %v9530 = vpop.f32.mrb[0].mxu0
      %v9531 = vadd.f32 0.0, %v9530
      %v9532 = vpop.f32.mrb[0].mxu0
      %v9533 = vpop.f32.mrb[0].mxu0
      %v9534 = vadd.f32 0.0, %v9533
      %v9535 = vpop.f32.mrb[0].mxu0
      %9536 = vmatprep.mubr.bf16.mxu0 0
      %9537 = vmatmul.mubr.bf16.gmra.mrb[0].mxu0 %v8732
      %v9538 = vpop.f32.mrb[0].mxu0
      %v9539 = vadd.f32 0.0, %v9538
      %v9540 = vpop.f32.mrb[0].mxu0
      %v9541 = vpop.f32.mrb[0].mxu0
      %v9542 = vadd.f32 0.0, %v9541
      %v9543 = vpop.f32.mrb[0].mxu0
      %9544 = vmatprep.mubr.bf16.mxu0 0
      %9545 = vmatmul.mubr.bf16.gmra.mrb[0].mxu0 %v9390
      %v9546 = vpop.f32.mrb[0].mxu0
      %v9547 = vadd.f32 0.0, %v9546
      %v9548 = vpop.f32.mrb[0].mxu0
      %v9549 = vpop.f32.mrb[0].mxu0
      %v9550 = vadd.f32 0.0, %v9549
      %v9551 = vpop.f32.mrb[0].mxu0
      %9552 = vdwg.mxu0
      %v9553 = vadd.f32 %v9337, %v9427
      %v9554 = vadd.f32 %v9338, %v9430
      %v9555 = vadd.f32 %v9339, %v9435
      %v9556 = vadd.f32 %v9340, %v9438
      %v9557 = vadd.f32 %v9341, %v9443
      %v9558 = vadd.f32 %v9342, %v9446
      %v9559 = vadd.f32 %v9343, %v9451
      %v9560 = vadd.f32 %v9344, %v9454
      %v9561 = vadd.f32 %v9345, %v9459
      %v9562 = vadd.f32 %v9346, %v9462
      %v9563 = vadd.f32 %v9347, %v9467
      %v9564 = vadd.f32 %v9348, %v9470
      %v9565 = vadd.f32 %v9349, %v9475
      %v9566 = vadd.f32 %v9350, %v9478
      %v9567 = vadd.f32 %v9351, %v9483
      %v9568 = vadd.f32 %v9352, %v9486
      %v9569 = vadd.f32 %v9353, %v9491
      %v9570 = vadd.f32 %v9354, %v9494
      %v9571 = vadd.f32 %v9355, %v9499
      %v9572 = vadd.f32 %v9356, %v9502
      %v9573 = vadd.f32 %v9357, %v9507
      %v9574 = vadd.f32 %v9358, %v9510
      %v9575 = vadd.f32 %v9359, %v9515
      %v9576 = vadd.f32 %v9360, %v9518
      %v9577 = vadd.f32 %v9361, %v9523
      %v9578 = vadd.f32 %v9362, %v9526
      %v9579 = vadd.f32 %v9363, %v9531
      %v9580 = vadd.f32 %v9364, %v9534
      %v9581 = vadd.f32 %v9365, %v9539
      %v9582 = vadd.f32 %v9366, %v9542
      %v9583 = vadd.f32 %v9367, %v9547
      %v9584 = vadd.f32 %v9368, %v9550
      %v9585 = vld [vmem:[%s4 + $0x2] sm:$0x1]
      %v9586 = vlaneseq
      %v9587 = vshrl.u32 %v9586, 7
      %v9588 = vsub.s32 0, %v9587
      %v9589 = vrot.slane %v9585, %v9588
      %v9590 = vadd.f32 %v9553, %v9589
      %v9591 = vadd.f32 %v9554, %v9589
      %v9592 = vadd.f32 %v9555, %v9589
      %v9593 = vadd.f32 %v9556, %v9589
      %v9594 = vadd.f32 %v9557, %v9589
      %v9595 = vadd.f32 %v9558, %v9589
      %v9596 = vadd.f32 %v9559, %v9589
      %v9597 = vadd.f32 %v9560, %v9589
      %v9598 = vadd.f32 %v9561, %v9589
      %v9599 = vadd.f32 %v9562, %v9589
      %v9600 = vadd.f32 %v9563, %v9589
      %v9601 = vadd.f32 %v9564, %v9589
      %v9602 = vadd.f32 %v9565, %v9589
      %v9603 = vadd.f32 %v9566, %v9589
      %v9604 = vadd.f32 %v9567, %v9589
      %v9605 = vadd.f32 %v9568, %v9589
      %v9606 = vadd.f32 %v9569, %v9589
      %v9607 = vadd.f32 %v9570, %v9589
      %v9608 = vadd.f32 %v9571, %v9589
      %v9609 = vadd.f32 %v9572, %v9589
      %v9610 = vadd.f32 %v9573, %v9589
      %v9611 = vadd.f32 %v9574, %v9589
      %v9612 = vadd.f32 %v9575, %v9589
      %v9613 = vadd.f32 %v9576, %v9589
      %v9614 = vadd.f32 %v9577, %v9589
      %v9615 = vadd.f32 %v9578, %v9589
      %v9616 = vadd.f32 %v9579, %v9589
      %v9617 = vadd.f32 %v9580, %v9589
      %v9618 = vadd.f32 %v9581, %v9589
      %v9619 = vadd.f32 %v9582, %v9589
      %v9620 = vadd.f32 %v9583, %v9589
      %v9621 = vadd.f32 %v9584, %v9589
      %v9622 = vmax.f32 %v9590, 0.0
      %v9623 = vmax.f32 %v9591, 0.0
      %v9624 = vmax.f32 %v9592, 0.0
      %v9625 = vmax.f32 %v9593, 0.0
      %v9626 = vmax.f32 %v9594, 0.0
      %v9627 = vmax.f32 %v9595, 0.0
      %v9628 = vmax.f32 %v9596, 0.0
      %v9629 = vmax.f32 %v9597, 0.0
      %v9630 = vmax.f32 %v9598, 0.0
      %v9631 = vmax.f32 %v9599, 0.0
      %v9632 = vmax.f32 %v9600, 0.0
      %v9633 = vmax.f32 %v9601, 0.0
      %v9634 = vmax.f32 %v9602, 0.0
      %v9635 = vmax.f32 %v9603, 0.0
      %v9636 = vmax.f32 %v9604, 0.0
      %v9637 = vmax.f32 %v9605, 0.0
      %v9638 = vmax.f32 %v9606, 0.0
      %v9639 = vmax.f32 %v9607, 0.0
      %v9640 = vmax.f32 %v9608, 0.0
      %v9641 = vmax.f32 %v9609, 0.0
      %v9642 = vmax.f32 %v9610, 0.0
      %v9643 = vmax.f32 %v9611, 0.0
      %v9644 = vmax.f32 %v9612, 0.0
      %v9645 = vmax.f32 %v9613, 0.0
      %v9646 = vmax.f32 %v9614, 0.0
      %v9647 = vmax.f32 %v9615, 0.0
      %v9648 = vmax.f32 %v9616, 0.0
      %v9649 = vmax.f32 %v9617, 0.0
      %v9650 = vmax.f32 %v9618, 0.0
      %v9651 = vmax.f32 %v9619, 0.0
      %v9652 = vmax.f32 %v9620, 0.0
      %v9653 = vmax.f32 %v9621, 0.0
      %vm9654 = vcmask 64512
      %9655 = vst.msk [vmem:[%s224] sm:$0xff] %vm9654, %v9622
      %9656 = vst.msk [vmem:[%s224 + $0x8] sm:$0xff] %vm9654, %v9623
      %9657 = vst.msk [vmem:[%s224 + $0x10] sm:$0xff] %vm9654, %v9624
      %9658 = vst.msk [vmem:[%s224 + $0x18] sm:$0xff] %vm9654, %v9625
      %9659 = vst.msk [vmem:[%s224 + $0x20] sm:$0xff] %vm9654, %v9626
      %9660 = vst.msk [vmem:[%s224 + $0x28] sm:$0xff] %vm9654, %v9627
      %9661 = vst.msk [vmem:[%s224 + $0x30] sm:$0xff] %vm9654, %v9628
      %9662 = vst.msk [vmem:[%s224 + $0x38] sm:$0xff] %vm9654, %v9629
      %9663 = vst.msk [vmem:[%s224 + $0x40] sm:$0xff] %vm9654, %v9630
      %9664 = vst.msk [vmem:[%s224 + $0x48] sm:$0xff] %vm9654, %v9631
      %9665 = vst.msk [vmem:[%s224 + $0x50] sm:$0xff] %vm9654, %v9632
      %9666 = vst.msk [vmem:[%s224 + $0x58] sm:$0xff] %vm9654, %v9633
      %9667 = vst.msk [vmem:[%s224 + $0x60] sm:$0xff] %vm9654, %v9634
      %9668 = vst.msk [vmem:[%s224 + $0x68] sm:$0xff] %vm9654, %v9635
      %9669 = vst.msk [vmem:[%s224 + $0x70] sm:$0xff] %vm9654, %v9636
      %9670 = vst.msk [vmem:[%s224 + $0x78] sm:$0xff] %vm9654, %v9637
      %9671 = vst.msk [vmem:[%s224 + $0x80] sm:$0xff] %vm9654, %v9638
      %9672 = vst.msk [vmem:[%s224 + $0x88] sm:$0xff] %vm9654, %v9639
      %9673 = vst.msk [vmem:[%s224 + $0x90] sm:$0xff] %vm9654, %v9640
      %9674 = vst.msk [vmem:[%s224 + $0x98] sm:$0xff] %vm9654, %v9641
      %9675 = vst.msk [vmem:[%s224 + $0xa0] sm:$0xff] %vm9654, %v9642
      %9676 = vst.msk [vmem:[%s224 + $0xa8] sm:$0xff] %vm9654, %v9643
      %9677 = vst.msk [vmem:[%s224 + $0xb0] sm:$0xff] %vm9654, %v9644
      %9678 = vst.msk [vmem:[%s224 + $0xb8] sm:$0xff] %vm9654, %v9645
      %9679 = vst.msk [vmem:[%s224 + $0xc0] sm:$0xff] %vm9654, %v9646
      %9680 = vst.msk [vmem:[%s224 + $0xc8] sm:$0xff] %vm9654, %v9647
      %9681 = vst.msk [vmem:[%s224 + $0xd0] sm:$0xff] %vm9654, %v9648
      %9682 = vst.msk [vmem:[%s224 + $0xd8] sm:$0xff] %vm9654, %v9649
      %9683 = vst.msk [vmem:[%s224 + $0xe0] sm:$0xff] %vm9654, %v9650
      %9684 = vst.msk [vmem:[%s224 + $0xe8] sm:$0xff] %vm9654, %v9651
      %9685 = vst.msk [vmem:[%s224 + $0xf0] sm:$0xff] %vm9654, %v9652
      %9686 = vst.msk [vmem:[%s224 + $0xf8] sm:$0xff] %vm9654, %v9653
      %p9687 = scmp.lt.s32.totalorder %s16, 1
      %s9688 = scalar_select %p9687, %s16, 1
      %s9689 = smul.addr %s9688, 32
      %s9690 = smul.addr %s9689, 8
      %s9691 = scalar_lea.vmem %s5, %s9690
      // Predicated region
      $region41: #{rfb_pallas.1} parent=39 // pred_check
        %p9692 = pneg %p144
      $region42: #{rfb_pallas.1} parent=39 // pred_check_branch
        %9694 = sbr.rel (%p9692) target = $region44
      $region43: #{rfb_pallas.1} parent=39 // pred_region
        _
      $region44: #{rfb_pallas.1} parent=39 // pred_fallthru
        _
    $region40: #{rfb_pallas.1} parent=5 // pred_fallthru
      _
    %p9695 = scmp.le.s32.totalorder 2, %s11
    // Predicated region
    $region45: #{rfb_pallas.1} parent=5 // pred_check
      %p9696 = pneg %p9695
    $region46: #{rfb_pallas.1} parent=5 // pred_check_branch
      %9698 = sbr.rel (%p9696) target = $region48
    $region47: #{rfb_pallas.1} parent=5 // pred_region
      %s9699 = ssub.s32 %s11, 2
      // Predicated region
      $region49: #{rfb_pallas.1} parent=47 // pred_check
        %p9700 = pneg %p150
      $region50: #{rfb_pallas.1} parent=47 // pred_check_branch
        %9702 = sbr.rel (%p9700) target = $region52
      $region51: #{rfb_pallas.1} parent=47 // pred_region
        %p9703 = scmp.lt.s32.totalorder %s17, 1
        %s9704 = scalar_select %p9703, %s17, 1
        %s9705 = smul.addr %s9704, 32
        %s9706 = smul.addr %s9705, 8
        %s9707 = scalar_lea.vmem %s5, %s9706
      $region52: #{rfb_pallas.1} parent=47 // pred_fallthru
        _
    $region48: #{rfb_pallas.1} parent=5 // pred_fallthru
      _
  $region6: #{rfb_pallas.1} parent=0 // loop_footer
    %s15 = sadd.s32 1, %s11
  $region7: #{rfb_pallas.1} parent=0 // loop_footer_branch
    %10 = sbr.rel target = $region3
  $region8: #{rfb_pallas.1} parent=0 // loop_exit
    _

</llo_original>
